<compile_context>
chip_gen: v6e
topology: v6e:2x2x1
jax: 0.10.0
libtpu: 0.0.40
codegen_flags: <defaults>
</compile_context>

<pallas_src>
import functools

import jax
import jax.numpy as jnp
from jax.experimental import pallas as pl
from jax.experimental.pallas import tpu as pltpu


def _round_up(a, m):
    return (a + m - 1) // m * m


# 3x3 taps in (kh, kw)-major order; tap index t == (dh + 1) * 3 + (dw + 1).
_TAPS = tuple((dh, dw) for dh in (-1, 0, 1) for dw in (-1, 0, 1))


def _tap_masks_array(H, W):
    """(9, H*W) f32 {0,1} masks implementing zero padding for each 3x3 tap."""
    lane = jnp.arange(H * W, dtype=jnp.int32)
    col = lane % W
    row = lane // W
    rows = []
    for dh, dw in _TAPS:
        ok = jnp.ones((H * W,), jnp.bool_)
        if dh == -1:
            ok = ok & (row >= 1)
        if dh == 1:
            ok = ok & (row <= H - 2)
        if dw == -1:
            ok = ok & (col >= 1)
        if dw == 1:
            ok = ok & (col <= W - 2)
        rows.append(jnp.where(ok, 1.0, 0.0).astype(jnp.float32))
    return jnp.stack(rows, axis=0)


def _roll_tap(x, dh, dw, W):
    """Roll so lane p holds x[..., p + dh*W + dw] (circular; mask separately)."""
    n = x.shape[-1]
    shift = (-(dh * W + dw)) % n
    return pltpu.roll(x, shift, axis=x.ndim - 1) if shift else x


# -----------------------------------------------------------------------------
# Kernel 1: fused L2Agg = Conv2d(3,3,k3,p1) -> ReLU -> Conv2d(3,1,k3,p1)
# -----------------------------------------------------------------------------
def _l2agg_kernel(x_ref, m_ref, w0_ref, b0_ref, w1_ref, b1_ref, o_ref, mid_ref,
                  *, W):
    # x_ref : (3, TN, HW) f32 VMEM   3 agg-conv input channels (slice shifts),
    #                                (window*image-channel) batch on sublanes,
    #                                flattened H*W on lanes
    # m_ref : (9, HW) f32 VMEM       hoisted per-tap zero-padding masks
    # w0_ref: (81,) f32 SMEM         conv0 weight (co,ci,kh,kw) row-major
    # b0_ref: (3,)  f32 SMEM
    # w1_ref: (27,) f32 SMEM         conv1 weight (ci,kh,kw) row-major
    # b1_ref: (1,)  f32 SMEM
    # o_ref : (TN, HW) f32 VMEM      conv1 output (single channel)
    # mid_ref:(3, TN, HW) f32 VMEM   scratch parking ReLU'd conv0 outputs
    TN, HW = o_ref.shape

    # conv0 (3 -> 3): each shifted tap computed once, reused by all 3 outputs.
    acc0 = [jnp.zeros((TN, HW), jnp.float32) for _ in range(3)]
    for ci in range(3):
        x_ci = x_ref[ci]                                    # (TN, HW)
        for t, (dh, dw) in enumerate(_TAPS):
            s = _roll_tap(x_ci, dh, dw, W)
            if (dh, dw) != (0, 0):
                s = s * m_ref[pl.ds(t, 1), :]
            for co in range(3):
                widx = ((co * 3 + ci) * 3 + (dh + 1)) * 3 + (dw + 1)
                acc0[co] = acc0[co] + w0_ref[widx] * s
    # park the ReLU'd mids in VMEM so conv1's live set stays small.
    for co in range(3):
        mid_ref[co] = jnp.maximum(acc0[co] + b0_ref[co], 0.0)

    # conv1 (3 -> 1), reading the parked mids.
    acc1 = jnp.zeros((TN, HW), jnp.float32)
    for ci in range(3):
        m_ci = mid_ref[ci]
        for t, (dh, dw) in enumerate(_TAPS):
            s = _roll_tap(m_ci, dh, dw, W)
            if (dh, dw) != (0, 0):
                s = s * m_ref[pl.ds(t, 1), :]
            widx = (ci * 3 + (dh + 1)) * 3 + (dw + 1)
            acc1 = acc1 + w1_ref[widx] * s
    o_ref[...] = acc1 + b1_ref[0]


def l2agg_apply(x3, masks, agg_params, H, W):
    """x3: (3, NB, H*W) -> (NB, H*W); conv input channel s of row b is x3[s, b]."""
    w0, b0, w1, b1 = agg_params
    _, NB, HW = x3.shape

    # Batch tile: multiple of 8 sublanes, capped so the ~5 live full-tile f32
    # temporaries stay near the 64-vreg register file (TN*HW <= ~8K elements);
    # also aim for >=2 grid steps (v7x has 2 TensorCores) when NB allows.
    tn = max(8, min(128, (8192 // max(HW, 1)) // 8 * 8))
    tn = min(tn, max(8, _round_up((NB + 1) // 2, 8)))
    nb_pad = _round_up(NB, tn)
    if nb_pad != NB:
        x3 = jnp.pad(x3, ((0, 0), (0, nb_pad - NB), (0, 0)))

    out = pl.pallas_call(
        functools.partial(_l2agg_kernel, W=W),
        out_shape=jax.ShapeDtypeStruct((nb_pad, HW), jnp.float32),
        grid=(nb_pad // tn,),
        in_specs=[
            pl.BlockSpec((3, tn, HW), lambda i: (0, i, 0)),
            pl.BlockSpec((9, HW), lambda i: (0, 0)),
            pl.BlockSpec(memory_space=pltpu.MemorySpace.SMEM),
            pl.BlockSpec(memory_space=pltpu.MemorySpace.SMEM),
            pl.BlockSpec(memory_space=pltpu.MemorySpace.SMEM),
            pl.BlockSpec(memory_space=pltpu.MemorySpace.SMEM),
        ],
        out_specs=pl.BlockSpec((tn, HW), lambda i: (i, 0)),
        scratch_shapes=[pltpu.VMEM((3, tn, HW), jnp.float32)],
        compiler_params=pltpu.CompilerParams(
            dimension_semantics=("parallel",),
            vmem_limit_bytes=32 * 1024 * 1024),
    )(x3, masks, w0.reshape(-1), b0, w1.reshape(-1), b1)
    return out[:NB]


# -----------------------------------------------------------------------------
# Kernel 2: extractor stand-in conv (tap-major in-kernel im2col -> MXU matmul)
#           + ReLU + global avg pool + Linear(fvdim, k) + sigmoid
# -----------------------------------------------------------------------------
def _head_kernel(x_ref, m_ref, wc_ref, bc_ref, wp_ref, bp_ref, o_ref, pt_ref,
                 *, H, W, tnb):
    # x_ref : (3, tnb*H*W) f32   channel-major, all samples' pixels on lanes
    # m_ref : (9, tnb*H*W) f32   hoisted per-tap masks (tiled per sample)
    # wc_ref: (fvdim, 27)  f32   extractor conv weight, tap-major cols (t*3+ci)
    # bc_ref: (fvdim, 1)   f32
    # wp_ref: (fvdim, k)   f32   projection weight
    # bp_ref: (1, k)       f32
    # o_ref : (tnb, k)     f32   sigmoid(proj(pool(relu(conv(x)))))
    # pt_ref: (27, tnb*H*W) f32  scratch: in-kernel tap-major im2col matrix
    HW = H * W
    fvdim = wc_ref.shape[0]

    # Tap-major im2col: ONE roll + mask + 3-row store per 3x3 tap (9 total).
    x = x_ref[...]                                          # (3, NL)
    for t, (dh, dw) in enumerate(_TAPS):
        s = _roll_tap(x, dh, dw, W)
        if (dh, dw) != (0, 0):
            s = s * m_ref[pl.ds(t, 1), :]
        pt_ref[pl.ds(t * 3, 3), :] = s

    # Extractor conv as ONE MXU matmul over all samples/pixels + bias + ReLU.
    feats = jnp.dot(wc_ref[...], pt_ref[...],
                    preferred_element_type=jnp.float32) + bc_ref[...]
    feats = jnp.maximum(feats, 0.0)                         # (fvdim, tnb*HW)

    # AdaptiveAvgPool2d(1): layout-preserving lane split + minor-axis reduce
    # (HW is a multiple of 128), no per-sample slicing/concat.
    pooled = jnp.sum(feats.reshape(fvdim, tnb, HW), axis=-1) * (1.0 / HW)

    # Linear(fvdim, k) contracting fvdim (dim 0 of both), then exact sigmoid.
    logits = jax.lax.dot_general(
        pooled, wp_ref[...], (((0,), (0,)), ((), ())),
        preferred_element_type=jnp.float32) + bp_ref[...]
    o_ref[...] = 1.0 / (1.0 + jnp.exp(-logits))


def head_apply(agg_imgs, masks, wc, bc, wp, bp, H, W):
    """agg_imgs: (nb, 3, H*W) -> (nb, k)."""
    nb, c, HW = agg_imgs.shape
    fvdim, k = wp.shape

    # Sample tile from a VMEM budget (x + im2col + feature map per sample);
    # keep >=2 grid steps when nb is large enough so v7x's 2 TCs both work.
    per_sample = (c * 4 + 27 * 4 + fvdim * 4) * HW
    tnb = max(8, min(64, (6 << 20) // per_sample // 8 * 8))
    tnb = min(tnb, max(8, _round_up((nb + 1) // 2, 8)))
    nb_pad = _round_up(nb, tnb)
    if nb_pad != nb:
        agg_imgs = jnp.pad(agg_imgs, ((0, nb_pad - nb), (0, 0), (0, 0)))
    # channel-major, all samples' pixels flattened on the lane axis
    # (wrapper-side layout plumbing only).
    x_head = jnp.transpose(agg_imgs, (1, 0, 2)).reshape(c, nb_pad * HW)
    m_head = jnp.tile(masks, (1, tnb))                       # (9, tnb*HW)

    out = pl.pallas_call(
        functools.partial(_head_kernel, H=H, W=W, tnb=tnb),
        out_shape=jax.ShapeDtypeStruct((nb_pad, k), jnp.float32),
        grid=(nb_pad // tnb,),
        in_specs=[
            pl.BlockSpec((c, tnb * HW), lambda i: (0, i)),
            pl.BlockSpec((9, tnb * HW), lambda i: (0, 0)),
            pl.BlockSpec((fvdim, 27), lambda i: (0, 0)),
            pl.BlockSpec((fvdim, 1), lambda i: (0, 0)),
            pl.BlockSpec((fvdim, k), lambda i: (0, 0)),
            pl.BlockSpec((1, k), lambda i: (0, 0)),
        ],
        out_specs=pl.BlockSpec((tnb, k), lambda i: (i, 0)),
        scratch_shapes=[pltpu.VMEM((27, tnb * HW), jnp.float32)],
        compiler_params=pltpu.CompilerParams(
            dimension_semantics=("parallel",),
            vmem_limit_bytes=32 * 1024 * 1024),
    )(x_head, m_head, wc, bc, wp, bp)
    return out[:nb]


# -----------------------------------------------------------------------------
# PreAggregator (agglevel=2, withbn=False) — level-batched recursion glue
# -----------------------------------------------------------------------------
def pre_aggregate(x, nslice, masks, agg_params, H, W):
    # x: (nb, ns, c, H*W); nslice: static Python ints per sample
    nb, ns, c, HW = x.shape
    cur = [x[i, :int(nslice[i])] for i in range(nb)]         # [(ns_i, c, HW)]

    # Level-synchronised recursion: every sample still holding >=3 slices
    # contributes its window-conv work to ONE batched l2agg pallas_call per
    # level (instead of nb*levels tiny calls).
    while max(f.shape[0] for f in cur) > 2:
        idxs = [i for i, f in enumerate(cur) if f.shape[0] >= 3]
        parts, sizes = [], []
        for i in idxs:
            f = cur[i]
            nw = f.shape[0] - 2
            # Conv input channel s of (window, image-channel) row b is the
            # slice-shifted view f[s:s+nw].
            parts.append(jnp.stack(
                [f[s:s + nw].reshape(nw * c, HW) for s in range(3)], axis=0))
            sizes.append(nw * c)
        x3 = parts[0] if len(parts) == 1 else jnp.concatenate(parts, axis=1)
        agg = l2agg_apply(x3, masks, agg_params, H, W)        # (sum(sizes), HW)
        off = 0
        for i, sz in zip(idxs, sizes):
            cur[i] = agg[off:off + sz].reshape(sz // c, c, HW)
            off += sz

    outs = [jnp.mean(f, axis=0, keepdims=True) if f.shape[0] == 2 else f
            for f in cur]
    return jnp.concatenate(outs, axis=0)                      # (nb, c, HW)


def predragn_forward(x, nslice, params, H, W):
    nb, ns, c, h, w = x.shape
    xf = x.reshape(nb, ns, c, h * w)
    masks = _tap_masks_array(H, W)                            # hoisted tap masks
    agg_imgs = pre_aggregate(xf, nslice, masks, params["agg"], H, W)
    return head_apply(agg_imgs, masks, params["wc"], params["bc"],
                      params["wp"], params["bp"], H, W)


# -----------------------------------------------------------------------------
# Deterministic parameter init (shapes implied by the module __init__)
# -----------------------------------------------------------------------------
def init_params(key, fvdim=64, k=10):
    ks = jax.random.split(key, 8)
    # L2Agg: Conv2d(3,3,3) and Conv2d(3,1,3)
    w0 = jax.random.normal(ks[0], (3, 3, 3, 3), jnp.float32) * 0.2
    b0 = jax.random.normal(ks[1], (3,), jnp.float32) * 0.1
    w1 = jax.random.normal(ks[2], (1, 3, 3, 3), jnp.float32) * 0.2
    b1 = jax.random.normal(ks[3], (1,), jnp.float32) * 0.1
    # extractor stand-in: Conv2d(3, fvdim, 3, padding=1), stored tap-major:
    # column order (kh*3 + kw)*3 + ci matches the in-kernel im2col row order.
    wc4 = jax.random.normal(ks[4], (fvdim, 3, 3, 3), jnp.float32) * 0.1
    wc = jnp.transpose(wc4, (0, 2, 3, 1)).reshape(fvdim, 27)
    bc = jax.random.normal(ks[5], (fvdim, 1), jnp.float32) * 0.1
    # proj: Linear(fvdim, k)
    wp = jax.random.normal(ks[6], (fvdim, k), jnp.float32) * 0.1
    bp = jax.random.normal(ks[7], (1, k), jnp.float32) * 0.1
    return {"agg": (w0, b0, w1, b1), "wc": wc, "bc": bc, "wp": wp, "bp": bp}


if __name__ == "__main__":
    key = jax.random.PRNGKey(0)
    kx, kp = jax.random.split(key)

    # x: (nb, ns, c, h, w); nslice: valid slice count per sample (static ints)
    nb, ns, c, h, w = 2, 5, 3, 16, 16
    x = jax.random.normal(kx, (nb, ns, c, h, w), jnp.float32)
    nslice = [5, 3]

    # nblock=1 -> fvdim = 512 // 2**(4-1) = 64 ; k = 10
    params = init_params(kp, fvdim=64, k=10)

    fwd = jax.jit(lambda xx: predragn_forward(xx, nslice, params, h, w))
    out = jax.block_until_ready(fwd(x))
    assert out.shape == (nb, 10)
    assert bool(jnp.all(jnp.isfinite(out)))
    assert bool(jnp.all((out >= 0.0) & (out <= 1.0)))
    print("KERNEL_OK")
</pallas_src>

<mosaic_0001>
module attributes {stable_mosaic.version = 11 : i64} {
  func.func @_head_kernel(%arg0: i32, %arg1: memref<3x2048xf32, #tpu.memory_space<vmem>>, %arg2: memref<9x2048xf32, #tpu.memory_space<vmem>>, %arg3: memref<64x27xf32, #tpu.memory_space<vmem>>, %arg4: memref<64x1xf32, #tpu.memory_space<vmem>>, %arg5: memref<64x10xf32, #tpu.memory_space<vmem>>, %arg6: memref<1x10xf32, #tpu.memory_space<vmem>>, %arg7: memref<8x10xf32, #tpu.memory_space<vmem>>, %arg8: memref<27x2048xf32, #tpu.memory_space<vmem>>) attributes {dimension_semantics = [#tpu.dimension_semantics<parallel>], iteration_bounds = array<i64: 1>, scalar_prefetch = 0 : i64, scratch_operands = 1 : i64, tpu.core_type = #tpu.core_type<tc>, window_params = [{transform_indices = @transform_0, window_bounds = array<i64: 3, 2048>}, {pipeline_mode = #tpu.pipeline_mode<synchronous>, transform_indices = @transform_1, window_bounds = array<i64: 9, 2048>}, {pipeline_mode = #tpu.pipeline_mode<synchronous>, transform_indices = @transform_2, window_bounds = array<i64: 64, 27>}, {pipeline_mode = #tpu.pipeline_mode<synchronous>, transform_indices = @transform_3, window_bounds = array<i64: 64, 1>}, {pipeline_mode = #tpu.pipeline_mode<synchronous>, transform_indices = @transform_4, window_bounds = array<i64: 64, 10>}, {pipeline_mode = #tpu.pipeline_mode<synchronous>, transform_indices = @transform_5, window_bounds = array<i64: 1, 10>}, {transform_indices = @transform_6, window_bounds = array<i64: 8, 10>}]} {
    %c0 = arith.constant 0 : index
    %c0_0 = arith.constant 0 : index
    %0 = vector.load %arg1[%c0, %c0_0] : memref<3x2048xf32, #tpu.memory_space<vmem>>, vector<3x2048xf32>
    %c17_i32 = arith.constant 17 : i32
    %1 = tpu.dynamic_rotate %0 by %c17_i32 dim 1 : vector<3x2048xf32>, i32 -> vector<3x2048xf32>
    %c0_1 = arith.constant 0 : index
    %c0_2 = arith.constant 0 : index
    %2 = vector.load %arg2[%c0_1, %c0_2] : memref<9x2048xf32, #tpu.memory_space<vmem>>, vector<1x2048xf32>
    %3 = vector.broadcast %2 : vector<1x2048xf32> to vector<3x2048xf32>
    %4 = arith.mulf %1, %3 : vector<3x2048xf32>
    %c0_3 = arith.constant 0 : index
    %c0_4 = arith.constant 0 : index
    %5 = vector.load %arg8[%c0_3, %c0_4] : memref<27x2048xf32, #tpu.memory_space<vmem>>, vector<3x2048xf32>
    tpu.vector_store %arg8[%c0_3, %c0_4], %4 {strides = array<i32>} : memref<27x2048xf32, #tpu.memory_space<vmem>>, vector<3x2048xf32>,
    %c16_i32 = arith.constant 16 : i32
    %6 = tpu.dynamic_rotate %0 by %c16_i32 dim 1 : vector<3x2048xf32>, i32 -> vector<3x2048xf32>
    %c1 = arith.constant 1 : index
    %c0_5 = arith.constant 0 : index
    %7 = vector.load %arg2[%c1, %c0_5] : memref<9x2048xf32, #tpu.memory_space<vmem>>, vector<1x2048xf32>
    %8 = vector.broadcast %7 : vector<1x2048xf32> to vector<3x2048xf32>
    %9 = arith.mulf %6, %8 : vector<3x2048xf32>
    %c3 = arith.constant 3 : index
    %c0_6 = arith.constant 0 : index
    %10 = vector.load %arg8[%c3, %c0_6] : memref<27x2048xf32, #tpu.memory_space<vmem>>, vector<3x2048xf32>
    tpu.vector_store %arg8[%c3, %c0_6], %9 {strides = array<i32>} : memref<27x2048xf32, #tpu.memory_space<vmem>>, vector<3x2048xf32>,
    %c15_i32 = arith.constant 15 : i32
    %11 = tpu.dynamic_rotate %0 by %c15_i32 dim 1 : vector<3x2048xf32>, i32 -> vector<3x2048xf32>
    %c2 = arith.constant 2 : index
    %c0_7 = arith.constant 0 : index
    %12 = vector.load %arg2[%c2, %c0_7] : memref<9x2048xf32, #tpu.memory_space<vmem>>, vector<1x2048xf32>
    %13 = vector.broadcast %12 : vector<1x2048xf32> to vector<3x2048xf32>
    %14 = arith.mulf %11, %13 : vector<3x2048xf32>
    %c6 = arith.constant 6 : index
    %c0_8 = arith.constant 0 : index
    %15 = vector.load %arg8[%c6, %c0_8] : memref<27x2048xf32, #tpu.memory_space<vmem>>, vector<3x2048xf32>
    tpu.vector_store %arg8[%c6, %c0_8], %14 {strides = array<i32>} : memref<27x2048xf32, #tpu.memory_space<vmem>>, vector<3x2048xf32>,
    %c1_i32 = arith.constant 1 : i32
    %16 = tpu.dynamic_rotate %0 by %c1_i32 dim 1 : vector<3x2048xf32>, i32 -> vector<3x2048xf32>
    %c3_9 = arith.constant 3 : index
    %c0_10 = arith.constant 0 : index
    %17 = vector.load %arg2[%c3_9, %c0_10] : memref<9x2048xf32, #tpu.memory_space<vmem>>, vector<1x2048xf32>
    %18 = vector.broadcast %17 : vector<1x2048xf32> to vector<3x2048xf32>
    %19 = arith.mulf %16, %18 : vector<3x2048xf32>
    %c9 = arith.constant 9 : index
    %c0_11 = arith.constant 0 : index
    %20 = vector.load %arg8[%c9, %c0_11] : memref<27x2048xf32, #tpu.memory_space<vmem>>, vector<3x2048xf32>
    tpu.vector_store %arg8[%c9, %c0_11], %19 {strides = array<i32>} : memref<27x2048xf32, #tpu.memory_space<vmem>>, vector<3x2048xf32>,
    %c12 = arith.constant 12 : index
    %c0_12 = arith.constant 0 : index
    %21 = vector.load %arg8[%c12, %c0_12] : memref<27x2048xf32, #tpu.memory_space<vmem>>, vector<3x2048xf32>
    tpu.vector_store %arg8[%c12, %c0_12], %0 {strides = array<i32>} : memref<27x2048xf32, #tpu.memory_space<vmem>>, vector<3x2048xf32>,
    %c2047_i32 = arith.constant 2047 : i32
    %22 = tpu.dynamic_rotate %0 by %c2047_i32 dim 1 : vector<3x2048xf32>, i32 -> vector<3x2048xf32>
    %c5 = arith.constant 5 : index
    %c0_13 = arith.constant 0 : index
    %23 = vector.load %arg2[%c5, %c0_13] : memref<9x2048xf32, #tpu.memory_space<vmem>>, vector<1x2048xf32>
    %24 = vector.broadcast %23 : vector<1x2048xf32> to vector<3x2048xf32>
    %25 = arith.mulf %22, %24 : vector<3x2048xf32>
    %c15 = arith.constant 15 : index
    %c0_14 = arith.constant 0 : index
    %26 = vector.load %arg8[%c15, %c0_14] : memref<27x2048xf32, #tpu.memory_space<vmem>>, vector<3x2048xf32>
    tpu.vector_store %arg8[%c15, %c0_14], %25 {strides = array<i32>} : memref<27x2048xf32, #tpu.memory_space<vmem>>, vector<3x2048xf32>,
    %c2033_i32 = arith.constant 2033 : i32
    %27 = tpu.dynamic_rotate %0 by %c2033_i32 dim 1 : vector<3x2048xf32>, i32 -> vector<3x2048xf32>
    %c6_15 = arith.constant 6 : index
    %c0_16 = arith.constant 0 : index
    %28 = vector.load %arg2[%c6_15, %c0_16] : memref<9x2048xf32, #tpu.memory_space<vmem>>, vector<1x2048xf32>
    %29 = vector.broadcast %28 : vector<1x2048xf32> to vector<3x2048xf32>
    %30 = arith.mulf %27, %29 : vector<3x2048xf32>
    %c18 = arith.constant 18 : index
    %c0_17 = arith.constant 0 : index
    %31 = vector.load %arg8[%c18, %c0_17] : memref<27x2048xf32, #tpu.memory_space<vmem>>, vector<3x2048xf32>
    tpu.vector_store %arg8[%c18, %c0_17], %30 {strides = array<i32>} : memref<27x2048xf32, #tpu.memory_space<vmem>>, vector<3x2048xf32>,
    %c2032_i32 = arith.constant 2032 : i32
    %32 = tpu.dynamic_rotate %0 by %c2032_i32 dim 1 : vector<3x2048xf32>, i32 -> vector<3x2048xf32>
    %c7 = arith.constant 7 : index
    %c0_18 = arith.constant 0 : index
    %33 = vector.load %arg2[%c7, %c0_18] : memref<9x2048xf32, #tpu.memory_space<vmem>>, vector<1x2048xf32>
    %34 = vector.broadcast %33 : vector<1x2048xf32> to vector<3x2048xf32>
    %35 = arith.mulf %32, %34 : vector<3x2048xf32>
    %c21 = arith.constant 21 : index
    %c0_19 = arith.constant 0 : index
    %36 = vector.load %arg8[%c21, %c0_19] : memref<27x2048xf32, #tpu.memory_space<vmem>>, vector<3x2048xf32>
    tpu.vector_store %arg8[%c21, %c0_19], %35 {strides = array<i32>} : memref<27x2048xf32, #tpu.memory_space<vmem>>, vector<3x2048xf32>,
    %c2031_i32 = arith.constant 2031 : i32
    %37 = tpu.dynamic_rotate %0 by %c2031_i32 dim 1 : vector<3x2048xf32>, i32 -> vector<3x2048xf32>
    %c8 = arith.constant 8 : index
    %c0_20 = arith.constant 0 : index
    %38 = vector.load %arg2[%c8, %c0_20] : memref<9x2048xf32, #tpu.memory_space<vmem>>, vector<1x2048xf32>
    %39 = vector.broadcast %38 : vector<1x2048xf32> to vector<3x2048xf32>
    %40 = arith.mulf %37, %39 : vector<3x2048xf32>
    %c24 = arith.constant 24 : index
    %c0_21 = arith.constant 0 : index
    %41 = vector.load %arg8[%c24, %c0_21] : memref<27x2048xf32, #tpu.memory_space<vmem>>, vector<3x2048xf32>
    tpu.vector_store %arg8[%c24, %c0_21], %40 {strides = array<i32>} : memref<27x2048xf32, #tpu.memory_space<vmem>>, vector<3x2048xf32>,
    %c0_22 = arith.constant 0 : index
    %c0_23 = arith.constant 0 : index
    %42 = vector.load %arg3[%c0_22, %c0_23] : memref<64x27xf32, #tpu.memory_space<vmem>>, vector<64x27xf32>
    %c0_24 = arith.constant 0 : index
    %c0_25 = arith.constant 0 : index
    %43 = vector.load %arg8[%c0_24, %c0_25] : memref<27x2048xf32, #tpu.memory_space<vmem>>, vector<27x2048xf32>
    %cst = arith.constant dense<0.000000e+00> : vector<64x2048xf32>
    %44 = tpu.matmul %42, %43, %cst {dimension_numbers = #tpu.dot_dimension_numbers<[1], [0], [0], [1], [0, 0, 1, 1], [], []>} : vector<64x27xf32>, vector<27x2048xf32>, vector<64x2048xf32> -> vector<64x2048xf32>
    %c0_26 = arith.constant 0 : index
    %c0_27 = arith.constant 0 : index
    %45 = vector.load %arg4[%c0_26, %c0_27] : memref<64x1xf32, #tpu.memory_space<vmem>>, vector<64x1xf32>
    %46 = vector.broadcast %45 : vector<64x1xf32> to vector<64x2048xf32>
    %47 = arith.addf %44, %46 : vector<64x2048xf32>
    %cst_28 = arith.constant 0.000000e+00 : f32
    %48 = vector.broadcast %cst_28 : f32 to vector<64x2048xf32>
    %49 = arith.maximumf %47, %48 : vector<64x2048xf32>
    %50 = vector.shape_cast %49 : vector<64x2048xf32> to vector<64x8x256xf32>
    %cst_29 = arith.constant dense<0.000000e+00> : vector<64x8xf32>
    %51 = vector.multi_reduction <add>, %50, %cst_29 [2] : vector<64x8x256xf32> to vector<64x8xf32>
    %cst_30 = arith.constant 3.906250e-03 : f32
    %52 = vector.broadcast %cst_30 : f32 to vector<64x8xf32>
    %53 = arith.mulf %51, %52 : vector<64x8xf32>
    %c0_31 = arith.constant 0 : index
    %c0_32 = arith.constant 0 : index
    %54 = vector.load %arg5[%c0_31, %c0_32] : memref<64x10xf32, #tpu.memory_space<vmem>>, vector<64x10xf32>
    %cst_33 = arith.constant dense<0.000000e+00> : vector<8x10xf32>
    %55 = tpu.matmul %53, %54, %cst_33 {dimension_numbers = #tpu.dot_dimension_numbers<[0], [0], [1], [1], [0, 1, 1, 1], [], []>} : vector<64x8xf32>, vector<64x10xf32>, vector<8x10xf32> -> vector<8x10xf32>
    %c0_34 = arith.constant 0 : index
    %c0_35 = arith.constant 0 : index
    %56 = vector.load %arg6[%c0_34, %c0_35] : memref<1x10xf32, #tpu.memory_space<vmem>>, vector<1x10xf32>
    %57 = vector.broadcast %56 : vector<1x10xf32> to vector<8x10xf32>
    %58 = arith.addf %55, %57 : vector<8x10xf32>
    %cst_36 = arith.constant 0.000000e+00 : f32
    %59 = vector.broadcast %cst_36 : f32 to vector<8x10xf32>
    %60 = arith.subf %59, %58 : vector<8x10xf32>
    %61 = math.exp %60 : vector<8x10xf32>
    %cst_37 = arith.constant 1.000000e+00 : f32
    %62 = vector.broadcast %cst_37 : f32 to vector<8x10xf32>
    %63 = arith.addf %62, %61 : vector<8x10xf32>
    %cst_38 = arith.constant 1.000000e+00 : f32
    %64 = vector.broadcast %cst_38 : f32 to vector<8x10xf32>
    %65 = arith.divf %64, %63 : vector<8x10xf32>
    %c0_39 = arith.constant 0 : index
    %c0_40 = arith.constant 0 : index
    %66 = vector.load %arg7[%c0_39, %c0_40] : memref<8x10xf32, #tpu.memory_space<vmem>>, vector<8x10xf32>
    tpu.vector_store %arg7[%c0_39, %c0_40], %65 {strides = array<i32>} : memref<8x10xf32, #tpu.memory_space<vmem>>, vector<8x10xf32>,
    return
  }
  func.func @transform_0(%arg0: i32) -> (i32, i32) {
    %c0_i32 = arith.constant 0 : i32
    %c0_i32_0 = arith.constant 0 : i32
    return %c0_i32, %arg0 : i32, i32
  }
  func.func @transform_1(%arg0: i32) -> (i32, i32) {
    %c0_i32 = arith.constant 0 : i32
    %c0_i32_0 = arith.constant 0 : i32
    %c0_i32_1 = arith.constant 0 : i32
    return %c0_i32, %c0_i32_0 : i32, i32
  }
  func.func @transform_2(%arg0: i32) -> (i32, i32) {
    %c0_i32 = arith.constant 0 : i32
    %c0_i32_0 = arith.constant 0 : i32
    %c0_i32_1 = arith.constant 0 : i32
    return %c0_i32, %c0_i32_0 : i32, i32
  }
  func.func @transform_3(%arg0: i32) -> (i32, i32) {
    %c0_i32 = arith.constant 0 : i32
    %c0_i32_0 = arith.constant 0 : i32
    %c0_i32_1 = arith.constant 0 : i32
    return %c0_i32, %c0_i32_0 : i32, i32
  }
  func.func @transform_4(%arg0: i32) -> (i32, i32) {
    %c0_i32 = arith.constant 0 : i32
    %c0_i32_0 = arith.constant 0 : i32
    %c0_i32_1 = arith.constant 0 : i32
    return %c0_i32, %c0_i32_0 : i32, i32
  }
  func.func @transform_5(%arg0: i32) -> (i32, i32) {
    %c0_i32 = arith.constant 0 : i32
    %c0_i32_0 = arith.constant 0 : i32
    %c0_i32_1 = arith.constant 0 : i32
    return %c0_i32, %c0_i32_0 : i32, i32
  }
  func.func @transform_6(%arg0: i32) -> (i32, i32) {
    %c0_i32 = arith.constant 0 : i32
    %c0_i32_0 = arith.constant 0 : i32
    return %arg0, %c0_i32 : i32, i32
  }
}

module attributes {stable_mosaic.version = 11 : i64} {
  func.func @_l2agg_kernel(%arg0: i32, %arg1: memref<3x8x256xf32, #tpu.memory_space<vmem>>, %arg2: memref<9x256xf32, #tpu.memory_space<vmem>>, %arg3: memref<81xf32, #tpu.memory_space<smem>>, %arg4: memref<3xf32, #tpu.memory_space<smem>>, %arg5: memref<27xf32, #tpu.memory_space<smem>>, %arg6: memref<1xf32, #tpu.memory_space<smem>>, %arg7: memref<8x256xf32, #tpu.memory_space<vmem>>, %arg8: memref<3x8x256xf32, #tpu.memory_space<vmem>>) attributes {dimension_semantics = [#tpu.dimension_semantics<parallel>], iteration_bounds = array<i64: 2>, scalar_prefetch = 0 : i64, scratch_operands = 1 : i64, tpu.core_type = #tpu.core_type<tc>, window_params = [{transform_indices = @transform_0, window_bounds = array<i64: 3, 8, 256>}, {pipeline_mode = #tpu.pipeline_mode<synchronous>, transform_indices = @transform_1, window_bounds = array<i64: 9, 256>}, {transform_indices = @transform_2, window_bounds = array<i64: 81>}, {transform_indices = @transform_3, window_bounds = array<i64: 3>}, {transform_indices = @transform_4, window_bounds = array<i64: 27>}, {transform_indices = @transform_5, window_bounds = array<i64: 1>}, {transform_indices = @transform_6, window_bounds = array<i64: 8, 256>}]} {
    %cst = arith.constant 0.000000e+00 : f32
    %0 = vector.broadcast %cst : f32 to vector<8x256xf32>
    %cst_0 = arith.constant 0.000000e+00 : f32
    %1 = vector.broadcast %cst_0 : f32 to vector<8x256xf32>
    %cst_1 = arith.constant 0.000000e+00 : f32
    %2 = vector.broadcast %cst_1 : f32 to vector<8x256xf32>
    %c0 = arith.constant 0 : index
    %c0_2 = arith.constant 0 : index
    %c0_3 = arith.constant 0 : index
    %3 = vector.load %arg1[%c0, %c0_2, %c0_3] : memref<3x8x256xf32, #tpu.memory_space<vmem>>, vector<1x8x256xf32>
    %4 = vector.shape_cast %3 : vector<1x8x256xf32> to vector<8x256xf32>
    %c17_i32 = arith.constant 17 : i32
    %5 = tpu.dynamic_rotate %4 by %c17_i32 dim 1 : vector<8x256xf32>, i32 -> vector<8x256xf32>
    %c0_4 = arith.constant 0 : index
    %c0_5 = arith.constant 0 : index
    %6 = vector.load %arg2[%c0_4, %c0_5] : memref<9x256xf32, #tpu.memory_space<vmem>>, vector<1x256xf32>
    %7 = vector.broadcast %6 : vector<1x256xf32> to vector<8x256xf32>
    %8 = arith.mulf %5, %7 : vector<8x256xf32>
    %c0_6 = arith.constant 0 : index
    %9 = memref.load %arg3[%c0_6] : memref<81xf32, #tpu.memory_space<smem>>
    %10 = vector.broadcast %9 : f32 to vector<8x256xf32>
    %11 = arith.mulf %10, %8 : vector<8x256xf32>
    %12 = arith.addf %0, %11 : vector<8x256xf32>
    %c27 = arith.constant 27 : index
    %13 = memref.load %arg3[%c27] : memref<81xf32, #tpu.memory_space<smem>>
    %14 = vector.broadcast %13 : f32 to vector<8x256xf32>
    %15 = arith.mulf %14, %8 : vector<8x256xf32>
    %16 = arith.addf %1, %15 : vector<8x256xf32>
    %c54 = arith.constant 54 : index
    %17 = memref.load %arg3[%c54] : memref<81xf32, #tpu.memory_space<smem>>
    %18 = vector.broadcast %17 : f32 to vector<8x256xf32>
    %19 = arith.mulf %18, %8 : vector<8x256xf32>
    %20 = arith.addf %2, %19 : vector<8x256xf32>
    %c16_i32 = arith.constant 16 : i32
    %21 = tpu.dynamic_rotate %4 by %c16_i32 dim 1 : vector<8x256xf32>, i32 -> vector<8x256xf32>
    %c1 = arith.constant 1 : index
    %c0_7 = arith.constant 0 : index
    %22 = vector.load %arg2[%c1, %c0_7] : memref<9x256xf32, #tpu.memory_space<vmem>>, vector<1x256xf32>
    %23 = vector.broadcast %22 : vector<1x256xf32> to vector<8x256xf32>
    %24 = arith.mulf %21, %23 : vector<8x256xf32>
    %c1_8 = arith.constant 1 : index
    %25 = memref.load %arg3[%c1_8] : memref<81xf32, #tpu.memory_space<smem>>
    %26 = vector.broadcast %25 : f32 to vector<8x256xf32>
    %27 = arith.mulf %26, %24 : vector<8x256xf32>
    %28 = arith.addf %12, %27 : vector<8x256xf32>
    %c28 = arith.constant 28 : index
    %29 = memref.load %arg3[%c28] : memref<81xf32, #tpu.memory_space<smem>>
    %30 = vector.broadcast %29 : f32 to vector<8x256xf32>
    %31 = arith.mulf %30, %24 : vector<8x256xf32>
    %32 = arith.addf %16, %31 : vector<8x256xf32>
    %c55 = arith.constant 55 : index
    %33 = memref.load %arg3[%c55] : memref<81xf32, #tpu.memory_space<smem>>
    %34 = vector.broadcast %33 : f32 to vector<8x256xf32>
    %35 = arith.mulf %34, %24 : vector<8x256xf32>
    %36 = arith.addf %20, %35 : vector<8x256xf32>
    %c15_i32 = arith.constant 15 : i32
    %37 = tpu.dynamic_rotate %4 by %c15_i32 dim 1 : vector<8x256xf32>, i32 -> vector<8x256xf32>
    %c2 = arith.constant 2 : index
    %c0_9 = arith.constant 0 : index
    %38 = vector.load %arg2[%c2, %c0_9] : memref<9x256xf32, #tpu.memory_space<vmem>>, vector<1x256xf32>
    %39 = vector.broadcast %38 : vector<1x256xf32> to vector<8x256xf32>
    %40 = arith.mulf %37, %39 : vector<8x256xf32>
    %c2_10 = arith.constant 2 : index
    %41 = memref.load %arg3[%c2_10] : memref<81xf32, #tpu.memory_space<smem>>
    %42 = vector.broadcast %41 : f32 to vector<8x256xf32>
    %43 = arith.mulf %42, %40 : vector<8x256xf32>
    %44 = arith.addf %28, %43 : vector<8x256xf32>
    %c29 = arith.constant 29 : index
    %45 = memref.load %arg3[%c29] : memref<81xf32, #tpu.memory_space<smem>>
    %46 = vector.broadcast %45 : f32 to vector<8x256xf32>
    %47 = arith.mulf %46, %40 : vector<8x256xf32>
    %48 = arith.addf %32, %47 : vector<8x256xf32>
    %c56 = arith.constant 56 : index
    %49 = memref.load %arg3[%c56] : memref<81xf32, #tpu.memory_space<smem>>
    %50 = vector.broadcast %49 : f32 to vector<8x256xf32>
    %51 = arith.mulf %50, %40 : vector<8x256xf32>
    %52 = arith.addf %36, %51 : vector<8x256xf32>
    %c1_i32 = arith.constant 1 : i32
    %53 = tpu.dynamic_rotate %4 by %c1_i32 dim 1 : vector<8x256xf32>, i32 -> vector<8x256xf32>
    %c3 = arith.constant 3 : index
    %c0_11 = arith.constant 0 : index
    %54 = vector.load %arg2[%c3, %c0_11] : memref<9x256xf32, #tpu.memory_space<vmem>>, vector<1x256xf32>
    %55 = vector.broadcast %54 : vector<1x256xf32> to vector<8x256xf32>
    %56 = arith.mulf %53, %55 : vector<8x256xf32>
    %c3_12 = arith.constant 3 : index
    %57 = memref.load %arg3[%c3_12] : memref<81xf32, #tpu.memory_space<smem>>
    %58 = vector.broadcast %57 : f32 to vector<8x256xf32>
    %59 = arith.mulf %58, %56 : vector<8x256xf32>
    %60 = arith.addf %44, %59 : vector<8x256xf32>
    %c30 = arith.constant 30 : index
    %61 = memref.load %arg3[%c30] : memref<81xf32, #tpu.memory_space<smem>>
    %62 = vector.broadcast %61 : f32 to vector<8x256xf32>
    %63 = arith.mulf %62, %56 : vector<8x256xf32>
    %64 = arith.addf %48, %63 : vector<8x256xf32>
    %c57 = arith.constant 57 : index
    %65 = memref.load %arg3[%c57] : memref<81xf32, #tpu.memory_space<smem>>
    %66 = vector.broadcast %65 : f32 to vector<8x256xf32>
    %67 = arith.mulf %66, %56 : vector<8x256xf32>
    %68 = arith.addf %52, %67 : vector<8x256xf32>
    %c4 = arith.constant 4 : index
    %69 = memref.load %arg3[%c4] : memref<81xf32, #tpu.memory_space<smem>>
    %70 = vector.broadcast %69 : f32 to vector<8x256xf32>
    %71 = arith.mulf %70, %4 : vector<8x256xf32>
    %72 = arith.addf %60, %71 : vector<8x256xf32>
    %c31 = arith.constant 31 : index
    %73 = memref.load %arg3[%c31] : memref<81xf32, #tpu.memory_space<smem>>
    %74 = vector.broadcast %73 : f32 to vector<8x256xf32>
    %75 = arith.mulf %74, %4 : vector<8x256xf32>
    %76 = arith.addf %64, %75 : vector<8x256xf32>
    %c58 = arith.constant 58 : index
    %77 = memref.load %arg3[%c58] : memref<81xf32, #tpu.memory_space<smem>>
    %78 = vector.broadcast %77 : f32 to vector<8x256xf32>
    %79 = arith.mulf %78, %4 : vector<8x256xf32>
    %80 = arith.addf %68, %79 : vector<8x256xf32>
    %c255_i32 = arith.constant 255 : i32
    %81 = tpu.dynamic_rotate %4 by %c255_i32 dim 1 : vector<8x256xf32>, i32 -> vector<8x256xf32>
    %c5 = arith.constant 5 : index
    %c0_13 = arith.constant 0 : index
    %82 = vector.load %arg2[%c5, %c0_13] : memref<9x256xf32, #tpu.memory_space<vmem>>, vector<1x256xf32>
    %83 = vector.broadcast %82 : vector<1x256xf32> to vector<8x256xf32>
    %84 = arith.mulf %81, %83 : vector<8x256xf32>
    %c5_14 = arith.constant 5 : index
    %85 = memref.load %arg3[%c5_14] : memref<81xf32, #tpu.memory_space<smem>>
    %86 = vector.broadcast %85 : f32 to vector<8x256xf32>
    %87 = arith.mulf %86, %84 : vector<8x256xf32>
    %88 = arith.addf %72, %87 : vector<8x256xf32>
    %c32 = arith.constant 32 : index
    %89 = memref.load %arg3[%c32] : memref<81xf32, #tpu.memory_space<smem>>
    %90 = vector.broadcast %89 : f32 to vector<8x256xf32>
    %91 = arith.mulf %90, %84 : vector<8x256xf32>
    %92 = arith.addf %76, %91 : vector<8x256xf32>
    %c59 = arith.constant 59 : index
    %93 = memref.load %arg3[%c59] : memref<81xf32, #tpu.memory_space<smem>>
    %94 = vector.broadcast %93 : f32 to vector<8x256xf32>
    %95 = arith.mulf %94, %84 : vector<8x256xf32>
    %96 = arith.addf %80, %95 : vector<8x256xf32>
    %c241_i32 = arith.constant 241 : i32
    %97 = tpu.dynamic_rotate %4 by %c241_i32 dim 1 : vector<8x256xf32>, i32 -> vector<8x256xf32>
    %c6 = arith.constant 6 : index
    %c0_15 = arith.constant 0 : index
    %98 = vector.load %arg2[%c6, %c0_15] : memref<9x256xf32, #tpu.memory_space<vmem>>, vector<1x256xf32>
    %99 = vector.broadcast %98 : vector<1x256xf32> to vector<8x256xf32>
    %100 = arith.mulf %97, %99 : vector<8x256xf32>
    %c6_16 = arith.constant 6 : index
    %101 = memref.load %arg3[%c6_16] : memref<81xf32, #tpu.memory_space<smem>>
    %102 = vector.broadcast %101 : f32 to vector<8x256xf32>
    %103 = arith.mulf %102, %100 : vector<8x256xf32>
    %104 = arith.addf %88, %103 : vector<8x256xf32>
    %c33 = arith.constant 33 : index
    %105 = memref.load %arg3[%c33] : memref<81xf32, #tpu.memory_space<smem>>
    %106 = vector.broadcast %105 : f32 to vector<8x256xf32>
    %107 = arith.mulf %106, %100 : vector<8x256xf32>
    %108 = arith.addf %92, %107 : vector<8x256xf32>
    %c60 = arith.constant 60 : index
    %109 = memref.load %arg3[%c60] : memref<81xf32, #tpu.memory_space<smem>>
    %110 = vector.broadcast %109 : f32 to vector<8x256xf32>
    %111 = arith.mulf %110, %100 : vector<8x256xf32>
    %112 = arith.addf %96, %111 : vector<8x256xf32>
    %c240_i32 = arith.constant 240 : i32
    %113 = tpu.dynamic_rotate %4 by %c240_i32 dim 1 : vector<8x256xf32>, i32 -> vector<8x256xf32>
    %c7 = arith.constant 7 : index
    %c0_17 = arith.constant 0 : index
    %114 = vector.load %arg2[%c7, %c0_17] : memref<9x256xf32, #tpu.memory_space<vmem>>, vector<1x256xf32>
    %115 = vector.broadcast %114 : vector<1x256xf32> to vector<8x256xf32>
    %116 = arith.mulf %113, %115 : vector<8x256xf32>
    %c7_18 = arith.constant 7 : index
    %117 = memref.load %arg3[%c7_18] : memref<81xf32, #tpu.memory_space<smem>>
    %118 = vector.broadcast %117 : f32 to vector<8x256xf32>
    %119 = arith.mulf %118, %116 : vector<8x256xf32>
    %120 = arith.addf %104, %119 : vector<8x256xf32>
    %c34 = arith.constant 34 : index
    %121 = memref.load %arg3[%c34] : memref<81xf32, #tpu.memory_space<smem>>
    %122 = vector.broadcast %121 : f32 to vector<8x256xf32>
    %123 = arith.mulf %122, %116 : vector<8x256xf32>
    %124 = arith.addf %108, %123 : vector<8x256xf32>
    %c61 = arith.constant 61 : index
    %125 = memref.load %arg3[%c61] : memref<81xf32, #tpu.memory_space<smem>>
    %126 = vector.broadcast %125 : f32 to vector<8x256xf32>
    %127 = arith.mulf %126, %116 : vector<8x256xf32>
    %128 = arith.addf %112, %127 : vector<8x256xf32>
    %c239_i32 = arith.constant 239 : i32
    %129 = tpu.dynamic_rotate %4 by %c239_i32 dim 1 : vector<8x256xf32>, i32 -> vector<8x256xf32>
    %c8 = arith.constant 8 : index
    %c0_19 = arith.constant 0 : index
    %130 = vector.load %arg2[%c8, %c0_19] : memref<9x256xf32, #tpu.memory_space<vmem>>, vector<1x256xf32>
    %131 = vector.broadcast %130 : vector<1x256xf32> to vector<8x256xf32>
    %132 = arith.mulf %129, %131 : vector<8x256xf32>
    %c8_20 = arith.constant 8 : index
    %133 = memref.load %arg3[%c8_20] : memref<81xf32, #tpu.memory_space<smem>>
    %134 = vector.broadcast %133 : f32 to vector<8x256xf32>
    %135 = arith.mulf %134, %132 : vector<8x256xf32>
    %136 = arith.addf %120, %135 : vector<8x256xf32>
    %c35 = arith.constant 35 : index
    %137 = memref.load %arg3[%c35] : memref<81xf32, #tpu.memory_space<smem>>
    %138 = vector.broadcast %137 : f32 to vector<8x256xf32>
    %139 = arith.mulf %138, %132 : vector<8x256xf32>
    %140 = arith.addf %124, %139 : vector<8x256xf32>
    %c62 = arith.constant 62 : index
    %141 = memref.load %arg3[%c62] : memref<81xf32, #tpu.memory_space<smem>>
    %142 = vector.broadcast %141 : f32 to vector<8x256xf32>
    %143 = arith.mulf %142, %132 : vector<8x256xf32>
    %144 = arith.addf %128, %143 : vector<8x256xf32>
    %c1_21 = arith.constant 1 : index
    %c0_22 = arith.constant 0 : index
    %c0_23 = arith.constant 0 : index
    %145 = vector.load %arg1[%c1_21, %c0_22, %c0_23] : memref<3x8x256xf32, #tpu.memory_space<vmem>>, vector<1x8x256xf32>
    %146 = vector.shape_cast %145 : vector<1x8x256xf32> to vector<8x256xf32>
    %c17_i32_24 = arith.constant 17 : i32
    %147 = tpu.dynamic_rotate %146 by %c17_i32_24 dim 1 : vector<8x256xf32>, i32 -> vector<8x256xf32>
    %c0_25 = arith.constant 0 : index
    %c0_26 = arith.constant 0 : index
    %148 = vector.load %arg2[%c0_25, %c0_26] : memref<9x256xf32, #tpu.memory_space<vmem>>, vector<1x256xf32>
    %149 = vector.broadcast %148 : vector<1x256xf32> to vector<8x256xf32>
    %150 = arith.mulf %147, %149 : vector<8x256xf32>
    %c9 = arith.constant 9 : index
    %151 = memref.load %arg3[%c9] : memref<81xf32, #tpu.memory_space<smem>>
    %152 = vector.broadcast %151 : f32 to vector<8x256xf32>
    %153 = arith.mulf %152, %150 : vector<8x256xf32>
    %154 = arith.addf %136, %153 : vector<8x256xf32>
    %c36 = arith.constant 36 : index
    %155 = memref.load %arg3[%c36] : memref<81xf32, #tpu.memory_space<smem>>
    %156 = vector.broadcast %155 : f32 to vector<8x256xf32>
    %157 = arith.mulf %156, %150 : vector<8x256xf32>
    %158 = arith.addf %140, %157 : vector<8x256xf32>
    %c63 = arith.constant 63 : index
    %159 = memref.load %arg3[%c63] : memref<81xf32, #tpu.memory_space<smem>>
    %160 = vector.broadcast %159 : f32 to vector<8x256xf32>
    %161 = arith.mulf %160, %150 : vector<8x256xf32>
    %162 = arith.addf %144, %161 : vector<8x256xf32>
    %c16_i32_27 = arith.constant 16 : i32
    %163 = tpu.dynamic_rotate %146 by %c16_i32_27 dim 1 : vector<8x256xf32>, i32 -> vector<8x256xf32>
    %c1_28 = arith.constant 1 : index
    %c0_29 = arith.constant 0 : index
    %164 = vector.load %arg2[%c1_28, %c0_29] : memref<9x256xf32, #tpu.memory_space<vmem>>, vector<1x256xf32>
    %165 = vector.broadcast %164 : vector<1x256xf32> to vector<8x256xf32>
    %166 = arith.mulf %163, %165 : vector<8x256xf32>
    %c10 = arith.constant 10 : index
    %167 = memref.load %arg3[%c10] : memref<81xf32, #tpu.memory_space<smem>>
    %168 = vector.broadcast %167 : f32 to vector<8x256xf32>
    %169 = arith.mulf %168, %166 : vector<8x256xf32>
    %170 = arith.addf %154, %169 : vector<8x256xf32>
    %c37 = arith.constant 37 : index
    %171 = memref.load %arg3[%c37] : memref<81xf32, #tpu.memory_space<smem>>
    %172 = vector.broadcast %171 : f32 to vector<8x256xf32>
    %173 = arith.mulf %172, %166 : vector<8x256xf32>
    %174 = arith.addf %158, %173 : vector<8x256xf32>
    %c64 = arith.constant 64 : index
    %175 = memref.load %arg3[%c64] : memref<81xf32, #tpu.memory_space<smem>>
    %176 = vector.broadcast %175 : f32 to vector<8x256xf32>
    %177 = arith.mulf %176, %166 : vector<8x256xf32>
    %178 = arith.addf %162, %177 : vector<8x256xf32>
    %c15_i32_30 = arith.constant 15 : i32
    %179 = tpu.dynamic_rotate %146 by %c15_i32_30 dim 1 : vector<8x256xf32>, i32 -> vector<8x256xf32>
    %c2_31 = arith.constant 2 : index
    %c0_32 = arith.constant 0 : index
    %180 = vector.load %arg2[%c2_31, %c0_32] : memref<9x256xf32, #tpu.memory_space<vmem>>, vector<1x256xf32>
    %181 = vector.broadcast %180 : vector<1x256xf32> to vector<8x256xf32>
    %182 = arith.mulf %179, %181 : vector<8x256xf32>
    %c11 = arith.constant 11 : index
    %183 = memref.load %arg3[%c11] : memref<81xf32, #tpu.memory_space<smem>>
    %184 = vector.broadcast %183 : f32 to vector<8x256xf32>
    %185 = arith.mulf %184, %182 : vector<8x256xf32>
    %186 = arith.addf %170, %185 : vector<8x256xf32>
    %c38 = arith.constant 38 : index
    %187 = memref.load %arg3[%c38] : memref<81xf32, #tpu.memory_space<smem>>
    %188 = vector.broadcast %187 : f32 to vector<8x256xf32>
    %189 = arith.mulf %188, %182 : vector<8x256xf32>
    %190 = arith.addf %174, %189 : vector<8x256xf32>
    %c65 = arith.constant 65 : index
    %191 = memref.load %arg3[%c65] : memref<81xf32, #tpu.memory_space<smem>>
    %192 = vector.broadcast %191 : f32 to vector<8x256xf32>
    %193 = arith.mulf %192, %182 : vector<8x256xf32>
    %194 = arith.addf %178, %193 : vector<8x256xf32>
    %c1_i32_33 = arith.constant 1 : i32
    %195 = tpu.dynamic_rotate %146 by %c1_i32_33 dim 1 : vector<8x256xf32>, i32 -> vector<8x256xf32>
    %c3_34 = arith.constant 3 : index
    %c0_35 = arith.constant 0 : index
    %196 = vector.load %arg2[%c3_34, %c0_35] : memref<9x256xf32, #tpu.memory_space<vmem>>, vector<1x256xf32>
    %197 = vector.broadcast %196 : vector<1x256xf32> to vector<8x256xf32>
    %198 = arith.mulf %195, %197 : vector<8x256xf32>
    %c12 = arith.constant 12 : index
    %199 = memref.load %arg3[%c12] : memref<81xf32, #tpu.memory_space<smem>>
    %200 = vector.broadcast %199 : f32 to vector<8x256xf32>
    %201 = arith.mulf %200, %198 : vector<8x256xf32>
    %202 = arith.addf %186, %201 : vector<8x256xf32>
    %c39 = arith.constant 39 : index
    %203 = memref.load %arg3[%c39] : memref<81xf32, #tpu.memory_space<smem>>
    %204 = vector.broadcast %203 : f32 to vector<8x256xf32>
    %205 = arith.mulf %204, %198 : vector<8x256xf32>
    %206 = arith.addf %190, %205 : vector<8x256xf32>
    %c66 = arith.constant 66 : index
    %207 = memref.load %arg3[%c66] : memref<81xf32, #tpu.memory_space<smem>>
    %208 = vector.broadcast %207 : f32 to vector<8x256xf32>
    %209 = arith.mulf %208, %198 : vector<8x256xf32>
    %210 = arith.addf %194, %209 : vector<8x256xf32>
    %c13 = arith.constant 13 : index
    %211 = memref.load %arg3[%c13] : memref<81xf32, #tpu.memory_space<smem>>
    %212 = vector.broadcast %211 : f32 to vector<8x256xf32>
    %213 = arith.mulf %212, %146 : vector<8x256xf32>
    %214 = arith.addf %202, %213 : vector<8x256xf32>
    %c40 = arith.constant 40 : index
    %215 = memref.load %arg3[%c40] : memref<81xf32, #tpu.memory_space<smem>>
    %216 = vector.broadcast %215 : f32 to vector<8x256xf32>
    %217 = arith.mulf %216, %146 : vector<8x256xf32>
    %218 = arith.addf %206, %217 : vector<8x256xf32>
    %c67 = arith.constant 67 : index
    %219 = memref.load %arg3[%c67] : memref<81xf32, #tpu.memory_space<smem>>
    %220 = vector.broadcast %219 : f32 to vector<8x256xf32>
    %221 = arith.mulf %220, %146 : vector<8x256xf32>
    %222 = arith.addf %210, %221 : vector<8x256xf32>
    %c255_i32_36 = arith.constant 255 : i32
    %223 = tpu.dynamic_rotate %146 by %c255_i32_36 dim 1 : vector<8x256xf32>, i32 -> vector<8x256xf32>
    %c5_37 = arith.constant 5 : index
    %c0_38 = arith.constant 0 : index
    %224 = vector.load %arg2[%c5_37, %c0_38] : memref<9x256xf32, #tpu.memory_space<vmem>>, vector<1x256xf32>
    %225 = vector.broadcast %224 : vector<1x256xf32> to vector<8x256xf32>
    %226 = arith.mulf %223, %225 : vector<8x256xf32>
    %c14 = arith.constant 14 : index
    %227 = memref.load %arg3[%c14] : memref<81xf32, #tpu.memory_space<smem>>
    %228 = vector.broadcast %227 : f32 to vector<8x256xf32>
    %229 = arith.mulf %228, %226 : vector<8x256xf32>
    %230 = arith.addf %214, %229 : vector<8x256xf32>
    %c41 = arith.constant 41 : index
    %231 = memref.load %arg3[%c41] : memref<81xf32, #tpu.memory_space<smem>>
    %232 = vector.broadcast %231 : f32 to vector<8x256xf32>
    %233 = arith.mulf %232, %226 : vector<8x256xf32>
    %234 = arith.addf %218, %233 : vector<8x256xf32>
    %c68 = arith.constant 68 : index
    %235 = memref.load %arg3[%c68] : memref<81xf32, #tpu.memory_space<smem>>
    %236 = vector.broadcast %235 : f32 to vector<8x256xf32>
    %237 = arith.mulf %236, %226 : vector<8x256xf32>
    %238 = arith.addf %222, %237 : vector<8x256xf32>
    %c241_i32_39 = arith.constant 241 : i32
    %239 = tpu.dynamic_rotate %146 by %c241_i32_39 dim 1 : vector<8x256xf32>, i32 -> vector<8x256xf32>
    %c6_40 = arith.constant 6 : index
    %c0_41 = arith.constant 0 : index
    %240 = vector.load %arg2[%c6_40, %c0_41] : memref<9x256xf32, #tpu.memory_space<vmem>>, vector<1x256xf32>
    %241 = vector.broadcast %240 : vector<1x256xf32> to vector<8x256xf32>
    %242 = arith.mulf %239, %241 : vector<8x256xf32>
    %c15 = arith.constant 15 : index
    %243 = memref.load %arg3[%c15] : memref<81xf32, #tpu.memory_space<smem>>
    %244 = vector.broadcast %243 : f32 to vector<8x256xf32>
    %245 = arith.mulf %244, %242 : vector<8x256xf32>
    %246 = arith.addf %230, %245 : vector<8x256xf32>
    %c42 = arith.constant 42 : index
    %247 = memref.load %arg3[%c42] : memref<81xf32, #tpu.memory_space<smem>>
    %248 = vector.broadcast %247 : f32 to vector<8x256xf32>
    %249 = arith.mulf %248, %242 : vector<8x256xf32>
    %250 = arith.addf %234, %249 : vector<8x256xf32>
    %c69 = arith.constant 69 : index
    %251 = memref.load %arg3[%c69] : memref<81xf32, #tpu.memory_space<smem>>
    %252 = vector.broadcast %251 : f32 to vector<8x256xf32>
    %253 = arith.mulf %252, %242 : vector<8x256xf32>
    %254 = arith.addf %238, %253 : vector<8x256xf32>
    %c240_i32_42 = arith.constant 240 : i32
    %255 = tpu.dynamic_rotate %146 by %c240_i32_42 dim 1 : vector<8x256xf32>, i32 -> vector<8x256xf32>
    %c7_43 = arith.constant 7 : index
    %c0_44 = arith.constant 0 : index
    %256 = vector.load %arg2[%c7_43, %c0_44] : memref<9x256xf32, #tpu.memory_space<vmem>>, vector<1x256xf32>
    %257 = vector.broadcast %256 : vector<1x256xf32> to vector<8x256xf32>
    %258 = arith.mulf %255, %257 : vector<8x256xf32>
    %c16 = arith.constant 16 : index
    %259 = memref.load %arg3[%c16] : memref<81xf32, #tpu.memory_space<smem>>
    %260 = vector.broadcast %259 : f32 to vector<8x256xf32>
    %261 = arith.mulf %260, %258 : vector<8x256xf32>
    %262 = arith.addf %246, %261 : vector<8x256xf32>
    %c43 = arith.constant 43 : index
    %263 = memref.load %arg3[%c43] : memref<81xf32, #tpu.memory_space<smem>>
    %264 = vector.broadcast %263 : f32 to vector<8x256xf32>
    %265 = arith.mulf %264, %258 : vector<8x256xf32>
    %266 = arith.addf %250, %265 : vector<8x256xf32>
    %c70 = arith.constant 70 : index
    %267 = memref.load %arg3[%c70] : memref<81xf32, #tpu.memory_space<smem>>
    %268 = vector.broadcast %267 : f32 to vector<8x256xf32>
    %269 = arith.mulf %268, %258 : vector<8x256xf32>
    %270 = arith.addf %254, %269 : vector<8x256xf32>
    %c239_i32_45 = arith.constant 239 : i32
    %271 = tpu.dynamic_rotate %146 by %c239_i32_45 dim 1 : vector<8x256xf32>, i32 -> vector<8x256xf32>
    %c8_46 = arith.constant 8 : index
    %c0_47 = arith.constant 0 : index
    %272 = vector.load %arg2[%c8_46, %c0_47] : memref<9x256xf32, #tpu.memory_space<vmem>>, vector<1x256xf32>
    %273 = vector.broadcast %272 : vector<1x256xf32> to vector<8x256xf32>
    %274 = arith.mulf %271, %273 : vector<8x256xf32>
    %c17 = arith.constant 17 : index
    %275 = memref.load %arg3[%c17] : memref<81xf32, #tpu.memory_space<smem>>
    %276 = vector.broadcast %275 : f32 to vector<8x256xf32>
    %277 = arith.mulf %276, %274 : vector<8x256xf32>
    %278 = arith.addf %262, %277 : vector<8x256xf32>
    %c44 = arith.constant 44 : index
    %279 = memref.load %arg3[%c44] : memref<81xf32, #tpu.memory_space<smem>>
    %280 = vector.broadcast %279 : f32 to vector<8x256xf32>
    %281 = arith.mulf %280, %274 : vector<8x256xf32>
    %282 = arith.addf %266, %281 : vector<8x256xf32>
    %c71 = arith.constant 71 : index
    %283 = memref.load %arg3[%c71] : memref<81xf32, #tpu.memory_space<smem>>
    %284 = vector.broadcast %283 : f32 to vector<8x256xf32>
    %285 = arith.mulf %284, %274 : vector<8x256xf32>
    %286 = arith.addf %270, %285 : vector<8x256xf32>
    %c2_48 = arith.constant 2 : index
    %c0_49 = arith.constant 0 : index
    %c0_50 = arith.constant 0 : index
    %287 = vector.load %arg1[%c2_48, %c0_49, %c0_50] : memref<3x8x256xf32, #tpu.memory_space<vmem>>, vector<1x8x256xf32>
    %288 = vector.shape_cast %287 : vector<1x8x256xf32> to vector<8x256xf32>
    %c17_i32_51 = arith.constant 17 : i32
    %289 = tpu.dynamic_rotate %288 by %c17_i32_51 dim 1 : vector<8x256xf32>, i32 -> vector<8x256xf32>
    %c0_52 = arith.constant 0 : index
    %c0_53 = arith.constant 0 : index
    %290 = vector.load %arg2[%c0_52, %c0_53] : memref<9x256xf32, #tpu.memory_space<vmem>>, vector<1x256xf32>
    %291 = vector.broadcast %290 : vector<1x256xf32> to vector<8x256xf32>
    %292 = arith.mulf %289, %291 : vector<8x256xf32>
    %c18 = arith.constant 18 : index
    %293 = memref.load %arg3[%c18] : memref<81xf32, #tpu.memory_space<smem>>
    %294 = vector.broadcast %293 : f32 to vector<8x256xf32>
    %295 = arith.mulf %294, %292 : vector<8x256xf32>
    %296 = arith.addf %278, %295 : vector<8x256xf32>
    %c45 = arith.constant 45 : index
    %297 = memref.load %arg3[%c45] : memref<81xf32, #tpu.memory_space<smem>>
    %298 = vector.broadcast %297 : f32 to vector<8x256xf32>
    %299 = arith.mulf %298, %292 : vector<8x256xf32>
    %300 = arith.addf %282, %299 : vector<8x256xf32>
    %c72 = arith.constant 72 : index
    %301 = memref.load %arg3[%c72] : memref<81xf32, #tpu.memory_space<smem>>
    %302 = vector.broadcast %301 : f32 to vector<8x256xf32>
    %303 = arith.mulf %302, %292 : vector<8x256xf32>
    %304 = arith.addf %286, %303 : vector<8x256xf32>
    %c16_i32_54 = arith.constant 16 : i32
    %305 = tpu.dynamic_rotate %288 by %c16_i32_54 dim 1 : vector<8x256xf32>, i32 -> vector<8x256xf32>
    %c1_55 = arith.constant 1 : index
    %c0_56 = arith.constant 0 : index
    %306 = vector.load %arg2[%c1_55, %c0_56] : memref<9x256xf32, #tpu.memory_space<vmem>>, vector<1x256xf32>
    %307 = vector.broadcast %306 : vector<1x256xf32> to vector<8x256xf32>
    %308 = arith.mulf %305, %307 : vector<8x256xf32>
    %c19 = arith.constant 19 : index
    %309 = memref.load %arg3[%c19] : memref<81xf32, #tpu.memory_space<smem>>
    %310 = vector.broadcast %309 : f32 to vector<8x256xf32>
    %311 = arith.mulf %310, %308 : vector<8x256xf32>
    %312 = arith.addf %296, %311 : vector<8x256xf32>
    %c46 = arith.constant 46 : index
    %313 = memref.load %arg3[%c46] : memref<81xf32, #tpu.memory_space<smem>>
    %314 = vector.broadcast %313 : f32 to vector<8x256xf32>
    %315 = arith.mulf %314, %308 : vector<8x256xf32>
    %316 = arith.addf %300, %315 : vector<8x256xf32>
    %c73 = arith.constant 73 : index
    %317 = memref.load %arg3[%c73] : memref<81xf32, #tpu.memory_space<smem>>
    %318 = vector.broadcast %317 : f32 to vector<8x256xf32>
    %319 = arith.mulf %318, %308 : vector<8x256xf32>
    %320 = arith.addf %304, %319 : vector<8x256xf32>
    %c15_i32_57 = arith.constant 15 : i32
    %321 = tpu.dynamic_rotate %288 by %c15_i32_57 dim 1 : vector<8x256xf32>, i32 -> vector<8x256xf32>
    %c2_58 = arith.constant 2 : index
    %c0_59 = arith.constant 0 : index
    %322 = vector.load %arg2[%c2_58, %c0_59] : memref<9x256xf32, #tpu.memory_space<vmem>>, vector<1x256xf32>
    %323 = vector.broadcast %322 : vector<1x256xf32> to vector<8x256xf32>
    %324 = arith.mulf %321, %323 : vector<8x256xf32>
    %c20 = arith.constant 20 : index
    %325 = memref.load %arg3[%c20] : memref<81xf32, #tpu.memory_space<smem>>
    %326 = vector.broadcast %325 : f32 to vector<8x256xf32>
    %327 = arith.mulf %326, %324 : vector<8x256xf32>
    %328 = arith.addf %312, %327 : vector<8x256xf32>
    %c47 = arith.constant 47 : index
    %329 = memref.load %arg3[%c47] : memref<81xf32, #tpu.memory_space<smem>>
    %330 = vector.broadcast %329 : f32 to vector<8x256xf32>
    %331 = arith.mulf %330, %324 : vector<8x256xf32>
    %332 = arith.addf %316, %331 : vector<8x256xf32>
    %c74 = arith.constant 74 : index
    %333 = memref.load %arg3[%c74] : memref<81xf32, #tpu.memory_space<smem>>
    %334 = vector.broadcast %333 : f32 to vector<8x256xf32>
    %335 = arith.mulf %334, %324 : vector<8x256xf32>
    %336 = arith.addf %320, %335 : vector<8x256xf32>
    %c1_i32_60 = arith.constant 1 : i32
    %337 = tpu.dynamic_rotate %288 by %c1_i32_60 dim 1 : vector<8x256xf32>, i32 -> vector<8x256xf32>
    %c3_61 = arith.constant 3 : index
    %c0_62 = arith.constant 0 : index
    %338 = vector.load %arg2[%c3_61, %c0_62] : memref<9x256xf32, #tpu.memory_space<vmem>>, vector<1x256xf32>
    %339 = vector.broadcast %338 : vector<1x256xf32> to vector<8x256xf32>
    %340 = arith.mulf %337, %339 : vector<8x256xf32>
    %c21 = arith.constant 21 : index
    %341 = memref.load %arg3[%c21] : memref<81xf32, #tpu.memory_space<smem>>
    %342 = vector.broadcast %341 : f32 to vector<8x256xf32>
    %343 = arith.mulf %342, %340 : vector<8x256xf32>
    %344 = arith.addf %328, %343 : vector<8x256xf32>
    %c48 = arith.constant 48 : index
    %345 = memref.load %arg3[%c48] : memref<81xf32, #tpu.memory_space<smem>>
    %346 = vector.broadcast %345 : f32 to vector<8x256xf32>
    %347 = arith.mulf %346, %340 : vector<8x256xf32>
    %348 = arith.addf %332, %347 : vector<8x256xf32>
    %c75 = arith.constant 75 : index
    %349 = memref.load %arg3[%c75] : memref<81xf32, #tpu.memory_space<smem>>
    %350 = vector.broadcast %349 : f32 to vector<8x256xf32>
    %351 = arith.mulf %350, %340 : vector<8x256xf32>
    %352 = arith.addf %336, %351 : vector<8x256xf32>
    %c22 = arith.constant 22 : index
    %353 = memref.load %arg3[%c22] : memref<81xf32, #tpu.memory_space<smem>>
    %354 = vector.broadcast %353 : f32 to vector<8x256xf32>
    %355 = arith.mulf %354, %288 : vector<8x256xf32>
    %356 = arith.addf %344, %355 : vector<8x256xf32>
    %c49 = arith.constant 49 : index
    %357 = memref.load %arg3[%c49] : memref<81xf32, #tpu.memory_space<smem>>
    %358 = vector.broadcast %357 : f32 to vector<8x256xf32>
    %359 = arith.mulf %358, %288 : vector<8x256xf32>
    %360 = arith.addf %348, %359 : vector<8x256xf32>
    %c76 = arith.constant 76 : index
    %361 = memref.load %arg3[%c76] : memref<81xf32, #tpu.memory_space<smem>>
    %362 = vector.broadcast %361 : f32 to vector<8x256xf32>
    %363 = arith.mulf %362, %288 : vector<8x256xf32>
    %364 = arith.addf %352, %363 : vector<8x256xf32>
    %c255_i32_63 = arith.constant 255 : i32
    %365 = tpu.dynamic_rotate %288 by %c255_i32_63 dim 1 : vector<8x256xf32>, i32 -> vector<8x256xf32>
    %c5_64 = arith.constant 5 : index
    %c0_65 = arith.constant 0 : index
    %366 = vector.load %arg2[%c5_64, %c0_65] : memref<9x256xf32, #tpu.memory_space<vmem>>, vector<1x256xf32>
    %367 = vector.broadcast %366 : vector<1x256xf32> to vector<8x256xf32>
    %368 = arith.mulf %365, %367 : vector<8x256xf32>
    %c23 = arith.constant 23 : index
    %369 = memref.load %arg3[%c23] : memref<81xf32, #tpu.memory_space<smem>>
    %370 = vector.broadcast %369 : f32 to vector<8x256xf32>
    %371 = arith.mulf %370, %368 : vector<8x256xf32>
    %372 = arith.addf %356, %371 : vector<8x256xf32>
    %c50 = arith.constant 50 : index
    %373 = memref.load %arg3[%c50] : memref<81xf32, #tpu.memory_space<smem>>
    %374 = vector.broadcast %373 : f32 to vector<8x256xf32>
    %375 = arith.mulf %374, %368 : vector<8x256xf32>
    %376 = arith.addf %360, %375 : vector<8x256xf32>
    %c77 = arith.constant 77 : index
    %377 = memref.load %arg3[%c77] : memref<81xf32, #tpu.memory_space<smem>>
    %378 = vector.broadcast %377 : f32 to vector<8x256xf32>
    %379 = arith.mulf %378, %368 : vector<8x256xf32>
    %380 = arith.addf %364, %379 : vector<8x256xf32>
    %c241_i32_66 = arith.constant 241 : i32
    %381 = tpu.dynamic_rotate %288 by %c241_i32_66 dim 1 : vector<8x256xf32>, i32 -> vector<8x256xf32>
    %c6_67 = arith.constant 6 : index
    %c0_68 = arith.constant 0 : index
    %382 = vector.load %arg2[%c6_67, %c0_68] : memref<9x256xf32, #tpu.memory_space<vmem>>, vector<1x256xf32>
    %383 = vector.broadcast %382 : vector<1x256xf32> to vector<8x256xf32>
    %384 = arith.mulf %381, %383 : vector<8x256xf32>
    %c24 = arith.constant 24 : index
    %385 = memref.load %arg3[%c24] : memref<81xf32, #tpu.memory_space<smem>>
    %386 = vector.broadcast %385 : f32 to vector<8x256xf32>
    %387 = arith.mulf %386, %384 : vector<8x256xf32>
    %388 = arith.addf %372, %387 : vector<8x256xf32>
    %c51 = arith.constant 51 : index
    %389 = memref.load %arg3[%c51] : memref<81xf32, #tpu.memory_space<smem>>
    %390 = vector.broadcast %389 : f32 to vector<8x256xf32>
    %391 = arith.mulf %390, %384 : vector<8x256xf32>
    %392 = arith.addf %376, %391 : vector<8x256xf32>
    %c78 = arith.constant 78 : index
    %393 = memref.load %arg3[%c78] : memref<81xf32, #tpu.memory_space<smem>>
    %394 = vector.broadcast %393 : f32 to vector<8x256xf32>
    %395 = arith.mulf %394, %384 : vector<8x256xf32>
    %396 = arith.addf %380, %395 : vector<8x256xf32>
    %c240_i32_69 = arith.constant 240 : i32
    %397 = tpu.dynamic_rotate %288 by %c240_i32_69 dim 1 : vector<8x256xf32>, i32 -> vector<8x256xf32>
    %c7_70 = arith.constant 7 : index
    %c0_71 = arith.constant 0 : index
    %398 = vector.load %arg2[%c7_70, %c0_71] : memref<9x256xf32, #tpu.memory_space<vmem>>, vector<1x256xf32>
    %399 = vector.broadcast %398 : vector<1x256xf32> to vector<8x256xf32>
    %400 = arith.mulf %397, %399 : vector<8x256xf32>
    %c25 = arith.constant 25 : index
    %401 = memref.load %arg3[%c25] : memref<81xf32, #tpu.memory_space<smem>>
    %402 = vector.broadcast %401 : f32 to vector<8x256xf32>
    %403 = arith.mulf %402, %400 : vector<8x256xf32>
    %404 = arith.addf %388, %403 : vector<8x256xf32>
    %c52 = arith.constant 52 : index
    %405 = memref.load %arg3[%c52] : memref<81xf32, #tpu.memory_space<smem>>
    %406 = vector.broadcast %405 : f32 to vector<8x256xf32>
    %407 = arith.mulf %406, %400 : vector<8x256xf32>
    %408 = arith.addf %392, %407 : vector<8x256xf32>
    %c79 = arith.constant 79 : index
    %409 = memref.load %arg3[%c79] : memref<81xf32, #tpu.memory_space<smem>>
    %410 = vector.broadcast %409 : f32 to vector<8x256xf32>
    %411 = arith.mulf %410, %400 : vector<8x256xf32>
    %412 = arith.addf %396, %411 : vector<8x256xf32>
    %c239_i32_72 = arith.constant 239 : i32
    %413 = tpu.dynamic_rotate %288 by %c239_i32_72 dim 1 : vector<8x256xf32>, i32 -> vector<8x256xf32>
    %c8_73 = arith.constant 8 : index
    %c0_74 = arith.constant 0 : index
    %414 = vector.load %arg2[%c8_73, %c0_74] : memref<9x256xf32, #tpu.memory_space<vmem>>, vector<1x256xf32>
    %415 = vector.broadcast %414 : vector<1x256xf32> to vector<8x256xf32>
    %416 = arith.mulf %413, %415 : vector<8x256xf32>
    %c26 = arith.constant 26 : index
    %417 = memref.load %arg3[%c26] : memref<81xf32, #tpu.memory_space<smem>>
    %418 = vector.broadcast %417 : f32 to vector<8x256xf32>
    %419 = arith.mulf %418, %416 : vector<8x256xf32>
    %420 = arith.addf %404, %419 : vector<8x256xf32>
    %c53 = arith.constant 53 : index
    %421 = memref.load %arg3[%c53] : memref<81xf32, #tpu.memory_space<smem>>
    %422 = vector.broadcast %421 : f32 to vector<8x256xf32>
    %423 = arith.mulf %422, %416 : vector<8x256xf32>
    %424 = arith.addf %408, %423 : vector<8x256xf32>
    %c80 = arith.constant 80 : index
    %425 = memref.load %arg3[%c80] : memref<81xf32, #tpu.memory_space<smem>>
    %426 = vector.broadcast %425 : f32 to vector<8x256xf32>
    %427 = arith.mulf %426, %416 : vector<8x256xf32>
    %428 = arith.addf %412, %427 : vector<8x256xf32>
    %c0_75 = arith.constant 0 : index
    %429 = memref.load %arg4[%c0_75] : memref<3xf32, #tpu.memory_space<smem>>
    %430 = vector.broadcast %429 : f32 to vector<8x256xf32>
    %431 = arith.addf %420, %430 : vector<8x256xf32>
    %cst_76 = arith.constant 0.000000e+00 : f32
    %432 = vector.broadcast %cst_76 : f32 to vector<8x256xf32>
    %433 = arith.maximumf %431, %432 : vector<8x256xf32>
    %c0_77 = arith.constant 0 : index
    %c0_78 = arith.constant 0 : index
    %c0_79 = arith.constant 0 : index
    %434 = vector.load %arg8[%c0_77, %c0_78, %c0_79] : memref<3x8x256xf32, #tpu.memory_space<vmem>>, vector<1x8x256xf32>
    %435 = vector.shape_cast %434 : vector<1x8x256xf32> to vector<8x256xf32>
    %436 = vector.shape_cast %433 : vector<8x256xf32> to vector<1x8x256xf32>
    tpu.vector_store %arg8[%c0_77, %c0_78, %c0_79], %436 {strides = array<i32>} : memref<3x8x256xf32, #tpu.memory_space<vmem>>, vector<1x8x256xf32>,
    %c1_80 = arith.constant 1 : index
    %437 = memref.load %arg4[%c1_80] : memref<3xf32, #tpu.memory_space<smem>>
    %438 = vector.broadcast %437 : f32 to vector<8x256xf32>
    %439 = arith.addf %424, %438 : vector<8x256xf32>
    %cst_81 = arith.constant 0.000000e+00 : f32
    %440 = vector.broadcast %cst_81 : f32 to vector<8x256xf32>
    %441 = arith.maximumf %439, %440 : vector<8x256xf32>
    %c1_82 = arith.constant 1 : index
    %c0_83 = arith.constant 0 : index
    %c0_84 = arith.constant 0 : index
    %442 = vector.load %arg8[%c1_82, %c0_83, %c0_84] : memref<3x8x256xf32, #tpu.memory_space<vmem>>, vector<1x8x256xf32>
    %443 = vector.shape_cast %442 : vector<1x8x256xf32> to vector<8x256xf32>
    %444 = vector.shape_cast %441 : vector<8x256xf32> to vector<1x8x256xf32>
    tpu.vector_store %arg8[%c1_82, %c0_83, %c0_84], %444 {strides = array<i32>} : memref<3x8x256xf32, #tpu.memory_space<vmem>>, vector<1x8x256xf32>,
    %c2_85 = arith.constant 2 : index
    %445 = memref.load %arg4[%c2_85] : memref<3xf32, #tpu.memory_space<smem>>
    %446 = vector.broadcast %445 : f32 to vector<8x256xf32>
    %447 = arith.addf %428, %446 : vector<8x256xf32>
    %cst_86 = arith.constant 0.000000e+00 : f32
    %448 = vector.broadcast %cst_86 : f32 to vector<8x256xf32>
    %449 = arith.maximumf %447, %448 : vector<8x256xf32>
    %c2_87 = arith.constant 2 : index
    %c0_88 = arith.constant 0 : index
    %c0_89 = arith.constant 0 : index
    %450 = vector.load %arg8[%c2_87, %c0_88, %c0_89] : memref<3x8x256xf32, #tpu.memory_space<vmem>>, vector<1x8x256xf32>
    %451 = vector.shape_cast %450 : vector<1x8x256xf32> to vector<8x256xf32>
    %452 = vector.shape_cast %449 : vector<8x256xf32> to vector<1x8x256xf32>
    tpu.vector_store %arg8[%c2_87, %c0_88, %c0_89], %452 {strides = array<i32>} : memref<3x8x256xf32, #tpu.memory_space<vmem>>, vector<1x8x256xf32>,
    %cst_90 = arith.constant 0.000000e+00 : f32
    %453 = vector.broadcast %cst_90 : f32 to vector<8x256xf32>
    %c0_91 = arith.constant 0 : index
    %c0_92 = arith.constant 0 : index
    %c0_93 = arith.constant 0 : index
    %454 = vector.load %arg8[%c0_91, %c0_92, %c0_93] : memref<3x8x256xf32, #tpu.memory_space<vmem>>, vector<1x8x256xf32>
    %455 = vector.shape_cast %454 : vector<1x8x256xf32> to vector<8x256xf32>
    %c17_i32_94 = arith.constant 17 : i32
    %456 = tpu.dynamic_rotate %455 by %c17_i32_94 dim 1 : vector<8x256xf32>, i32 -> vector<8x256xf32>
    %c0_95 = arith.constant 0 : index
    %c0_96 = arith.constant 0 : index
    %457 = vector.load %arg2[%c0_95, %c0_96] : memref<9x256xf32, #tpu.memory_space<vmem>>, vector<1x256xf32>
    %458 = vector.broadcast %457 : vector<1x256xf32> to vector<8x256xf32>
    %459 = arith.mulf %456, %458 : vector<8x256xf32>
    %c0_97 = arith.constant 0 : index
    %460 = memref.load %arg5[%c0_97] : memref<27xf32, #tpu.memory_space<smem>>
    %461 = vector.broadcast %460 : f32 to vector<8x256xf32>
    %462 = arith.mulf %461, %459 : vector<8x256xf32>
    %463 = arith.addf %453, %462 : vector<8x256xf32>
    %c16_i32_98 = arith.constant 16 : i32
    %464 = tpu.dynamic_rotate %455 by %c16_i32_98 dim 1 : vector<8x256xf32>, i32 -> vector<8x256xf32>
    %c1_99 = arith.constant 1 : index
    %c0_100 = arith.constant 0 : index
    %465 = vector.load %arg2[%c1_99, %c0_100] : memref<9x256xf32, #tpu.memory_space<vmem>>, vector<1x256xf32>
    %466 = vector.broadcast %465 : vector<1x256xf32> to vector<8x256xf32>
    %467 = arith.mulf %464, %466 : vector<8x256xf32>
    %c1_101 = arith.constant 1 : index
    %468 = memref.load %arg5[%c1_101] : memref<27xf32, #tpu.memory_space<smem>>
    %469 = vector.broadcast %468 : f32 to vector<8x256xf32>
    %470 = arith.mulf %469, %467 : vector<8x256xf32>
    %471 = arith.addf %463, %470 : vector<8x256xf32>
    %c15_i32_102 = arith.constant 15 : i32
    %472 = tpu.dynamic_rotate %455 by %c15_i32_102 dim 1 : vector<8x256xf32>, i32 -> vector<8x256xf32>
    %c2_103 = arith.constant 2 : index
    %c0_104 = arith.constant 0 : index
    %473 = vector.load %arg2[%c2_103, %c0_104] : memref<9x256xf32, #tpu.memory_space<vmem>>, vector<1x256xf32>
    %474 = vector.broadcast %473 : vector<1x256xf32> to vector<8x256xf32>
    %475 = arith.mulf %472, %474 : vector<8x256xf32>
    %c2_105 = arith.constant 2 : index
    %476 = memref.load %arg5[%c2_105] : memref<27xf32, #tpu.memory_space<smem>>
    %477 = vector.broadcast %476 : f32 to vector<8x256xf32>
    %478 = arith.mulf %477, %475 : vector<8x256xf32>
    %479 = arith.addf %471, %478 : vector<8x256xf32>
    %c1_i32_106 = arith.constant 1 : i32
    %480 = tpu.dynamic_rotate %455 by %c1_i32_106 dim 1 : vector<8x256xf32>, i32 -> vector<8x256xf32>
    %c3_107 = arith.constant 3 : index
    %c0_108 = arith.constant 0 : index
    %481 = vector.load %arg2[%c3_107, %c0_108] : memref<9x256xf32, #tpu.memory_space<vmem>>, vector<1x256xf32>
    %482 = vector.broadcast %481 : vector<1x256xf32> to vector<8x256xf32>
    %483 = arith.mulf %480, %482 : vector<8x256xf32>
    %c3_109 = arith.constant 3 : index
    %484 = memref.load %arg5[%c3_109] : memref<27xf32, #tpu.memory_space<smem>>
    %485 = vector.broadcast %484 : f32 to vector<8x256xf32>
    %486 = arith.mulf %485, %483 : vector<8x256xf32>
    %487 = arith.addf %479, %486 : vector<8x256xf32>
    %c4_110 = arith.constant 4 : index
    %488 = memref.load %arg5[%c4_110] : memref<27xf32, #tpu.memory_space<smem>>
    %489 = vector.broadcast %488 : f32 to vector<8x256xf32>
    %490 = arith.mulf %489, %455 : vector<8x256xf32>
    %491 = arith.addf %487, %490 : vector<8x256xf32>
    %c255_i32_111 = arith.constant 255 : i32
    %492 = tpu.dynamic_rotate %455 by %c255_i32_111 dim 1 : vector<8x256xf32>, i32 -> vector<8x256xf32>
    %c5_112 = arith.constant 5 : index
    %c0_113 = arith.constant 0 : index
    %493 = vector.load %arg2[%c5_112, %c0_113] : memref<9x256xf32, #tpu.memory_space<vmem>>, vector<1x256xf32>
    %494 = vector.broadcast %493 : vector<1x256xf32> to vector<8x256xf32>
    %495 = arith.mulf %492, %494 : vector<8x256xf32>
    %c5_114 = arith.constant 5 : index
    %496 = memref.load %arg5[%c5_114] : memref<27xf32, #tpu.memory_space<smem>>
    %497 = vector.broadcast %496 : f32 to vector<8x256xf32>
    %498 = arith.mulf %497, %495 : vector<8x256xf32>
    %499 = arith.addf %491, %498 : vector<8x256xf32>
    %c241_i32_115 = arith.constant 241 : i32
    %500 = tpu.dynamic_rotate %455 by %c241_i32_115 dim 1 : vector<8x256xf32>, i32 -> vector<8x256xf32>
    %c6_116 = arith.constant 6 : index
    %c0_117 = arith.constant 0 : index
    %501 = vector.load %arg2[%c6_116, %c0_117] : memref<9x256xf32, #tpu.memory_space<vmem>>, vector<1x256xf32>
    %502 = vector.broadcast %501 : vector<1x256xf32> to vector<8x256xf32>
    %503 = arith.mulf %500, %502 : vector<8x256xf32>
    %c6_118 = arith.constant 6 : index
    %504 = memref.load %arg5[%c6_118] : memref<27xf32, #tpu.memory_space<smem>>
    %505 = vector.broadcast %504 : f32 to vector<8x256xf32>
    %506 = arith.mulf %505, %503 : vector<8x256xf32>
    %507 = arith.addf %499, %506 : vector<8x256xf32>
    %c240_i32_119 = arith.constant 240 : i32
    %508 = tpu.dynamic_rotate %455 by %c240_i32_119 dim 1 : vector<8x256xf32>, i32 -> vector<8x256xf32>
    %c7_120 = arith.constant 7 : index
    %c0_121 = arith.constant 0 : index
    %509 = vector.load %arg2[%c7_120, %c0_121] : memref<9x256xf32, #tpu.memory_space<vmem>>, vector<1x256xf32>
    %510 = vector.broadcast %509 : vector<1x256xf32> to vector<8x256xf32>
    %511 = arith.mulf %508, %510 : vector<8x256xf32>
    %c7_122 = arith.constant 7 : index
    %512 = memref.load %arg5[%c7_122] : memref<27xf32, #tpu.memory_space<smem>>
    %513 = vector.broadcast %512 : f32 to vector<8x256xf32>
    %514 = arith.mulf %513, %511 : vector<8x256xf32>
    %515 = arith.addf %507, %514 : vector<8x256xf32>
    %c239_i32_123 = arith.constant 239 : i32
    %516 = tpu.dynamic_rotate %455 by %c239_i32_123 dim 1 : vector<8x256xf32>, i32 -> vector<8x256xf32>
    %c8_124 = arith.constant 8 : index
    %c0_125 = arith.constant 0 : index
    %517 = vector.load %arg2[%c8_124, %c0_125] : memref<9x256xf32, #tpu.memory_space<vmem>>, vector<1x256xf32>
    %518 = vector.broadcast %517 : vector<1x256xf32> to vector<8x256xf32>
    %519 = arith.mulf %516, %518 : vector<8x256xf32>
    %c8_126 = arith.constant 8 : index
    %520 = memref.load %arg5[%c8_126] : memref<27xf32, #tpu.memory_space<smem>>
    %521 = vector.broadcast %520 : f32 to vector<8x256xf32>
    %522 = arith.mulf %521, %519 : vector<8x256xf32>
    %523 = arith.addf %515, %522 : vector<8x256xf32>
    %c1_127 = arith.constant 1 : index
    %c0_128 = arith.constant 0 : index
    %c0_129 = arith.constant 0 : index
    %524 = vector.load %arg8[%c1_127, %c0_128, %c0_129] : memref<3x8x256xf32, #tpu.memory_space<vmem>>, vector<1x8x256xf32>
    %525 = vector.shape_cast %524 : vector<1x8x256xf32> to vector<8x256xf32>
    %c17_i32_130 = arith.constant 17 : i32
    %526 = tpu.dynamic_rotate %525 by %c17_i32_130 dim 1 : vector<8x256xf32>, i32 -> vector<8x256xf32>
    %c0_131 = arith.constant 0 : index
    %c0_132 = arith.constant 0 : index
    %527 = vector.load %arg2[%c0_131, %c0_132] : memref<9x256xf32, #tpu.memory_space<vmem>>, vector<1x256xf32>
    %528 = vector.broadcast %527 : vector<1x256xf32> to vector<8x256xf32>
    %529 = arith.mulf %526, %528 : vector<8x256xf32>
    %c9_133 = arith.constant 9 : index
    %530 = memref.load %arg5[%c9_133] : memref<27xf32, #tpu.memory_space<smem>>
    %531 = vector.broadcast %530 : f32 to vector<8x256xf32>
    %532 = arith.mulf %531, %529 : vector<8x256xf32>
    %533 = arith.addf %523, %532 : vector<8x256xf32>
    %c16_i32_134 = arith.constant 16 : i32
    %534 = tpu.dynamic_rotate %525 by %c16_i32_134 dim 1 : vector<8x256xf32>, i32 -> vector<8x256xf32>
    %c1_135 = arith.constant 1 : index
    %c0_136 = arith.constant 0 : index
    %535 = vector.load %arg2[%c1_135, %c0_136] : memref<9x256xf32, #tpu.memory_space<vmem>>, vector<1x256xf32>
    %536 = vector.broadcast %535 : vector<1x256xf32> to vector<8x256xf32>
    %537 = arith.mulf %534, %536 : vector<8x256xf32>
    %c10_137 = arith.constant 10 : index
    %538 = memref.load %arg5[%c10_137] : memref<27xf32, #tpu.memory_space<smem>>
    %539 = vector.broadcast %538 : f32 to vector<8x256xf32>
    %540 = arith.mulf %539, %537 : vector<8x256xf32>
    %541 = arith.addf %533, %540 : vector<8x256xf32>
    %c15_i32_138 = arith.constant 15 : i32
    %542 = tpu.dynamic_rotate %525 by %c15_i32_138 dim 1 : vector<8x256xf32>, i32 -> vector<8x256xf32>
    %c2_139 = arith.constant 2 : index
    %c0_140 = arith.constant 0 : index
    %543 = vector.load %arg2[%c2_139, %c0_140] : memref<9x256xf32, #tpu.memory_space<vmem>>, vector<1x256xf32>
    %544 = vector.broadcast %543 : vector<1x256xf32> to vector<8x256xf32>
    %545 = arith.mulf %542, %544 : vector<8x256xf32>
    %c11_141 = arith.constant 11 : index
    %546 = memref.load %arg5[%c11_141] : memref<27xf32, #tpu.memory_space<smem>>
    %547 = vector.broadcast %546 : f32 to vector<8x256xf32>
    %548 = arith.mulf %547, %545 : vector<8x256xf32>
    %549 = arith.addf %541, %548 : vector<8x256xf32>
    %c1_i32_142 = arith.constant 1 : i32
    %550 = tpu.dynamic_rotate %525 by %c1_i32_142 dim 1 : vector<8x256xf32>, i32 -> vector<8x256xf32>
    %c3_143 = arith.constant 3 : index
    %c0_144 = arith.constant 0 : index
    %551 = vector.load %arg2[%c3_143, %c0_144] : memref<9x256xf32, #tpu.memory_space<vmem>>, vector<1x256xf32>
    %552 = vector.broadcast %551 : vector<1x256xf32> to vector<8x256xf32>
    %553 = arith.mulf %550, %552 : vector<8x256xf32>
    %c12_145 = arith.constant 12 : index
    %554 = memref.load %arg5[%c12_145] : memref<27xf32, #tpu.memory_space<smem>>
    %555 = vector.broadcast %554 : f32 to vector<8x256xf32>
    %556 = arith.mulf %555, %553 : vector<8x256xf32>
    %557 = arith.addf %549, %556 : vector<8x256xf32>
    %c13_146 = arith.constant 13 : index
    %558 = memref.load %arg5[%c13_146] : memref<27xf32, #tpu.memory_space<smem>>
    %559 = vector.broadcast %558 : f32 to vector<8x256xf32>
    %560 = arith.mulf %559, %525 : vector<8x256xf32>
    %561 = arith.addf %557, %560 : vector<8x256xf32>
    %c255_i32_147 = arith.constant 255 : i32
    %562 = tpu.dynamic_rotate %525 by %c255_i32_147 dim 1 : vector<8x256xf32>, i32 -> vector<8x256xf32>
    %c5_148 = arith.constant 5 : index
    %c0_149 = arith.constant 0 : index
    %563 = vector.load %arg2[%c5_148, %c0_149] : memref<9x256xf32, #tpu.memory_space<vmem>>, vector<1x256xf32>
    %564 = vector.broadcast %563 : vector<1x256xf32> to vector<8x256xf32>
    %565 = arith.mulf %562, %564 : vector<8x256xf32>
    %c14_150 = arith.constant 14 : index
    %566 = memref.load %arg5[%c14_150] : memref<27xf32, #tpu.memory_space<smem>>
    %567 = vector.broadcast %566 : f32 to vector<8x256xf32>
    %568 = arith.mulf %567, %565 : vector<8x256xf32>
    %569 = arith.addf %561, %568 : vector<8x256xf32>
    %c241_i32_151 = arith.constant 241 : i32
    %570 = tpu.dynamic_rotate %525 by %c241_i32_151 dim 1 : vector<8x256xf32>, i32 -> vector<8x256xf32>
    %c6_152 = arith.constant 6 : index
    %c0_153 = arith.constant 0 : index
    %571 = vector.load %arg2[%c6_152, %c0_153] : memref<9x256xf32, #tpu.memory_space<vmem>>, vector<1x256xf32>
    %572 = vector.broadcast %571 : vector<1x256xf32> to vector<8x256xf32>
    %573 = arith.mulf %570, %572 : vector<8x256xf32>
    %c15_154 = arith.constant 15 : index
    %574 = memref.load %arg5[%c15_154] : memref<27xf32, #tpu.memory_space<smem>>
    %575 = vector.broadcast %574 : f32 to vector<8x256xf32>
    %576 = arith.mulf %575, %573 : vector<8x256xf32>
    %577 = arith.addf %569, %576 : vector<8x256xf32>
    %c240_i32_155 = arith.constant 240 : i32
    %578 = tpu.dynamic_rotate %525 by %c240_i32_155 dim 1 : vector<8x256xf32>, i32 -> vector<8x256xf32>
    %c7_156 = arith.constant 7 : index
    %c0_157 = arith.constant 0 : index
    %579 = vector.load %arg2[%c7_156, %c0_157] : memref<9x256xf32, #tpu.memory_space<vmem>>, vector<1x256xf32>
    %580 = vector.broadcast %579 : vector<1x256xf32> to vector<8x256xf32>
    %581 = arith.mulf %578, %580 : vector<8x256xf32>
    %c16_158 = arith.constant 16 : index
    %582 = memref.load %arg5[%c16_158] : memref<27xf32, #tpu.memory_space<smem>>
    %583 = vector.broadcast %582 : f32 to vector<8x256xf32>
    %584 = arith.mulf %583, %581 : vector<8x256xf32>
    %585 = arith.addf %577, %584 : vector<8x256xf32>
    %c239_i32_159 = arith.constant 239 : i32
    %586 = tpu.dynamic_rotate %525 by %c239_i32_159 dim 1 : vector<8x256xf32>, i32 -> vector<8x256xf32>
    %c8_160 = arith.constant 8 : index
    %c0_161 = arith.constant 0 : index
    %587 = vector.load %arg2[%c8_160, %c0_161] : memref<9x256xf32, #tpu.memory_space<vmem>>, vector<1x256xf32>
    %588 = vector.broadcast %587 : vector<1x256xf32> to vector<8x256xf32>
    %589 = arith.mulf %586, %588 : vector<8x256xf32>
    %c17_162 = arith.constant 17 : index
    %590 = memref.load %arg5[%c17_162] : memref<27xf32, #tpu.memory_space<smem>>
    %591 = vector.broadcast %590 : f32 to vector<8x256xf32>
    %592 = arith.mulf %591, %589 : vector<8x256xf32>
    %593 = arith.addf %585, %592 : vector<8x256xf32>
    %c2_163 = arith.constant 2 : index
    %c0_164 = arith.constant 0 : index
    %c0_165 = arith.constant 0 : index
    %594 = vector.load %arg8[%c2_163, %c0_164, %c0_165] : memref<3x8x256xf32, #tpu.memory_space<vmem>>, vector<1x8x256xf32>
    %595 = vector.shape_cast %594 : vector<1x8x256xf32> to vector<8x256xf32>
    %c17_i32_166 = arith.constant 17 : i32
    %596 = tpu.dynamic_rotate %595 by %c17_i32_166 dim 1 : vector<8x256xf32>, i32 -> vector<8x256xf32>
    %c0_167 = arith.constant 0 : index
    %c0_168 = arith.constant 0 : index
    %597 = vector.load %arg2[%c0_167, %c0_168] : memref<9x256xf32, #tpu.memory_space<vmem>>, vector<1x256xf32>
    %598 = vector.broadcast %597 : vector<1x256xf32> to vector<8x256xf32>
    %599 = arith.mulf %596, %598 : vector<8x256xf32>
    %c18_169 = arith.constant 18 : index
    %600 = memref.load %arg5[%c18_169] : memref<27xf32, #tpu.memory_space<smem>>
    %601 = vector.broadcast %600 : f32 to vector<8x256xf32>
    %602 = arith.mulf %601, %599 : vector<8x256xf32>
    %603 = arith.addf %593, %602 : vector<8x256xf32>
    %c16_i32_170 = arith.constant 16 : i32
    %604 = tpu.dynamic_rotate %595 by %c16_i32_170 dim 1 : vector<8x256xf32>, i32 -> vector<8x256xf32>
    %c1_171 = arith.constant 1 : index
    %c0_172 = arith.constant 0 : index
    %605 = vector.load %arg2[%c1_171, %c0_172] : memref<9x256xf32, #tpu.memory_space<vmem>>, vector<1x256xf32>
    %606 = vector.broadcast %605 : vector<1x256xf32> to vector<8x256xf32>
    %607 = arith.mulf %604, %606 : vector<8x256xf32>
    %c19_173 = arith.constant 19 : index
    %608 = memref.load %arg5[%c19_173] : memref<27xf32, #tpu.memory_space<smem>>
    %609 = vector.broadcast %608 : f32 to vector<8x256xf32>
    %610 = arith.mulf %609, %607 : vector<8x256xf32>
    %611 = arith.addf %603, %610 : vector<8x256xf32>
    %c15_i32_174 = arith.constant 15 : i32
    %612 = tpu.dynamic_rotate %595 by %c15_i32_174 dim 1 : vector<8x256xf32>, i32 -> vector<8x256xf32>
    %c2_175 = arith.constant 2 : index
    %c0_176 = arith.constant 0 : index
    %613 = vector.load %arg2[%c2_175, %c0_176] : memref<9x256xf32, #tpu.memory_space<vmem>>, vector<1x256xf32>
    %614 = vector.broadcast %613 : vector<1x256xf32> to vector<8x256xf32>
    %615 = arith.mulf %612, %614 : vector<8x256xf32>
    %c20_177 = arith.constant 20 : index
    %616 = memref.load %arg5[%c20_177] : memref<27xf32, #tpu.memory_space<smem>>
    %617 = vector.broadcast %616 : f32 to vector<8x256xf32>
    %618 = arith.mulf %617, %615 : vector<8x256xf32>
    %619 = arith.addf %611, %618 : vector<8x256xf32>
    %c1_i32_178 = arith.constant 1 : i32
    %620 = tpu.dynamic_rotate %595 by %c1_i32_178 dim 1 : vector<8x256xf32>, i32 -> vector<8x256xf32>
    %c3_179 = arith.constant 3 : index
    %c0_180 = arith.constant 0 : index
    %621 = vector.load %arg2[%c3_179, %c0_180] : memref<9x256xf32, #tpu.memory_space<vmem>>, vector<1x256xf32>
    %622 = vector.broadcast %621 : vector<1x256xf32> to vector<8x256xf32>
    %623 = arith.mulf %620, %622 : vector<8x256xf32>
    %c21_181 = arith.constant 21 : index
    %624 = memref.load %arg5[%c21_181] : memref<27xf32, #tpu.memory_space<smem>>
    %625 = vector.broadcast %624 : f32 to vector<8x256xf32>
    %626 = arith.mulf %625, %623 : vector<8x256xf32>
    %627 = arith.addf %619, %626 : vector<8x256xf32>
    %c22_182 = arith.constant 22 : index
    %628 = memref.load %arg5[%c22_182] : memref<27xf32, #tpu.memory_space<smem>>
    %629 = vector.broadcast %628 : f32 to vector<8x256xf32>
    %630 = arith.mulf %629, %595 : vector<8x256xf32>
    %631 = arith.addf %627, %630 : vector<8x256xf32>
    %c255_i32_183 = arith.constant 255 : i32
    %632 = tpu.dynamic_rotate %595 by %c255_i32_183 dim 1 : vector<8x256xf32>, i32 -> vector<8x256xf32>
    %c5_184 = arith.constant 5 : index
    %c0_185 = arith.constant 0 : index
    %633 = vector.load %arg2[%c5_184, %c0_185] : memref<9x256xf32, #tpu.memory_space<vmem>>, vector<1x256xf32>
    %634 = vector.broadcast %633 : vector<1x256xf32> to vector<8x256xf32>
    %635 = arith.mulf %632, %634 : vector<8x256xf32>
    %c23_186 = arith.constant 23 : index
    %636 = memref.load %arg5[%c23_186] : memref<27xf32, #tpu.memory_space<smem>>
    %637 = vector.broadcast %636 : f32 to vector<8x256xf32>
    %638 = arith.mulf %637, %635 : vector<8x256xf32>
    %639 = arith.addf %631, %638 : vector<8x256xf32>
    %c241_i32_187 = arith.constant 241 : i32
    %640 = tpu.dynamic_rotate %595 by %c241_i32_187 dim 1 : vector<8x256xf32>, i32 -> vector<8x256xf32>
    %c6_188 = arith.constant 6 : index
    %c0_189 = arith.constant 0 : index
    %641 = vector.load %arg2[%c6_188, %c0_189] : memref<9x256xf32, #tpu.memory_space<vmem>>, vector<1x256xf32>
    %642 = vector.broadcast %641 : vector<1x256xf32> to vector<8x256xf32>
    %643 = arith.mulf %640, %642 : vector<8x256xf32>
    %c24_190 = arith.constant 24 : index
    %644 = memref.load %arg5[%c24_190] : memref<27xf32, #tpu.memory_space<smem>>
    %645 = vector.broadcast %644 : f32 to vector<8x256xf32>
    %646 = arith.mulf %645, %643 : vector<8x256xf32>
    %647 = arith.addf %639, %646 : vector<8x256xf32>
    %c240_i32_191 = arith.constant 240 : i32
    %648 = tpu.dynamic_rotate %595 by %c240_i32_191 dim 1 : vector<8x256xf32>, i32 -> vector<8x256xf32>
    %c7_192 = arith.constant 7 : index
    %c0_193 = arith.constant 0 : index
    %649 = vector.load %arg2[%c7_192, %c0_193] : memref<9x256xf32, #tpu.memory_space<vmem>>, vector<1x256xf32>
    %650 = vector.broadcast %649 : vector<1x256xf32> to vector<8x256xf32>
    %651 = arith.mulf %648, %650 : vector<8x256xf32>
    %c25_194 = arith.constant 25 : index
    %652 = memref.load %arg5[%c25_194] : memref<27xf32, #tpu.memory_space<smem>>
    %653 = vector.broadcast %652 : f32 to vector<8x256xf32>
    %654 = arith.mulf %653, %651 : vector<8x256xf32>
    %655 = arith.addf %647, %654 : vector<8x256xf32>
    %c239_i32_195 = arith.constant 239 : i32
    %656 = tpu.dynamic_rotate %595 by %c239_i32_195 dim 1 : vector<8x256xf32>, i32 -> vector<8x256xf32>
    %c8_196 = arith.constant 8 : index
    %c0_197 = arith.constant 0 : index
    %657 = vector.load %arg2[%c8_196, %c0_197] : memref<9x256xf32, #tpu.memory_space<vmem>>, vector<1x256xf32>
    %658 = vector.broadcast %657 : vector<1x256xf32> to vector<8x256xf32>
    %659 = arith.mulf %656, %658 : vector<8x256xf32>
    %c26_198 = arith.constant 26 : index
    %660 = memref.load %arg5[%c26_198] : memref<27xf32, #tpu.memory_space<smem>>
    %661 = vector.broadcast %660 : f32 to vector<8x256xf32>
    %662 = arith.mulf %661, %659 : vector<8x256xf32>
    %663 = arith.addf %655, %662 : vector<8x256xf32>
    %c0_199 = arith.constant 0 : index
    %664 = memref.load %arg6[%c0_199] : memref<1xf32, #tpu.memory_space<smem>>
    %665 = vector.broadcast %664 : f32 to vector<8x256xf32>
    %666 = arith.addf %663, %665 : vector<8x256xf32>
    %c0_200 = arith.constant 0 : index
    %c0_201 = arith.constant 0 : index
    %667 = vector.load %arg7[%c0_200, %c0_201] : memref<8x256xf32, #tpu.memory_space<vmem>>, vector<8x256xf32>
    tpu.vector_store %arg7[%c0_200, %c0_201], %666 {strides = array<i32>} : memref<8x256xf32, #tpu.memory_space<vmem>>, vector<8x256xf32>,
    return
  }
  func.func @transform_0(%arg0: i32) -> (i32, i32, i32) {
    %c0_i32 = arith.constant 0 : i32
    %c0_i32_0 = arith.constant 0 : i32
    %c0_i32_1 = arith.constant 0 : i32
    return %c0_i32, %arg0, %c0_i32_0 : i32, i32, i32
  }
  func.func @transform_1(%arg0: i32) -> (i32, i32) {
    %c0_i32 = arith.constant 0 : i32
    %c0_i32_0 = arith.constant 0 : i32
    %c0_i32_1 = arith.constant 0 : i32
    return %c0_i32, %c0_i32_0 : i32, i32
  }
  func.func @transform_2(%arg0: i32) -> i32 {
    %c0_i32 = arith.constant 0 : i32
    %c0_i32_0 = arith.constant 0 : i32
    return %c0_i32 : i32
  }
  func.func @transform_3(%arg0: i32) -> i32 {
    %c0_i32 = arith.constant 0 : i32
    %c0_i32_0 = arith.constant 0 : i32
    return %c0_i32 : i32
  }
  func.func @transform_4(%arg0: i32) -> i32 {
    %c0_i32 = arith.constant 0 : i32
    %c0_i32_0 = arith.constant 0 : i32
    return %c0_i32 : i32
  }
  func.func @transform_5(%arg0: i32) -> i32 {
    %c0_i32 = arith.constant 0 : i32
    %c0_i32_0 = arith.constant 0 : i32
    return %c0_i32 : i32
  }
  func.func @transform_6(%arg0: i32) -> (i32, i32) {
    %c0_i32 = arith.constant 0 : i32
    %c0_i32_0 = arith.constant 0 : i32
    return %arg0, %c0_i32 : i32, i32
  }
}

module attributes {stable_mosaic.version = 11 : i64} {
  func.func @_l2agg_kernel(%arg0: i32, %arg1: memref<3x8x256xf32, #tpu.memory_space<vmem>>, %arg2: memref<9x256xf32, #tpu.memory_space<vmem>>, %arg3: memref<81xf32, #tpu.memory_space<smem>>, %arg4: memref<3xf32, #tpu.memory_space<smem>>, %arg5: memref<27xf32, #tpu.memory_space<smem>>, %arg6: memref<1xf32, #tpu.memory_space<smem>>, %arg7: memref<8x256xf32, #tpu.memory_space<vmem>>, %arg8: memref<3x8x256xf32, #tpu.memory_space<vmem>>) attributes {dimension_semantics = [#tpu.dimension_semantics<parallel>], iteration_bounds = array<i64: 1>, scalar_prefetch = 0 : i64, scratch_operands = 1 : i64, tpu.core_type = #tpu.core_type<tc>, window_params = [{transform_indices = @transform_0, window_bounds = array<i64: 3, 8, 256>}, {pipeline_mode = #tpu.pipeline_mode<synchronous>, transform_indices = @transform_1, window_bounds = array<i64: 9, 256>}, {transform_indices = @transform_2, window_bounds = array<i64: 81>}, {transform_indices = @transform_3, window_bounds = array<i64: 3>}, {transform_indices = @transform_4, window_bounds = array<i64: 27>}, {transform_indices = @transform_5, window_bounds = array<i64: 1>}, {transform_indices = @transform_6, window_bounds = array<i64: 8, 256>}]} {
    %cst = arith.constant 0.000000e+00 : f32
    %0 = vector.broadcast %cst : f32 to vector<8x256xf32>
    %cst_0 = arith.constant 0.000000e+00 : f32
    %1 = vector.broadcast %cst_0 : f32 to vector<8x256xf32>
    %cst_1 = arith.constant 0.000000e+00 : f32
    %2 = vector.broadcast %cst_1 : f32 to vector<8x256xf32>
    %c0 = arith.constant 0 : index
    %c0_2 = arith.constant 0 : index
    %c0_3 = arith.constant 0 : index
    %3 = vector.load %arg1[%c0, %c0_2, %c0_3] : memref<3x8x256xf32, #tpu.memory_space<vmem>>, vector<1x8x256xf32>
    %4 = vector.shape_cast %3 : vector<1x8x256xf32> to vector<8x256xf32>
    %c17_i32 = arith.constant 17 : i32
    %5 = tpu.dynamic_rotate %4 by %c17_i32 dim 1 : vector<8x256xf32>, i32 -> vector<8x256xf32>
    %c0_4 = arith.constant 0 : index
    %c0_5 = arith.constant 0 : index
    %6 = vector.load %arg2[%c0_4, %c0_5] : memref<9x256xf32, #tpu.memory_space<vmem>>, vector<1x256xf32>
    %7 = vector.broadcast %6 : vector<1x256xf32> to vector<8x256xf32>
    %8 = arith.mulf %5, %7 : vector<8x256xf32>
    %c0_6 = arith.constant 0 : index
    %9 = memref.load %arg3[%c0_6] : memref<81xf32, #tpu.memory_space<smem>>
    %10 = vector.broadcast %9 : f32 to vector<8x256xf32>
    %11 = arith.mulf %10, %8 : vector<8x256xf32>
    %12 = arith.addf %0, %11 : vector<8x256xf32>
    %c27 = arith.constant 27 : index
    %13 = memref.load %arg3[%c27] : memref<81xf32, #tpu.memory_space<smem>>
    %14 = vector.broadcast %13 : f32 to vector<8x256xf32>
    %15 = arith.mulf %14, %8 : vector<8x256xf32>
    %16 = arith.addf %1, %15 : vector<8x256xf32>
    %c54 = arith.constant 54 : index
    %17 = memref.load %arg3[%c54] : memref<81xf32, #tpu.memory_space<smem>>
    %18 = vector.broadcast %17 : f32 to vector<8x256xf32>
    %19 = arith.mulf %18, %8 : vector<8x256xf32>
    %20 = arith.addf %2, %19 : vector<8x256xf32>
    %c16_i32 = arith.constant 16 : i32
    %21 = tpu.dynamic_rotate %4 by %c16_i32 dim 1 : vector<8x256xf32>, i32 -> vector<8x256xf32>
    %c1 = arith.constant 1 : index
    %c0_7 = arith.constant 0 : index
    %22 = vector.load %arg2[%c1, %c0_7] : memref<9x256xf32, #tpu.memory_space<vmem>>, vector<1x256xf32>
    %23 = vector.broadcast %22 : vector<1x256xf32> to vector<8x256xf32>
    %24 = arith.mulf %21, %23 : vector<8x256xf32>
    %c1_8 = arith.constant 1 : index
    %25 = memref.load %arg3[%c1_8] : memref<81xf32, #tpu.memory_space<smem>>
    %26 = vector.broadcast %25 : f32 to vector<8x256xf32>
    %27 = arith.mulf %26, %24 : vector<8x256xf32>
    %28 = arith.addf %12, %27 : vector<8x256xf32>
    %c28 = arith.constant 28 : index
    %29 = memref.load %arg3[%c28] : memref<81xf32, #tpu.memory_space<smem>>
    %30 = vector.broadcast %29 : f32 to vector<8x256xf32>
    %31 = arith.mulf %30, %24 : vector<8x256xf32>
    %32 = arith.addf %16, %31 : vector<8x256xf32>
    %c55 = arith.constant 55 : index
    %33 = memref.load %arg3[%c55] : memref<81xf32, #tpu.memory_space<smem>>
    %34 = vector.broadcast %33 : f32 to vector<8x256xf32>
    %35 = arith.mulf %34, %24 : vector<8x256xf32>
    %36 = arith.addf %20, %35 : vector<8x256xf32>
    %c15_i32 = arith.constant 15 : i32
    %37 = tpu.dynamic_rotate %4 by %c15_i32 dim 1 : vector<8x256xf32>, i32 -> vector<8x256xf32>
    %c2 = arith.constant 2 : index
    %c0_9 = arith.constant 0 : index
    %38 = vector.load %arg2[%c2, %c0_9] : memref<9x256xf32, #tpu.memory_space<vmem>>, vector<1x256xf32>
    %39 = vector.broadcast %38 : vector<1x256xf32> to vector<8x256xf32>
    %40 = arith.mulf %37, %39 : vector<8x256xf32>
    %c2_10 = arith.constant 2 : index
    %41 = memref.load %arg3[%c2_10] : memref<81xf32, #tpu.memory_space<smem>>
    %42 = vector.broadcast %41 : f32 to vector<8x256xf32>
    %43 = arith.mulf %42, %40 : vector<8x256xf32>
    %44 = arith.addf %28, %43 : vector<8x256xf32>
    %c29 = arith.constant 29 : index
    %45 = memref.load %arg3[%c29] : memref<81xf32, #tpu.memory_space<smem>>
    %46 = vector.broadcast %45 : f32 to vector<8x256xf32>
    %47 = arith.mulf %46, %40 : vector<8x256xf32>
    %48 = arith.addf %32, %47 : vector<8x256xf32>
    %c56 = arith.constant 56 : index
    %49 = memref.load %arg3[%c56] : memref<81xf32, #tpu.memory_space<smem>>
    %50 = vector.broadcast %49 : f32 to vector<8x256xf32>
    %51 = arith.mulf %50, %40 : vector<8x256xf32>
    %52 = arith.addf %36, %51 : vector<8x256xf32>
    %c1_i32 = arith.constant 1 : i32
    %53 = tpu.dynamic_rotate %4 by %c1_i32 dim 1 : vector<8x256xf32>, i32 -> vector<8x256xf32>
    %c3 = arith.constant 3 : index
    %c0_11 = arith.constant 0 : index
    %54 = vector.load %arg2[%c3, %c0_11] : memref<9x256xf32, #tpu.memory_space<vmem>>, vector<1x256xf32>
    %55 = vector.broadcast %54 : vector<1x256xf32> to vector<8x256xf32>
    %56 = arith.mulf %53, %55 : vector<8x256xf32>
    %c3_12 = arith.constant 3 : index
    %57 = memref.load %arg3[%c3_12] : memref<81xf32, #tpu.memory_space<smem>>
    %58 = vector.broadcast %57 : f32 to vector<8x256xf32>
    %59 = arith.mulf %58, %56 : vector<8x256xf32>
    %60 = arith.addf %44, %59 : vector<8x256xf32>
    %c30 = arith.constant 30 : index
    %61 = memref.load %arg3[%c30] : memref<81xf32, #tpu.memory_space<smem>>
    %62 = vector.broadcast %61 : f32 to vector<8x256xf32>
    %63 = arith.mulf %62, %56 : vector<8x256xf32>
    %64 = arith.addf %48, %63 : vector<8x256xf32>
    %c57 = arith.constant 57 : index
    %65 = memref.load %arg3[%c57] : memref<81xf32, #tpu.memory_space<smem>>
    %66 = vector.broadcast %65 : f32 to vector<8x256xf32>
    %67 = arith.mulf %66, %56 : vector<8x256xf32>
    %68 = arith.addf %52, %67 : vector<8x256xf32>
    %c4 = arith.constant 4 : index
    %69 = memref.load %arg3[%c4] : memref<81xf32, #tpu.memory_space<smem>>
    %70 = vector.broadcast %69 : f32 to vector<8x256xf32>
    %71 = arith.mulf %70, %4 : vector<8x256xf32>
    %72 = arith.addf %60, %71 : vector<8x256xf32>
    %c31 = arith.constant 31 : index
    %73 = memref.load %arg3[%c31] : memref<81xf32, #tpu.memory_space<smem>>
    %74 = vector.broadcast %73 : f32 to vector<8x256xf32>
    %75 = arith.mulf %74, %4 : vector<8x256xf32>
    %76 = arith.addf %64, %75 : vector<8x256xf32>
    %c58 = arith.constant 58 : index
    %77 = memref.load %arg3[%c58] : memref<81xf32, #tpu.memory_space<smem>>
    %78 = vector.broadcast %77 : f32 to vector<8x256xf32>
    %79 = arith.mulf %78, %4 : vector<8x256xf32>
    %80 = arith.addf %68, %79 : vector<8x256xf32>
    %c255_i32 = arith.constant 255 : i32
    %81 = tpu.dynamic_rotate %4 by %c255_i32 dim 1 : vector<8x256xf32>, i32 -> vector<8x256xf32>
    %c5 = arith.constant 5 : index
    %c0_13 = arith.constant 0 : index
    %82 = vector.load %arg2[%c5, %c0_13] : memref<9x256xf32, #tpu.memory_space<vmem>>, vector<1x256xf32>
    %83 = vector.broadcast %82 : vector<1x256xf32> to vector<8x256xf32>
    %84 = arith.mulf %81, %83 : vector<8x256xf32>
    %c5_14 = arith.constant 5 : index
    %85 = memref.load %arg3[%c5_14] : memref<81xf32, #tpu.memory_space<smem>>
    %86 = vector.broadcast %85 : f32 to vector<8x256xf32>
    %87 = arith.mulf %86, %84 : vector<8x256xf32>
    %88 = arith.addf %72, %87 : vector<8x256xf32>
    %c32 = arith.constant 32 : index
    %89 = memref.load %arg3[%c32] : memref<81xf32, #tpu.memory_space<smem>>
    %90 = vector.broadcast %89 : f32 to vector<8x256xf32>
    %91 = arith.mulf %90, %84 : vector<8x256xf32>
    %92 = arith.addf %76, %91 : vector<8x256xf32>
    %c59 = arith.constant 59 : index
    %93 = memref.load %arg3[%c59] : memref<81xf32, #tpu.memory_space<smem>>
    %94 = vector.broadcast %93 : f32 to vector<8x256xf32>
    %95 = arith.mulf %94, %84 : vector<8x256xf32>
    %96 = arith.addf %80, %95 : vector<8x256xf32>
    %c241_i32 = arith.constant 241 : i32
    %97 = tpu.dynamic_rotate %4 by %c241_i32 dim 1 : vector<8x256xf32>, i32 -> vector<8x256xf32>
    %c6 = arith.constant 6 : index
    %c0_15 = arith.constant 0 : index
    %98 = vector.load %arg2[%c6, %c0_15] : memref<9x256xf32, #tpu.memory_space<vmem>>, vector<1x256xf32>
    %99 = vector.broadcast %98 : vector<1x256xf32> to vector<8x256xf32>
    %100 = arith.mulf %97, %99 : vector<8x256xf32>
    %c6_16 = arith.constant 6 : index
    %101 = memref.load %arg3[%c6_16] : memref<81xf32, #tpu.memory_space<smem>>
    %102 = vector.broadcast %101 : f32 to vector<8x256xf32>
    %103 = arith.mulf %102, %100 : vector<8x256xf32>
    %104 = arith.addf %88, %103 : vector<8x256xf32>
    %c33 = arith.constant 33 : index
    %105 = memref.load %arg3[%c33] : memref<81xf32, #tpu.memory_space<smem>>
    %106 = vector.broadcast %105 : f32 to vector<8x256xf32>
    %107 = arith.mulf %106, %100 : vector<8x256xf32>
    %108 = arith.addf %92, %107 : vector<8x256xf32>
    %c60 = arith.constant 60 : index
    %109 = memref.load %arg3[%c60] : memref<81xf32, #tpu.memory_space<smem>>
    %110 = vector.broadcast %109 : f32 to vector<8x256xf32>
    %111 = arith.mulf %110, %100 : vector<8x256xf32>
    %112 = arith.addf %96, %111 : vector<8x256xf32>
    %c240_i32 = arith.constant 240 : i32
    %113 = tpu.dynamic_rotate %4 by %c240_i32 dim 1 : vector<8x256xf32>, i32 -> vector<8x256xf32>
    %c7 = arith.constant 7 : index
    %c0_17 = arith.constant 0 : index
    %114 = vector.load %arg2[%c7, %c0_17] : memref<9x256xf32, #tpu.memory_space<vmem>>, vector<1x256xf32>
    %115 = vector.broadcast %114 : vector<1x256xf32> to vector<8x256xf32>
    %116 = arith.mulf %113, %115 : vector<8x256xf32>
    %c7_18 = arith.constant 7 : index
    %117 = memref.load %arg3[%c7_18] : memref<81xf32, #tpu.memory_space<smem>>
    %118 = vector.broadcast %117 : f32 to vector<8x256xf32>
    %119 = arith.mulf %118, %116 : vector<8x256xf32>
    %120 = arith.addf %104, %119 : vector<8x256xf32>
    %c34 = arith.constant 34 : index
    %121 = memref.load %arg3[%c34] : memref<81xf32, #tpu.memory_space<smem>>
    %122 = vector.broadcast %121 : f32 to vector<8x256xf32>
    %123 = arith.mulf %122, %116 : vector<8x256xf32>
    %124 = arith.addf %108, %123 : vector<8x256xf32>
    %c61 = arith.constant 61 : index
    %125 = memref.load %arg3[%c61] : memref<81xf32, #tpu.memory_space<smem>>
    %126 = vector.broadcast %125 : f32 to vector<8x256xf32>
    %127 = arith.mulf %126, %116 : vector<8x256xf32>
    %128 = arith.addf %112, %127 : vector<8x256xf32>
    %c239_i32 = arith.constant 239 : i32
    %129 = tpu.dynamic_rotate %4 by %c239_i32 dim 1 : vector<8x256xf32>, i32 -> vector<8x256xf32>
    %c8 = arith.constant 8 : index
    %c0_19 = arith.constant 0 : index
    %130 = vector.load %arg2[%c8, %c0_19] : memref<9x256xf32, #tpu.memory_space<vmem>>, vector<1x256xf32>
    %131 = vector.broadcast %130 : vector<1x256xf32> to vector<8x256xf32>
    %132 = arith.mulf %129, %131 : vector<8x256xf32>
    %c8_20 = arith.constant 8 : index
    %133 = memref.load %arg3[%c8_20] : memref<81xf32, #tpu.memory_space<smem>>
    %134 = vector.broadcast %133 : f32 to vector<8x256xf32>
    %135 = arith.mulf %134, %132 : vector<8x256xf32>
    %136 = arith.addf %120, %135 : vector<8x256xf32>
    %c35 = arith.constant 35 : index
    %137 = memref.load %arg3[%c35] : memref<81xf32, #tpu.memory_space<smem>>
    %138 = vector.broadcast %137 : f32 to vector<8x256xf32>
    %139 = arith.mulf %138, %132 : vector<8x256xf32>
    %140 = arith.addf %124, %139 : vector<8x256xf32>
    %c62 = arith.constant 62 : index
    %141 = memref.load %arg3[%c62] : memref<81xf32, #tpu.memory_space<smem>>
    %142 = vector.broadcast %141 : f32 to vector<8x256xf32>
    %143 = arith.mulf %142, %132 : vector<8x256xf32>
    %144 = arith.addf %128, %143 : vector<8x256xf32>
    %c1_21 = arith.constant 1 : index
    %c0_22 = arith.constant 0 : index
    %c0_23 = arith.constant 0 : index
    %145 = vector.load %arg1[%c1_21, %c0_22, %c0_23] : memref<3x8x256xf32, #tpu.memory_space<vmem>>, vector<1x8x256xf32>
    %146 = vector.shape_cast %145 : vector<1x8x256xf32> to vector<8x256xf32>
    %c17_i32_24 = arith.constant 17 : i32
    %147 = tpu.dynamic_rotate %146 by %c17_i32_24 dim 1 : vector<8x256xf32>, i32 -> vector<8x256xf32>
    %c0_25 = arith.constant 0 : index
    %c0_26 = arith.constant 0 : index
    %148 = vector.load %arg2[%c0_25, %c0_26] : memref<9x256xf32, #tpu.memory_space<vmem>>, vector<1x256xf32>
    %149 = vector.broadcast %148 : vector<1x256xf32> to vector<8x256xf32>
    %150 = arith.mulf %147, %149 : vector<8x256xf32>
    %c9 = arith.constant 9 : index
    %151 = memref.load %arg3[%c9] : memref<81xf32, #tpu.memory_space<smem>>
    %152 = vector.broadcast %151 : f32 to vector<8x256xf32>
    %153 = arith.mulf %152, %150 : vector<8x256xf32>
    %154 = arith.addf %136, %153 : vector<8x256xf32>
    %c36 = arith.constant 36 : index
    %155 = memref.load %arg3[%c36] : memref<81xf32, #tpu.memory_space<smem>>
    %156 = vector.broadcast %155 : f32 to vector<8x256xf32>
    %157 = arith.mulf %156, %150 : vector<8x256xf32>
    %158 = arith.addf %140, %157 : vector<8x256xf32>
    %c63 = arith.constant 63 : index
    %159 = memref.load %arg3[%c63] : memref<81xf32, #tpu.memory_space<smem>>
    %160 = vector.broadcast %159 : f32 to vector<8x256xf32>
    %161 = arith.mulf %160, %150 : vector<8x256xf32>
    %162 = arith.addf %144, %161 : vector<8x256xf32>
    %c16_i32_27 = arith.constant 16 : i32
    %163 = tpu.dynamic_rotate %146 by %c16_i32_27 dim 1 : vector<8x256xf32>, i32 -> vector<8x256xf32>
    %c1_28 = arith.constant 1 : index
    %c0_29 = arith.constant 0 : index
    %164 = vector.load %arg2[%c1_28, %c0_29] : memref<9x256xf32, #tpu.memory_space<vmem>>, vector<1x256xf32>
    %165 = vector.broadcast %164 : vector<1x256xf32> to vector<8x256xf32>
    %166 = arith.mulf %163, %165 : vector<8x256xf32>
    %c10 = arith.constant 10 : index
    %167 = memref.load %arg3[%c10] : memref<81xf32, #tpu.memory_space<smem>>
    %168 = vector.broadcast %167 : f32 to vector<8x256xf32>
    %169 = arith.mulf %168, %166 : vector<8x256xf32>
    %170 = arith.addf %154, %169 : vector<8x256xf32>
    %c37 = arith.constant 37 : index
    %171 = memref.load %arg3[%c37] : memref<81xf32, #tpu.memory_space<smem>>
    %172 = vector.broadcast %171 : f32 to vector<8x256xf32>
    %173 = arith.mulf %172, %166 : vector<8x256xf32>
    %174 = arith.addf %158, %173 : vector<8x256xf32>
    %c64 = arith.constant 64 : index
    %175 = memref.load %arg3[%c64] : memref<81xf32, #tpu.memory_space<smem>>
    %176 = vector.broadcast %175 : f32 to vector<8x256xf32>
    %177 = arith.mulf %176, %166 : vector<8x256xf32>
    %178 = arith.addf %162, %177 : vector<8x256xf32>
    %c15_i32_30 = arith.constant 15 : i32
    %179 = tpu.dynamic_rotate %146 by %c15_i32_30 dim 1 : vector<8x256xf32>, i32 -> vector<8x256xf32>
    %c2_31 = arith.constant 2 : index
    %c0_32 = arith.constant 0 : index
    %180 = vector.load %arg2[%c2_31, %c0_32] : memref<9x256xf32, #tpu.memory_space<vmem>>, vector<1x256xf32>
    %181 = vector.broadcast %180 : vector<1x256xf32> to vector<8x256xf32>
    %182 = arith.mulf %179, %181 : vector<8x256xf32>
    %c11 = arith.constant 11 : index
    %183 = memref.load %arg3[%c11] : memref<81xf32, #tpu.memory_space<smem>>
    %184 = vector.broadcast %183 : f32 to vector<8x256xf32>
    %185 = arith.mulf %184, %182 : vector<8x256xf32>
    %186 = arith.addf %170, %185 : vector<8x256xf32>
    %c38 = arith.constant 38 : index
    %187 = memref.load %arg3[%c38] : memref<81xf32, #tpu.memory_space<smem>>
    %188 = vector.broadcast %187 : f32 to vector<8x256xf32>
    %189 = arith.mulf %188, %182 : vector<8x256xf32>
    %190 = arith.addf %174, %189 : vector<8x256xf32>
    %c65 = arith.constant 65 : index
    %191 = memref.load %arg3[%c65] : memref<81xf32, #tpu.memory_space<smem>>
    %192 = vector.broadcast %191 : f32 to vector<8x256xf32>
    %193 = arith.mulf %192, %182 : vector<8x256xf32>
    %194 = arith.addf %178, %193 : vector<8x256xf32>
    %c1_i32_33 = arith.constant 1 : i32
    %195 = tpu.dynamic_rotate %146 by %c1_i32_33 dim 1 : vector<8x256xf32>, i32 -> vector<8x256xf32>
    %c3_34 = arith.constant 3 : index
    %c0_35 = arith.constant 0 : index
    %196 = vector.load %arg2[%c3_34, %c0_35] : memref<9x256xf32, #tpu.memory_space<vmem>>, vector<1x256xf32>
    %197 = vector.broadcast %196 : vector<1x256xf32> to vector<8x256xf32>
    %198 = arith.mulf %195, %197 : vector<8x256xf32>
    %c12 = arith.constant 12 : index
    %199 = memref.load %arg3[%c12] : memref<81xf32, #tpu.memory_space<smem>>
    %200 = vector.broadcast %199 : f32 to vector<8x256xf32>
    %201 = arith.mulf %200, %198 : vector<8x256xf32>
    %202 = arith.addf %186, %201 : vector<8x256xf32>
    %c39 = arith.constant 39 : index
    %203 = memref.load %arg3[%c39] : memref<81xf32, #tpu.memory_space<smem>>
    %204 = vector.broadcast %203 : f32 to vector<8x256xf32>
    %205 = arith.mulf %204, %198 : vector<8x256xf32>
    %206 = arith.addf %190, %205 : vector<8x256xf32>
    %c66 = arith.constant 66 : index
    %207 = memref.load %arg3[%c66] : memref<81xf32, #tpu.memory_space<smem>>
    %208 = vector.broadcast %207 : f32 to vector<8x256xf32>
    %209 = arith.mulf %208, %198 : vector<8x256xf32>
    %210 = arith.addf %194, %209 : vector<8x256xf32>
    %c13 = arith.constant 13 : index
    %211 = memref.load %arg3[%c13] : memref<81xf32, #tpu.memory_space<smem>>
    %212 = vector.broadcast %211 : f32 to vector<8x256xf32>
    %213 = arith.mulf %212, %146 : vector<8x256xf32>
    %214 = arith.addf %202, %213 : vector<8x256xf32>
    %c40 = arith.constant 40 : index
    %215 = memref.load %arg3[%c40] : memref<81xf32, #tpu.memory_space<smem>>
    %216 = vector.broadcast %215 : f32 to vector<8x256xf32>
    %217 = arith.mulf %216, %146 : vector<8x256xf32>
    %218 = arith.addf %206, %217 : vector<8x256xf32>
    %c67 = arith.constant 67 : index
    %219 = memref.load %arg3[%c67] : memref<81xf32, #tpu.memory_space<smem>>
    %220 = vector.broadcast %219 : f32 to vector<8x256xf32>
    %221 = arith.mulf %220, %146 : vector<8x256xf32>
    %222 = arith.addf %210, %221 : vector<8x256xf32>
    %c255_i32_36 = arith.constant 255 : i32
    %223 = tpu.dynamic_rotate %146 by %c255_i32_36 dim 1 : vector<8x256xf32>, i32 -> vector<8x256xf32>
    %c5_37 = arith.constant 5 : index
    %c0_38 = arith.constant 0 : index
    %224 = vector.load %arg2[%c5_37, %c0_38] : memref<9x256xf32, #tpu.memory_space<vmem>>, vector<1x256xf32>
    %225 = vector.broadcast %224 : vector<1x256xf32> to vector<8x256xf32>
    %226 = arith.mulf %223, %225 : vector<8x256xf32>
    %c14 = arith.constant 14 : index
    %227 = memref.load %arg3[%c14] : memref<81xf32, #tpu.memory_space<smem>>
    %228 = vector.broadcast %227 : f32 to vector<8x256xf32>
    %229 = arith.mulf %228, %226 : vector<8x256xf32>
    %230 = arith.addf %214, %229 : vector<8x256xf32>
    %c41 = arith.constant 41 : index
    %231 = memref.load %arg3[%c41] : memref<81xf32, #tpu.memory_space<smem>>
    %232 = vector.broadcast %231 : f32 to vector<8x256xf32>
    %233 = arith.mulf %232, %226 : vector<8x256xf32>
    %234 = arith.addf %218, %233 : vector<8x256xf32>
    %c68 = arith.constant 68 : index
    %235 = memref.load %arg3[%c68] : memref<81xf32, #tpu.memory_space<smem>>
    %236 = vector.broadcast %235 : f32 to vector<8x256xf32>
    %237 = arith.mulf %236, %226 : vector<8x256xf32>
    %238 = arith.addf %222, %237 : vector<8x256xf32>
    %c241_i32_39 = arith.constant 241 : i32
    %239 = tpu.dynamic_rotate %146 by %c241_i32_39 dim 1 : vector<8x256xf32>, i32 -> vector<8x256xf32>
    %c6_40 = arith.constant 6 : index
    %c0_41 = arith.constant 0 : index
    %240 = vector.load %arg2[%c6_40, %c0_41] : memref<9x256xf32, #tpu.memory_space<vmem>>, vector<1x256xf32>
    %241 = vector.broadcast %240 : vector<1x256xf32> to vector<8x256xf32>
    %242 = arith.mulf %239, %241 : vector<8x256xf32>
    %c15 = arith.constant 15 : index
    %243 = memref.load %arg3[%c15] : memref<81xf32, #tpu.memory_space<smem>>
    %244 = vector.broadcast %243 : f32 to vector<8x256xf32>
    %245 = arith.mulf %244, %242 : vector<8x256xf32>
    %246 = arith.addf %230, %245 : vector<8x256xf32>
    %c42 = arith.constant 42 : index
    %247 = memref.load %arg3[%c42] : memref<81xf32, #tpu.memory_space<smem>>
    %248 = vector.broadcast %247 : f32 to vector<8x256xf32>
    %249 = arith.mulf %248, %242 : vector<8x256xf32>
    %250 = arith.addf %234, %249 : vector<8x256xf32>
    %c69 = arith.constant 69 : index
    %251 = memref.load %arg3[%c69] : memref<81xf32, #tpu.memory_space<smem>>
    %252 = vector.broadcast %251 : f32 to vector<8x256xf32>
    %253 = arith.mulf %252, %242 : vector<8x256xf32>
    %254 = arith.addf %238, %253 : vector<8x256xf32>
    %c240_i32_42 = arith.constant 240 : i32
    %255 = tpu.dynamic_rotate %146 by %c240_i32_42 dim 1 : vector<8x256xf32>, i32 -> vector<8x256xf32>
    %c7_43 = arith.constant 7 : index
    %c0_44 = arith.constant 0 : index
    %256 = vector.load %arg2[%c7_43, %c0_44] : memref<9x256xf32, #tpu.memory_space<vmem>>, vector<1x256xf32>
    %257 = vector.broadcast %256 : vector<1x256xf32> to vector<8x256xf32>
    %258 = arith.mulf %255, %257 : vector<8x256xf32>
    %c16 = arith.constant 16 : index
    %259 = memref.load %arg3[%c16] : memref<81xf32, #tpu.memory_space<smem>>
    %260 = vector.broadcast %259 : f32 to vector<8x256xf32>
    %261 = arith.mulf %260, %258 : vector<8x256xf32>
    %262 = arith.addf %246, %261 : vector<8x256xf32>
    %c43 = arith.constant 43 : index
    %263 = memref.load %arg3[%c43] : memref<81xf32, #tpu.memory_space<smem>>
    %264 = vector.broadcast %263 : f32 to vector<8x256xf32>
    %265 = arith.mulf %264, %258 : vector<8x256xf32>
    %266 = arith.addf %250, %265 : vector<8x256xf32>
    %c70 = arith.constant 70 : index
    %267 = memref.load %arg3[%c70] : memref<81xf32, #tpu.memory_space<smem>>
    %268 = vector.broadcast %267 : f32 to vector<8x256xf32>
    %269 = arith.mulf %268, %258 : vector<8x256xf32>
    %270 = arith.addf %254, %269 : vector<8x256xf32>
    %c239_i32_45 = arith.constant 239 : i32
    %271 = tpu.dynamic_rotate %146 by %c239_i32_45 dim 1 : vector<8x256xf32>, i32 -> vector<8x256xf32>
    %c8_46 = arith.constant 8 : index
    %c0_47 = arith.constant 0 : index
    %272 = vector.load %arg2[%c8_46, %c0_47] : memref<9x256xf32, #tpu.memory_space<vmem>>, vector<1x256xf32>
    %273 = vector.broadcast %272 : vector<1x256xf32> to vector<8x256xf32>
    %274 = arith.mulf %271, %273 : vector<8x256xf32>
    %c17 = arith.constant 17 : index
    %275 = memref.load %arg3[%c17] : memref<81xf32, #tpu.memory_space<smem>>
    %276 = vector.broadcast %275 : f32 to vector<8x256xf32>
    %277 = arith.mulf %276, %274 : vector<8x256xf32>
    %278 = arith.addf %262, %277 : vector<8x256xf32>
    %c44 = arith.constant 44 : index
    %279 = memref.load %arg3[%c44] : memref<81xf32, #tpu.memory_space<smem>>
    %280 = vector.broadcast %279 : f32 to vector<8x256xf32>
    %281 = arith.mulf %280, %274 : vector<8x256xf32>
    %282 = arith.addf %266, %281 : vector<8x256xf32>
    %c71 = arith.constant 71 : index
    %283 = memref.load %arg3[%c71] : memref<81xf32, #tpu.memory_space<smem>>
    %284 = vector.broadcast %283 : f32 to vector<8x256xf32>
    %285 = arith.mulf %284, %274 : vector<8x256xf32>
    %286 = arith.addf %270, %285 : vector<8x256xf32>
    %c2_48 = arith.constant 2 : index
    %c0_49 = arith.constant 0 : index
    %c0_50 = arith.constant 0 : index
    %287 = vector.load %arg1[%c2_48, %c0_49, %c0_50] : memref<3x8x256xf32, #tpu.memory_space<vmem>>, vector<1x8x256xf32>
    %288 = vector.shape_cast %287 : vector<1x8x256xf32> to vector<8x256xf32>
    %c17_i32_51 = arith.constant 17 : i32
    %289 = tpu.dynamic_rotate %288 by %c17_i32_51 dim 1 : vector<8x256xf32>, i32 -> vector<8x256xf32>
    %c0_52 = arith.constant 0 : index
    %c0_53 = arith.constant 0 : index
    %290 = vector.load %arg2[%c0_52, %c0_53] : memref<9x256xf32, #tpu.memory_space<vmem>>, vector<1x256xf32>
    %291 = vector.broadcast %290 : vector<1x256xf32> to vector<8x256xf32>
    %292 = arith.mulf %289, %291 : vector<8x256xf32>
    %c18 = arith.constant 18 : index
    %293 = memref.load %arg3[%c18] : memref<81xf32, #tpu.memory_space<smem>>
    %294 = vector.broadcast %293 : f32 to vector<8x256xf32>
    %295 = arith.mulf %294, %292 : vector<8x256xf32>
    %296 = arith.addf %278, %295 : vector<8x256xf32>
    %c45 = arith.constant 45 : index
    %297 = memref.load %arg3[%c45] : memref<81xf32, #tpu.memory_space<smem>>
    %298 = vector.broadcast %297 : f32 to vector<8x256xf32>
    %299 = arith.mulf %298, %292 : vector<8x256xf32>
    %300 = arith.addf %282, %299 : vector<8x256xf32>
    %c72 = arith.constant 72 : index
    %301 = memref.load %arg3[%c72] : memref<81xf32, #tpu.memory_space<smem>>
    %302 = vector.broadcast %301 : f32 to vector<8x256xf32>
    %303 = arith.mulf %302, %292 : vector<8x256xf32>
    %304 = arith.addf %286, %303 : vector<8x256xf32>
    %c16_i32_54 = arith.constant 16 : i32
    %305 = tpu.dynamic_rotate %288 by %c16_i32_54 dim 1 : vector<8x256xf32>, i32 -> vector<8x256xf32>
    %c1_55 = arith.constant 1 : index
    %c0_56 = arith.constant 0 : index
    %306 = vector.load %arg2[%c1_55, %c0_56] : memref<9x256xf32, #tpu.memory_space<vmem>>, vector<1x256xf32>
    %307 = vector.broadcast %306 : vector<1x256xf32> to vector<8x256xf32>
    %308 = arith.mulf %305, %307 : vector<8x256xf32>
    %c19 = arith.constant 19 : index
    %309 = memref.load %arg3[%c19] : memref<81xf32, #tpu.memory_space<smem>>
    %310 = vector.broadcast %309 : f32 to vector<8x256xf32>
    %311 = arith.mulf %310, %308 : vector<8x256xf32>
    %312 = arith.addf %296, %311 : vector<8x256xf32>
    %c46 = arith.constant 46 : index
    %313 = memref.load %arg3[%c46] : memref<81xf32, #tpu.memory_space<smem>>
    %314 = vector.broadcast %313 : f32 to vector<8x256xf32>
    %315 = arith.mulf %314, %308 : vector<8x256xf32>
    %316 = arith.addf %300, %315 : vector<8x256xf32>
    %c73 = arith.constant 73 : index
    %317 = memref.load %arg3[%c73] : memref<81xf32, #tpu.memory_space<smem>>
    %318 = vector.broadcast %317 : f32 to vector<8x256xf32>
    %319 = arith.mulf %318, %308 : vector<8x256xf32>
    %320 = arith.addf %304, %319 : vector<8x256xf32>
    %c15_i32_57 = arith.constant 15 : i32
    %321 = tpu.dynamic_rotate %288 by %c15_i32_57 dim 1 : vector<8x256xf32>, i32 -> vector<8x256xf32>
    %c2_58 = arith.constant 2 : index
    %c0_59 = arith.constant 0 : index
    %322 = vector.load %arg2[%c2_58, %c0_59] : memref<9x256xf32, #tpu.memory_space<vmem>>, vector<1x256xf32>
    %323 = vector.broadcast %322 : vector<1x256xf32> to vector<8x256xf32>
    %324 = arith.mulf %321, %323 : vector<8x256xf32>
    %c20 = arith.constant 20 : index
    %325 = memref.load %arg3[%c20] : memref<81xf32, #tpu.memory_space<smem>>
    %326 = vector.broadcast %325 : f32 to vector<8x256xf32>
    %327 = arith.mulf %326, %324 : vector<8x256xf32>
    %328 = arith.addf %312, %327 : vector<8x256xf32>
    %c47 = arith.constant 47 : index
    %329 = memref.load %arg3[%c47] : memref<81xf32, #tpu.memory_space<smem>>
    %330 = vector.broadcast %329 : f32 to vector<8x256xf32>
    %331 = arith.mulf %330, %324 : vector<8x256xf32>
    %332 = arith.addf %316, %331 : vector<8x256xf32>
    %c74 = arith.constant 74 : index
    %333 = memref.load %arg3[%c74] : memref<81xf32, #tpu.memory_space<smem>>
    %334 = vector.broadcast %333 : f32 to vector<8x256xf32>
    %335 = arith.mulf %334, %324 : vector<8x256xf32>
    %336 = arith.addf %320, %335 : vector<8x256xf32>
    %c1_i32_60 = arith.constant 1 : i32
    %337 = tpu.dynamic_rotate %288 by %c1_i32_60 dim 1 : vector<8x256xf32>, i32 -> vector<8x256xf32>
    %c3_61 = arith.constant 3 : index
    %c0_62 = arith.constant 0 : index
    %338 = vector.load %arg2[%c3_61, %c0_62] : memref<9x256xf32, #tpu.memory_space<vmem>>, vector<1x256xf32>
    %339 = vector.broadcast %338 : vector<1x256xf32> to vector<8x256xf32>
    %340 = arith.mulf %337, %339 : vector<8x256xf32>
    %c21 = arith.constant 21 : index
    %341 = memref.load %arg3[%c21] : memref<81xf32, #tpu.memory_space<smem>>
    %342 = vector.broadcast %341 : f32 to vector<8x256xf32>
    %343 = arith.mulf %342, %340 : vector<8x256xf32>
    %344 = arith.addf %328, %343 : vector<8x256xf32>
    %c48 = arith.constant 48 : index
    %345 = memref.load %arg3[%c48] : memref<81xf32, #tpu.memory_space<smem>>
    %346 = vector.broadcast %345 : f32 to vector<8x256xf32>
    %347 = arith.mulf %346, %340 : vector<8x256xf32>
    %348 = arith.addf %332, %347 : vector<8x256xf32>
    %c75 = arith.constant 75 : index
    %349 = memref.load %arg3[%c75] : memref<81xf32, #tpu.memory_space<smem>>
    %350 = vector.broadcast %349 : f32 to vector<8x256xf32>
    %351 = arith.mulf %350, %340 : vector<8x256xf32>
    %352 = arith.addf %336, %351 : vector<8x256xf32>
    %c22 = arith.constant 22 : index
    %353 = memref.load %arg3[%c22] : memref<81xf32, #tpu.memory_space<smem>>
    %354 = vector.broadcast %353 : f32 to vector<8x256xf32>
    %355 = arith.mulf %354, %288 : vector<8x256xf32>
    %356 = arith.addf %344, %355 : vector<8x256xf32>
    %c49 = arith.constant 49 : index
    %357 = memref.load %arg3[%c49] : memref<81xf32, #tpu.memory_space<smem>>
    %358 = vector.broadcast %357 : f32 to vector<8x256xf32>
    %359 = arith.mulf %358, %288 : vector<8x256xf32>
    %360 = arith.addf %348, %359 : vector<8x256xf32>
    %c76 = arith.constant 76 : index
    %361 = memref.load %arg3[%c76] : memref<81xf32, #tpu.memory_space<smem>>
    %362 = vector.broadcast %361 : f32 to vector<8x256xf32>
    %363 = arith.mulf %362, %288 : vector<8x256xf32>
    %364 = arith.addf %352, %363 : vector<8x256xf32>
    %c255_i32_63 = arith.constant 255 : i32
    %365 = tpu.dynamic_rotate %288 by %c255_i32_63 dim 1 : vector<8x256xf32>, i32 -> vector<8x256xf32>
    %c5_64 = arith.constant 5 : index
    %c0_65 = arith.constant 0 : index
    %366 = vector.load %arg2[%c5_64, %c0_65] : memref<9x256xf32, #tpu.memory_space<vmem>>, vector<1x256xf32>
    %367 = vector.broadcast %366 : vector<1x256xf32> to vector<8x256xf32>
    %368 = arith.mulf %365, %367 : vector<8x256xf32>
    %c23 = arith.constant 23 : index
    %369 = memref.load %arg3[%c23] : memref<81xf32, #tpu.memory_space<smem>>
    %370 = vector.broadcast %369 : f32 to vector<8x256xf32>
    %371 = arith.mulf %370, %368 : vector<8x256xf32>
    %372 = arith.addf %356, %371 : vector<8x256xf32>
    %c50 = arith.constant 50 : index
    %373 = memref.load %arg3[%c50] : memref<81xf32, #tpu.memory_space<smem>>
    %374 = vector.broadcast %373 : f32 to vector<8x256xf32>
    %375 = arith.mulf %374, %368 : vector<8x256xf32>
    %376 = arith.addf %360, %375 : vector<8x256xf32>
    %c77 = arith.constant 77 : index
    %377 = memref.load %arg3[%c77] : memref<81xf32, #tpu.memory_space<smem>>
    %378 = vector.broadcast %377 : f32 to vector<8x256xf32>
    %379 = arith.mulf %378, %368 : vector<8x256xf32>
    %380 = arith.addf %364, %379 : vector<8x256xf32>
    %c241_i32_66 = arith.constant 241 : i32
    %381 = tpu.dynamic_rotate %288 by %c241_i32_66 dim 1 : vector<8x256xf32>, i32 -> vector<8x256xf32>
    %c6_67 = arith.constant 6 : index
    %c0_68 = arith.constant 0 : index
    %382 = vector.load %arg2[%c6_67, %c0_68] : memref<9x256xf32, #tpu.memory_space<vmem>>, vector<1x256xf32>
    %383 = vector.broadcast %382 : vector<1x256xf32> to vector<8x256xf32>
    %384 = arith.mulf %381, %383 : vector<8x256xf32>
    %c24 = arith.constant 24 : index
    %385 = memref.load %arg3[%c24] : memref<81xf32, #tpu.memory_space<smem>>
    %386 = vector.broadcast %385 : f32 to vector<8x256xf32>
    %387 = arith.mulf %386, %384 : vector<8x256xf32>
    %388 = arith.addf %372, %387 : vector<8x256xf32>
    %c51 = arith.constant 51 : index
    %389 = memref.load %arg3[%c51] : memref<81xf32, #tpu.memory_space<smem>>
    %390 = vector.broadcast %389 : f32 to vector<8x256xf32>
    %391 = arith.mulf %390, %384 : vector<8x256xf32>
    %392 = arith.addf %376, %391 : vector<8x256xf32>
    %c78 = arith.constant 78 : index
    %393 = memref.load %arg3[%c78] : memref<81xf32, #tpu.memory_space<smem>>
    %394 = vector.broadcast %393 : f32 to vector<8x256xf32>
    %395 = arith.mulf %394, %384 : vector<8x256xf32>
    %396 = arith.addf %380, %395 : vector<8x256xf32>
    %c240_i32_69 = arith.constant 240 : i32
    %397 = tpu.dynamic_rotate %288 by %c240_i32_69 dim 1 : vector<8x256xf32>, i32 -> vector<8x256xf32>
    %c7_70 = arith.constant 7 : index
    %c0_71 = arith.constant 0 : index
    %398 = vector.load %arg2[%c7_70, %c0_71] : memref<9x256xf32, #tpu.memory_space<vmem>>, vector<1x256xf32>
    %399 = vector.broadcast %398 : vector<1x256xf32> to vector<8x256xf32>
    %400 = arith.mulf %397, %399 : vector<8x256xf32>
    %c25 = arith.constant 25 : index
    %401 = memref.load %arg3[%c25] : memref<81xf32, #tpu.memory_space<smem>>
    %402 = vector.broadcast %401 : f32 to vector<8x256xf32>
    %403 = arith.mulf %402, %400 : vector<8x256xf32>
    %404 = arith.addf %388, %403 : vector<8x256xf32>
    %c52 = arith.constant 52 : index
    %405 = memref.load %arg3[%c52] : memref<81xf32, #tpu.memory_space<smem>>
    %406 = vector.broadcast %405 : f32 to vector<8x256xf32>
    %407 = arith.mulf %406, %400 : vector<8x256xf32>
    %408 = arith.addf %392, %407 : vector<8x256xf32>
    %c79 = arith.constant 79 : index
    %409 = memref.load %arg3[%c79] : memref<81xf32, #tpu.memory_space<smem>>
    %410 = vector.broadcast %409 : f32 to vector<8x256xf32>
    %411 = arith.mulf %410, %400 : vector<8x256xf32>
    %412 = arith.addf %396, %411 : vector<8x256xf32>
    %c239_i32_72 = arith.constant 239 : i32
    %413 = tpu.dynamic_rotate %288 by %c239_i32_72 dim 1 : vector<8x256xf32>, i32 -> vector<8x256xf32>
    %c8_73 = arith.constant 8 : index
    %c0_74 = arith.constant 0 : index
    %414 = vector.load %arg2[%c8_73, %c0_74] : memref<9x256xf32, #tpu.memory_space<vmem>>, vector<1x256xf32>
    %415 = vector.broadcast %414 : vector<1x256xf32> to vector<8x256xf32>
    %416 = arith.mulf %413, %415 : vector<8x256xf32>
    %c26 = arith.constant 26 : index
    %417 = memref.load %arg3[%c26] : memref<81xf32, #tpu.memory_space<smem>>
    %418 = vector.broadcast %417 : f32 to vector<8x256xf32>
    %419 = arith.mulf %418, %416 : vector<8x256xf32>
    %420 = arith.addf %404, %419 : vector<8x256xf32>
    %c53 = arith.constant 53 : index
    %421 = memref.load %arg3[%c53] : memref<81xf32, #tpu.memory_space<smem>>
    %422 = vector.broadcast %421 : f32 to vector<8x256xf32>
    %423 = arith.mulf %422, %416 : vector<8x256xf32>
    %424 = arith.addf %408, %423 : vector<8x256xf32>
    %c80 = arith.constant 80 : index
    %425 = memref.load %arg3[%c80] : memref<81xf32, #tpu.memory_space<smem>>
    %426 = vector.broadcast %425 : f32 to vector<8x256xf32>
    %427 = arith.mulf %426, %416 : vector<8x256xf32>
    %428 = arith.addf %412, %427 : vector<8x256xf32>
    %c0_75 = arith.constant 0 : index
    %429 = memref.load %arg4[%c0_75] : memref<3xf32, #tpu.memory_space<smem>>
    %430 = vector.broadcast %429 : f32 to vector<8x256xf32>
    %431 = arith.addf %420, %430 : vector<8x256xf32>
    %cst_76 = arith.constant 0.000000e+00 : f32
    %432 = vector.broadcast %cst_76 : f32 to vector<8x256xf32>
    %433 = arith.maximumf %431, %432 : vector<8x256xf32>
    %c0_77 = arith.constant 0 : index
    %c0_78 = arith.constant 0 : index
    %c0_79 = arith.constant 0 : index
    %434 = vector.load %arg8[%c0_77, %c0_78, %c0_79] : memref<3x8x256xf32, #tpu.memory_space<vmem>>, vector<1x8x256xf32>
    %435 = vector.shape_cast %434 : vector<1x8x256xf32> to vector<8x256xf32>
    %436 = vector.shape_cast %433 : vector<8x256xf32> to vector<1x8x256xf32>
    tpu.vector_store %arg8[%c0_77, %c0_78, %c0_79], %436 {strides = array<i32>} : memref<3x8x256xf32, #tpu.memory_space<vmem>>, vector<1x8x256xf32>,
    %c1_80 = arith.constant 1 : index
    %437 = memref.load %arg4[%c1_80] : memref<3xf32, #tpu.memory_space<smem>>
    %438 = vector.broadcast %437 : f32 to vector<8x256xf32>
    %439 = arith.addf %424, %438 : vector<8x256xf32>
    %cst_81 = arith.constant 0.000000e+00 : f32
    %440 = vector.broadcast %cst_81 : f32 to vector<8x256xf32>
    %441 = arith.maximumf %439, %440 : vector<8x256xf32>
    %c1_82 = arith.constant 1 : index
    %c0_83 = arith.constant 0 : index
    %c0_84 = arith.constant 0 : index
    %442 = vector.load %arg8[%c1_82, %c0_83, %c0_84] : memref<3x8x256xf32, #tpu.memory_space<vmem>>, vector<1x8x256xf32>
    %443 = vector.shape_cast %442 : vector<1x8x256xf32> to vector<8x256xf32>
    %444 = vector.shape_cast %441 : vector<8x256xf32> to vector<1x8x256xf32>
    tpu.vector_store %arg8[%c1_82, %c0_83, %c0_84], %444 {strides = array<i32>} : memref<3x8x256xf32, #tpu.memory_space<vmem>>, vector<1x8x256xf32>,
    %c2_85 = arith.constant 2 : index
    %445 = memref.load %arg4[%c2_85] : memref<3xf32, #tpu.memory_space<smem>>
    %446 = vector.broadcast %445 : f32 to vector<8x256xf32>
    %447 = arith.addf %428, %446 : vector<8x256xf32>
    %cst_86 = arith.constant 0.000000e+00 : f32
    %448 = vector.broadcast %cst_86 : f32 to vector<8x256xf32>
    %449 = arith.maximumf %447, %448 : vector<8x256xf32>
    %c2_87 = arith.constant 2 : index
    %c0_88 = arith.constant 0 : index
    %c0_89 = arith.constant 0 : index
    %450 = vector.load %arg8[%c2_87, %c0_88, %c0_89] : memref<3x8x256xf32, #tpu.memory_space<vmem>>, vector<1x8x256xf32>
    %451 = vector.shape_cast %450 : vector<1x8x256xf32> to vector<8x256xf32>
    %452 = vector.shape_cast %449 : vector<8x256xf32> to vector<1x8x256xf32>
    tpu.vector_store %arg8[%c2_87, %c0_88, %c0_89], %452 {strides = array<i32>} : memref<3x8x256xf32, #tpu.memory_space<vmem>>, vector<1x8x256xf32>,
    %cst_90 = arith.constant 0.000000e+00 : f32
    %453 = vector.broadcast %cst_90 : f32 to vector<8x256xf32>
    %c0_91 = arith.constant 0 : index
    %c0_92 = arith.constant 0 : index
    %c0_93 = arith.constant 0 : index
    %454 = vector.load %arg8[%c0_91, %c0_92, %c0_93] : memref<3x8x256xf32, #tpu.memory_space<vmem>>, vector<1x8x256xf32>
    %455 = vector.shape_cast %454 : vector<1x8x256xf32> to vector<8x256xf32>
    %c17_i32_94 = arith.constant 17 : i32
    %456 = tpu.dynamic_rotate %455 by %c17_i32_94 dim 1 : vector<8x256xf32>, i32 -> vector<8x256xf32>
    %c0_95 = arith.constant 0 : index
    %c0_96 = arith.constant 0 : index
    %457 = vector.load %arg2[%c0_95, %c0_96] : memref<9x256xf32, #tpu.memory_space<vmem>>, vector<1x256xf32>
    %458 = vector.broadcast %457 : vector<1x256xf32> to vector<8x256xf32>
    %459 = arith.mulf %456, %458 : vector<8x256xf32>
    %c0_97 = arith.constant 0 : index
    %460 = memref.load %arg5[%c0_97] : memref<27xf32, #tpu.memory_space<smem>>
    %461 = vector.broadcast %460 : f32 to vector<8x256xf32>
    %462 = arith.mulf %461, %459 : vector<8x256xf32>
    %463 = arith.addf %453, %462 : vector<8x256xf32>
    %c16_i32_98 = arith.constant 16 : i32
    %464 = tpu.dynamic_rotate %455 by %c16_i32_98 dim 1 : vector<8x256xf32>, i32 -> vector<8x256xf32>
    %c1_99 = arith.constant 1 : index
    %c0_100 = arith.constant 0 : index
    %465 = vector.load %arg2[%c1_99, %c0_100] : memref<9x256xf32, #tpu.memory_space<vmem>>, vector<1x256xf32>
    %466 = vector.broadcast %465 : vector<1x256xf32> to vector<8x256xf32>
    %467 = arith.mulf %464, %466 : vector<8x256xf32>
    %c1_101 = arith.constant 1 : index
    %468 = memref.load %arg5[%c1_101] : memref<27xf32, #tpu.memory_space<smem>>
    %469 = vector.broadcast %468 : f32 to vector<8x256xf32>
    %470 = arith.mulf %469, %467 : vector<8x256xf32>
    %471 = arith.addf %463, %470 : vector<8x256xf32>
    %c15_i32_102 = arith.constant 15 : i32
    %472 = tpu.dynamic_rotate %455 by %c15_i32_102 dim 1 : vector<8x256xf32>, i32 -> vector<8x256xf32>
    %c2_103 = arith.constant 2 : index
    %c0_104 = arith.constant 0 : index
    %473 = vector.load %arg2[%c2_103, %c0_104] : memref<9x256xf32, #tpu.memory_space<vmem>>, vector<1x256xf32>
    %474 = vector.broadcast %473 : vector<1x256xf32> to vector<8x256xf32>
    %475 = arith.mulf %472, %474 : vector<8x256xf32>
    %c2_105 = arith.constant 2 : index
    %476 = memref.load %arg5[%c2_105] : memref<27xf32, #tpu.memory_space<smem>>
    %477 = vector.broadcast %476 : f32 to vector<8x256xf32>
    %478 = arith.mulf %477, %475 : vector<8x256xf32>
    %479 = arith.addf %471, %478 : vector<8x256xf32>
    %c1_i32_106 = arith.constant 1 : i32
    %480 = tpu.dynamic_rotate %455 by %c1_i32_106 dim 1 : vector<8x256xf32>, i32 -> vector<8x256xf32>
    %c3_107 = arith.constant 3 : index
    %c0_108 = arith.constant 0 : index
    %481 = vector.load %arg2[%c3_107, %c0_108] : memref<9x256xf32, #tpu.memory_space<vmem>>, vector<1x256xf32>
    %482 = vector.broadcast %481 : vector<1x256xf32> to vector<8x256xf32>
    %483 = arith.mulf %480, %482 : vector<8x256xf32>
    %c3_109 = arith.constant 3 : index
    %484 = memref.load %arg5[%c3_109] : memref<27xf32, #tpu.memory_space<smem>>
    %485 = vector.broadcast %484 : f32 to vector<8x256xf32>
    %486 = arith.mulf %485, %483 : vector<8x256xf32>
    %487 = arith.addf %479, %486 : vector<8x256xf32>
    %c4_110 = arith.constant 4 : index
    %488 = memref.load %arg5[%c4_110] : memref<27xf32, #tpu.memory_space<smem>>
    %489 = vector.broadcast %488 : f32 to vector<8x256xf32>
    %490 = arith.mulf %489, %455 : vector<8x256xf32>
    %491 = arith.addf %487, %490 : vector<8x256xf32>
    %c255_i32_111 = arith.constant 255 : i32
    %492 = tpu.dynamic_rotate %455 by %c255_i32_111 dim 1 : vector<8x256xf32>, i32 -> vector<8x256xf32>
    %c5_112 = arith.constant 5 : index
    %c0_113 = arith.constant 0 : index
    %493 = vector.load %arg2[%c5_112, %c0_113] : memref<9x256xf32, #tpu.memory_space<vmem>>, vector<1x256xf32>
    %494 = vector.broadcast %493 : vector<1x256xf32> to vector<8x256xf32>
    %495 = arith.mulf %492, %494 : vector<8x256xf32>
    %c5_114 = arith.constant 5 : index
    %496 = memref.load %arg5[%c5_114] : memref<27xf32, #tpu.memory_space<smem>>
    %497 = vector.broadcast %496 : f32 to vector<8x256xf32>
    %498 = arith.mulf %497, %495 : vector<8x256xf32>
    %499 = arith.addf %491, %498 : vector<8x256xf32>
    %c241_i32_115 = arith.constant 241 : i32
    %500 = tpu.dynamic_rotate %455 by %c241_i32_115 dim 1 : vector<8x256xf32>, i32 -> vector<8x256xf32>
    %c6_116 = arith.constant 6 : index
    %c0_117 = arith.constant 0 : index
    %501 = vector.load %arg2[%c6_116, %c0_117] : memref<9x256xf32, #tpu.memory_space<vmem>>, vector<1x256xf32>
    %502 = vector.broadcast %501 : vector<1x256xf32> to vector<8x256xf32>
    %503 = arith.mulf %500, %502 : vector<8x256xf32>
    %c6_118 = arith.constant 6 : index
    %504 = memref.load %arg5[%c6_118] : memref<27xf32, #tpu.memory_space<smem>>
    %505 = vector.broadcast %504 : f32 to vector<8x256xf32>
    %506 = arith.mulf %505, %503 : vector<8x256xf32>
    %507 = arith.addf %499, %506 : vector<8x256xf32>
    %c240_i32_119 = arith.constant 240 : i32
    %508 = tpu.dynamic_rotate %455 by %c240_i32_119 dim 1 : vector<8x256xf32>, i32 -> vector<8x256xf32>
    %c7_120 = arith.constant 7 : index
    %c0_121 = arith.constant 0 : index
    %509 = vector.load %arg2[%c7_120, %c0_121] : memref<9x256xf32, #tpu.memory_space<vmem>>, vector<1x256xf32>
    %510 = vector.broadcast %509 : vector<1x256xf32> to vector<8x256xf32>
    %511 = arith.mulf %508, %510 : vector<8x256xf32>
    %c7_122 = arith.constant 7 : index
    %512 = memref.load %arg5[%c7_122] : memref<27xf32, #tpu.memory_space<smem>>
    %513 = vector.broadcast %512 : f32 to vector<8x256xf32>
    %514 = arith.mulf %513, %511 : vector<8x256xf32>
    %515 = arith.addf %507, %514 : vector<8x256xf32>
    %c239_i32_123 = arith.constant 239 : i32
    %516 = tpu.dynamic_rotate %455 by %c239_i32_123 dim 1 : vector<8x256xf32>, i32 -> vector<8x256xf32>
    %c8_124 = arith.constant 8 : index
    %c0_125 = arith.constant 0 : index
    %517 = vector.load %arg2[%c8_124, %c0_125] : memref<9x256xf32, #tpu.memory_space<vmem>>, vector<1x256xf32>
    %518 = vector.broadcast %517 : vector<1x256xf32> to vector<8x256xf32>
    %519 = arith.mulf %516, %518 : vector<8x256xf32>
    %c8_126 = arith.constant 8 : index
    %520 = memref.load %arg5[%c8_126] : memref<27xf32, #tpu.memory_space<smem>>
    %521 = vector.broadcast %520 : f32 to vector<8x256xf32>
    %522 = arith.mulf %521, %519 : vector<8x256xf32>
    %523 = arith.addf %515, %522 : vector<8x256xf32>
    %c1_127 = arith.constant 1 : index
    %c0_128 = arith.constant 0 : index
    %c0_129 = arith.constant 0 : index
    %524 = vector.load %arg8[%c1_127, %c0_128, %c0_129] : memref<3x8x256xf32, #tpu.memory_space<vmem>>, vector<1x8x256xf32>
    %525 = vector.shape_cast %524 : vector<1x8x256xf32> to vector<8x256xf32>
    %c17_i32_130 = arith.constant 17 : i32
    %526 = tpu.dynamic_rotate %525 by %c17_i32_130 dim 1 : vector<8x256xf32>, i32 -> vector<8x256xf32>
    %c0_131 = arith.constant 0 : index
    %c0_132 = arith.constant 0 : index
    %527 = vector.load %arg2[%c0_131, %c0_132] : memref<9x256xf32, #tpu.memory_space<vmem>>, vector<1x256xf32>
    %528 = vector.broadcast %527 : vector<1x256xf32> to vector<8x256xf32>
    %529 = arith.mulf %526, %528 : vector<8x256xf32>
    %c9_133 = arith.constant 9 : index
    %530 = memref.load %arg5[%c9_133] : memref<27xf32, #tpu.memory_space<smem>>
    %531 = vector.broadcast %530 : f32 to vector<8x256xf32>
    %532 = arith.mulf %531, %529 : vector<8x256xf32>
    %533 = arith.addf %523, %532 : vector<8x256xf32>
    %c16_i32_134 = arith.constant 16 : i32
    %534 = tpu.dynamic_rotate %525 by %c16_i32_134 dim 1 : vector<8x256xf32>, i32 -> vector<8x256xf32>
    %c1_135 = arith.constant 1 : index
    %c0_136 = arith.constant 0 : index
    %535 = vector.load %arg2[%c1_135, %c0_136] : memref<9x256xf32, #tpu.memory_space<vmem>>, vector<1x256xf32>
    %536 = vector.broadcast %535 : vector<1x256xf32> to vector<8x256xf32>
    %537 = arith.mulf %534, %536 : vector<8x256xf32>
    %c10_137 = arith.constant 10 : index
    %538 = memref.load %arg5[%c10_137] : memref<27xf32, #tpu.memory_space<smem>>
    %539 = vector.broadcast %538 : f32 to vector<8x256xf32>
    %540 = arith.mulf %539, %537 : vector<8x256xf32>
    %541 = arith.addf %533, %540 : vector<8x256xf32>
    %c15_i32_138 = arith.constant 15 : i32
    %542 = tpu.dynamic_rotate %525 by %c15_i32_138 dim 1 : vector<8x256xf32>, i32 -> vector<8x256xf32>
    %c2_139 = arith.constant 2 : index
    %c0_140 = arith.constant 0 : index
    %543 = vector.load %arg2[%c2_139, %c0_140] : memref<9x256xf32, #tpu.memory_space<vmem>>, vector<1x256xf32>
    %544 = vector.broadcast %543 : vector<1x256xf32> to vector<8x256xf32>
    %545 = arith.mulf %542, %544 : vector<8x256xf32>
    %c11_141 = arith.constant 11 : index
    %546 = memref.load %arg5[%c11_141] : memref<27xf32, #tpu.memory_space<smem>>
    %547 = vector.broadcast %546 : f32 to vector<8x256xf32>
    %548 = arith.mulf %547, %545 : vector<8x256xf32>
    %549 = arith.addf %541, %548 : vector<8x256xf32>
    %c1_i32_142 = arith.constant 1 : i32
    %550 = tpu.dynamic_rotate %525 by %c1_i32_142 dim 1 : vector<8x256xf32>, i32 -> vector<8x256xf32>
    %c3_143 = arith.constant 3 : index
    %c0_144 = arith.constant 0 : index
    %551 = vector.load %arg2[%c3_143, %c0_144] : memref<9x256xf32, #tpu.memory_space<vmem>>, vector<1x256xf32>
    %552 = vector.broadcast %551 : vector<1x256xf32> to vector<8x256xf32>
    %553 = arith.mulf %550, %552 : vector<8x256xf32>
    %c12_145 = arith.constant 12 : index
    %554 = memref.load %arg5[%c12_145] : memref<27xf32, #tpu.memory_space<smem>>
    %555 = vector.broadcast %554 : f32 to vector<8x256xf32>
    %556 = arith.mulf %555, %553 : vector<8x256xf32>
    %557 = arith.addf %549, %556 : vector<8x256xf32>
    %c13_146 = arith.constant 13 : index
    %558 = memref.load %arg5[%c13_146] : memref<27xf32, #tpu.memory_space<smem>>
    %559 = vector.broadcast %558 : f32 to vector<8x256xf32>
    %560 = arith.mulf %559, %525 : vector<8x256xf32>
    %561 = arith.addf %557, %560 : vector<8x256xf32>
    %c255_i32_147 = arith.constant 255 : i32
    %562 = tpu.dynamic_rotate %525 by %c255_i32_147 dim 1 : vector<8x256xf32>, i32 -> vector<8x256xf32>
    %c5_148 = arith.constant 5 : index
    %c0_149 = arith.constant 0 : index
    %563 = vector.load %arg2[%c5_148, %c0_149] : memref<9x256xf32, #tpu.memory_space<vmem>>, vector<1x256xf32>
    %564 = vector.broadcast %563 : vector<1x256xf32> to vector<8x256xf32>
    %565 = arith.mulf %562, %564 : vector<8x256xf32>
    %c14_150 = arith.constant 14 : index
    %566 = memref.load %arg5[%c14_150] : memref<27xf32, #tpu.memory_space<smem>>
    %567 = vector.broadcast %566 : f32 to vector<8x256xf32>
    %568 = arith.mulf %567, %565 : vector<8x256xf32>
    %569 = arith.addf %561, %568 : vector<8x256xf32>
    %c241_i32_151 = arith.constant 241 : i32
    %570 = tpu.dynamic_rotate %525 by %c241_i32_151 dim 1 : vector<8x256xf32>, i32 -> vector<8x256xf32>
    %c6_152 = arith.constant 6 : index
    %c0_153 = arith.constant 0 : index
    %571 = vector.load %arg2[%c6_152, %c0_153] : memref<9x256xf32, #tpu.memory_space<vmem>>, vector<1x256xf32>
    %572 = vector.broadcast %571 : vector<1x256xf32> to vector<8x256xf32>
    %573 = arith.mulf %570, %572 : vector<8x256xf32>
    %c15_154 = arith.constant 15 : index
    %574 = memref.load %arg5[%c15_154] : memref<27xf32, #tpu.memory_space<smem>>
    %575 = vector.broadcast %574 : f32 to vector<8x256xf32>
    %576 = arith.mulf %575, %573 : vector<8x256xf32>
    %577 = arith.addf %569, %576 : vector<8x256xf32>
    %c240_i32_155 = arith.constant 240 : i32
    %578 = tpu.dynamic_rotate %525 by %c240_i32_155 dim 1 : vector<8x256xf32>, i32 -> vector<8x256xf32>
    %c7_156 = arith.constant 7 : index
    %c0_157 = arith.constant 0 : index
    %579 = vector.load %arg2[%c7_156, %c0_157] : memref<9x256xf32, #tpu.memory_space<vmem>>, vector<1x256xf32>
    %580 = vector.broadcast %579 : vector<1x256xf32> to vector<8x256xf32>
    %581 = arith.mulf %578, %580 : vector<8x256xf32>
    %c16_158 = arith.constant 16 : index
    %582 = memref.load %arg5[%c16_158] : memref<27xf32, #tpu.memory_space<smem>>
    %583 = vector.broadcast %582 : f32 to vector<8x256xf32>
    %584 = arith.mulf %583, %581 : vector<8x256xf32>
    %585 = arith.addf %577, %584 : vector<8x256xf32>
    %c239_i32_159 = arith.constant 239 : i32
    %586 = tpu.dynamic_rotate %525 by %c239_i32_159 dim 1 : vector<8x256xf32>, i32 -> vector<8x256xf32>
    %c8_160 = arith.constant 8 : index
    %c0_161 = arith.constant 0 : index
    %587 = vector.load %arg2[%c8_160, %c0_161] : memref<9x256xf32, #tpu.memory_space<vmem>>, vector<1x256xf32>
    %588 = vector.broadcast %587 : vector<1x256xf32> to vector<8x256xf32>
    %589 = arith.mulf %586, %588 : vector<8x256xf32>
    %c17_162 = arith.constant 17 : index
    %590 = memref.load %arg5[%c17_162] : memref<27xf32, #tpu.memory_space<smem>>
    %591 = vector.broadcast %590 : f32 to vector<8x256xf32>
    %592 = arith.mulf %591, %589 : vector<8x256xf32>
    %593 = arith.addf %585, %592 : vector<8x256xf32>
    %c2_163 = arith.constant 2 : index
    %c0_164 = arith.constant 0 : index
    %c0_165 = arith.constant 0 : index
    %594 = vector.load %arg8[%c2_163, %c0_164, %c0_165] : memref<3x8x256xf32, #tpu.memory_space<vmem>>, vector<1x8x256xf32>
    %595 = vector.shape_cast %594 : vector<1x8x256xf32> to vector<8x256xf32>
    %c17_i32_166 = arith.constant 17 : i32
    %596 = tpu.dynamic_rotate %595 by %c17_i32_166 dim 1 : vector<8x256xf32>, i32 -> vector<8x256xf32>
    %c0_167 = arith.constant 0 : index
    %c0_168 = arith.constant 0 : index
    %597 = vector.load %arg2[%c0_167, %c0_168] : memref<9x256xf32, #tpu.memory_space<vmem>>, vector<1x256xf32>
    %598 = vector.broadcast %597 : vector<1x256xf32> to vector<8x256xf32>
    %599 = arith.mulf %596, %598 : vector<8x256xf32>
    %c18_169 = arith.constant 18 : index
    %600 = memref.load %arg5[%c18_169] : memref<27xf32, #tpu.memory_space<smem>>
    %601 = vector.broadcast %600 : f32 to vector<8x256xf32>
    %602 = arith.mulf %601, %599 : vector<8x256xf32>
    %603 = arith.addf %593, %602 : vector<8x256xf32>
    %c16_i32_170 = arith.constant 16 : i32
    %604 = tpu.dynamic_rotate %595 by %c16_i32_170 dim 1 : vector<8x256xf32>, i32 -> vector<8x256xf32>
    %c1_171 = arith.constant 1 : index
    %c0_172 = arith.constant 0 : index
    %605 = vector.load %arg2[%c1_171, %c0_172] : memref<9x256xf32, #tpu.memory_space<vmem>>, vector<1x256xf32>
    %606 = vector.broadcast %605 : vector<1x256xf32> to vector<8x256xf32>
    %607 = arith.mulf %604, %606 : vector<8x256xf32>
    %c19_173 = arith.constant 19 : index
    %608 = memref.load %arg5[%c19_173] : memref<27xf32, #tpu.memory_space<smem>>
    %609 = vector.broadcast %608 : f32 to vector<8x256xf32>
    %610 = arith.mulf %609, %607 : vector<8x256xf32>
    %611 = arith.addf %603, %610 : vector<8x256xf32>
    %c15_i32_174 = arith.constant 15 : i32
    %612 = tpu.dynamic_rotate %595 by %c15_i32_174 dim 1 : vector<8x256xf32>, i32 -> vector<8x256xf32>
    %c2_175 = arith.constant 2 : index
    %c0_176 = arith.constant 0 : index
    %613 = vector.load %arg2[%c2_175, %c0_176] : memref<9x256xf32, #tpu.memory_space<vmem>>, vector<1x256xf32>
    %614 = vector.broadcast %613 : vector<1x256xf32> to vector<8x256xf32>
    %615 = arith.mulf %612, %614 : vector<8x256xf32>
    %c20_177 = arith.constant 20 : index
    %616 = memref.load %arg5[%c20_177] : memref<27xf32, #tpu.memory_space<smem>>
    %617 = vector.broadcast %616 : f32 to vector<8x256xf32>
    %618 = arith.mulf %617, %615 : vector<8x256xf32>
    %619 = arith.addf %611, %618 : vector<8x256xf32>
    %c1_i32_178 = arith.constant 1 : i32
    %620 = tpu.dynamic_rotate %595 by %c1_i32_178 dim 1 : vector<8x256xf32>, i32 -> vector<8x256xf32>
    %c3_179 = arith.constant 3 : index
    %c0_180 = arith.constant 0 : index
    %621 = vector.load %arg2[%c3_179, %c0_180] : memref<9x256xf32, #tpu.memory_space<vmem>>, vector<1x256xf32>
    %622 = vector.broadcast %621 : vector<1x256xf32> to vector<8x256xf32>
    %623 = arith.mulf %620, %622 : vector<8x256xf32>
    %c21_181 = arith.constant 21 : index
    %624 = memref.load %arg5[%c21_181] : memref<27xf32, #tpu.memory_space<smem>>
    %625 = vector.broadcast %624 : f32 to vector<8x256xf32>
    %626 = arith.mulf %625, %623 : vector<8x256xf32>
    %627 = arith.addf %619, %626 : vector<8x256xf32>
    %c22_182 = arith.constant 22 : index
    %628 = memref.load %arg5[%c22_182] : memref<27xf32, #tpu.memory_space<smem>>
    %629 = vector.broadcast %628 : f32 to vector<8x256xf32>
    %630 = arith.mulf %629, %595 : vector<8x256xf32>
    %631 = arith.addf %627, %630 : vector<8x256xf32>
    %c255_i32_183 = arith.constant 255 : i32
    %632 = tpu.dynamic_rotate %595 by %c255_i32_183 dim 1 : vector<8x256xf32>, i32 -> vector<8x256xf32>
    %c5_184 = arith.constant 5 : index
    %c0_185 = arith.constant 0 : index
    %633 = vector.load %arg2[%c5_184, %c0_185] : memref<9x256xf32, #tpu.memory_space<vmem>>, vector<1x256xf32>
    %634 = vector.broadcast %633 : vector<1x256xf32> to vector<8x256xf32>
    %635 = arith.mulf %632, %634 : vector<8x256xf32>
    %c23_186 = arith.constant 23 : index
    %636 = memref.load %arg5[%c23_186] : memref<27xf32, #tpu.memory_space<smem>>
    %637 = vector.broadcast %636 : f32 to vector<8x256xf32>
    %638 = arith.mulf %637, %635 : vector<8x256xf32>
    %639 = arith.addf %631, %638 : vector<8x256xf32>
    %c241_i32_187 = arith.constant 241 : i32
    %640 = tpu.dynamic_rotate %595 by %c241_i32_187 dim 1 : vector<8x256xf32>, i32 -> vector<8x256xf32>
    %c6_188 = arith.constant 6 : index
    %c0_189 = arith.constant 0 : index
    %641 = vector.load %arg2[%c6_188, %c0_189] : memref<9x256xf32, #tpu.memory_space<vmem>>, vector<1x256xf32>
    %642 = vector.broadcast %641 : vector<1x256xf32> to vector<8x256xf32>
    %643 = arith.mulf %640, %642 : vector<8x256xf32>
    %c24_190 = arith.constant 24 : index
    %644 = memref.load %arg5[%c24_190] : memref<27xf32, #tpu.memory_space<smem>>
    %645 = vector.broadcast %644 : f32 to vector<8x256xf32>
    %646 = arith.mulf %645, %643 : vector<8x256xf32>
    %647 = arith.addf %639, %646 : vector<8x256xf32>
    %c240_i32_191 = arith.constant 240 : i32
    %648 = tpu.dynamic_rotate %595 by %c240_i32_191 dim 1 : vector<8x256xf32>, i32 -> vector<8x256xf32>
    %c7_192 = arith.constant 7 : index
    %c0_193 = arith.constant 0 : index
    %649 = vector.load %arg2[%c7_192, %c0_193] : memref<9x256xf32, #tpu.memory_space<vmem>>, vector<1x256xf32>
    %650 = vector.broadcast %649 : vector<1x256xf32> to vector<8x256xf32>
    %651 = arith.mulf %648, %650 : vector<8x256xf32>
    %c25_194 = arith.constant 25 : index
    %652 = memref.load %arg5[%c25_194] : memref<27xf32, #tpu.memory_space<smem>>
    %653 = vector.broadcast %652 : f32 to vector<8x256xf32>
    %654 = arith.mulf %653, %651 : vector<8x256xf32>
    %655 = arith.addf %647, %654 : vector<8x256xf32>
    %c239_i32_195 = arith.constant 239 : i32
    %656 = tpu.dynamic_rotate %595 by %c239_i32_195 dim 1 : vector<8x256xf32>, i32 -> vector<8x256xf32>
    %c8_196 = arith.constant 8 : index
    %c0_197 = arith.constant 0 : index
    %657 = vector.load %arg2[%c8_196, %c0_197] : memref<9x256xf32, #tpu.memory_space<vmem>>, vector<1x256xf32>
    %658 = vector.broadcast %657 : vector<1x256xf32> to vector<8x256xf32>
    %659 = arith.mulf %656, %658 : vector<8x256xf32>
    %c26_198 = arith.constant 26 : index
    %660 = memref.load %arg5[%c26_198] : memref<27xf32, #tpu.memory_space<smem>>
    %661 = vector.broadcast %660 : f32 to vector<8x256xf32>
    %662 = arith.mulf %661, %659 : vector<8x256xf32>
    %663 = arith.addf %655, %662 : vector<8x256xf32>
    %c0_199 = arith.constant 0 : index
    %664 = memref.load %arg6[%c0_199] : memref<1xf32, #tpu.memory_space<smem>>
    %665 = vector.broadcast %664 : f32 to vector<8x256xf32>
    %666 = arith.addf %663, %665 : vector<8x256xf32>
    %c0_200 = arith.constant 0 : index
    %c0_201 = arith.constant 0 : index
    %667 = vector.load %arg7[%c0_200, %c0_201] : memref<8x256xf32, #tpu.memory_space<vmem>>, vector<8x256xf32>
    tpu.vector_store %arg7[%c0_200, %c0_201], %666 {strides = array<i32>} : memref<8x256xf32, #tpu.memory_space<vmem>>, vector<8x256xf32>,
    return
  }
  func.func @transform_0(%arg0: i32) -> (i32, i32, i32) {
    %c0_i32 = arith.constant 0 : i32
    %c0_i32_0 = arith.constant 0 : i32
    %c0_i32_1 = arith.constant 0 : i32
    return %c0_i32, %arg0, %c0_i32_0 : i32, i32, i32
  }
  func.func @transform_1(%arg0: i32) -> (i32, i32) {
    %c0_i32 = arith.constant 0 : i32
    %c0_i32_0 = arith.constant 0 : i32
    %c0_i32_1 = arith.constant 0 : i32
    return %c0_i32, %c0_i32_0 : i32, i32
  }
  func.func @transform_2(%arg0: i32) -> i32 {
    %c0_i32 = arith.constant 0 : i32
    %c0_i32_0 = arith.constant 0 : i32
    return %c0_i32 : i32
  }
  func.func @transform_3(%arg0: i32) -> i32 {
    %c0_i32 = arith.constant 0 : i32
    %c0_i32_0 = arith.constant 0 : i32
    return %c0_i32 : i32
  }
  func.func @transform_4(%arg0: i32) -> i32 {
    %c0_i32 = arith.constant 0 : i32
    %c0_i32_0 = arith.constant 0 : i32
    return %c0_i32 : i32
  }
  func.func @transform_5(%arg0: i32) -> i32 {
    %c0_i32 = arith.constant 0 : i32
    %c0_i32_0 = arith.constant 0 : i32
    return %c0_i32 : i32
  }
  func.func @transform_6(%arg0: i32) -> (i32, i32) {
    %c0_i32 = arith.constant 0 : i32
    %c0_i32_0 = arith.constant 0 : i32
    return %arg0, %c0_i32 : i32, i32
  }
}

</mosaic_0001>

<llo_original>
// kernel: squeeze.2
$region0: #{squeeze.2}
  %s0 = inlined_call_operand.vmem [shape: f32[1,5,3,16,16], index: 0, kind: input, shape index: {}]
  %s1 = inlined_call_operand.vmem [shape: f32[5,3,256], index: 1, kind: output, shape index: {}]
  $region1: #{squeeze.2} parent=0
    #allocation0 [shape = 'u8[40960]{0}', space=vmem, size = 0xa000, scoped, tag = 'scoped mem for output reshape']
    %v2 = vld [vmem:[%s0] ss:$8 sm:$0xf]
    %v3 = vld [vmem:[%s0] ss:$8 sm:$0xf0]
    %vm4 = vcmask 1047556
    %v5 = vsel %vm4, %v3, %v2
    %vm6 = vcmask 130048
    %7 = vst.msk [vmem:[#allocation0] ss:$8 sm:$0x3] %vm6, %v5
    %s8 = scalar_lea.vmem [#allocation0], 4294967281
    %9 = vst.msk [vmem:[%s8] ss:$8 sm:$0xc] %vm6, %v5
    %s10 = scalar_lea.vmem [#allocation0], 4294967266
    %11 = vst.msk [vmem:[%s10] ss:$8 sm:$0x30] %vm6, %v5
    %s12 = scalar_lea.vmem [#allocation0], 4294967264
    %13 = vst.msk [vmem:[%s12] ss:$8 sm:$0xc0] %vm6, %v5
    %s14 = scalar_lea.vmem %s0, 64
    %v15 = vld [vmem:[%s14] ss:$8 sm:$0xf]
    %s16 = scalar_lea.vmem %s0, 64
    %v17 = vld [vmem:[%s16] ss:$8 sm:$0xf0]
    %vm18 = vcmask 1047556
    %v19 = vsel %vm18, %v17, %v15
    %vm20 = vcmask 130048
    %s21 = scalar_lea.vmem [#allocation0], 17
    %22 = vst.msk [vmem:[%s21] ss:$8 sm:$0x3] %vm20, %v19
    %s23 = scalar_lea.vmem [#allocation0], 2
    %24 = vst.msk [vmem:[%s23] ss:$8 sm:$0xc] %vm20, %v19
    %25 = vst.msk [vmem:[#allocation0] ss:$8 sm:$0x30] %vm20, %v19
    %s26 = scalar_lea.vmem [#allocation0], 4294967281
    %27 = vst.msk [vmem:[%s26] ss:$8 sm:$0xc0] %vm20, %v19
    %s28 = scalar_lea.vmem %s0, 128
    %v29 = vld [vmem:[%s28] ss:$8 sm:$0xf]
    %s30 = scalar_lea.vmem %s0, 128
    %v31 = vld [vmem:[%s30] ss:$8 sm:$0xf0]
    %vm32 = vcmask 1047556
    %v33 = vsel %vm32, %v31, %v29
    %vm34 = vcmask 130048
    %s35 = scalar_lea.vmem [#allocation0], 34
    %36 = vst.msk [vmem:[%s35] ss:$8 sm:$0x3] %vm34, %v33
    %s37 = scalar_lea.vmem [#allocation0], 32
    %38 = vst.msk [vmem:[%s37] ss:$8 sm:$0xc] %vm34, %v33
    %s39 = scalar_lea.vmem [#allocation0], 17
    %40 = vst.msk [vmem:[%s39] ss:$8 sm:$0x30] %vm34, %v33
    %s41 = scalar_lea.vmem [#allocation0], 2
    %42 = vst.msk [vmem:[%s41] ss:$8 sm:$0xc0] %vm34, %v33
    %s43 = scalar_lea.vmem %s0, 192
    %v44 = vld [vmem:[%s43] ss:$8 sm:$0xf]
    %s45 = scalar_lea.vmem %s0, 192
    %s46 = smov 48
    %v47 = vld [vmem:[%s45] ss:$8 sm:%s46]
    %vm48 = vcmask 1045508
    %v49 = vsel %vm48, %v47, %v44
    %vm50 = vcmask 130048
    %s51 = scalar_lea.vmem [#allocation0], 64
    %52 = vst.msk [vmem:[%s51] ss:$8 sm:$0x3] %vm50, %v49
    %s53 = scalar_lea.vmem [#allocation0], 49
    %54 = vst.msk [vmem:[%s53] ss:$8 sm:$0xc] %vm50, %v49
    %s55 = scalar_lea.vmem [#allocation0], 34
    %56 = vst.msk [vmem:[%s55] ss:$8 sm:$0x30] %vm50, %v49
    %s57 = scalar_lea.vmem %s0, 7
    %s58 = smov 3
    %v59 = vld [vmem:[%s57] ss:$16 sm:%s58]
    %s60 = scalar_lea.vmem %s0, 87
    %s61 = smov 12
    %v62 = vld [vmem:[%s60] ss:$-24 sm:%s61]
    %vm63 = vcmask 1043458
    %v64 = vsel %vm63, %v62, %v59
    %s65 = scalar_lea.vmem %s0, 4294967263
    %s66 = smov 48
    %v67 = vld [vmem:[%s65] ss:$16 sm:%s66]
    %vm68 = vcmask 1045508
    %v69 = vsel %vm68, %v67, %v64
    %s70 = scalar_lea.vmem %s0, 4294967255
    %s71 = smov 192
    %v72 = vld [vmem:[%s70] ss:$16 sm:%s71]
    %vm73 = vcmask 1047558
    %v74 = vsel %vm73, %v72, %v69
    %75 = vrot.lane.b32.xlu0 %v74, 112
    %v76 = vpop.permute.xlu0 %75
    %vm77 = vcmask 1048448
    %78 = vst.msk [vmem:[#allocation0] sm:$0x7] %vm77, %v76
    %s79 = scalar_lea.vmem [#allocation0], 5
    %80 = vst.msk [vmem:[%s79] sm:$0x38] %vm77, %v76
    %s81 = scalar_lea.vmem [#allocation0], 10
    %82 = vst.msk [vmem:[%s81] sm:$0xc0] %vm77, %v76
    %s83 = scalar_lea.vmem %s0, 103
    %s84 = smov 3
    %v85 = vld [vmem:[%s83] ss:$16 sm:%s84]
    %s86 = scalar_lea.vmem %s0, 183
    %s87 = smov 12
    %v88 = vld [vmem:[%s86] ss:$-24 sm:%s87]
    %vm89 = vcmask 1043458
    %v90 = vsel %vm89, %v88, %v85
    %s91 = scalar_lea.vmem %s0, 63
    %s92 = smov 48
    %v93 = vld [vmem:[%s91] ss:$16 sm:%s92]
    %vm94 = vcmask 1045508
    %v95 = vsel %vm94, %v93, %v90
    %s96 = scalar_lea.vmem %s0, 55
    %s97 = smov 192
    %v98 = vld [vmem:[%s96] ss:$16 sm:%s97]
    %vm99 = vcmask 1047558
    %v100 = vsel %vm99, %v98, %v95
    %101 = vrot.lane.b32.xlu0 %v100, 112
    %v102 = vpop.permute.xlu0 %101
    %vm103 = vcmask 1048448
    %s104 = scalar_lea.vmem [#allocation0], 32
    %105 = vst.msk [vmem:[%s104] sm:$0x7] %vm103, %v102
    %s106 = scalar_lea.vmem [#allocation0], 37
    %107 = vst.msk [vmem:[%s106] sm:$0x38] %vm103, %v102
    %s108 = scalar_lea.vmem [#allocation0], 42
    %109 = vst.msk [vmem:[%s108] sm:$0xc0] %vm103, %v102
    %s110 = scalar_lea.vmem %s0, 199
    %s111 = smov 3
    %v112 = vld [vmem:[%s110] ss:$16 sm:%s111]
    %s113 = scalar_lea.vmem %s0, 279
    %s114 = smov 12
    %v115 = vld [vmem:[%s113] ss:$-24 sm:%s114]
    %vm116 = vcmask 1043458
    %v117 = vsel %vm116, %v115, %v112
    %s118 = scalar_lea.vmem %s0, 159
    %s119 = smov 48
    %v120 = vld [vmem:[%s118] ss:$16 sm:%s119]
    %vm121 = vcmask 1045508
    %v122 = vsel %vm121, %v120, %v117
    %s123 = scalar_lea.vmem %s0, 231
    %s124 = smov 192
    %v125 = vld [vmem:[%s123] ss:$-24 sm:%s124]
    %vm126 = vcmask 1047558
    %v127 = vsel %vm126, %v125, %v122
    %128 = vrot.lane.b32.xlu0 %v127, 112
    %v129 = vpop.permute.xlu0 %128
    %vm130 = vcmask 1048448
    %s131 = scalar_lea.vmem [#allocation0], 64
    %132 = vst.msk [vmem:[%s131] sm:$0x7] %vm130, %v129
    %s133 = scalar_lea.vmem [#allocation0], 69
    %134 = vst.msk [vmem:[%s133] sm:$0x38] %vm130, %v129
    %s135 = scalar_lea.vmem [#allocation0], 4294967278
    %136 = vst.msk [vmem:[%s135] ss:$6 sm:$0xc0] %vm130, %v129
    %s137 = scalar_lea.vmem %s0, 183
    %s138 = smov 3
    %v139 = vld [vmem:[%s137] ss:$-24 sm:%s138]
    %s140 = scalar_lea.vmem %s0, 47
    %s141 = smov 12
    %v142 = vld [vmem:[%s140] ss:$16 sm:%s141]
    %vm143 = vcmask 1043458
    %v144 = vsel %vm143, %v142, %v139
    %s145 = scalar_lea.vmem %s0, 111
    %s146 = smov 48
    %v147 = vld [vmem:[%s145] ss:$16 sm:%s146]
    %vm148 = vcmask 1045508
    %v149 = vsel %vm148, %v147, %v144
    %150 = vrot.lane.b32.xlu0 %v149, 112
    %v151 = vpop.permute.xlu0 %150
    %vm152 = vcmask 1048448
    %s153 = scalar_lea.vmem [#allocation0], 50
    %154 = vst.msk [vmem:[%s153] ss:$6 sm:$0x3] %vm152, %v151
    %s155 = scalar_lea.vmem [#allocation0], 23
    %156 = vst.msk [vmem:[%s155] sm:$0xc] %vm152, %v151
    %s157 = scalar_lea.vmem [#allocation0], 53
    %158 = vst.msk [vmem:[%s157] sm:$0x30] %vm152, %v151
    %s159 = scalar_lea.vmem %s0, 6
    %s160 = smov 3
    %v161 = vld [vmem:[%s159] ss:$16 sm:%s160]
    %s162 = scalar_lea.vmem %s0, 86
    %s163 = smov 12
    %v164 = vld [vmem:[%s162] ss:$-24 sm:%s163]
    %vm165 = vcmask 1043458
    %v166 = vsel %vm165, %v164, %v161
    %s167 = scalar_lea.vmem %s0, 4294967262
    %s168 = smov 48
    %v169 = vld [vmem:[%s167] ss:$16 sm:%s168]
    %vm170 = vcmask 1045508
    %v171 = vsel %vm170, %v169, %v166
    %s172 = scalar_lea.vmem %s0, 4294967254
    %s173 = smov 192
    %v174 = vld [vmem:[%s172] ss:$16 sm:%s173]
    %vm175 = vcmask 1047558
    %v176 = vsel %vm175, %v174, %v171
    %177 = vrot.lane.b32.xlu0 %v176, 96
    %v178 = vpop.permute.xlu0 %177
    %vm179 = vcmask 917248
    %180 = vst.msk [vmem:[#allocation0] sm:$0x7] %vm179, %v178
    %s181 = scalar_lea.vmem [#allocation0], 5
    %182 = vst.msk [vmem:[%s181] sm:$0x38] %vm179, %v178
    %s183 = scalar_lea.vmem [#allocation0], 10
    %184 = vst.msk [vmem:[%s183] sm:$0xc0] %vm179, %v178
    %s185 = scalar_lea.vmem %s0, 102
    %s186 = smov 3
    %v187 = vld [vmem:[%s185] ss:$16 sm:%s186]
    %s188 = scalar_lea.vmem %s0, 182
    %s189 = smov 12
    %v190 = vld [vmem:[%s188] ss:$-24 sm:%s189]
    %vm191 = vcmask 1043458
    %v192 = vsel %vm191, %v190, %v187
    %s193 = scalar_lea.vmem %s0, 62
    %s194 = smov 48
    %v195 = vld [vmem:[%s193] ss:$16 sm:%s194]
    %vm196 = vcmask 1045508
    %v197 = vsel %vm196, %v195, %v192
    %s198 = scalar_lea.vmem %s0, 54
    %s199 = smov 192
    %v200 = vld [vmem:[%s198] ss:$16 sm:%s199]
    %vm201 = vcmask 1047558
    %v202 = vsel %vm201, %v200, %v197
    %203 = vrot.lane.b32.xlu0 %v202, 96
    %v204 = vpop.permute.xlu0 %203
    %vm205 = vcmask 917248
    %s206 = scalar_lea.vmem [#allocation0], 32
    %207 = vst.msk [vmem:[%s206] sm:$0x7] %vm205, %v204
    %s208 = scalar_lea.vmem [#allocation0], 37
    %209 = vst.msk [vmem:[%s208] sm:$0x38] %vm205, %v204
    %s210 = scalar_lea.vmem [#allocation0], 42
    %211 = vst.msk [vmem:[%s210] sm:$0xc0] %vm205, %v204
    %s212 = scalar_lea.vmem %s0, 198
    %s213 = smov 3
    %v214 = vld [vmem:[%s212] ss:$16 sm:%s213]
    %s215 = scalar_lea.vmem %s0, 278
    %s216 = smov 12
    %v217 = vld [vmem:[%s215] ss:$-24 sm:%s216]
    %vm218 = vcmask 1043458
    %v219 = vsel %vm218, %v217, %v214
    %s220 = scalar_lea.vmem %s0, 158
    %s221 = smov 48
    %v222 = vld [vmem:[%s220] ss:$16 sm:%s221]
    %vm223 = vcmask 1045508
    %v224 = vsel %vm223, %v222, %v219
    %s225 = scalar_lea.vmem %s0, 230
    %s226 = smov 192
    %v227 = vld [vmem:[%s225] ss:$-24 sm:%s226]
    %vm228 = vcmask 1047558
    %v229 = vsel %vm228, %v227, %v224
    %230 = vrot.lane.b32.xlu0 %v229, 96
    %v231 = vpop.permute.xlu0 %230
    %vm232 = vcmask 917248
    %s233 = scalar_lea.vmem [#allocation0], 64
    %234 = vst.msk [vmem:[%s233] sm:$0x7] %vm232, %v231
    %s235 = scalar_lea.vmem [#allocation0], 69
    %236 = vst.msk [vmem:[%s235] sm:$0x38] %vm232, %v231
    %s237 = scalar_lea.vmem [#allocation0], 4294967278
    %238 = vst.msk [vmem:[%s237] ss:$6 sm:$0xc0] %vm232, %v231
    %s239 = scalar_lea.vmem %s0, 182
    %s240 = smov 3
    %v241 = vld [vmem:[%s239] ss:$-24 sm:%s240]
    %s242 = scalar_lea.vmem %s0, 46
    %s243 = smov 12
    %v244 = vld [vmem:[%s242] ss:$16 sm:%s243]
    %vm245 = vcmask 1043458
    %v246 = vsel %vm245, %v244, %v241
    %s247 = scalar_lea.vmem %s0, 110
    %s248 = smov 48
    %v249 = vld [vmem:[%s247] ss:$16 sm:%s248]
    %vm250 = vcmask 1045508
    %v251 = vsel %vm250, %v249, %v246
    %252 = vrot.lane.b32.xlu0 %v251, 96
    %v253 = vpop.permute.xlu0 %252
    %vm254 = vcmask 917248
    %s255 = scalar_lea.vmem [#allocation0], 50
    %256 = vst.msk [vmem:[%s255] ss:$6 sm:$0x3] %vm254, %v253
    %s257 = scalar_lea.vmem [#allocation0], 23
    %258 = vst.msk [vmem:[%s257] sm:$0xc] %vm254, %v253
    %s259 = scalar_lea.vmem [#allocation0], 53
    %260 = vst.msk [vmem:[%s259] sm:$0x30] %vm254, %v253
    %s261 = scalar_lea.vmem %s0, 5
    %s262 = smov 3
    %v263 = vld [vmem:[%s261] ss:$16 sm:%s262]
    %s264 = scalar_lea.vmem %s0, 85
    %s265 = smov 12
    %v266 = vld [vmem:[%s264] ss:$-24 sm:%s265]
    %vm267 = vcmask 1043458
    %v268 = vsel %vm267, %v266, %v263
    %s269 = scalar_lea.vmem %s0, 4294967261
    %s270 = smov 48
    %v271 = vld [vmem:[%s269] ss:$16 sm:%s270]
    %vm272 = vcmask 1045508
    %v273 = vsel %vm272, %v271, %v268
    %s274 = scalar_lea.vmem %s0, 4294967253
    %s275 = smov 192
    %v276 = vld [vmem:[%s274] ss:$16 sm:%s275]
    %vm277 = vcmask 1047558
    %v278 = vsel %vm277, %v276, %v273
    %279 = vrot.lane.b32.xlu0 %v278, 80
    %v280 = vpop.permute.xlu0 %279
    %vm281 = vcmask 786048
    %282 = vst.msk [vmem:[#allocation0] sm:$0x7] %vm281, %v280
    %s283 = scalar_lea.vmem [#allocation0], 5
    %284 = vst.msk [vmem:[%s283] sm:$0x38] %vm281, %v280
    %s285 = scalar_lea.vmem [#allocation0], 10
    %286 = vst.msk [vmem:[%s285] sm:$0xc0] %vm281, %v280
    %s287 = scalar_lea.vmem %s0, 101
    %s288 = smov 3
    %v289 = vld [vmem:[%s287] ss:$16 sm:%s288]
    %s290 = scalar_lea.vmem %s0, 181
    %s291 = smov 12
    %v292 = vld [vmem:[%s290] ss:$-24 sm:%s291]
    %vm293 = vcmask 1043458
    %v294 = vsel %vm293, %v292, %v289
    %s295 = scalar_lea.vmem %s0, 61
    %s296 = smov 48
    %v297 = vld [vmem:[%s295] ss:$16 sm:%s296]
    %vm298 = vcmask 1045508
    %v299 = vsel %vm298, %v297, %v294
    %s300 = scalar_lea.vmem %s0, 53
    %s301 = smov 192
    %v302 = vld [vmem:[%s300] ss:$16 sm:%s301]
    %vm303 = vcmask 1047558
    %v304 = vsel %vm303, %v302, %v299
    %305 = vrot.lane.b32.xlu0 %v304, 80
    %v306 = vpop.permute.xlu0 %305
    %vm307 = vcmask 786048
    %s308 = scalar_lea.vmem [#allocation0], 32
    %309 = vst.msk [vmem:[%s308] sm:$0x7] %vm307, %v306
    %s310 = scalar_lea.vmem [#allocation0], 37
    %311 = vst.msk [vmem:[%s310] sm:$0x38] %vm307, %v306
    %s312 = scalar_lea.vmem [#allocation0], 42
    %313 = vst.msk [vmem:[%s312] sm:$0xc0] %vm307, %v306
    %s314 = scalar_lea.vmem %s0, 197
    %s315 = smov 3
    %v316 = vld [vmem:[%s314] ss:$16 sm:%s315]
    %s317 = scalar_lea.vmem %s0, 277
    %s318 = smov 12
    %v319 = vld [vmem:[%s317] ss:$-24 sm:%s318]
    %vm320 = vcmask 1043458
    %v321 = vsel %vm320, %v319, %v316
    %s322 = scalar_lea.vmem %s0, 157
    %s323 = smov 48
    %v324 = vld [vmem:[%s322] ss:$16 sm:%s323]
    %vm325 = vcmask 1045508
    %v326 = vsel %vm325, %v324, %v321
    %s327 = scalar_lea.vmem %s0, 229
    %s328 = smov 192
    %v329 = vld [vmem:[%s327] ss:$-24 sm:%s328]
    %vm330 = vcmask 1047558
    %v331 = vsel %vm330, %v329, %v326
    %332 = vrot.lane.b32.xlu0 %v331, 80
    %v333 = vpop.permute.xlu0 %332
    %vm334 = vcmask 786048
    %s335 = scalar_lea.vmem [#allocation0], 64
    %336 = vst.msk [vmem:[%s335] sm:$0x7] %vm334, %v333
    %s337 = scalar_lea.vmem [#allocation0], 69
    %338 = vst.msk [vmem:[%s337] sm:$0x38] %vm334, %v333
    %s339 = scalar_lea.vmem [#allocation0], 4294967278
    %340 = vst.msk [vmem:[%s339] ss:$6 sm:$0xc0] %vm334, %v333
    %s341 = scalar_lea.vmem %s0, 181
    %s342 = smov 3
    %v343 = vld [vmem:[%s341] ss:$-24 sm:%s342]
    %s344 = scalar_lea.vmem %s0, 45
    %s345 = smov 12
    %v346 = vld [vmem:[%s344] ss:$16 sm:%s345]
    %vm347 = vcmask 1043458
    %v348 = vsel %vm347, %v346, %v343
    %s349 = scalar_lea.vmem %s0, 109
    %s350 = smov 48
    %v351 = vld [vmem:[%s349] ss:$16 sm:%s350]
    %vm352 = vcmask 1045508
    %v353 = vsel %vm352, %v351, %v348
    %354 = vrot.lane.b32.xlu0 %v353, 80
    %v355 = vpop.permute.xlu0 %354
    %vm356 = vcmask 786048
    %s357 = scalar_lea.vmem [#allocation0], 50
    %358 = vst.msk [vmem:[%s357] ss:$6 sm:$0x3] %vm356, %v355
    %s359 = scalar_lea.vmem [#allocation0], 23
    %360 = vst.msk [vmem:[%s359] sm:$0xc] %vm356, %v355
    %s361 = scalar_lea.vmem [#allocation0], 53
    %362 = vst.msk [vmem:[%s361] sm:$0x30] %vm356, %v355
    %s363 = scalar_lea.vmem %s0, 4
    %s364 = smov 3
    %v365 = vld [vmem:[%s363] ss:$16 sm:%s364]
    %s366 = scalar_lea.vmem %s0, 84
    %s367 = smov 12
    %v368 = vld [vmem:[%s366] ss:$-24 sm:%s367]
    %vm369 = vcmask 1043458
    %v370 = vsel %vm369, %v368, %v365
    %s371 = scalar_lea.vmem %s0, 4294967260
    %s372 = smov 48
    %v373 = vld [vmem:[%s371] ss:$16 sm:%s372]
    %vm374 = vcmask 1045508
    %v375 = vsel %vm374, %v373, %v370
    %s376 = scalar_lea.vmem %s0, 4294967252
    %s377 = smov 192
    %v378 = vld [vmem:[%s376] ss:$16 sm:%s377]
    %vm379 = vcmask 1047558
    %v380 = vsel %vm379, %v378, %v375
    %381 = vrot.lane.b32.xlu0 %v380, 64
    %v382 = vpop.permute.xlu0 %381
    %vm383 = vcmask 654848
    %384 = vst.msk [vmem:[#allocation0] sm:$0x7] %vm383, %v382
    %s385 = scalar_lea.vmem [#allocation0], 5
    %386 = vst.msk [vmem:[%s385] sm:$0x38] %vm383, %v382
    %s387 = scalar_lea.vmem [#allocation0], 10
    %388 = vst.msk [vmem:[%s387] sm:$0xc0] %vm383, %v382
    %s389 = scalar_lea.vmem %s0, 100
    %s390 = smov 3
    %v391 = vld [vmem:[%s389] ss:$16 sm:%s390]
    %s392 = scalar_lea.vmem %s0, 180
    %s393 = smov 12
    %v394 = vld [vmem:[%s392] ss:$-24 sm:%s393]
    %vm395 = vcmask 1043458
    %v396 = vsel %vm395, %v394, %v391
    %s397 = scalar_lea.vmem %s0, 60
    %s398 = smov 48
    %v399 = vld [vmem:[%s397] ss:$16 sm:%s398]
    %vm400 = vcmask 1045508
    %v401 = vsel %vm400, %v399, %v396
    %s402 = scalar_lea.vmem %s0, 52
    %s403 = smov 192
    %v404 = vld [vmem:[%s402] ss:$16 sm:%s403]
    %vm405 = vcmask 1047558
    %v406 = vsel %vm405, %v404, %v401
    %407 = vrot.lane.b32.xlu0 %v406, 64
    %v408 = vpop.permute.xlu0 %407
    %vm409 = vcmask 654848
    %s410 = scalar_lea.vmem [#allocation0], 32
    %411 = vst.msk [vmem:[%s410] sm:$0x7] %vm409, %v408
    %s412 = scalar_lea.vmem [#allocation0], 37
    %413 = vst.msk [vmem:[%s412] sm:$0x38] %vm409, %v408
    %s414 = scalar_lea.vmem [#allocation0], 42
    %415 = vst.msk [vmem:[%s414] sm:$0xc0] %vm409, %v408
    %s416 = scalar_lea.vmem %s0, 196
    %s417 = smov 3
    %v418 = vld [vmem:[%s416] ss:$16 sm:%s417]
    %s419 = scalar_lea.vmem %s0, 276
    %s420 = smov 12
    %v421 = vld [vmem:[%s419] ss:$-24 sm:%s420]
    %vm422 = vcmask 1043458
    %v423 = vsel %vm422, %v421, %v418
    %s424 = scalar_lea.vmem %s0, 156
    %s425 = smov 48
    %v426 = vld [vmem:[%s424] ss:$16 sm:%s425]
    %vm427 = vcmask 1045508
    %v428 = vsel %vm427, %v426, %v423
    %s429 = scalar_lea.vmem %s0, 228
    %s430 = smov 192
    %v431 = vld [vmem:[%s429] ss:$-24 sm:%s430]
    %vm432 = vcmask 1047558
    %v433 = vsel %vm432, %v431, %v428
    %434 = vrot.lane.b32.xlu0 %v433, 64
    %v435 = vpop.permute.xlu0 %434
    %vm436 = vcmask 654848
    %s437 = scalar_lea.vmem [#allocation0], 64
    %438 = vst.msk [vmem:[%s437] sm:$0x7] %vm436, %v435
    %s439 = scalar_lea.vmem [#allocation0], 69
    %440 = vst.msk [vmem:[%s439] sm:$0x38] %vm436, %v435
    %s441 = scalar_lea.vmem [#allocation0], 4294967278
    %442 = vst.msk [vmem:[%s441] ss:$6 sm:$0xc0] %vm436, %v435
    %s443 = scalar_lea.vmem %s0, 180
    %s444 = smov 3
    %v445 = vld [vmem:[%s443] ss:$-24 sm:%s444]
    %s446 = scalar_lea.vmem %s0, 44
    %s447 = smov 12
    %v448 = vld [vmem:[%s446] ss:$16 sm:%s447]
    %vm449 = vcmask 1043458
    %v450 = vsel %vm449, %v448, %v445
    %s451 = scalar_lea.vmem %s0, 108
    %s452 = smov 48
    %v453 = vld [vmem:[%s451] ss:$16 sm:%s452]
    %vm454 = vcmask 1045508
    %v455 = vsel %vm454, %v453, %v450
    %456 = vrot.lane.b32.xlu0 %v455, 64
    %v457 = vpop.permute.xlu0 %456
    %vm458 = vcmask 654848
    %s459 = scalar_lea.vmem [#allocation0], 50
    %460 = vst.msk [vmem:[%s459] ss:$6 sm:$0x3] %vm458, %v457
    %s461 = scalar_lea.vmem [#allocation0], 23
    %462 = vst.msk [vmem:[%s461] sm:$0xc] %vm458, %v457
    %s463 = scalar_lea.vmem [#allocation0], 53
    %464 = vst.msk [vmem:[%s463] sm:$0x30] %vm458, %v457
    %s465 = scalar_lea.vmem %s0, 3
    %s466 = smov 3
    %v467 = vld [vmem:[%s465] ss:$16 sm:%s466]
    %s468 = scalar_lea.vmem %s0, 83
    %s469 = smov 12
    %v470 = vld [vmem:[%s468] ss:$-24 sm:%s469]
    %vm471 = vcmask 1043458
    %v472 = vsel %vm471, %v470, %v467
    %s473 = scalar_lea.vmem %s0, 4294967259
    %s474 = smov 48
    %v475 = vld [vmem:[%s473] ss:$16 sm:%s474]
    %vm476 = vcmask 1045508
    %v477 = vsel %vm476, %v475, %v472
    %s478 = scalar_lea.vmem %s0, 4294967251
    %s479 = smov 192
    %v480 = vld [vmem:[%s478] ss:$16 sm:%s479]
    %vm481 = vcmask 1047558
    %v482 = vsel %vm481, %v480, %v477
    %483 = vrot.lane.b32.xlu0 %v482, 48
    %v484 = vpop.permute.xlu0 %483
    %vm485 = vcmask 523648
    %486 = vst.msk [vmem:[#allocation0] sm:$0x7] %vm485, %v484
    %s487 = scalar_lea.vmem [#allocation0], 5
    %488 = vst.msk [vmem:[%s487] sm:$0x38] %vm485, %v484
    %s489 = scalar_lea.vmem [#allocation0], 10
    %490 = vst.msk [vmem:[%s489] sm:$0xc0] %vm485, %v484
    %s491 = scalar_lea.vmem %s0, 99
    %s492 = smov 3
    %v493 = vld [vmem:[%s491] ss:$16 sm:%s492]
    %s494 = scalar_lea.vmem %s0, 179
    %s495 = smov 12
    %v496 = vld [vmem:[%s494] ss:$-24 sm:%s495]
    %vm497 = vcmask 1043458
    %v498 = vsel %vm497, %v496, %v493
    %s499 = scalar_lea.vmem %s0, 59
    %s500 = smov 48
    %v501 = vld [vmem:[%s499] ss:$16 sm:%s500]
    %vm502 = vcmask 1045508
    %v503 = vsel %vm502, %v501, %v498
    %s504 = scalar_lea.vmem %s0, 51
    %s505 = smov 192
    %v506 = vld [vmem:[%s504] ss:$16 sm:%s505]
    %vm507 = vcmask 1047558
    %v508 = vsel %vm507, %v506, %v503
    %509 = vrot.lane.b32.xlu0 %v508, 48
    %v510 = vpop.permute.xlu0 %509
    %vm511 = vcmask 523648
    %s512 = scalar_lea.vmem [#allocation0], 32
    %513 = vst.msk [vmem:[%s512] sm:$0x7] %vm511, %v510
    %s514 = scalar_lea.vmem [#allocation0], 37
    %515 = vst.msk [vmem:[%s514] sm:$0x38] %vm511, %v510
    %s516 = scalar_lea.vmem [#allocation0], 42
    %517 = vst.msk [vmem:[%s516] sm:$0xc0] %vm511, %v510
    %s518 = scalar_lea.vmem %s0, 195
    %s519 = smov 3
    %v520 = vld [vmem:[%s518] ss:$16 sm:%s519]
    %s521 = scalar_lea.vmem %s0, 275
    %s522 = smov 12
    %v523 = vld [vmem:[%s521] ss:$-24 sm:%s522]
    %vm524 = vcmask 1043458
    %v525 = vsel %vm524, %v523, %v520
    %s526 = scalar_lea.vmem %s0, 155
    %s527 = smov 48
    %v528 = vld [vmem:[%s526] ss:$16 sm:%s527]
    %vm529 = vcmask 1045508
    %v530 = vsel %vm529, %v528, %v525
    %s531 = scalar_lea.vmem %s0, 227
    %s532 = smov 192
    %v533 = vld [vmem:[%s531] ss:$-24 sm:%s532]
    %vm534 = vcmask 1047558
    %v535 = vsel %vm534, %v533, %v530
    %536 = vrot.lane.b32.xlu0 %v535, 48
    %v537 = vpop.permute.xlu0 %536
    %vm538 = vcmask 523648
    %s539 = scalar_lea.vmem [#allocation0], 64
    %540 = vst.msk [vmem:[%s539] sm:$0x7] %vm538, %v537
    %s541 = scalar_lea.vmem [#allocation0], 69
    %542 = vst.msk [vmem:[%s541] sm:$0x38] %vm538, %v537
    %s543 = scalar_lea.vmem [#allocation0], 4294967278
    %544 = vst.msk [vmem:[%s543] ss:$6 sm:$0xc0] %vm538, %v537
    %s545 = scalar_lea.vmem %s0, 179
    %s546 = smov 3
    %v547 = vld [vmem:[%s545] ss:$-24 sm:%s546]
    %s548 = scalar_lea.vmem %s0, 43
    %s549 = smov 12
    %v550 = vld [vmem:[%s548] ss:$16 sm:%s549]
    %vm551 = vcmask 1043458
    %v552 = vsel %vm551, %v550, %v547
    %s553 = scalar_lea.vmem %s0, 107
    %s554 = smov 48
    %v555 = vld [vmem:[%s553] ss:$16 sm:%s554]
    %vm556 = vcmask 1045508
    %v557 = vsel %vm556, %v555, %v552
    %558 = vrot.lane.b32.xlu0 %v557, 48
    %v559 = vpop.permute.xlu0 %558
    %vm560 = vcmask 523648
    %s561 = scalar_lea.vmem [#allocation0], 50
    %562 = vst.msk [vmem:[%s561] ss:$6 sm:$0x3] %vm560, %v559
    %s563 = scalar_lea.vmem [#allocation0], 23
    %564 = vst.msk [vmem:[%s563] sm:$0xc] %vm560, %v559
    %s565 = scalar_lea.vmem [#allocation0], 53
    %566 = vst.msk [vmem:[%s565] sm:$0x30] %vm560, %v559
    %s567 = scalar_lea.vmem %s0, 2
    %s568 = smov 3
    %v569 = vld [vmem:[%s567] ss:$16 sm:%s568]
    %s570 = scalar_lea.vmem %s0, 82
    %s571 = smov 12
    %v572 = vld [vmem:[%s570] ss:$-24 sm:%s571]
    %vm573 = vcmask 1043458
    %v574 = vsel %vm573, %v572, %v569
    %s575 = scalar_lea.vmem %s0, 4294967258
    %s576 = smov 48
    %v577 = vld [vmem:[%s575] ss:$16 sm:%s576]
    %vm578 = vcmask 1045508
    %v579 = vsel %vm578, %v577, %v574
    %s580 = scalar_lea.vmem %s0, 4294967250
    %s581 = smov 192
    %v582 = vld [vmem:[%s580] ss:$16 sm:%s581]
    %vm583 = vcmask 1047558
    %v584 = vsel %vm583, %v582, %v579
    %585 = vrot.lane.b32.xlu0 %v584, 32
    %v586 = vpop.permute.xlu0 %585
    %vm587 = vcmask 392448
    %588 = vst.msk [vmem:[#allocation0] sm:$0x7] %vm587, %v586
    %s589 = scalar_lea.vmem [#allocation0], 5
    %590 = vst.msk [vmem:[%s589] sm:$0x38] %vm587, %v586
    %s591 = scalar_lea.vmem [#allocation0], 10
    %592 = vst.msk [vmem:[%s591] sm:$0xc0] %vm587, %v586
    %s593 = scalar_lea.vmem %s0, 98
    %s594 = smov 3
    %v595 = vld [vmem:[%s593] ss:$16 sm:%s594]
    %s596 = scalar_lea.vmem %s0, 178
    %s597 = smov 12
    %v598 = vld [vmem:[%s596] ss:$-24 sm:%s597]
    %vm599 = vcmask 1043458
    %v600 = vsel %vm599, %v598, %v595
    %s601 = scalar_lea.vmem %s0, 58
    %s602 = smov 48
    %v603 = vld [vmem:[%s601] ss:$16 sm:%s602]
    %vm604 = vcmask 1045508
    %v605 = vsel %vm604, %v603, %v600
    %s606 = scalar_lea.vmem %s0, 50
    %s607 = smov 192
    %v608 = vld [vmem:[%s606] ss:$16 sm:%s607]
    %vm609 = vcmask 1047558
    %v610 = vsel %vm609, %v608, %v605
    %611 = vrot.lane.b32.xlu0 %v610, 32
    %v612 = vpop.permute.xlu0 %611
    %vm613 = vcmask 392448
    %s614 = scalar_lea.vmem [#allocation0], 32
    %615 = vst.msk [vmem:[%s614] sm:$0x7] %vm613, %v612
    %s616 = scalar_lea.vmem [#allocation0], 37
    %617 = vst.msk [vmem:[%s616] sm:$0x38] %vm613, %v612
    %s618 = scalar_lea.vmem [#allocation0], 42
    %619 = vst.msk [vmem:[%s618] sm:$0xc0] %vm613, %v612
    %s620 = scalar_lea.vmem %s0, 194
    %s621 = smov 3
    %v622 = vld [vmem:[%s620] ss:$16 sm:%s621]
    %s623 = scalar_lea.vmem %s0, 274
    %s624 = smov 12
    %v625 = vld [vmem:[%s623] ss:$-24 sm:%s624]
    %vm626 = vcmask 1043458
    %v627 = vsel %vm626, %v625, %v622
    %s628 = scalar_lea.vmem %s0, 154
    %s629 = smov 48
    %v630 = vld [vmem:[%s628] ss:$16 sm:%s629]
    %vm631 = vcmask 1045508
    %v632 = vsel %vm631, %v630, %v627
    %s633 = scalar_lea.vmem %s0, 226
    %s634 = smov 192
    %v635 = vld [vmem:[%s633] ss:$-24 sm:%s634]
    %vm636 = vcmask 1047558
    %v637 = vsel %vm636, %v635, %v632
    %638 = vrot.lane.b32.xlu0 %v637, 32
    %v639 = vpop.permute.xlu0 %638
    %vm640 = vcmask 392448
    %s641 = scalar_lea.vmem [#allocation0], 64
    %642 = vst.msk [vmem:[%s641] sm:$0x7] %vm640, %v639
    %s643 = scalar_lea.vmem [#allocation0], 69
    %644 = vst.msk [vmem:[%s643] sm:$0x38] %vm640, %v639
    %s645 = scalar_lea.vmem [#allocation0], 4294967278
    %646 = vst.msk [vmem:[%s645] ss:$6 sm:$0xc0] %vm640, %v639
    %s647 = scalar_lea.vmem %s0, 178
    %s648 = smov 3
    %v649 = vld [vmem:[%s647] ss:$-24 sm:%s648]
    %s650 = scalar_lea.vmem %s0, 42
    %s651 = smov 12
    %v652 = vld [vmem:[%s650] ss:$16 sm:%s651]
    %vm653 = vcmask 1043458
    %v654 = vsel %vm653, %v652, %v649
    %s655 = scalar_lea.vmem %s0, 106
    %s656 = smov 48
    %v657 = vld [vmem:[%s655] ss:$16 sm:%s656]
    %vm658 = vcmask 1045508
    %v659 = vsel %vm658, %v657, %v654
    %660 = vrot.lane.b32.xlu0 %v659, 32
    %v661 = vpop.permute.xlu0 %660
    %vm662 = vcmask 392448
    %s663 = scalar_lea.vmem [#allocation0], 50
    %664 = vst.msk [vmem:[%s663] ss:$6 sm:$0x3] %vm662, %v661
    %s665 = scalar_lea.vmem [#allocation0], 23
    %666 = vst.msk [vmem:[%s665] sm:$0xc] %vm662, %v661
    %s667 = scalar_lea.vmem [#allocation0], 53
    %668 = vst.msk [vmem:[%s667] sm:$0x30] %vm662, %v661
    %s669 = scalar_lea.vmem %s0, 1
    %s670 = smov 3
    %v671 = vld [vmem:[%s669] ss:$16 sm:%s670]
    %s672 = scalar_lea.vmem %s0, 81
    %s673 = smov 12
    %v674 = vld [vmem:[%s672] ss:$-24 sm:%s673]
    %vm675 = vcmask 1043458
    %v676 = vsel %vm675, %v674, %v671
    %s677 = scalar_lea.vmem %s0, 4294967257
    %s678 = smov 48
    %v679 = vld [vmem:[%s677] ss:$16 sm:%s678]
    %vm680 = vcmask 1045508
    %v681 = vsel %vm680, %v679, %v676
    %s682 = scalar_lea.vmem %s0, 4294967249
    %s683 = smov 192
    %v684 = vld [vmem:[%s682] ss:$16 sm:%s683]
    %vm685 = vcmask 1047558
    %v686 = vsel %vm685, %v684, %v681
    %687 = vrot.lane.b32.xlu0 %v686, 16
    %v688 = vpop.permute.xlu0 %687
    %vm689 = vcmask 261248
    %690 = vst.msk [vmem:[#allocation0] sm:$0x7] %vm689, %v688
    %s691 = scalar_lea.vmem [#allocation0], 5
    %692 = vst.msk [vmem:[%s691] sm:$0x38] %vm689, %v688
    %s693 = scalar_lea.vmem [#allocation0], 10
    %694 = vst.msk [vmem:[%s693] sm:$0xc0] %vm689, %v688
    %s695 = scalar_lea.vmem %s0, 97
    %s696 = smov 3
    %v697 = vld [vmem:[%s695] ss:$16 sm:%s696]
    %s698 = scalar_lea.vmem %s0, 177
    %s699 = smov 12
    %v700 = vld [vmem:[%s698] ss:$-24 sm:%s699]
    %vm701 = vcmask 1043458
    %v702 = vsel %vm701, %v700, %v697
    %s703 = scalar_lea.vmem %s0, 57
    %s704 = smov 48
    %v705 = vld [vmem:[%s703] ss:$16 sm:%s704]
    %vm706 = vcmask 1045508
    %v707 = vsel %vm706, %v705, %v702
    %s708 = scalar_lea.vmem %s0, 49
    %s709 = smov 192
    %v710 = vld [vmem:[%s708] ss:$16 sm:%s709]
    %vm711 = vcmask 1047558
    %v712 = vsel %vm711, %v710, %v707
    %713 = vrot.lane.b32.xlu0 %v712, 16
    %v714 = vpop.permute.xlu0 %713
    %vm715 = vcmask 261248
    %s716 = scalar_lea.vmem [#allocation0], 32
    %717 = vst.msk [vmem:[%s716] sm:$0x7] %vm715, %v714
    %s718 = scalar_lea.vmem [#allocation0], 37
    %719 = vst.msk [vmem:[%s718] sm:$0x38] %vm715, %v714
    %s720 = scalar_lea.vmem [#allocation0], 42
    %721 = vst.msk [vmem:[%s720] sm:$0xc0] %vm715, %v714
    %s722 = scalar_lea.vmem %s0, 193
    %s723 = smov 3
    %v724 = vld [vmem:[%s722] ss:$16 sm:%s723]
    %s725 = scalar_lea.vmem %s0, 273
    %s726 = smov 12
    %v727 = vld [vmem:[%s725] ss:$-24 sm:%s726]
    %vm728 = vcmask 1043458
    %v729 = vsel %vm728, %v727, %v724
    %s730 = scalar_lea.vmem %s0, 153
    %s731 = smov 48
    %v732 = vld [vmem:[%s730] ss:$16 sm:%s731]
    %vm733 = vcmask 1045508
    %v734 = vsel %vm733, %v732, %v729
    %s735 = scalar_lea.vmem %s0, 225
    %s736 = smov 192
    %v737 = vld [vmem:[%s735] ss:$-24 sm:%s736]
    %vm738 = vcmask 1047558
    %v739 = vsel %vm738, %v737, %v734
    %740 = vrot.lane.b32.xlu0 %v739, 16
    %v741 = vpop.permute.xlu0 %740
    %vm742 = vcmask 261248
    %s743 = scalar_lea.vmem [#allocation0], 64
    %744 = vst.msk [vmem:[%s743] sm:$0x7] %vm742, %v741
    %s745 = scalar_lea.vmem [#allocation0], 69
    %746 = vst.msk [vmem:[%s745] sm:$0x38] %vm742, %v741
    %s747 = scalar_lea.vmem [#allocation0], 4294967278
    %748 = vst.msk [vmem:[%s747] ss:$6 sm:$0xc0] %vm742, %v741
    %s749 = scalar_lea.vmem %s0, 177
    %s750 = smov 3
    %v751 = vld [vmem:[%s749] ss:$-24 sm:%s750]
    %s752 = scalar_lea.vmem %s0, 41
    %s753 = smov 12
    %v754 = vld [vmem:[%s752] ss:$16 sm:%s753]
    %vm755 = vcmask 1043458
    %v756 = vsel %vm755, %v754, %v751
    %s757 = scalar_lea.vmem %s0, 105
    %s758 = smov 48
    %v759 = vld [vmem:[%s757] ss:$16 sm:%s758]
    %vm760 = vcmask 1045508
    %v761 = vsel %vm760, %v759, %v756
    %762 = vrot.lane.b32.xlu0 %v761, 16
    %v763 = vpop.permute.xlu0 %762
    %vm764 = vcmask 261248
    %s765 = scalar_lea.vmem [#allocation0], 50
    %766 = vst.msk [vmem:[%s765] ss:$6 sm:$0x3] %vm764, %v763
    %s767 = scalar_lea.vmem [#allocation0], 23
    %768 = vst.msk [vmem:[%s767] sm:$0xc] %vm764, %v763
    %s769 = scalar_lea.vmem [#allocation0], 53
    %770 = vst.msk [vmem:[%s769] sm:$0x30] %vm764, %v763
    %s772 = sshll.u32 1, 4
    %s773 = ssub.s32 %s772, 1
    %v775 = vld [vmem:[#allocation0] sm:%s773]
    %s776 = sshll.u32 1, 4
    %s777 = ssub.s32 %s776, 1
    %778 = vst [vmem:[%s1] sm:%s777] %v775
    %s779 = scalar_lea.vmem [#allocation0], 8
    %v780 = vld [vmem:[%s779] sm:%s773]
    %s781 = sshll.u32 1, 4
    %s782 = ssub.s32 %s781, 1
    %s783 = scalar_lea.vmem %s1, 4
    %784 = vst [vmem:[%s783] sm:%s782] %v780
    %s785 = scalar_lea.vmem [#allocation0], 16
    %v786 = vld [vmem:[%s785] sm:%s773]
    %s787 = sshll.u32 1, 4
    %s788 = ssub.s32 %s787, 1
    %s789 = smul.addr 4, 2
    %s790 = scalar_lea.vmem %s1, %s789
    %791 = vst [vmem:[%s790] sm:%s788] %v786
    %s792 = scalar_lea.vmem [#allocation0], 24
    %v793 = vld [vmem:[%s792] sm:%s773]
    %s794 = sshll.u32 1, 4
    %s795 = ssub.s32 %s794, 1
    %s796 = smul.addr 4, 3
    %s797 = scalar_lea.vmem %s1, %s796
    %798 = vst [vmem:[%s797] sm:%s795] %v793
    %s799 = scalar_lea.vmem [#allocation0], 32
    %v800 = vld [vmem:[%s799] sm:%s773]
    %s801 = sshll.u32 1, 4
    %s802 = ssub.s32 %s801, 1
    %s803 = smul.addr 4, 4
    %s804 = scalar_lea.vmem %s1, %s803
    %805 = vst [vmem:[%s804] sm:%s802] %v800
    %s806 = scalar_lea.vmem [#allocation0], 40
    %v807 = vld [vmem:[%s806] sm:%s773]
    %s808 = sshll.u32 1, 4
    %s809 = ssub.s32 %s808, 1
    %s810 = smul.addr 4, 5
    %s811 = scalar_lea.vmem %s1, %s810
    %812 = vst [vmem:[%s811] sm:%s809] %v807
    %s813 = scalar_lea.vmem [#allocation0], 48
    %v814 = vld [vmem:[%s813] sm:%s773]
    %s815 = sshll.u32 1, 4
    %s816 = ssub.s32 %s815, 1
    %s817 = smul.addr 4, 6
    %s818 = scalar_lea.vmem %s1, %s817
    %819 = vst [vmem:[%s818] sm:%s816] %v814
    %s820 = scalar_lea.vmem [#allocation0], 56
    %v821 = vld [vmem:[%s820] sm:%s773]
    %s822 = sshll.u32 1, 4
    %s823 = ssub.s32 %s822, 1
    %s824 = smul.addr 4, 7
    %s825 = scalar_lea.vmem %s1, %s824
    %826 = vst [vmem:[%s825] sm:%s823] %v821
    %s827 = scalar_lea.vmem [#allocation0], 64
    %v828 = vld [vmem:[%s827] sm:%s773]
    %s829 = sshll.u32 1, 4
    %s830 = ssub.s32 %s829, 1
    %s831 = smul.addr 4, 8
    %s832 = scalar_lea.vmem %s1, %s831
    %833 = vst [vmem:[%s832] sm:%s830] %v828
    %s834 = scalar_lea.vmem [#allocation0], 72
    %v835 = vld [vmem:[%s834] sm:%s773]
    %s836 = sshll.u32 1, 4
    %s837 = ssub.s32 %s836, 1
    %s838 = smul.addr 4, 9
    %s839 = scalar_lea.vmem %s1, %s838
    %840 = vst [vmem:[%s839] sm:%s837] %v835

// kernel: _lambda_.4
$region0: #{_lambda_.4}
  #allocation0 [shape = 'u32[]', space=smem, size = 0x4, offset = 0x4, fixed_abs, tag = 'smem constant byte address 0x4 - core index']
  #allocation1 [shape = 'u32[144,128]{1,0:T(1,128)}', space=vmem, size = 0x12000, scoped, tag = 'internal scratch']
  #allocation2 [shape = 'f32[3,8,256]{2,1,0:T(8,128)}', space=vmem, size = 0x6000, scoped, tag = 'scratch operand']
  #allocation3 [shape = 'f32[1]{0:T(128)S(6)}', space=smem, size = 0x200, scoped, tag = 'scoped memory for _lambda_.4']
  %s0 = inlined_call_operand.vmem [shape: f32[3,8,256], index: 0, kind: input, shape index: {}]
  %s1 = inlined_call_operand.vmem [shape: f32[9,256], index: 1, kind: input, shape index: {}]
  %s2 = inlined_call_operand.vmem [shape: f32[81], index: 2, kind: input, shape index: {}]
  %s3 = inlined_call_operand.vmem [shape: f32[3], index: 3, kind: input, shape index: {}]
  %s4 = inlined_call_operand.vmem [shape: f32[27], index: 4, kind: input, shape index: {}]
  %s5 = inlined_call_operand.<no memory space> [shape: f32[1], index: 5, kind: input, shape index: {}]
  %s6 = inlined_call_operand.vmem [shape: f32[8,256], index: 6, kind: output, shape index: {}]
  %s7 = sld [smem:[#allocation0]]
  $region46: #{_lambda_.4} parent=0
    _
  %s9 = ssub.s32 1, %s7
  %s10 = scalar_select 0, %s9, %s7
  %11 = sst [smem:[#allocation3]] %s5
  $region1: #{_lambda_.4} parent=0
    #allocation4 [shape = 'u8[512]{0}', space=smem, size = 0x200, scoped, tag = 'input window, operand 2, single buffered']
    #allocation5 [shape = 's32[1]{0}', space=sflag, size = 0x4, scoped, tag = 'scoped memory for _lambda_.4']
    #allocation6 [shape = 'u8[512]{0}', space=smem, size = 0x200, scoped, tag = 'input window, operand 3, single buffered']
    #allocation7 [shape = 's32[1]{0}', space=sflag, size = 0x4, scoped, tag = 'scoped memory for _lambda_.4']
    #allocation8 [shape = 'u8[512]{0}', space=smem, size = 0x200, scoped, tag = 'input window, operand 4, single buffered']
    %12 = vsyncpa [#allocation5], 0
    %13 = vsyncpa [#allocation7], 0
    // Predicated region
    $region2: #{_lambda_.4} parent=1 // pred_check
      _
    $region3: #{_lambda_.4} parent=1 // pred_check_branch
      %15 = sbr.rel (0) target = $region5
    $region4: #{_lambda_.4} parent=1 // pred_region
      _
    $region5: #{_lambda_.4} parent=1 // pred_fallthru
      _
    // Predicated region
    $region6: #{_lambda_.4} parent=1 // pred_check
      _
    $region7: #{_lambda_.4} parent=1 // pred_check_branch
      %17 = sbr.rel (0) target = $region9
    $region8: #{_lambda_.4} parent=1 // pred_region
      _
    $region9: #{_lambda_.4} parent=1 // pred_fallthru
      _
    // Predicated region
    $region10: #{_lambda_.4} parent=1 // pred_check
      _
    $region11: #{_lambda_.4} parent=1 // pred_check_branch
      %19 = sbr.rel (0) target = $region13
    $region12: #{_lambda_.4} parent=1 // pred_region
      %s21 = ssub.s32 16, 16
      %22 = vsyncadd [#allocation5], %s21
      %s24 = sshll.u32 %s2, 4
      %s25 = int_to_ptr.vmem [resolvable:$true] %s24
      %27 = dma.vmem_to_smem %s25, 16, [#allocation4], [#allocation5]
    $region13: #{_lambda_.4} parent=1 // pred_fallthru
      _
    // Predicated region
    $region14: #{_lambda_.4} parent=1 // pred_check
      _
    $region15: #{_lambda_.4} parent=1 // pred_check_branch
      %29 = sbr.rel (0) target = $region17
    $region16: #{_lambda_.4} parent=1 // pred_region
      %s31 = ssub.s32 16, 16
      %32 = vsyncadd [#allocation7], %s31
      %s34 = sshll.u32 %s3, 4
      %s35 = int_to_ptr.vmem [resolvable:$true] %s34
      %37 = dma.vmem_to_smem %s35, 16, [#allocation6], [#allocation7]
    $region17: #{_lambda_.4} parent=1 // pred_fallthru
      _
    // Predicated region
    $region18: #{_lambda_.4} parent=1 // pred_check
      _
    $region19: #{_lambda_.4} parent=1 // pred_check_branch
      %39 = sbr.rel (0) target = $region21
    $region20: #{_lambda_.4} parent=1 // pred_region
      %s41 = ssub.s32 16, 16
      %42 = vsyncadd [#allocation7], %s41
      %s44 = sshll.u32 %s4, 4
      %s45 = int_to_ptr.vmem [resolvable:$true] %s44
      %47 = dma.vmem_to_smem %s45, 16, [#allocation8], [#allocation7]
    $region21: #{_lambda_.4} parent=1 // pred_fallthru
      _
    // Predicated region
    $region22: #{_lambda_.4} parent=1 // pred_check
      _
    $region23: #{_lambda_.4} parent=1 // pred_check_branch
      %49 = sbr.rel (0) target = $region25
    $region24: #{_lambda_.4} parent=1 // pred_region
      _
    $region25: #{_lambda_.4} parent=1 // pred_fallthru
      _
    // Predicated region
    $region26: #{_lambda_.4} parent=1 // pred_check
      _
    $region27: #{_lambda_.4} parent=1 // pred_check_branch
      %51 = sbr.rel (0) target = $region29
    $region28: #{_lambda_.4} parent=1 // pred_region
      %52 = dma.done [#allocation5], 16
    $region29: #{_lambda_.4} parent=1 // pred_fallthru
      _
    // Predicated region
    $region30: #{_lambda_.4} parent=1 // pred_check
      _
    $region31: #{_lambda_.4} parent=1 // pred_check_branch
      %54 = sbr.rel (0) target = $region33
    $region32: #{_lambda_.4} parent=1 // pred_region
      %55 = dma.done [#allocation7], 16
    $region33: #{_lambda_.4} parent=1 // pred_fallthru
      _
    // Predicated region
    $region34: #{_lambda_.4} parent=1 // pred_check
      _
    $region35: #{_lambda_.4} parent=1 // pred_check_branch
      %57 = sbr.rel (0) target = $region37
    $region36: #{_lambda_.4} parent=1 // pred_region
      %58 = dma.done [#allocation7], 16
    $region37: #{_lambda_.4} parent=1 // pred_fallthru
      _
    %59 = sfence
    %v60 = vld [vmem:[%s0] sm:$0xff]
    %v61 = vld [vmem:[%s0 + $0x8] sm:$0xff]
    %62 = vrot.lane.b32.xlu0 %v60, 17
    %v63 = vpop.permute.xlu0 %62
    %64 = vrot.lane.b32.xlu0 %v61, 17
    %v65 = vpop.permute.xlu0 %64
    %v66 = vlaneseq
    %v67 = vand.u32 %v66, 127
    %vm68 = vcmp.lt.s32.totalorder %v67, 17
    %v69 = vsel %vm68, %v63, %v65
    %v70 = vsel %vm68, %v65, %v63
    %v71 = vld [vmem:[%s1] ss:$8 sm:$0x3]
    %v73 = vlaneseq
    %v74 = vshrl.u32 %v73, 7
    %v75 = vsub.s32 0, %v74
    %v76 = vrot.slane %v71, %v75
    %v77 = vlaneseq
    %v78 = vshrl.u32 %v77, 7
    %v79 = vsub.s32 1, %v78
    %v80 = vrot.slane %v71, %v79
    %v83 = vmul.f32 %v70, %v76
    %v84 = vmul.f32 %v69, %v80
    %s85 = sld [smem:[#allocation4]]
    %v86 = vstv %s85
    %v87 = vmul.f32 %v86, %v83
    %v88 = vmul.f32 %v86, %v84
    %v89 = vadd.f32 %v87, 0.0
    %v90 = vadd.f32 %v88, 0.0
    %s91 = sld [smem:[#allocation4 + $0x1b]]
    %v92 = vstv %s91
    %v93 = vmul.f32 %v92, %v83
    %v94 = vmul.f32 %v92, %v84
    %v95 = vadd.f32 %v93, 0.0
    %v96 = vadd.f32 %v94, 0.0
    %s97 = sld [smem:[#allocation4 + $0x36]]
    %v98 = vstv %s97
    %v99 = vmul.f32 %v98, %v83
    %v100 = vmul.f32 %v98, %v84
    %v101 = vadd.f32 %v99, 0.0
    %v102 = vadd.f32 %v100, 0.0
    %103 = vrot.lane.b32.xlu0 %v60, 16
    %v104 = vpop.permute.xlu0 %103
    %105 = vrot.lane.b32.xlu0 %v61, 16
    %v106 = vpop.permute.xlu0 %105
    %vm107 = vcmp.lt.s32.totalorder %v67, 16
    %v108 = vsel %vm107, %v104, %v106
    %v109 = vsel %vm107, %v106, %v104
    %s110 = scalar_lea.vmem %s1, 1
    %v111 = vld [vmem:[%s110] ss:$8 sm:$0x3]
    %v113 = vlaneseq
    %v114 = vshrl.u32 %v113, 7
    %v115 = vsub.s32 0, %v114
    %v116 = vrot.slane %v111, %v115
    %v117 = vlaneseq
    %v118 = vshrl.u32 %v117, 7
    %v119 = vsub.s32 1, %v118
    %v120 = vrot.slane %v111, %v119
    %v123 = vmul.f32 %v109, %v116
    %v124 = vmul.f32 %v108, %v120
    %s125 = sld [smem:[#allocation4 + $0x1]]
    %v126 = vstv %s125
    %v127 = vmul.f32 %v126, %v123
    %v128 = vmul.f32 %v126, %v124
    %v129 = vadd.f32 %v89, %v127
    %v130 = vadd.f32 %v90, %v128
    %s131 = sld [smem:[#allocation4 + $0x1c]]
    %v132 = vstv %s131
    %v133 = vmul.f32 %v132, %v123
    %v134 = vmul.f32 %v132, %v124
    %v135 = vadd.f32 %v95, %v133
    %v136 = vadd.f32 %v96, %v134
    %s137 = sld [smem:[#allocation4 + $0x37]]
    %v138 = vstv %s137
    %v139 = vmul.f32 %v138, %v123
    %v140 = vmul.f32 %v138, %v124
    %v141 = vadd.f32 %v101, %v139
    %v142 = vadd.f32 %v102, %v140
    %143 = vrot.lane.b32.xlu0 %v60, 15
    %v144 = vpop.permute.xlu0 %143
    %145 = vrot.lane.b32.xlu0 %v61, 15
    %v146 = vpop.permute.xlu0 %145
    %vm147 = vcmp.lt.s32.totalorder %v67, 15
    %v148 = vsel %vm147, %v144, %v146
    %v149 = vsel %vm147, %v146, %v144
    %s150 = scalar_lea.vmem %s1, 2
    %v151 = vld [vmem:[%s150] ss:$8 sm:$0x3]
    %v153 = vlaneseq
    %v154 = vshrl.u32 %v153, 7
    %v155 = vsub.s32 0, %v154
    %v156 = vrot.slane %v151, %v155
    %v157 = vlaneseq
    %v158 = vshrl.u32 %v157, 7
    %v159 = vsub.s32 1, %v158
    %v160 = vrot.slane %v151, %v159
    %v163 = vmul.f32 %v149, %v156
    %v164 = vmul.f32 %v148, %v160
    %s165 = sld [smem:[#allocation4 + $0x2]]
    %v166 = vstv %s165
    %v167 = vmul.f32 %v166, %v163
    %v168 = vmul.f32 %v166, %v164
    %v169 = vadd.f32 %v129, %v167
    %v170 = vadd.f32 %v130, %v168
    %s171 = sld [smem:[#allocation4 + $0x1d]]
    %v172 = vstv %s171
    %v173 = vmul.f32 %v172, %v163
    %v174 = vmul.f32 %v172, %v164
    %v175 = vadd.f32 %v135, %v173
    %v176 = vadd.f32 %v136, %v174
    %s177 = sld [smem:[#allocation4 + $0x38]]
    %v178 = vstv %s177
    %v179 = vmul.f32 %v178, %v163
    %v180 = vmul.f32 %v178, %v164
    %v181 = vadd.f32 %v141, %v179
    %v182 = vadd.f32 %v142, %v180
    %183 = vrot.lane.b32.xlu0 %v60, 1
    %v184 = vpop.permute.xlu0 %183
    %185 = vrot.lane.b32.xlu0 %v61, 1
    %v186 = vpop.permute.xlu0 %185
    %vm187 = vcmp.lt.s32.totalorder %v67, 1
    %v188 = vsel %vm187, %v184, %v186
    %v189 = vsel %vm187, %v186, %v184
    %s190 = scalar_lea.vmem %s1, 3
    %v191 = vld [vmem:[%s190] ss:$8 sm:$0x3]
    %v193 = vlaneseq
    %v194 = vshrl.u32 %v193, 7
    %v195 = vsub.s32 0, %v194
    %v196 = vrot.slane %v191, %v195
    %v197 = vlaneseq
    %v198 = vshrl.u32 %v197, 7
    %v199 = vsub.s32 1, %v198
    %v200 = vrot.slane %v191, %v199
    %v203 = vmul.f32 %v189, %v196
    %v204 = vmul.f32 %v188, %v200
    %s205 = sld [smem:[#allocation4 + $0x3]]
    %v206 = vstv %s205
    %v207 = vmul.f32 %v206, %v203
    %v208 = vmul.f32 %v206, %v204
    %v209 = vadd.f32 %v169, %v207
    %v210 = vadd.f32 %v170, %v208
    %s211 = sld [smem:[#allocation4 + $0x1e]]
    %v212 = vstv %s211
    %v213 = vmul.f32 %v212, %v203
    %v214 = vmul.f32 %v212, %v204
    %v215 = vadd.f32 %v175, %v213
    %v216 = vadd.f32 %v176, %v214
    %s217 = sld [smem:[#allocation4 + $0x39]]
    %v218 = vstv %s217
    %v219 = vmul.f32 %v218, %v203
    %v220 = vmul.f32 %v218, %v204
    %v221 = vadd.f32 %v181, %v219
    %v222 = vadd.f32 %v182, %v220
    %s223 = sld [smem:[#allocation4 + $0x4]]
    %v224 = vstv %s223
    %v225 = vmul.f32 %v224, %v60
    %v226 = vmul.f32 %v224, %v61
    %v227 = vadd.f32 %v209, %v225
    %v228 = vadd.f32 %v210, %v226
    %s229 = sld [smem:[#allocation4 + $0x1f]]
    %v230 = vstv %s229
    %v231 = vmul.f32 %v230, %v60
    %v232 = vmul.f32 %v230, %v61
    %v233 = vadd.f32 %v215, %v231
    %v234 = vadd.f32 %v216, %v232
    %s235 = sld [smem:[#allocation4 + $0x3a]]
    %v236 = vstv %s235
    %v237 = vmul.f32 %v236, %v60
    %v238 = vmul.f32 %v236, %v61
    %v239 = vadd.f32 %v221, %v237
    %v240 = vadd.f32 %v222, %v238
    %241 = vrot.lane.b32.xlu0 %v60, 127
    %v242 = vpop.permute.xlu0 %241
    %243 = vrot.lane.b32.xlu0 %v61, 127
    %v244 = vpop.permute.xlu0 %243
    %vm245 = vcmp.lt.s32.totalorder %v67, 127
    %v246 = vsel %vm245, %v242, %v244
    %v247 = vsel %vm245, %v244, %v242
    %s248 = scalar_lea.vmem %s1, 5
    %v249 = vld [vmem:[%s248] ss:$8 sm:$0x3]
    %v251 = vlaneseq
    %v252 = vshrl.u32 %v251, 7
    %v253 = vsub.s32 0, %v252
    %v254 = vrot.slane %v249, %v253
    %v255 = vlaneseq
    %v256 = vshrl.u32 %v255, 7
    %v257 = vsub.s32 1, %v256
    %v258 = vrot.slane %v249, %v257
    %v261 = vmul.f32 %v246, %v254
    %v262 = vmul.f32 %v247, %v258
    %s263 = sld [smem:[#allocation4 + $0x5]]
    %v264 = vstv %s263
    %v265 = vmul.f32 %v264, %v261
    %v266 = vmul.f32 %v264, %v262
    %v267 = vadd.f32 %v227, %v265
    %v268 = vadd.f32 %v228, %v266
    %s269 = sld [smem:[#allocation4 + $0x20]]
    %v270 = vstv %s269
    %v271 = vmul.f32 %v270, %v261
    %v272 = vmul.f32 %v270, %v262
    %v273 = vadd.f32 %v233, %v271
    %v274 = vadd.f32 %v234, %v272
    %s275 = sld [smem:[#allocation4 + $0x3b]]
    %v276 = vstv %s275
    %v277 = vmul.f32 %v276, %v261
    %v278 = vmul.f32 %v276, %v262
    %v279 = vadd.f32 %v239, %v277
    %v280 = vadd.f32 %v240, %v278
    %281 = vrot.lane.b32.xlu0 %v60, 113
    %v282 = vpop.permute.xlu0 %281
    %283 = vrot.lane.b32.xlu0 %v61, 113
    %v284 = vpop.permute.xlu0 %283
    %vm285 = vcmp.lt.s32.totalorder %v67, 113
    %v286 = vsel %vm285, %v282, %v284
    %v287 = vsel %vm285, %v284, %v282
    %s288 = scalar_lea.vmem %s1, 6
    %v289 = vld [vmem:[%s288] ss:$8 sm:$0x3]
    %v291 = vlaneseq
    %v292 = vshrl.u32 %v291, 7
    %v293 = vsub.s32 0, %v292
    %v294 = vrot.slane %v289, %v293
    %v295 = vlaneseq
    %v296 = vshrl.u32 %v295, 7
    %v297 = vsub.s32 1, %v296
    %v298 = vrot.slane %v289, %v297
    %v301 = vmul.f32 %v286, %v294
    %v302 = vmul.f32 %v287, %v298
    %s303 = sld [smem:[#allocation4 + $0x6]]
    %v304 = vstv %s303
    %v305 = vmul.f32 %v304, %v301
    %v306 = vmul.f32 %v304, %v302
    %v307 = vadd.f32 %v267, %v305
    %v308 = vadd.f32 %v268, %v306
    %s309 = sld [smem:[#allocation4 + $0x21]]
    %v310 = vstv %s309
    %v311 = vmul.f32 %v310, %v301
    %v312 = vmul.f32 %v310, %v302
    %v313 = vadd.f32 %v273, %v311
    %v314 = vadd.f32 %v274, %v312
    %s315 = sld [smem:[#allocation4 + $0x3c]]
    %v316 = vstv %s315
    %v317 = vmul.f32 %v316, %v301
    %v318 = vmul.f32 %v316, %v302
    %v319 = vadd.f32 %v279, %v317
    %v320 = vadd.f32 %v280, %v318
    %321 = vrot.lane.b32.xlu0 %v60, 112
    %v322 = vpop.permute.xlu0 %321
    %323 = vrot.lane.b32.xlu0 %v61, 112
    %v324 = vpop.permute.xlu0 %323
    %vm325 = vcmp.lt.s32.totalorder %v67, 112
    %v326 = vsel %vm325, %v322, %v324
    %v327 = vsel %vm325, %v324, %v322
    %s328 = scalar_lea.vmem %s1, 7
    %v329 = vld [vmem:[%s328] ss:$8 sm:$0x3]
    %v331 = vlaneseq
    %v332 = vshrl.u32 %v331, 7
    %v333 = vsub.s32 0, %v332
    %v334 = vrot.slane %v329, %v333
    %v335 = vlaneseq
    %v336 = vshrl.u32 %v335, 7
    %v337 = vsub.s32 1, %v336
    %v338 = vrot.slane %v329, %v337
    %v341 = vmul.f32 %v326, %v334
    %v342 = vmul.f32 %v327, %v338
    %s343 = sld [smem:[#allocation4 + $0x7]]
    %v344 = vstv %s343
    %v345 = vmul.f32 %v344, %v341
    %v346 = vmul.f32 %v344, %v342
    %v347 = vadd.f32 %v307, %v345
    %v348 = vadd.f32 %v308, %v346
    %s349 = sld [smem:[#allocation4 + $0x22]]
    %v350 = vstv %s349
    %v351 = vmul.f32 %v350, %v341
    %v352 = vmul.f32 %v350, %v342
    %v353 = vadd.f32 %v313, %v351
    %v354 = vadd.f32 %v314, %v352
    %s355 = sld [smem:[#allocation4 + $0x3d]]
    %v356 = vstv %s355
    %v357 = vmul.f32 %v356, %v341
    %v358 = vmul.f32 %v356, %v342
    %v359 = vadd.f32 %v319, %v357
    %v360 = vadd.f32 %v320, %v358
    %361 = vrot.lane.b32.xlu0 %v60, 111
    %v362 = vpop.permute.xlu0 %361
    %363 = vrot.lane.b32.xlu0 %v61, 111
    %v364 = vpop.permute.xlu0 %363
    %vm365 = vcmp.lt.s32.totalorder %v67, 111
    %v366 = vsel %vm365, %v362, %v364
    %v367 = vsel %vm365, %v364, %v362
    %s368 = scalar_lea.vmem %s1, 16
    %v369 = vld [vmem:[%s368] ss:$8 sm:$0x3]
    %v371 = vlaneseq
    %v372 = vshrl.u32 %v371, 7
    %v373 = vsub.s32 0, %v372
    %v374 = vrot.slane %v369, %v373
    %v375 = vlaneseq
    %v376 = vshrl.u32 %v375, 7
    %v377 = vsub.s32 1, %v376
    %v378 = vrot.slane %v369, %v377
    %v381 = vmul.f32 %v366, %v374
    %v382 = vmul.f32 %v367, %v378
    %s383 = sld [smem:[#allocation4 + $0x8]]
    %v384 = vstv %s383
    %v385 = vmul.f32 %v384, %v381
    %v386 = vmul.f32 %v384, %v382
    %v387 = vadd.f32 %v347, %v385
    %v388 = vadd.f32 %v348, %v386
    %s389 = sld [smem:[#allocation4 + $0x23]]
    %v390 = vstv %s389
    %v391 = vmul.f32 %v390, %v381
    %v392 = vmul.f32 %v390, %v382
    %v393 = vadd.f32 %v353, %v391
    %v394 = vadd.f32 %v354, %v392
    %s395 = sld [smem:[#allocation4 + $0x3e]]
    %v396 = vstv %s395
    %v397 = vmul.f32 %v396, %v381
    %v398 = vmul.f32 %v396, %v382
    %v399 = vadd.f32 %v359, %v397
    %v400 = vadd.f32 %v360, %v398
    %s401 = scalar_lea.vmem %s0, 16
    %v402 = vld [vmem:[%s401] sm:$0xff]
    %v403 = vld [vmem:[%s401 + $0x8] sm:$0xff]
    %404 = vrot.lane.b32.xlu0 %v402, 17
    %v405 = vpop.permute.xlu0 %404
    %406 = vrot.lane.b32.xlu0 %v403, 17
    %v407 = vpop.permute.xlu0 %406
    %v408 = vsel %vm68, %v405, %v407
    %v409 = vsel %vm68, %v407, %v405
    %v410 = vmul.f32 %v409, %v76
    %v411 = vmul.f32 %v408, %v80
    %s412 = sld [smem:[#allocation4 + $0x9]]
    %v413 = vstv %s412
    %v414 = vmul.f32 %v413, %v410
    %v415 = vmul.f32 %v413, %v411
    %v416 = vadd.f32 %v387, %v414
    %v417 = vadd.f32 %v388, %v415
    %s418 = sld [smem:[#allocation4 + $0x24]]
    %v419 = vstv %s418
    %v420 = vmul.f32 %v419, %v410
    %v421 = vmul.f32 %v419, %v411
    %v422 = vadd.f32 %v393, %v420
    %v423 = vadd.f32 %v394, %v421
    %s424 = sld [smem:[#allocation4 + $0x3f]]
    %v425 = vstv %s424
    %v426 = vmul.f32 %v425, %v410
    %v427 = vmul.f32 %v425, %v411
    %v428 = vadd.f32 %v399, %v426
    %v429 = vadd.f32 %v400, %v427
    %430 = vrot.lane.b32.xlu0 %v402, 16
    %v431 = vpop.permute.xlu0 %430
    %432 = vrot.lane.b32.xlu0 %v403, 16
    %v433 = vpop.permute.xlu0 %432
    %v434 = vsel %vm107, %v431, %v433
    %v435 = vsel %vm107, %v433, %v431
    %v436 = vmul.f32 %v435, %v116
    %v437 = vmul.f32 %v434, %v120
    %s438 = sld [smem:[#allocation4 + $0xa]]
    %v439 = vstv %s438
    %v440 = vmul.f32 %v439, %v436
    %v441 = vmul.f32 %v439, %v437
    %v442 = vadd.f32 %v416, %v440
    %v443 = vadd.f32 %v417, %v441
    %s444 = sld [smem:[#allocation4 + $0x25]]
    %v445 = vstv %s444
    %v446 = vmul.f32 %v445, %v436
    %v447 = vmul.f32 %v445, %v437
    %v448 = vadd.f32 %v422, %v446
    %v449 = vadd.f32 %v423, %v447
    %s450 = sld [smem:[#allocation4 + $0x40]]
    %v451 = vstv %s450
    %v452 = vmul.f32 %v451, %v436
    %v453 = vmul.f32 %v451, %v437
    %v454 = vadd.f32 %v428, %v452
    %v455 = vadd.f32 %v429, %v453
    %456 = vrot.lane.b32.xlu0 %v402, 15
    %v457 = vpop.permute.xlu0 %456
    %458 = vrot.lane.b32.xlu0 %v403, 15
    %v459 = vpop.permute.xlu0 %458
    %v460 = vsel %vm147, %v457, %v459
    %v461 = vsel %vm147, %v459, %v457
    %v462 = vmul.f32 %v461, %v156
    %v463 = vmul.f32 %v460, %v160
    %s464 = sld [smem:[#allocation4 + $0xb]]
    %v465 = vstv %s464
    %v466 = vmul.f32 %v465, %v462
    %v467 = vmul.f32 %v465, %v463
    %v468 = vadd.f32 %v442, %v466
    %v469 = vadd.f32 %v443, %v467
    %s470 = sld [smem:[#allocation4 + $0x26]]
    %v471 = vstv %s470
    %v472 = vmul.f32 %v471, %v462
    %v473 = vmul.f32 %v471, %v463
    %v474 = vadd.f32 %v448, %v472
    %v475 = vadd.f32 %v449, %v473
    %s476 = sld [smem:[#allocation4 + $0x41]]
    %v477 = vstv %s476
    %v478 = vmul.f32 %v477, %v462
    %v479 = vmul.f32 %v477, %v463
    %v480 = vadd.f32 %v454, %v478
    %v481 = vadd.f32 %v455, %v479
    %482 = vrot.lane.b32.xlu0 %v402, 1
    %v483 = vpop.permute.xlu0 %482
    %484 = vrot.lane.b32.xlu0 %v403, 1
    %v485 = vpop.permute.xlu0 %484
    %v486 = vsel %vm187, %v483, %v485
    %v487 = vsel %vm187, %v485, %v483
    %v488 = vmul.f32 %v487, %v196
    %v489 = vmul.f32 %v486, %v200
    %s490 = sld [smem:[#allocation4 + $0xc]]
    %v491 = vstv %s490
    %v492 = vmul.f32 %v491, %v488
    %v493 = vmul.f32 %v491, %v489
    %v494 = vadd.f32 %v468, %v492
    %v495 = vadd.f32 %v469, %v493
    %s496 = sld [smem:[#allocation4 + $0x27]]
    %v497 = vstv %s496
    %v498 = vmul.f32 %v497, %v488
    %v499 = vmul.f32 %v497, %v489
    %v500 = vadd.f32 %v474, %v498
    %v501 = vadd.f32 %v475, %v499
    %s502 = sld [smem:[#allocation4 + $0x42]]
    %v503 = vstv %s502
    %v504 = vmul.f32 %v503, %v488
    %v505 = vmul.f32 %v503, %v489
    %v506 = vadd.f32 %v480, %v504
    %v507 = vadd.f32 %v481, %v505
    %s508 = sld [smem:[#allocation4 + $0xd]]
    %v509 = vstv %s508
    %v510 = vmul.f32 %v509, %v402
    %v511 = vmul.f32 %v509, %v403
    %v512 = vadd.f32 %v494, %v510
    %v513 = vadd.f32 %v495, %v511
    %s514 = sld [smem:[#allocation4 + $0x28]]
    %v515 = vstv %s514
    %v516 = vmul.f32 %v515, %v402
    %v517 = vmul.f32 %v515, %v403
    %v518 = vadd.f32 %v500, %v516
    %v519 = vadd.f32 %v501, %v517
    %s520 = sld [smem:[#allocation4 + $0x43]]
    %v521 = vstv %s520
    %v522 = vmul.f32 %v521, %v402
    %v523 = vmul.f32 %v521, %v403
    %v524 = vadd.f32 %v506, %v522
    %v525 = vadd.f32 %v507, %v523
    %526 = vrot.lane.b32.xlu0 %v402, 127
    %v527 = vpop.permute.xlu0 %526
    %528 = vrot.lane.b32.xlu0 %v403, 127
    %v529 = vpop.permute.xlu0 %528
    %v530 = vsel %vm245, %v527, %v529
    %v531 = vsel %vm245, %v529, %v527
    %v532 = vmul.f32 %v530, %v254
    %v533 = vmul.f32 %v531, %v258
    %s534 = sld [smem:[#allocation4 + $0xe]]
    %v535 = vstv %s534
    %v536 = vmul.f32 %v535, %v532
    %v537 = vmul.f32 %v535, %v533
    %v538 = vadd.f32 %v512, %v536
    %v539 = vadd.f32 %v513, %v537
    %s540 = sld [smem:[#allocation4 + $0x29]]
    %v541 = vstv %s540
    %v542 = vmul.f32 %v541, %v532
    %v543 = vmul.f32 %v541, %v533
    %v544 = vadd.f32 %v518, %v542
    %v545 = vadd.f32 %v519, %v543
    %s546 = sld [smem:[#allocation4 + $0x44]]
    %v547 = vstv %s546
    %v548 = vmul.f32 %v547, %v532
    %v549 = vmul.f32 %v547, %v533
    %v550 = vadd.f32 %v524, %v548
    %v551 = vadd.f32 %v525, %v549
    %552 = vrot.lane.b32.xlu0 %v402, 113
    %v553 = vpop.permute.xlu0 %552
    %554 = vrot.lane.b32.xlu0 %v403, 113
    %v555 = vpop.permute.xlu0 %554
    %v556 = vsel %vm285, %v553, %v555
    %v557 = vsel %vm285, %v555, %v553
    %v558 = vmul.f32 %v556, %v294
    %v559 = vmul.f32 %v557, %v298
    %s560 = sld [smem:[#allocation4 + $0xf]]
    %v561 = vstv %s560
    %v562 = vmul.f32 %v561, %v558
    %v563 = vmul.f32 %v561, %v559
    %v564 = vadd.f32 %v538, %v562
    %v565 = vadd.f32 %v539, %v563
    %s566 = sld [smem:[#allocation4 + $0x2a]]
    %v567 = vstv %s566
    %v568 = vmul.f32 %v567, %v558
    %v569 = vmul.f32 %v567, %v559
    %v570 = vadd.f32 %v544, %v568
    %v571 = vadd.f32 %v545, %v569
    %s572 = sld [smem:[#allocation4 + $0x45]]
    %v573 = vstv %s572
    %v574 = vmul.f32 %v573, %v558
    %v575 = vmul.f32 %v573, %v559
    %v576 = vadd.f32 %v550, %v574
    %v577 = vadd.f32 %v551, %v575
    %578 = vrot.lane.b32.xlu0 %v402, 112
    %v579 = vpop.permute.xlu0 %578
    %580 = vrot.lane.b32.xlu0 %v403, 112
    %v581 = vpop.permute.xlu0 %580
    %v582 = vsel %vm325, %v579, %v581
    %v583 = vsel %vm325, %v581, %v579
    %v584 = vmul.f32 %v582, %v334
    %v585 = vmul.f32 %v583, %v338
    %s586 = sld [smem:[#allocation4 + $0x10]]
    %v587 = vstv %s586
    %v588 = vmul.f32 %v587, %v584
    %v589 = vmul.f32 %v587, %v585
    %v590 = vadd.f32 %v564, %v588
    %v591 = vadd.f32 %v565, %v589
    %s592 = sld [smem:[#allocation4 + $0x2b]]
    %v593 = vstv %s592
    %v594 = vmul.f32 %v593, %v584
    %v595 = vmul.f32 %v593, %v585
    %v596 = vadd.f32 %v570, %v594
    %v597 = vadd.f32 %v571, %v595
    %s598 = sld [smem:[#allocation4 + $0x46]]
    %v599 = vstv %s598
    %v600 = vmul.f32 %v599, %v584
    %v601 = vmul.f32 %v599, %v585
    %v602 = vadd.f32 %v576, %v600
    %v603 = vadd.f32 %v577, %v601
    %604 = vrot.lane.b32.xlu0 %v402, 111
    %v605 = vpop.permute.xlu0 %604
    %606 = vrot.lane.b32.xlu0 %v403, 111
    %v607 = vpop.permute.xlu0 %606
    %v608 = vsel %vm365, %v605, %v607
    %v609 = vsel %vm365, %v607, %v605
    %v610 = vmul.f32 %v608, %v374
    %v611 = vmul.f32 %v609, %v378
    %s612 = sld [smem:[#allocation4 + $0x11]]
    %v613 = vstv %s612
    %v614 = vmul.f32 %v613, %v610
    %v615 = vmul.f32 %v613, %v611
    %v616 = vadd.f32 %v590, %v614
    %v617 = vadd.f32 %v591, %v615
    %s618 = sld [smem:[#allocation4 + $0x2c]]
    %v619 = vstv %s618
    %v620 = vmul.f32 %v619, %v610
    %v621 = vmul.f32 %v619, %v611
    %v622 = vadd.f32 %v596, %v620
    %v623 = vadd.f32 %v597, %v621
    %s624 = sld [smem:[#allocation4 + $0x47]]
    %v625 = vstv %s624
    %v626 = vmul.f32 %v625, %v610
    %v627 = vmul.f32 %v625, %v611
    %v628 = vadd.f32 %v602, %v626
    %v629 = vadd.f32 %v603, %v627
    %s630 = scalar_lea.vmem %s0, 32
    %v631 = vld [vmem:[%s630] sm:$0xff]
    %v632 = vld [vmem:[%s630 + $0x8] sm:$0xff]
    %633 = vrot.lane.b32.xlu0 %v631, 17
    %v634 = vpop.permute.xlu0 %633
    %635 = vrot.lane.b32.xlu0 %v632, 17
    %v636 = vpop.permute.xlu0 %635
    %v637 = vsel %vm68, %v634, %v636
    %v638 = vsel %vm68, %v636, %v634
    %v639 = vmul.f32 %v638, %v76
    %v640 = vmul.f32 %v637, %v80
    %s641 = sld [smem:[#allocation4 + $0x12]]
    %v642 = vstv %s641
    %v643 = vmul.f32 %v642, %v639
    %v644 = vmul.f32 %v642, %v640
    %v645 = vadd.f32 %v616, %v643
    %v646 = vadd.f32 %v617, %v644
    %s647 = sld [smem:[#allocation4 + $0x2d]]
    %v648 = vstv %s647
    %v649 = vmul.f32 %v648, %v639
    %v650 = vmul.f32 %v648, %v640
    %v651 = vadd.f32 %v622, %v649
    %v652 = vadd.f32 %v623, %v650
    %s653 = sld [smem:[#allocation4 + $0x48]]
    %v654 = vstv %s653
    %v655 = vmul.f32 %v654, %v639
    %v656 = vmul.f32 %v654, %v640
    %v657 = vadd.f32 %v628, %v655
    %v658 = vadd.f32 %v629, %v656
    %659 = vrot.lane.b32.xlu0 %v631, 16
    %v660 = vpop.permute.xlu0 %659
    %661 = vrot.lane.b32.xlu0 %v632, 16
    %v662 = vpop.permute.xlu0 %661
    %v663 = vsel %vm107, %v660, %v662
    %v664 = vsel %vm107, %v662, %v660
    %v665 = vmul.f32 %v664, %v116
    %v666 = vmul.f32 %v663, %v120
    %s667 = sld [smem:[#allocation4 + $0x13]]
    %v668 = vstv %s667
    %v669 = vmul.f32 %v668, %v665
    %v670 = vmul.f32 %v668, %v666
    %v671 = vadd.f32 %v645, %v669
    %v672 = vadd.f32 %v646, %v670
    %s673 = sld [smem:[#allocation4 + $0x2e]]
    %v674 = vstv %s673
    %v675 = vmul.f32 %v674, %v665
    %v676 = vmul.f32 %v674, %v666
    %v677 = vadd.f32 %v651, %v675
    %v678 = vadd.f32 %v652, %v676
    %s679 = sld [smem:[#allocation4 + $0x49]]
    %v680 = vstv %s679
    %v681 = vmul.f32 %v680, %v665
    %v682 = vmul.f32 %v680, %v666
    %v683 = vadd.f32 %v657, %v681
    %v684 = vadd.f32 %v658, %v682
    %685 = vrot.lane.b32.xlu0 %v631, 15
    %v686 = vpop.permute.xlu0 %685
    %687 = vrot.lane.b32.xlu0 %v632, 15
    %v688 = vpop.permute.xlu0 %687
    %v689 = vsel %vm147, %v686, %v688
    %v690 = vsel %vm147, %v688, %v686
    %v691 = vmul.f32 %v690, %v156
    %v692 = vmul.f32 %v689, %v160
    %s693 = sld [smem:[#allocation4 + $0x14]]
    %v694 = vstv %s693
    %v695 = vmul.f32 %v694, %v691
    %v696 = vmul.f32 %v694, %v692
    %v697 = vadd.f32 %v671, %v695
    %v698 = vadd.f32 %v672, %v696
    %s699 = sld [smem:[#allocation4 + $0x2f]]
    %v700 = vstv %s699
    %v701 = vmul.f32 %v700, %v691
    %v702 = vmul.f32 %v700, %v692
    %v703 = vadd.f32 %v677, %v701
    %v704 = vadd.f32 %v678, %v702
    %s705 = sld [smem:[#allocation4 + $0x4a]]
    %v706 = vstv %s705
    %v707 = vmul.f32 %v706, %v691
    %v708 = vmul.f32 %v706, %v692
    %v709 = vadd.f32 %v683, %v707
    %v710 = vadd.f32 %v684, %v708
    %711 = vrot.lane.b32.xlu0 %v631, 1
    %v712 = vpop.permute.xlu0 %711
    %713 = vrot.lane.b32.xlu0 %v632, 1
    %v714 = vpop.permute.xlu0 %713
    %v715 = vsel %vm187, %v712, %v714
    %v716 = vsel %vm187, %v714, %v712
    %v717 = vmul.f32 %v716, %v196
    %v718 = vmul.f32 %v715, %v200
    %s719 = sld [smem:[#allocation4 + $0x15]]
    %v720 = vstv %s719
    %v721 = vmul.f32 %v720, %v717
    %v722 = vmul.f32 %v720, %v718
    %v723 = vadd.f32 %v697, %v721
    %v724 = vadd.f32 %v698, %v722
    %s725 = sld [smem:[#allocation4 + $0x30]]
    %v726 = vstv %s725
    %v727 = vmul.f32 %v726, %v717
    %v728 = vmul.f32 %v726, %v718
    %v729 = vadd.f32 %v703, %v727
    %v730 = vadd.f32 %v704, %v728
    %s731 = sld [smem:[#allocation4 + $0x4b]]
    %v732 = vstv %s731
    %v733 = vmul.f32 %v732, %v717
    %v734 = vmul.f32 %v732, %v718
    %v735 = vadd.f32 %v709, %v733
    %v736 = vadd.f32 %v710, %v734
    %s737 = sld [smem:[#allocation4 + $0x16]]
    %v738 = vstv %s737
    %v739 = vmul.f32 %v738, %v631
    %v740 = vmul.f32 %v738, %v632
    %v741 = vadd.f32 %v723, %v739
    %v742 = vadd.f32 %v724, %v740
    %s743 = sld [smem:[#allocation4 + $0x31]]
    %v744 = vstv %s743
    %v745 = vmul.f32 %v744, %v631
    %v746 = vmul.f32 %v744, %v632
    %v747 = vadd.f32 %v729, %v745
    %v748 = vadd.f32 %v730, %v746
    %s749 = sld [smem:[#allocation4 + $0x4c]]
    %v750 = vstv %s749
    %v751 = vmul.f32 %v750, %v631
    %v752 = vmul.f32 %v750, %v632
    %v753 = vadd.f32 %v735, %v751
    %v754 = vadd.f32 %v736, %v752
    %755 = vrot.lane.b32.xlu0 %v631, 127
    %v756 = vpop.permute.xlu0 %755
    %757 = vrot.lane.b32.xlu0 %v632, 127
    %v758 = vpop.permute.xlu0 %757
    %v759 = vsel %vm245, %v756, %v758
    %v760 = vsel %vm245, %v758, %v756
    %v761 = vmul.f32 %v759, %v254
    %v762 = vmul.f32 %v760, %v258
    %s763 = sld [smem:[#allocation4 + $0x17]]
    %v764 = vstv %s763
    %v765 = vmul.f32 %v764, %v761
    %v766 = vmul.f32 %v764, %v762
    %v767 = vadd.f32 %v741, %v765
    %v768 = vadd.f32 %v742, %v766
    %s769 = sld [smem:[#allocation4 + $0x32]]
    %v770 = vstv %s769
    %v771 = vmul.f32 %v770, %v761
    %v772 = vmul.f32 %v770, %v762
    %v773 = vadd.f32 %v747, %v771
    %v774 = vadd.f32 %v748, %v772
    %s775 = sld [smem:[#allocation4 + $0x4d]]
    %v776 = vstv %s775
    %v777 = vmul.f32 %v776, %v761
    %v778 = vmul.f32 %v776, %v762
    %v779 = vadd.f32 %v753, %v777
    %v780 = vadd.f32 %v754, %v778
    %781 = vrot.lane.b32.xlu0 %v631, 113
    %v782 = vpop.permute.xlu0 %781
    %783 = vrot.lane.b32.xlu0 %v632, 113
    %v784 = vpop.permute.xlu0 %783
    %v785 = vsel %vm285, %v782, %v784
    %v786 = vsel %vm285, %v784, %v782
    %v787 = vmul.f32 %v785, %v294
    %v788 = vmul.f32 %v786, %v298
    %s789 = sld [smem:[#allocation4 + $0x18]]
    %v790 = vstv %s789
    %v791 = vmul.f32 %v790, %v787
    %v792 = vmul.f32 %v790, %v788
    %v793 = vadd.f32 %v767, %v791
    %v794 = vadd.f32 %v768, %v792
    %s795 = sld [smem:[#allocation4 + $0x33]]
    %v796 = vstv %s795
    %v797 = vmul.f32 %v796, %v787
    %v798 = vmul.f32 %v796, %v788
    %v799 = vadd.f32 %v773, %v797
    %v800 = vadd.f32 %v774, %v798
    %s801 = sld [smem:[#allocation4 + $0x4e]]
    %v802 = vstv %s801
    %v803 = vmul.f32 %v802, %v787
    %v804 = vmul.f32 %v802, %v788
    %v805 = vadd.f32 %v779, %v803
    %v806 = vadd.f32 %v780, %v804
    %807 = vrot.lane.b32.xlu0 %v631, 112
    %v808 = vpop.permute.xlu0 %807
    %809 = vrot.lane.b32.xlu0 %v632, 112
    %v810 = vpop.permute.xlu0 %809
    %v811 = vsel %vm325, %v808, %v810
    %v812 = vsel %vm325, %v810, %v808
    %v813 = vmul.f32 %v811, %v334
    %v814 = vmul.f32 %v812, %v338
    %s815 = sld [smem:[#allocation4 + $0x19]]
    %v816 = vstv %s815
    %v817 = vmul.f32 %v816, %v813
    %v818 = vmul.f32 %v816, %v814
    %v819 = vadd.f32 %v793, %v817
    %v820 = vadd.f32 %v794, %v818
    %s821 = sld [smem:[#allocation4 + $0x34]]
    %v822 = vstv %s821
    %v823 = vmul.f32 %v822, %v813
    %v824 = vmul.f32 %v822, %v814
    %v825 = vadd.f32 %v799, %v823
    %v826 = vadd.f32 %v800, %v824
    %s827 = sld [smem:[#allocation4 + $0x4f]]
    %v828 = vstv %s827
    %v829 = vmul.f32 %v828, %v813
    %v830 = vmul.f32 %v828, %v814
    %v831 = vadd.f32 %v805, %v829
    %v832 = vadd.f32 %v806, %v830
    %833 = vrot.lane.b32.xlu0 %v631, 111
    %v834 = vpop.permute.xlu0 %833
    %835 = vrot.lane.b32.xlu0 %v632, 111
    %v836 = vpop.permute.xlu0 %835
    %v837 = vsel %vm365, %v834, %v836
    %v838 = vsel %vm365, %v836, %v834
    %v839 = vmul.f32 %v837, %v374
    %v840 = vmul.f32 %v838, %v378
    %s841 = sld [smem:[#allocation4 + $0x1a]]
    %v842 = vstv %s841
    %v843 = vmul.f32 %v842, %v839
    %v844 = vmul.f32 %v842, %v840
    %v845 = vadd.f32 %v819, %v843
    %v846 = vadd.f32 %v820, %v844
    %s847 = sld [smem:[#allocation4 + $0x35]]
    %v848 = vstv %s847
    %v849 = vmul.f32 %v848, %v839
    %v850 = vmul.f32 %v848, %v840
    %v851 = vadd.f32 %v825, %v849
    %v852 = vadd.f32 %v826, %v850
    %s853 = sld [smem:[#allocation4 + $0x50]]
    %v854 = vstv %s853
    %v855 = vmul.f32 %v854, %v839
    %v856 = vmul.f32 %v854, %v840
    %v857 = vadd.f32 %v831, %v855
    %v858 = vadd.f32 %v832, %v856
    %s859 = sld [smem:[#allocation6]]
    %v860 = vstv %s859
    %v861 = vadd.f32 %v845, %v860
    %v862 = vadd.f32 %v846, %v860
    %v863 = vmax.f32 %v861, 0.0
    %v864 = vmax.f32 %v862, 0.0
    %865 = vst [vmem:[#allocation2] sm:$0xff] %v863
    %866 = vst [vmem:[#allocation2 + $0x8] sm:$0xff] %v864
    %s867 = sld [smem:[#allocation6 + $0x1]]
    %v868 = vstv %s867
    %v869 = vadd.f32 %v851, %v868
    %v870 = vadd.f32 %v852, %v868
    %v871 = vmax.f32 %v869, 0.0
    %v872 = vmax.f32 %v870, 0.0
    %s873 = scalar_lea.vmem [#allocation2], 16
    %874 = vst [vmem:[%s873] sm:$0xff] %v871
    %875 = vst [vmem:[%s873 + $0x8] sm:$0xff] %v872
    %s876 = sld [smem:[#allocation6 + $0x2]]
    %v877 = vstv %s876
    %v878 = vadd.f32 %v857, %v877
    %v879 = vadd.f32 %v858, %v877
    %v880 = vmax.f32 %v878, 0.0
    %v881 = vmax.f32 %v879, 0.0
    %s882 = scalar_lea.vmem [#allocation2], 32
    %883 = vst [vmem:[%s882] sm:$0xff] %v880
    %884 = vst [vmem:[%s882 + $0x8] sm:$0xff] %v881
    %v885 = vld [vmem:[#allocation2] sm:$0xff]
    %v886 = vld [vmem:[#allocation2 + $0x8] sm:$0xff]
    %887 = vrot.lane.b32.xlu0 %v885, 17
    %v888 = vpop.permute.xlu0 %887
    %889 = vrot.lane.b32.xlu0 %v886, 17
    %v890 = vpop.permute.xlu0 %889
    %v891 = vsel %vm68, %v888, %v890
    %v892 = vsel %vm68, %v890, %v888
    %v893 = vld [vmem:[%s1] ss:$8 sm:$0x3]
    %v895 = vlaneseq
    %v896 = vshrl.u32 %v895, 7
    %v897 = vsub.s32 0, %v896
    %v898 = vrot.slane %v893, %v897
    %v899 = vlaneseq
    %v900 = vshrl.u32 %v899, 7
    %v901 = vsub.s32 1, %v900
    %v902 = vrot.slane %v893, %v901
    %v905 = vmul.f32 %v892, %v898
    %v906 = vmul.f32 %v891, %v902
    %s907 = sld [smem:[#allocation8]]
    %v908 = vstv %s907
    %v909 = vmul.f32 %v908, %v905
    %v910 = vmul.f32 %v908, %v906
    %v911 = vadd.f32 %v909, 0.0
    %v912 = vadd.f32 %v910, 0.0
    %913 = vrot.lane.b32.xlu0 %v885, 16
    %v914 = vpop.permute.xlu0 %913
    %915 = vrot.lane.b32.xlu0 %v886, 16
    %v916 = vpop.permute.xlu0 %915
    %v917 = vsel %vm107, %v914, %v916
    %v918 = vsel %vm107, %v916, %v914
    %v919 = vld [vmem:[%s110] ss:$8 sm:$0x3]
    %v921 = vlaneseq
    %v922 = vshrl.u32 %v921, 7
    %v923 = vsub.s32 0, %v922
    %v924 = vrot.slane %v919, %v923
    %v925 = vlaneseq
    %v926 = vshrl.u32 %v925, 7
    %v927 = vsub.s32 1, %v926
    %v928 = vrot.slane %v919, %v927
    %v931 = vmul.f32 %v918, %v924
    %v932 = vmul.f32 %v917, %v928
    %s933 = sld [smem:[#allocation8 + $0x1]]
    %v934 = vstv %s933
    %v935 = vmul.f32 %v934, %v931
    %v936 = vmul.f32 %v934, %v932
    %v937 = vadd.f32 %v911, %v935
    %v938 = vadd.f32 %v912, %v936
    %939 = vrot.lane.b32.xlu0 %v885, 15
    %v940 = vpop.permute.xlu0 %939
    %941 = vrot.lane.b32.xlu0 %v886, 15
    %v942 = vpop.permute.xlu0 %941
    %v943 = vsel %vm147, %v940, %v942
    %v944 = vsel %vm147, %v942, %v940
    %v945 = vld [vmem:[%s150] ss:$8 sm:$0x3]
    %v947 = vlaneseq
    %v948 = vshrl.u32 %v947, 7
    %v949 = vsub.s32 0, %v948
    %v950 = vrot.slane %v945, %v949
    %v951 = vlaneseq
    %v952 = vshrl.u32 %v951, 7
    %v953 = vsub.s32 1, %v952
    %v954 = vrot.slane %v945, %v953
    %v957 = vmul.f32 %v944, %v950
    %v958 = vmul.f32 %v943, %v954
    %s959 = sld [smem:[#allocation8 + $0x2]]
    %v960 = vstv %s959
    %v961 = vmul.f32 %v960, %v957
    %v962 = vmul.f32 %v960, %v958
    %v963 = vadd.f32 %v937, %v961
    %v964 = vadd.f32 %v938, %v962
    %965 = vrot.lane.b32.xlu0 %v885, 1
    %v966 = vpop.permute.xlu0 %965
    %967 = vrot.lane.b32.xlu0 %v886, 1
    %v968 = vpop.permute.xlu0 %967
    %v969 = vsel %vm187, %v966, %v968
    %v970 = vsel %vm187, %v968, %v966
    %v971 = vld [vmem:[%s190] ss:$8 sm:$0x3]
    %v973 = vlaneseq
    %v974 = vshrl.u32 %v973, 7
    %v975 = vsub.s32 0, %v974
    %v976 = vrot.slane %v971, %v975
    %v977 = vlaneseq
    %v978 = vshrl.u32 %v977, 7
    %v979 = vsub.s32 1, %v978
    %v980 = vrot.slane %v971, %v979
    %v983 = vmul.f32 %v970, %v976
    %v984 = vmul.f32 %v969, %v980
    %s985 = sld [smem:[#allocation8 + $0x3]]
    %v986 = vstv %s985
    %v987 = vmul.f32 %v986, %v983
    %v988 = vmul.f32 %v986, %v984
    %v989 = vadd.f32 %v963, %v987
    %v990 = vadd.f32 %v964, %v988
    %s991 = sld [smem:[#allocation8 + $0x4]]
    %v992 = vstv %s991
    %v993 = vmul.f32 %v992, %v885
    %v994 = vmul.f32 %v992, %v886
    %v995 = vadd.f32 %v989, %v993
    %v996 = vadd.f32 %v990, %v994
    %997 = vrot.lane.b32.xlu0 %v885, 127
    %v998 = vpop.permute.xlu0 %997
    %999 = vrot.lane.b32.xlu0 %v886, 127
    %v1000 = vpop.permute.xlu0 %999
    %v1001 = vsel %vm245, %v998, %v1000
    %v1002 = vsel %vm245, %v1000, %v998
    %v1003 = vld [vmem:[%s248] ss:$8 sm:$0x3]
    %v1005 = vlaneseq
    %v1006 = vshrl.u32 %v1005, 7
    %v1007 = vsub.s32 0, %v1006
    %v1008 = vrot.slane %v1003, %v1007
    %v1009 = vlaneseq
    %v1010 = vshrl.u32 %v1009, 7
    %v1011 = vsub.s32 1, %v1010
    %v1012 = vrot.slane %v1003, %v1011
    %v1015 = vmul.f32 %v1001, %v1008
    %v1016 = vmul.f32 %v1002, %v1012
    %s1017 = sld [smem:[#allocation8 + $0x5]]
    %v1018 = vstv %s1017
    %v1019 = vmul.f32 %v1018, %v1015
    %v1020 = vmul.f32 %v1018, %v1016
    %v1021 = vadd.f32 %v995, %v1019
    %v1022 = vadd.f32 %v996, %v1020
    %1023 = vrot.lane.b32.xlu0 %v885, 113
    %v1024 = vpop.permute.xlu0 %1023
    %1025 = vrot.lane.b32.xlu0 %v886, 113
    %v1026 = vpop.permute.xlu0 %1025
    %v1027 = vsel %vm285, %v1024, %v1026
    %v1028 = vsel %vm285, %v1026, %v1024
    %v1029 = vld [vmem:[%s288] ss:$8 sm:$0x3]
    %v1031 = vlaneseq
    %v1032 = vshrl.u32 %v1031, 7
    %v1033 = vsub.s32 0, %v1032
    %v1034 = vrot.slane %v1029, %v1033
    %v1035 = vlaneseq
    %v1036 = vshrl.u32 %v1035, 7
    %v1037 = vsub.s32 1, %v1036
    %v1038 = vrot.slane %v1029, %v1037
    %v1041 = vmul.f32 %v1027, %v1034
    %v1042 = vmul.f32 %v1028, %v1038
    %s1043 = sld [smem:[#allocation8 + $0x6]]
    %v1044 = vstv %s1043
    %v1045 = vmul.f32 %v1044, %v1041
    %v1046 = vmul.f32 %v1044, %v1042
    %v1047 = vadd.f32 %v1021, %v1045
    %v1048 = vadd.f32 %v1022, %v1046
    %1049 = vrot.lane.b32.xlu0 %v885, 112
    %v1050 = vpop.permute.xlu0 %1049
    %1051 = vrot.lane.b32.xlu0 %v886, 112
    %v1052 = vpop.permute.xlu0 %1051
    %v1053 = vsel %vm325, %v1050, %v1052
    %v1054 = vsel %vm325, %v1052, %v1050
    %v1055 = vld [vmem:[%s328] ss:$8 sm:$0x3]
    %v1057 = vlaneseq
    %v1058 = vshrl.u32 %v1057, 7
    %v1059 = vsub.s32 0, %v1058
    %v1060 = vrot.slane %v1055, %v1059
    %v1061 = vlaneseq
    %v1062 = vshrl.u32 %v1061, 7
    %v1063 = vsub.s32 1, %v1062
    %v1064 = vrot.slane %v1055, %v1063
    %v1067 = vmul.f32 %v1053, %v1060
    %v1068 = vmul.f32 %v1054, %v1064
    %s1069 = sld [smem:[#allocation8 + $0x7]]
    %v1070 = vstv %s1069
    %v1071 = vmul.f32 %v1070, %v1067
    %v1072 = vmul.f32 %v1070, %v1068
    %v1073 = vadd.f32 %v1047, %v1071
    %v1074 = vadd.f32 %v1048, %v1072
    %1075 = vrot.lane.b32.xlu0 %v885, 111
    %v1076 = vpop.permute.xlu0 %1075
    %1077 = vrot.lane.b32.xlu0 %v886, 111
    %v1078 = vpop.permute.xlu0 %1077
    %v1079 = vsel %vm365, %v1076, %v1078
    %v1080 = vsel %vm365, %v1078, %v1076
    %v1081 = vld [vmem:[%s368] ss:$8 sm:$0x3]
    %v1083 = vlaneseq
    %v1084 = vshrl.u32 %v1083, 7
    %v1085 = vsub.s32 0, %v1084
    %v1086 = vrot.slane %v1081, %v1085
    %v1087 = vlaneseq
    %v1088 = vshrl.u32 %v1087, 7
    %v1089 = vsub.s32 1, %v1088
    %v1090 = vrot.slane %v1081, %v1089
    %v1093 = vmul.f32 %v1079, %v1086
    %v1094 = vmul.f32 %v1080, %v1090
    %s1095 = sld [smem:[#allocation8 + $0x8]]
    %v1096 = vstv %s1095
    %v1097 = vmul.f32 %v1096, %v1093
    %v1098 = vmul.f32 %v1096, %v1094
    %v1099 = vadd.f32 %v1073, %v1097
    %v1100 = vadd.f32 %v1074, %v1098
    %v1101 = vld [vmem:[%s873] sm:$0xff]
    %v1102 = vld [vmem:[%s873 + $0x8] sm:$0xff]
    %1103 = vrot.lane.b32.xlu0 %v1101, 17
    %v1104 = vpop.permute.xlu0 %1103
    %1105 = vrot.lane.b32.xlu0 %v1102, 17
    %v1106 = vpop.permute.xlu0 %1105
    %v1107 = vsel %vm68, %v1104, %v1106
    %v1108 = vsel %vm68, %v1106, %v1104
    %v1109 = vmul.f32 %v1108, %v898
    %v1110 = vmul.f32 %v1107, %v902
    %s1111 = sld [smem:[#allocation8 + $0x9]]
    %v1112 = vstv %s1111
    %v1113 = vmul.f32 %v1112, %v1109
    %v1114 = vmul.f32 %v1112, %v1110
    %v1115 = vadd.f32 %v1099, %v1113
    %v1116 = vadd.f32 %v1100, %v1114
    %1117 = vrot.lane.b32.xlu0 %v1101, 16
    %v1118 = vpop.permute.xlu0 %1117
    %1119 = vrot.lane.b32.xlu0 %v1102, 16
    %v1120 = vpop.permute.xlu0 %1119
    %v1121 = vsel %vm107, %v1118, %v1120
    %v1122 = vsel %vm107, %v1120, %v1118
    %v1123 = vmul.f32 %v1122, %v924
    %v1124 = vmul.f32 %v1121, %v928
    %s1125 = sld [smem:[#allocation8 + $0xa]]
    %v1126 = vstv %s1125
    %v1127 = vmul.f32 %v1126, %v1123
    %v1128 = vmul.f32 %v1126, %v1124
    %v1129 = vadd.f32 %v1115, %v1127
    %v1130 = vadd.f32 %v1116, %v1128
    %1131 = vrot.lane.b32.xlu0 %v1101, 15
    %v1132 = vpop.permute.xlu0 %1131
    %1133 = vrot.lane.b32.xlu0 %v1102, 15
    %v1134 = vpop.permute.xlu0 %1133
    %v1135 = vsel %vm147, %v1132, %v1134
    %v1136 = vsel %vm147, %v1134, %v1132
    %v1137 = vmul.f32 %v1136, %v950
    %v1138 = vmul.f32 %v1135, %v954
    %s1139 = sld [smem:[#allocation8 + $0xb]]
    %v1140 = vstv %s1139
    %v1141 = vmul.f32 %v1140, %v1137
    %v1142 = vmul.f32 %v1140, %v1138
    %v1143 = vadd.f32 %v1129, %v1141
    %v1144 = vadd.f32 %v1130, %v1142
    %1145 = vrot.lane.b32.xlu0 %v1101, 1
    %v1146 = vpop.permute.xlu0 %1145
    %1147 = vrot.lane.b32.xlu0 %v1102, 1
    %v1148 = vpop.permute.xlu0 %1147
    %v1149 = vsel %vm187, %v1146, %v1148
    %v1150 = vsel %vm187, %v1148, %v1146
    %v1151 = vmul.f32 %v1150, %v976
    %v1152 = vmul.f32 %v1149, %v980
    %s1153 = sld [smem:[#allocation8 + $0xc]]
    %v1154 = vstv %s1153
    %v1155 = vmul.f32 %v1154, %v1151
    %v1156 = vmul.f32 %v1154, %v1152
    %v1157 = vadd.f32 %v1143, %v1155
    %v1158 = vadd.f32 %v1144, %v1156
    %s1159 = sld [smem:[#allocation8 + $0xd]]
    %v1160 = vstv %s1159
    %v1161 = vmul.f32 %v1160, %v1101
    %v1162 = vmul.f32 %v1160, %v1102
    %v1163 = vadd.f32 %v1157, %v1161
    %v1164 = vadd.f32 %v1158, %v1162
    %1165 = vrot.lane.b32.xlu0 %v1101, 127
    %v1166 = vpop.permute.xlu0 %1165
    %1167 = vrot.lane.b32.xlu0 %v1102, 127
    %v1168 = vpop.permute.xlu0 %1167
    %v1169 = vsel %vm245, %v1166, %v1168
    %v1170 = vsel %vm245, %v1168, %v1166
    %v1171 = vmul.f32 %v1169, %v1008
    %v1172 = vmul.f32 %v1170, %v1012
    %s1173 = sld [smem:[#allocation8 + $0xe]]
    %v1174 = vstv %s1173
    %v1175 = vmul.f32 %v1174, %v1171
    %v1176 = vmul.f32 %v1174, %v1172
    %v1177 = vadd.f32 %v1163, %v1175
    %v1178 = vadd.f32 %v1164, %v1176
    %1179 = vrot.lane.b32.xlu0 %v1101, 113
    %v1180 = vpop.permute.xlu0 %1179
    %1181 = vrot.lane.b32.xlu0 %v1102, 113
    %v1182 = vpop.permute.xlu0 %1181
    %v1183 = vsel %vm285, %v1180, %v1182
    %v1184 = vsel %vm285, %v1182, %v1180
    %v1185 = vmul.f32 %v1183, %v1034
    %v1186 = vmul.f32 %v1184, %v1038
    %s1187 = sld [smem:[#allocation8 + $0xf]]
    %v1188 = vstv %s1187
    %v1189 = vmul.f32 %v1188, %v1185
    %v1190 = vmul.f32 %v1188, %v1186
    %v1191 = vadd.f32 %v1177, %v1189
    %v1192 = vadd.f32 %v1178, %v1190
    %1193 = vrot.lane.b32.xlu0 %v1101, 112
    %v1194 = vpop.permute.xlu0 %1193
    %1195 = vrot.lane.b32.xlu0 %v1102, 112
    %v1196 = vpop.permute.xlu0 %1195
    %v1197 = vsel %vm325, %v1194, %v1196
    %v1198 = vsel %vm325, %v1196, %v1194
    %v1199 = vmul.f32 %v1197, %v1060
    %v1200 = vmul.f32 %v1198, %v1064
    %s1201 = sld [smem:[#allocation8 + $0x10]]
    %v1202 = vstv %s1201
    %v1203 = vmul.f32 %v1202, %v1199
    %v1204 = vmul.f32 %v1202, %v1200
    %v1205 = vadd.f32 %v1191, %v1203
    %v1206 = vadd.f32 %v1192, %v1204
    %1207 = vrot.lane.b32.xlu0 %v1101, 111
    %v1208 = vpop.permute.xlu0 %1207
    %1209 = vrot.lane.b32.xlu0 %v1102, 111
    %v1210 = vpop.permute.xlu0 %1209
    %v1211 = vsel %vm365, %v1208, %v1210
    %v1212 = vsel %vm365, %v1210, %v1208
    %v1213 = vmul.f32 %v1211, %v1086
    %v1214 = vmul.f32 %v1212, %v1090
    %s1215 = sld [smem:[#allocation8 + $0x11]]
    %v1216 = vstv %s1215
    %v1217 = vmul.f32 %v1216, %v1213
    %v1218 = vmul.f32 %v1216, %v1214
    %v1219 = vadd.f32 %v1205, %v1217
    %v1220 = vadd.f32 %v1206, %v1218
    %v1221 = vld [vmem:[%s882] sm:$0xff]
    %v1222 = vld [vmem:[%s882 + $0x8] sm:$0xff]
    %1223 = vrot.lane.b32.xlu0 %v1221, 17
    %v1224 = vpop.permute.xlu0 %1223
    %1225 = vrot.lane.b32.xlu0 %v1222, 17
    %v1226 = vpop.permute.xlu0 %1225
    %v1227 = vsel %vm68, %v1224, %v1226
    %v1228 = vsel %vm68, %v1226, %v1224
    %v1229 = vmul.f32 %v1228, %v898
    %v1230 = vmul.f32 %v1227, %v902
    %s1231 = sld [smem:[#allocation8 + $0x12]]
    %v1232 = vstv %s1231
    %v1233 = vmul.f32 %v1232, %v1229
    %v1234 = vmul.f32 %v1232, %v1230
    %v1235 = vadd.f32 %v1219, %v1233
    %v1236 = vadd.f32 %v1220, %v1234
    %1237 = vrot.lane.b32.xlu0 %v1221, 16
    %v1238 = vpop.permute.xlu0 %1237
    %1239 = vrot.lane.b32.xlu0 %v1222, 16
    %v1240 = vpop.permute.xlu0 %1239
    %v1241 = vsel %vm107, %v1238, %v1240
    %v1242 = vsel %vm107, %v1240, %v1238
    %v1243 = vmul.f32 %v1242, %v924
    %v1244 = vmul.f32 %v1241, %v928
    %s1245 = sld [smem:[#allocation8 + $0x13]]
    %v1246 = vstv %s1245
    %v1247 = vmul.f32 %v1246, %v1243
    %v1248 = vmul.f32 %v1246, %v1244
    %v1249 = vadd.f32 %v1235, %v1247
    %v1250 = vadd.f32 %v1236, %v1248
    %1251 = vrot.lane.b32.xlu0 %v1221, 15
    %v1252 = vpop.permute.xlu0 %1251
    %1253 = vrot.lane.b32.xlu0 %v1222, 15
    %v1254 = vpop.permute.xlu0 %1253
    %v1255 = vsel %vm147, %v1252, %v1254
    %v1256 = vsel %vm147, %v1254, %v1252
    %v1257 = vmul.f32 %v1256, %v950
    %v1258 = vmul.f32 %v1255, %v954
    %s1259 = sld [smem:[#allocation8 + $0x14]]
    %v1260 = vstv %s1259
    %v1261 = vmul.f32 %v1260, %v1257
    %v1262 = vmul.f32 %v1260, %v1258
    %v1263 = vadd.f32 %v1249, %v1261
    %v1264 = vadd.f32 %v1250, %v1262
    %1265 = vrot.lane.b32.xlu0 %v1221, 1
    %v1266 = vpop.permute.xlu0 %1265
    %1267 = vrot.lane.b32.xlu0 %v1222, 1
    %v1268 = vpop.permute.xlu0 %1267
    %v1269 = vsel %vm187, %v1266, %v1268
    %v1270 = vsel %vm187, %v1268, %v1266
    %v1271 = vmul.f32 %v1270, %v976
    %v1272 = vmul.f32 %v1269, %v980
    %s1273 = sld [smem:[#allocation8 + $0x15]]
    %v1274 = vstv %s1273
    %v1275 = vmul.f32 %v1274, %v1271
    %v1276 = vmul.f32 %v1274, %v1272
    %v1277 = vadd.f32 %v1263, %v1275
    %v1278 = vadd.f32 %v1264, %v1276
    %s1279 = sld [smem:[#allocation8 + $0x16]]
    %v1280 = vstv %s1279
    %v1281 = vmul.f32 %v1280, %v1221
    %v1282 = vmul.f32 %v1280, %v1222
    %v1283 = vadd.f32 %v1277, %v1281
    %v1284 = vadd.f32 %v1278, %v1282
    %1285 = vrot.lane.b32.xlu0 %v1221, 127
    %v1286 = vpop.permute.xlu0 %1285
    %1287 = vrot.lane.b32.xlu0 %v1222, 127
    %v1288 = vpop.permute.xlu0 %1287
    %v1289 = vsel %vm245, %v1286, %v1288
    %v1290 = vsel %vm245, %v1288, %v1286
    %v1291 = vmul.f32 %v1289, %v1008
    %v1292 = vmul.f32 %v1290, %v1012
    %s1293 = sld [smem:[#allocation8 + $0x17]]
    %v1294 = vstv %s1293
    %v1295 = vmul.f32 %v1294, %v1291
    %v1296 = vmul.f32 %v1294, %v1292
    %v1297 = vadd.f32 %v1283, %v1295
    %v1298 = vadd.f32 %v1284, %v1296
    %1299 = vrot.lane.b32.xlu0 %v1221, 113
    %v1300 = vpop.permute.xlu0 %1299
    %1301 = vrot.lane.b32.xlu0 %v1222, 113
    %v1302 = vpop.permute.xlu0 %1301
    %v1303 = vsel %vm285, %v1300, %v1302
    %v1304 = vsel %vm285, %v1302, %v1300
    %v1305 = vmul.f32 %v1303, %v1034
    %v1306 = vmul.f32 %v1304, %v1038
    %s1307 = sld [smem:[#allocation8 + $0x18]]
    %v1308 = vstv %s1307
    %v1309 = vmul.f32 %v1308, %v1305
    %v1310 = vmul.f32 %v1308, %v1306
    %v1311 = vadd.f32 %v1297, %v1309
    %v1312 = vadd.f32 %v1298, %v1310
    %1313 = vrot.lane.b32.xlu0 %v1221, 112
    %v1314 = vpop.permute.xlu0 %1313
    %1315 = vrot.lane.b32.xlu0 %v1222, 112
    %v1316 = vpop.permute.xlu0 %1315
    %v1317 = vsel %vm325, %v1314, %v1316
    %v1318 = vsel %vm325, %v1316, %v1314
    %v1319 = vmul.f32 %v1317, %v1060
    %v1320 = vmul.f32 %v1318, %v1064
    %s1321 = sld [smem:[#allocation8 + $0x19]]
    %v1322 = vstv %s1321
    %v1323 = vmul.f32 %v1322, %v1319
    %v1324 = vmul.f32 %v1322, %v1320
    %v1325 = vadd.f32 %v1311, %v1323
    %v1326 = vadd.f32 %v1312, %v1324
    %1327 = vrot.lane.b32.xlu0 %v1221, 111
    %v1328 = vpop.permute.xlu0 %1327
    %1329 = vrot.lane.b32.xlu0 %v1222, 111
    %v1330 = vpop.permute.xlu0 %1329
    %v1331 = vsel %vm365, %v1328, %v1330
    %v1332 = vsel %vm365, %v1330, %v1328
    %v1333 = vmul.f32 %v1331, %v1086
    %v1334 = vmul.f32 %v1332, %v1090
    %s1335 = sld [smem:[#allocation8 + $0x1a]]
    %v1336 = vstv %s1335
    %v1337 = vmul.f32 %v1336, %v1333
    %v1338 = vmul.f32 %v1336, %v1334
    %v1339 = vadd.f32 %v1325, %v1337
    %v1340 = vadd.f32 %v1326, %v1338
    %s1341 = sld [smem:[#allocation3]]
    %v1342 = vstv %s1341
    %v1343 = vadd.f32 %v1339, %v1342
    %v1344 = vadd.f32 %v1340, %v1342
    %1345 = vst [vmem:[%s6] sm:$0xff] %v1343
    %1346 = vst [vmem:[%s6 + $0x8] sm:$0xff] %v1344
    // Predicated region
    $region38: #{_lambda_.4} parent=1 // pred_check
      _
    $region39: #{_lambda_.4} parent=1 // pred_check_branch
      %1348 = sbr.rel (0) target = $region41
    $region40: #{_lambda_.4} parent=1 // pred_region
      _
    $region41: #{_lambda_.4} parent=1 // pred_fallthru
      _
    // Predicated region
    $region42: #{_lambda_.4} parent=1 // pred_check
      _
    $region43: #{_lambda_.4} parent=1 // pred_check_branch
      %1350 = sbr.rel (0) target = $region45
    $region44: #{_lambda_.4} parent=1 // pred_region
      _
    $region45: #{_lambda_.4} parent=1 // pred_fallthru
      _
    %1351 = vsyncpa [#allocation5], 1
    %1352 = vsyncpa [#allocation7], 1

// kernel: _lambda_.3
$region0: #{_lambda_.3}
  #allocation0 [shape = 'u32[]', space=smem, size = 0x4, offset = 0x4, fixed_abs, tag = 'smem constant byte address 0x4 - core index']
  #allocation1 [shape = 'u32[144,128]{1,0:T(1,128)}', space=vmem, size = 0x12000, scoped, tag = 'internal scratch']
  #allocation2 [shape = 'f32[3,8,256]{2,1,0:T(8,128)}', space=vmem, size = 0x6000, scoped, tag = 'scratch operand']
  #allocation3 [shape = 'f32[1]{0:T(128)S(6)}', space=smem, size = 0x200, scoped, tag = 'scoped memory for _lambda_.3']
  %s0 = inlined_call_operand.vmem [shape: f32[3,16,256], index: 0, kind: input, shape index: {}]
  %s1 = inlined_call_operand.vmem [shape: f32[9,256], index: 1, kind: input, shape index: {}]
  %s2 = inlined_call_operand.vmem [shape: f32[81], index: 2, kind: input, shape index: {}]
  %s3 = inlined_call_operand.vmem [shape: f32[3], index: 3, kind: input, shape index: {}]
  %s4 = inlined_call_operand.vmem [shape: f32[27], index: 4, kind: input, shape index: {}]
  %s5 = inlined_call_operand.<no memory space> [shape: f32[1], index: 5, kind: input, shape index: {}]
  %s6 = inlined_call_operand.vmem [shape: f32[16,256], index: 6, kind: output, shape index: {}]
  %s7 = sld [smem:[#allocation0]]
  $region92: #{_lambda_.3} parent=0
    _
  %s9 = ssub.s32 1, %s7
  %s10 = scalar_select 0, %s9, %s7
  %11 = sst [smem:[#allocation3]] %s5
  $region1: #{_lambda_.3} parent=0
    #allocation4 [shape = 'u8[49152]{0}', space=vmem, size = 0xc000, scoped, tag = 'input window, operand 0']
    #allocation5 [shape = 'u8[512]{0}', space=smem, size = 0x200, scoped, tag = 'input window, operand 2, single buffered']
    #allocation6 [shape = 's32[2]{0}', space=sflag, size = 0x8, scoped, tag = 'scoped memory for _lambda_.3']
    #allocation7 [shape = 'u8[512]{0}', space=smem, size = 0x200, scoped, tag = 'input window, operand 3, single buffered']
    #allocation8 [shape = 's32[1]{0}', space=sflag, size = 0x4, scoped, tag = 'scoped memory for _lambda_.3']
    #allocation9 [shape = 'u8[512]{0}', space=smem, size = 0x200, scoped, tag = 'input window, operand 4, single buffered']
    %12 = vsyncpa [#allocation6], 0
    %13 = vsyncpa [#allocation8], 0
    loop: start=0, step=1, limit=4
    $region2: #{_lambda_.3} parent=1 // loop_pre_header
      _
    $region3: #{_lambda_.3} parent=1 // loop_header
      %s15 = sphi 0, %s19
      %p16 = scmp.ge.s32.totalorder %s15, 4
      %s25 = sphi 0, %s27
      %s28 = sphi 0, %s25
      %s29 = sphi 0, %s28
      %s45 = sphi 0, %s29
      %s49 = sphi 0, %s49
      %s51 = sphi 0, %s49
      %s52 = sphi 0, %s51
      %s66 = sphi 0, %s52
      %s70 = sphi 0, %s70
      %s72 = sphi 0, %s70
      %s73 = sphi 0, %s72
      %s87 = sphi 0, %s73
      %s91 = sphi 0, %s91
      %s93 = sphi 0, %s91
      %s94 = sphi 0, %s93
      %s108 = sphi 0, %s94
      %s112 = sphi 0, %s112
      %s114 = sphi 0, %s112
      %s115 = sphi 0, %s114
      %s129 = sphi 0, %s115
      %s133 = sphi 0, %s133
      %s135 = sphi 0, %s133
      %s136 = sphi 0, %s135
      %s150 = sphi 0, %s136
      %s156 = sphi 0, %s158
      %s159 = sphi 0, %s156
      %s160 = sphi 0, %s159
      %s176 = sphi 0, %s160
    $region4: #{_lambda_.3} parent=1 // loop_header_branch
      %18 = sbr.rel (%p16) target = $region8
    $region5: #{_lambda_.3} parent=1 // loop_body
      %s20 = ssub.s32 %s15, 1
      %s21 = ssub.s32 %s15, 2
      %s22 = sadd.s32 %s15, 1
      %s23 = ssub.s32 %s15, %s22
      %p24 = scmp.eq.s32.totalorder %s23, 0
      %s26 = sadd.s32 %s25, 1
      %s27 = scalar_select %p24, %s25, %s26
      %p30 = pneg %p24
      %p31 = scmp.eq.s32.totalorder %s15, 1
      %p32 = por %p30, %p31
      %p33 = scmp.ne.s32.totalorder %s25, %s28
      %p34 = scmp.eq.s32.totalorder %s15, 0
      %p35 = por %p33, %p34
      %p36 = scmp.ne.s32.totalorder %s25, %s28
      %p37 = scmp.eq.s32.totalorder %s20, 1
      %p38 = por %p36, %p37
      %p39 = scmp.ne.s32.totalorder %s28, %s29
      %p40 = scmp.eq.s32.totalorder %s20, 0
      %p41 = por %p39, %p40
      %p42 = scmp.ne.s32.totalorder %s28, %s29
      %p43 = scmp.eq.s32.totalorder %s21, 1
      %p44 = por %p42, %p43
      %p46 = scmp.ne.s32.totalorder %s29, %s45
      %p47 = scmp.eq.s32.totalorder %s21, 0
      %p48 = por %p46, %p47
      %s50 = sadd.s32 %s49, 1
      %p53 = scmp.eq.s32.totalorder %s15, 1
      %p54 = scmp.ne.s32.totalorder %s49, %s51
      %p55 = scmp.eq.s32.totalorder %s15, 0
      %p56 = por %p54, %p55
      %p57 = scmp.ne.s32.totalorder %s49, %s51
      %p58 = scmp.eq.s32.totalorder %s20, 1
      %p59 = por %p57, %p58
      %p60 = scmp.ne.s32.totalorder %s51, %s52
      %p61 = scmp.eq.s32.totalorder %s20, 0
      %p62 = por %p60, %p61
      %p63 = scmp.ne.s32.totalorder %s51, %s52
      %p64 = scmp.eq.s32.totalorder %s21, 1
      %p65 = por %p63, %p64
      %p67 = scmp.ne.s32.totalorder %s52, %s66
      %p68 = scmp.eq.s32.totalorder %s21, 0
      %p69 = por %p67, %p68
      %s71 = sadd.s32 %s70, 1
      %p74 = scmp.eq.s32.totalorder %s15, 1
      %p75 = scmp.ne.s32.totalorder %s70, %s72
      %p76 = scmp.eq.s32.totalorder %s15, 0
      %p77 = por %p75, %p76
      %p78 = scmp.ne.s32.totalorder %s70, %s72
      %p79 = scmp.eq.s32.totalorder %s20, 1
      %p80 = por %p78, %p79
      %p81 = scmp.ne.s32.totalorder %s72, %s73
      %p82 = scmp.eq.s32.totalorder %s20, 0
      %p83 = por %p81, %p82
      %p84 = scmp.ne.s32.totalorder %s72, %s73
      %p85 = scmp.eq.s32.totalorder %s21, 1
      %p86 = por %p84, %p85
      %p88 = scmp.ne.s32.totalorder %s73, %s87
      %p89 = scmp.eq.s32.totalorder %s21, 0
      %p90 = por %p88, %p89
      %s92 = sadd.s32 %s91, 1
      %p95 = scmp.eq.s32.totalorder %s15, 1
      %p96 = scmp.ne.s32.totalorder %s91, %s93
      %p97 = scmp.eq.s32.totalorder %s15, 0
      %p98 = por %p96, %p97
      %p99 = scmp.ne.s32.totalorder %s91, %s93
      %p100 = scmp.eq.s32.totalorder %s20, 1
      %p101 = por %p99, %p100
      %p102 = scmp.ne.s32.totalorder %s93, %s94
      %p103 = scmp.eq.s32.totalorder %s20, 0
      %p104 = por %p102, %p103
      %p105 = scmp.ne.s32.totalorder %s93, %s94
      %p106 = scmp.eq.s32.totalorder %s21, 1
      %p107 = por %p105, %p106
      %p109 = scmp.ne.s32.totalorder %s94, %s108
      %p110 = scmp.eq.s32.totalorder %s21, 0
      %p111 = por %p109, %p110
      %s113 = sadd.s32 %s112, 1
      %p116 = scmp.eq.s32.totalorder %s15, 1
      %p117 = scmp.ne.s32.totalorder %s112, %s114
      %p118 = scmp.eq.s32.totalorder %s15, 0
      %p119 = por %p117, %p118
      %p120 = scmp.ne.s32.totalorder %s112, %s114
      %p121 = scmp.eq.s32.totalorder %s20, 1
      %p122 = por %p120, %p121
      %p123 = scmp.ne.s32.totalorder %s114, %s115
      %p124 = scmp.eq.s32.totalorder %s20, 0
      %p125 = por %p123, %p124
      %p126 = scmp.ne.s32.totalorder %s114, %s115
      %p127 = scmp.eq.s32.totalorder %s21, 1
      %p128 = por %p126, %p127
      %p130 = scmp.ne.s32.totalorder %s115, %s129
      %p131 = scmp.eq.s32.totalorder %s21, 0
      %p132 = por %p130, %p131
      %s134 = sadd.s32 %s133, 1
      %p137 = scmp.eq.s32.totalorder %s15, 1
      %p138 = scmp.ne.s32.totalorder %s133, %s135
      %p139 = scmp.eq.s32.totalorder %s15, 0
      %p140 = por %p138, %p139
      %p141 = scmp.ne.s32.totalorder %s133, %s135
      %p142 = scmp.eq.s32.totalorder %s20, 1
      %p143 = por %p141, %p142
      %p144 = scmp.ne.s32.totalorder %s135, %s136
      %p145 = scmp.eq.s32.totalorder %s20, 0
      %p146 = por %p144, %p145
      %p147 = scmp.ne.s32.totalorder %s135, %s136
      %p148 = scmp.eq.s32.totalorder %s21, 1
      %p149 = por %p147, %p148
      %p151 = scmp.ne.s32.totalorder %s136, %s150
      %p152 = scmp.eq.s32.totalorder %s21, 0
      %p153 = por %p151, %p152
      %s154 = ssub.s32 %s15, %s22
      %p155 = scmp.eq.s32.totalorder %s154, 0
      %s157 = sadd.s32 %s156, 1
      %s158 = scalar_select %p155, %s156, %s157
      %p161 = pneg %p155
      %p162 = scmp.eq.s32.totalorder %s15, 1
      %p163 = por %p161, %p162
      %p164 = scmp.ne.s32.totalorder %s156, %s159
      %p165 = scmp.eq.s32.totalorder %s15, 0
      %p166 = por %p164, %p165
      %p167 = scmp.ne.s32.totalorder %s156, %s159
      %p168 = scmp.eq.s32.totalorder %s20, 1
      %p169 = por %p167, %p168
      %p170 = scmp.ne.s32.totalorder %s159, %s160
      %p171 = scmp.eq.s32.totalorder %s20, 0
      %p172 = por %p170, %p171
      %p173 = scmp.ne.s32.totalorder %s159, %s160
      %p174 = scmp.eq.s32.totalorder %s21, 1
      %p175 = por %p173, %p174
      %p177 = scmp.ne.s32.totalorder %s160, %s176
      %p178 = scmp.eq.s32.totalorder %s21, 0
      %p179 = por %p177, %p178
      %p180 = scmp.le.s32.totalorder 1, %s15
      %p181 = scmp.lt.s32.totalorder %s15, 3
      %p182 = pnand %p180, %p181
      %p183 = pneg %p182
      // Predicated region
      $region9: #{_lambda_.3} parent=5 // pred_check
        _
      $region10: #{_lambda_.3} parent=5 // pred_check_branch
        %185 = sbr.rel (%p182) target = $region12
      $region11: #{_lambda_.3} parent=5 // pred_region
        %s186 = ssub.s32 %s15, 1
        // Predicated region
        $region13: #{_lambda_.3} parent=11 // pred_check
          %p187 = pneg %p62
        $region14: #{_lambda_.3} parent=11 // pred_check_branch
          %189 = sbr.rel (%p187) target = $region16
        $region15: #{_lambda_.3} parent=11 // pred_region
          _
        $region16: #{_lambda_.3} parent=11 // pred_fallthru
          _
        // Predicated region
        $region17: #{_lambda_.3} parent=11 // pred_check
          %p190 = pneg %p83
        $region18: #{_lambda_.3} parent=11 // pred_check_branch
          %192 = sbr.rel (%p190) target = $region20
        $region19: #{_lambda_.3} parent=11 // pred_region
          %s194 = ssub.s32 16, 16
          %195 = vsyncadd [#allocation6], %s194
          %s197 = sshll.u32 %s2, 4
          %s198 = int_to_ptr.vmem [resolvable:$true] %s197
          %200 = dma.vmem_to_smem %s198, 16, [#allocation5], [#allocation6]
        $region20: #{_lambda_.3} parent=11 // pred_fallthru
          _
        // Predicated region
        $region21: #{_lambda_.3} parent=11 // pred_check
          %p201 = pneg %p104
        $region22: #{_lambda_.3} parent=11 // pred_check_branch
          %203 = sbr.rel (%p201) target = $region24
        $region23: #{_lambda_.3} parent=11 // pred_region
          %s205 = ssub.s32 16, 16
          %206 = vsyncadd [#allocation8], %s205
          %s208 = sshll.u32 %s3, 4
          %s209 = int_to_ptr.vmem [resolvable:$true] %s208
          %211 = dma.vmem_to_smem %s209, 16, [#allocation7], [#allocation8]
        $region24: #{_lambda_.3} parent=11 // pred_fallthru
          _
        // Predicated region
        $region25: #{_lambda_.3} parent=11 // pred_check
          %p212 = pneg %p125
        $region26: #{_lambda_.3} parent=11 // pred_check_branch
          %214 = sbr.rel (%p212) target = $region28
        $region27: #{_lambda_.3} parent=11 // pred_region
          %s216 = ssub.s32 16, 16
          %217 = vsyncadd [#allocation8], %s216
          %s219 = sshll.u32 %s4, 4
          %s220 = int_to_ptr.vmem [resolvable:$true] %s219
          %222 = dma.vmem_to_smem %s220, 16, [#allocation9], [#allocation8]
        $region28: #{_lambda_.3} parent=11 // pred_fallthru
          _
        // Predicated region
        $region29: #{_lambda_.3} parent=11 // pred_check
          %p223 = pneg %p146
        $region30: #{_lambda_.3} parent=11 // pred_check_branch
          %225 = sbr.rel (%p223) target = $region32
        $region31: #{_lambda_.3} parent=11 // pred_region
          _
        $region32: #{_lambda_.3} parent=11 // pred_fallthru
          _
      $region12: #{_lambda_.3} parent=5 // pred_fallthru
        _
      %p226 = scmp.lt.s32.totalorder %s15, 2
      // Predicated region
      $region33: #{_lambda_.3} parent=5 // pred_check
        %p227 = pneg %p226
      $region34: #{_lambda_.3} parent=5 // pred_check_branch
        %229 = sbr.rel (%p227) target = $region36
      $region35: #{_lambda_.3} parent=5 // pred_region
        // Predicated region
        $region37: #{_lambda_.3} parent=35 // pred_check
          %p230 = pneg %p35
        $region38: #{_lambda_.3} parent=35 // pred_check_branch
          %232 = sbr.rel (%p230) target = $region40
        $region39: #{_lambda_.3} parent=35 // pred_region
          %s233 = sand.u32 %s25, 1
          %s234 = sand.u32 %s25, 1
          %s235 = smul.addr %s234, 48
          %s236 = scalar_lea.vmem [#allocation4], %s235
          %s237 = smul.addr %s15, 2
          %s238 = smul.addr %s237, 8
          %s239 = scalar_lea.vmem %s0, %s238
          // Predicated region
          $region41: #{_lambda_.3} parent=39 // pred_check
            _
          $region42: #{_lambda_.3} parent=39 // pred_check_branch
            %241 = sbr.rel (0) target = $region44
          $region43: #{_lambda_.3} parent=39 // pred_region
            // Predicated region
            $region45: #{_lambda_.3} parent=43 // pred_check
              _
            $region46: #{_lambda_.3} parent=43 // pred_check_branch
              %243 = sbr.rel (0) target = $region48
            $region47: #{_lambda_.3} parent=43 // pred_region
              loop: start=0, step=1, limit=1
              $region49: #{_lambda_.3} parent=47 // loop_pre_header
                _
              $region50: #{_lambda_.3} parent=47 // loop_header
                %s245 = sphi 0, %s249
                %p246 = scmp.ge.s32.totalorder %s245, 1
                %s250 = sphi %s239, %s239
                %s251 = sphi %s236, %s236
              $region51: #{_lambda_.3} parent=47 // loop_header_branch
                %248 = sbr.rel (%p246) target = $region55
              $region52: #{_lambda_.3} parent=47 // loop_body
                %v252 = vld [vmem:[%s250] sm:$0xff]
                %253 = vst [vmem:[%s251] sm:$0xff] %v252
                %v254 = vld [vmem:[%s250 + $0x8] sm:$0xff]
                %255 = vst [vmem:[%s251 + $0x8] sm:$0xff] %v254
                %v256 = vld [vmem:[%s250 + $0x20] sm:$0xff]
                %257 = vst [vmem:[%s251 + $0x10] sm:$0xff] %v256
                %v258 = vld [vmem:[%s250 + $0x28] sm:$0xff]
                %259 = vst [vmem:[%s251 + $0x18] sm:$0xff] %v258
                %v260 = vld [vmem:[%s250 + $0x40] sm:$0xff]
                %261 = vst [vmem:[%s251 + $0x20] sm:$0xff] %v260
                %v262 = vld [vmem:[%s250 + $0x48] sm:$0xff]
                %263 = vst [vmem:[%s251 + $0x28] sm:$0xff] %v262
              $region53: #{_lambda_.3} parent=47 // loop_footer
                %s249 = sadd.s32 1, %s245
              $region54: #{_lambda_.3} parent=47 // loop_footer_branch
                %244 = sbr.rel target = $region50
              $region55: #{_lambda_.3} parent=47 // loop_exit
                _
            $region48: #{_lambda_.3} parent=43 // pred_fallthru
              _
            // Predicated region
            $region56: #{_lambda_.3} parent=43 // pred_check
              _
            $region57: #{_lambda_.3} parent=43 // pred_check_branch
              %265 = sbr.rel target = $region59
            $region58: #{_lambda_.3} parent=43 // pred_region
              _
            $region59: #{_lambda_.3} parent=43 // pred_fallthru
              _
          $region44: #{_lambda_.3} parent=39 // pred_fallthru
            _
          %266 = vnop
        $region40: #{_lambda_.3} parent=35 // pred_fallthru
          _
      $region36: #{_lambda_.3} parent=5 // pred_fallthru
        _
      %p267 = scmp.le.s32.totalorder 1, %s15
      %p268 = scmp.lt.s32.totalorder %s15, 3
      %p269 = pnand %p267, %p268
      %p270 = pneg %p269
      // Predicated region
      $region60: #{_lambda_.3} parent=5 // pred_check
        _
      $region61: #{_lambda_.3} parent=5 // pred_check_branch
        %272 = sbr.rel (%p269) target = $region63
      $region62: #{_lambda_.3} parent=5 // pred_region
        %s273 = ssub.s32 %s15, 1
        %s274 = sand.u32 %s28, 1
        %s275 = sand.u32 %s28, 1
        %s276 = smul.addr %s275, 48
        %s277 = scalar_lea.vmem [#allocation4], %s276
        // Predicated region
        $region64: #{_lambda_.3} parent=62 // pred_check
          %p278 = pneg %p41
        $region65: #{_lambda_.3} parent=62 // pred_check_branch
          %280 = sbr.rel (%p278) target = $region67
        $region66: #{_lambda_.3} parent=62 // pred_region
          _
        $region67: #{_lambda_.3} parent=62 // pred_fallthru
          _
        // Predicated region
        $region68: #{_lambda_.3} parent=62 // pred_check
          %p281 = pneg %p83
        $region69: #{_lambda_.3} parent=62 // pred_check_branch
          %283 = sbr.rel (%p281) target = $region71
        $region70: #{_lambda_.3} parent=62 // pred_region
          %284 = dma.done [#allocation6], 16
        $region71: #{_lambda_.3} parent=62 // pred_fallthru
          _
        // Predicated region
        $region72: #{_lambda_.3} parent=62 // pred_check
          %p285 = pneg %p104
        $region73: #{_lambda_.3} parent=62 // pred_check_branch
          %287 = sbr.rel (%p285) target = $region75
        $region74: #{_lambda_.3} parent=62 // pred_region
          %288 = dma.done [#allocation8], 16
        $region75: #{_lambda_.3} parent=62 // pred_fallthru
          _
        // Predicated region
        $region76: #{_lambda_.3} parent=62 // pred_check
          %p289 = pneg %p125
        $region77: #{_lambda_.3} parent=62 // pred_check_branch
          %291 = sbr.rel (%p289) target = $region79
        $region78: #{_lambda_.3} parent=62 // pred_region
          %292 = dma.done [#allocation8], 16
        $region79: #{_lambda_.3} parent=62 // pred_fallthru
          _
        %293 = sfence
        %s294 = sand.u32 %s28, 1
        %s295 = sand.u32 %s28, 1
        %s296 = smul.addr %s295, 48
        %s297 = scalar_lea.vmem [#allocation4], %s296
        %p298 = pneg %p41
        %p299 = pneg %p38
        %p300 = pneg %p62
        %p301 = pneg %p59
        %p302 = pneg %p83
        %p303 = pneg %p80
        %p304 = pneg %p104
        %p305 = pneg %p101
        %p306 = pneg %p125
        %p307 = pneg %p122
        %p308 = pneg %p146
        %p309 = pneg %p143
        %p310 = pneg %p172
        %p311 = pneg %p169
        %p312 = scmp.lt.s32.totalorder %s20, 1
        %s313 = scalar_select %p312, %s20, 1
        %s314 = smul.addr %s313, 2
        %s315 = smul.addr %s314, 8
        %s316 = scalar_lea.vmem %s6, %s315
        %p317 = scmp.lt.s32.totalorder %s20, 1
        %s318 = scalar_select %p317, %s20, 1
        %s319 = smul.addr %s318, 2
        %s320 = smul.addr %s319, 8
        %s321 = scalar_lea.vmem %s6, %s320
        %v322 = vld [vmem:[%s277] sm:$0xff]
        %v323 = vld [vmem:[%s277 + $0x8] sm:$0xff]
        %324 = vrot.lane.b32.xlu0 %v322, 17
        %v325 = vpop.permute.xlu0 %324
        %326 = vrot.lane.b32.xlu0 %v323, 17
        %v327 = vpop.permute.xlu0 %326
        %v328 = vlaneseq
        %v329 = vand.u32 %v328, 127
        %vm330 = vcmp.lt.s32.totalorder %v329, 17
        %v331 = vsel %vm330, %v325, %v327
        %v332 = vsel %vm330, %v327, %v325
        %v333 = vld [vmem:[%s1] ss:$8 sm:$0x3]
        %v335 = vlaneseq
        %v336 = vshrl.u32 %v335, 7
        %v337 = vsub.s32 0, %v336
        %v338 = vrot.slane %v333, %v337
        %v339 = vlaneseq
        %v340 = vshrl.u32 %v339, 7
        %v341 = vsub.s32 1, %v340
        %v342 = vrot.slane %v333, %v341
        %v345 = vmul.f32 %v332, %v338
        %v346 = vmul.f32 %v331, %v342
        %s347 = sld [smem:[#allocation5]]
        %v348 = vstv %s347
        %v349 = vmul.f32 %v348, %v345
        %v350 = vmul.f32 %v348, %v346
        %v351 = vadd.f32 %v349, 0.0
        %v352 = vadd.f32 %v350, 0.0
        %s353 = sld [smem:[#allocation5 + $0x1b]]
        %v354 = vstv %s353
        %v355 = vmul.f32 %v354, %v345
        %v356 = vmul.f32 %v354, %v346
        %v357 = vadd.f32 %v355, 0.0
        %v358 = vadd.f32 %v356, 0.0
        %s359 = sld [smem:[#allocation5 + $0x36]]
        %v360 = vstv %s359
        %v361 = vmul.f32 %v360, %v345
        %v362 = vmul.f32 %v360, %v346
        %v363 = vadd.f32 %v361, 0.0
        %v364 = vadd.f32 %v362, 0.0
        %365 = vrot.lane.b32.xlu0 %v322, 16
        %v366 = vpop.permute.xlu0 %365
        %367 = vrot.lane.b32.xlu0 %v323, 16
        %v368 = vpop.permute.xlu0 %367
        %vm369 = vcmp.lt.s32.totalorder %v329, 16
        %v370 = vsel %vm369, %v366, %v368
        %v371 = vsel %vm369, %v368, %v366
        %s372 = scalar_lea.vmem %s1, 1
        %v373 = vld [vmem:[%s372] ss:$8 sm:$0x3]
        %v375 = vlaneseq
        %v376 = vshrl.u32 %v375, 7
        %v377 = vsub.s32 0, %v376
        %v378 = vrot.slane %v373, %v377
        %v379 = vlaneseq
        %v380 = vshrl.u32 %v379, 7
        %v381 = vsub.s32 1, %v380
        %v382 = vrot.slane %v373, %v381
        %v385 = vmul.f32 %v371, %v378
        %v386 = vmul.f32 %v370, %v382
        %s387 = sld [smem:[#allocation5 + $0x1]]
        %v388 = vstv %s387
        %v389 = vmul.f32 %v388, %v385
        %v390 = vmul.f32 %v388, %v386
        %v391 = vadd.f32 %v351, %v389
        %v392 = vadd.f32 %v352, %v390
        %s393 = sld [smem:[#allocation5 + $0x1c]]
        %v394 = vstv %s393
        %v395 = vmul.f32 %v394, %v385
        %v396 = vmul.f32 %v394, %v386
        %v397 = vadd.f32 %v357, %v395
        %v398 = vadd.f32 %v358, %v396
        %s399 = sld [smem:[#allocation5 + $0x37]]
        %v400 = vstv %s399
        %v401 = vmul.f32 %v400, %v385
        %v402 = vmul.f32 %v400, %v386
        %v403 = vadd.f32 %v363, %v401
        %v404 = vadd.f32 %v364, %v402
        %405 = vrot.lane.b32.xlu0 %v322, 15
        %v406 = vpop.permute.xlu0 %405
        %407 = vrot.lane.b32.xlu0 %v323, 15
        %v408 = vpop.permute.xlu0 %407
        %vm409 = vcmp.lt.s32.totalorder %v329, 15
        %v410 = vsel %vm409, %v406, %v408
        %v411 = vsel %vm409, %v408, %v406
        %s412 = scalar_lea.vmem %s1, 2
        %v413 = vld [vmem:[%s412] ss:$8 sm:$0x3]
        %v415 = vlaneseq
        %v416 = vshrl.u32 %v415, 7
        %v417 = vsub.s32 0, %v416
        %v418 = vrot.slane %v413, %v417
        %v419 = vlaneseq
        %v420 = vshrl.u32 %v419, 7
        %v421 = vsub.s32 1, %v420
        %v422 = vrot.slane %v413, %v421
        %v425 = vmul.f32 %v411, %v418
        %v426 = vmul.f32 %v410, %v422
        %s427 = sld [smem:[#allocation5 + $0x2]]
        %v428 = vstv %s427
        %v429 = vmul.f32 %v428, %v425
        %v430 = vmul.f32 %v428, %v426
        %v431 = vadd.f32 %v391, %v429
        %v432 = vadd.f32 %v392, %v430
        %s433 = sld [smem:[#allocation5 + $0x1d]]
        %v434 = vstv %s433
        %v435 = vmul.f32 %v434, %v425
        %v436 = vmul.f32 %v434, %v426
        %v437 = vadd.f32 %v397, %v435
        %v438 = vadd.f32 %v398, %v436
        %s439 = sld [smem:[#allocation5 + $0x38]]
        %v440 = vstv %s439
        %v441 = vmul.f32 %v440, %v425
        %v442 = vmul.f32 %v440, %v426
        %v443 = vadd.f32 %v403, %v441
        %v444 = vadd.f32 %v404, %v442
        %445 = vrot.lane.b32.xlu0 %v322, 1
        %v446 = vpop.permute.xlu0 %445
        %447 = vrot.lane.b32.xlu0 %v323, 1
        %v448 = vpop.permute.xlu0 %447
        %vm449 = vcmp.lt.s32.totalorder %v329, 1
        %v450 = vsel %vm449, %v446, %v448
        %v451 = vsel %vm449, %v448, %v446
        %s452 = scalar_lea.vmem %s1, 3
        %v453 = vld [vmem:[%s452] ss:$8 sm:$0x3]
        %v455 = vlaneseq
        %v456 = vshrl.u32 %v455, 7
        %v457 = vsub.s32 0, %v456
        %v458 = vrot.slane %v453, %v457
        %v459 = vlaneseq
        %v460 = vshrl.u32 %v459, 7
        %v461 = vsub.s32 1, %v460
        %v462 = vrot.slane %v453, %v461
        %v465 = vmul.f32 %v451, %v458
        %v466 = vmul.f32 %v450, %v462
        %s467 = sld [smem:[#allocation5 + $0x3]]
        %v468 = vstv %s467
        %v469 = vmul.f32 %v468, %v465
        %v470 = vmul.f32 %v468, %v466
        %v471 = vadd.f32 %v431, %v469
        %v472 = vadd.f32 %v432, %v470
        %s473 = sld [smem:[#allocation5 + $0x1e]]
        %v474 = vstv %s473
        %v475 = vmul.f32 %v474, %v465
        %v476 = vmul.f32 %v474, %v466
        %v477 = vadd.f32 %v437, %v475
        %v478 = vadd.f32 %v438, %v476
        %s479 = sld [smem:[#allocation5 + $0x39]]
        %v480 = vstv %s479
        %v481 = vmul.f32 %v480, %v465
        %v482 = vmul.f32 %v480, %v466
        %v483 = vadd.f32 %v443, %v481
        %v484 = vadd.f32 %v444, %v482
        %s485 = sld [smem:[#allocation5 + $0x4]]
        %v486 = vstv %s485
        %v487 = vmul.f32 %v486, %v322
        %v488 = vmul.f32 %v486, %v323
        %v489 = vadd.f32 %v471, %v487
        %v490 = vadd.f32 %v472, %v488
        %s491 = sld [smem:[#allocation5 + $0x1f]]
        %v492 = vstv %s491
        %v493 = vmul.f32 %v492, %v322
        %v494 = vmul.f32 %v492, %v323
        %v495 = vadd.f32 %v477, %v493
        %v496 = vadd.f32 %v478, %v494
        %s497 = sld [smem:[#allocation5 + $0x3a]]
        %v498 = vstv %s497
        %v499 = vmul.f32 %v498, %v322
        %v500 = vmul.f32 %v498, %v323
        %v501 = vadd.f32 %v483, %v499
        %v502 = vadd.f32 %v484, %v500
        %503 = vrot.lane.b32.xlu0 %v322, 127
        %v504 = vpop.permute.xlu0 %503
        %505 = vrot.lane.b32.xlu0 %v323, 127
        %v506 = vpop.permute.xlu0 %505
        %vm507 = vcmp.lt.s32.totalorder %v329, 127
        %v508 = vsel %vm507, %v504, %v506
        %v509 = vsel %vm507, %v506, %v504
        %s510 = scalar_lea.vmem %s1, 5
        %v511 = vld [vmem:[%s510] ss:$8 sm:$0x3]
        %v513 = vlaneseq
        %v514 = vshrl.u32 %v513, 7
        %v515 = vsub.s32 0, %v514
        %v516 = vrot.slane %v511, %v515
        %v517 = vlaneseq
        %v518 = vshrl.u32 %v517, 7
        %v519 = vsub.s32 1, %v518
        %v520 = vrot.slane %v511, %v519
        %v523 = vmul.f32 %v508, %v516
        %v524 = vmul.f32 %v509, %v520
        %s525 = sld [smem:[#allocation5 + $0x5]]
        %v526 = vstv %s525
        %v527 = vmul.f32 %v526, %v523
        %v528 = vmul.f32 %v526, %v524
        %v529 = vadd.f32 %v489, %v527
        %v530 = vadd.f32 %v490, %v528
        %s531 = sld [smem:[#allocation5 + $0x20]]
        %v532 = vstv %s531
        %v533 = vmul.f32 %v532, %v523
        %v534 = vmul.f32 %v532, %v524
        %v535 = vadd.f32 %v495, %v533
        %v536 = vadd.f32 %v496, %v534
        %s537 = sld [smem:[#allocation5 + $0x3b]]
        %v538 = vstv %s537
        %v539 = vmul.f32 %v538, %v523
        %v540 = vmul.f32 %v538, %v524
        %v541 = vadd.f32 %v501, %v539
        %v542 = vadd.f32 %v502, %v540
        %543 = vrot.lane.b32.xlu0 %v322, 113
        %v544 = vpop.permute.xlu0 %543
        %545 = vrot.lane.b32.xlu0 %v323, 113
        %v546 = vpop.permute.xlu0 %545
        %vm547 = vcmp.lt.s32.totalorder %v329, 113
        %v548 = vsel %vm547, %v544, %v546
        %v549 = vsel %vm547, %v546, %v544
        %s550 = scalar_lea.vmem %s1, 6
        %v551 = vld [vmem:[%s550] ss:$8 sm:$0x3]
        %v553 = vlaneseq
        %v554 = vshrl.u32 %v553, 7
        %v555 = vsub.s32 0, %v554
        %v556 = vrot.slane %v551, %v555
        %v557 = vlaneseq
        %v558 = vshrl.u32 %v557, 7
        %v559 = vsub.s32 1, %v558
        %v560 = vrot.slane %v551, %v559
        %v563 = vmul.f32 %v548, %v556
        %v564 = vmul.f32 %v549, %v560
        %s565 = sld [smem:[#allocation5 + $0x6]]
        %v566 = vstv %s565
        %v567 = vmul.f32 %v566, %v563
        %v568 = vmul.f32 %v566, %v564
        %v569 = vadd.f32 %v529, %v567
        %v570 = vadd.f32 %v530, %v568
        %s571 = sld [smem:[#allocation5 + $0x21]]
        %v572 = vstv %s571
        %v573 = vmul.f32 %v572, %v563
        %v574 = vmul.f32 %v572, %v564
        %v575 = vadd.f32 %v535, %v573
        %v576 = vadd.f32 %v536, %v574
        %s577 = sld [smem:[#allocation5 + $0x3c]]
        %v578 = vstv %s577
        %v579 = vmul.f32 %v578, %v563
        %v580 = vmul.f32 %v578, %v564
        %v581 = vadd.f32 %v541, %v579
        %v582 = vadd.f32 %v542, %v580
        %583 = vrot.lane.b32.xlu0 %v322, 112
        %v584 = vpop.permute.xlu0 %583
        %585 = vrot.lane.b32.xlu0 %v323, 112
        %v586 = vpop.permute.xlu0 %585
        %vm587 = vcmp.lt.s32.totalorder %v329, 112
        %v588 = vsel %vm587, %v584, %v586
        %v589 = vsel %vm587, %v586, %v584
        %s590 = scalar_lea.vmem %s1, 7
        %v591 = vld [vmem:[%s590] ss:$8 sm:$0x3]
        %v593 = vlaneseq
        %v594 = vshrl.u32 %v593, 7
        %v595 = vsub.s32 0, %v594
        %v596 = vrot.slane %v591, %v595
        %v597 = vlaneseq
        %v598 = vshrl.u32 %v597, 7
        %v599 = vsub.s32 1, %v598
        %v600 = vrot.slane %v591, %v599
        %v603 = vmul.f32 %v588, %v596
        %v604 = vmul.f32 %v589, %v600
        %s605 = sld [smem:[#allocation5 + $0x7]]
        %v606 = vstv %s605
        %v607 = vmul.f32 %v606, %v603
        %v608 = vmul.f32 %v606, %v604
        %v609 = vadd.f32 %v569, %v607
        %v610 = vadd.f32 %v570, %v608
        %s611 = sld [smem:[#allocation5 + $0x22]]
        %v612 = vstv %s611
        %v613 = vmul.f32 %v612, %v603
        %v614 = vmul.f32 %v612, %v604
        %v615 = vadd.f32 %v575, %v613
        %v616 = vadd.f32 %v576, %v614
        %s617 = sld [smem:[#allocation5 + $0x3d]]
        %v618 = vstv %s617
        %v619 = vmul.f32 %v618, %v603
        %v620 = vmul.f32 %v618, %v604
        %v621 = vadd.f32 %v581, %v619
        %v622 = vadd.f32 %v582, %v620
        %623 = vrot.lane.b32.xlu0 %v322, 111
        %v624 = vpop.permute.xlu0 %623
        %625 = vrot.lane.b32.xlu0 %v323, 111
        %v626 = vpop.permute.xlu0 %625
        %vm627 = vcmp.lt.s32.totalorder %v329, 111
        %v628 = vsel %vm627, %v624, %v626
        %v629 = vsel %vm627, %v626, %v624
        %s630 = scalar_lea.vmem %s1, 16
        %v631 = vld [vmem:[%s630] ss:$8 sm:$0x3]
        %v633 = vlaneseq
        %v634 = vshrl.u32 %v633, 7
        %v635 = vsub.s32 0, %v634
        %v636 = vrot.slane %v631, %v635
        %v637 = vlaneseq
        %v638 = vshrl.u32 %v637, 7
        %v639 = vsub.s32 1, %v638
        %v640 = vrot.slane %v631, %v639
        %v643 = vmul.f32 %v628, %v636
        %v644 = vmul.f32 %v629, %v640
        %s645 = sld [smem:[#allocation5 + $0x8]]
        %v646 = vstv %s645
        %v647 = vmul.f32 %v646, %v643
        %v648 = vmul.f32 %v646, %v644
        %v649 = vadd.f32 %v609, %v647
        %v650 = vadd.f32 %v610, %v648
        %s651 = sld [smem:[#allocation5 + $0x23]]
        %v652 = vstv %s651
        %v653 = vmul.f32 %v652, %v643
        %v654 = vmul.f32 %v652, %v644
        %v655 = vadd.f32 %v615, %v653
        %v656 = vadd.f32 %v616, %v654
        %s657 = sld [smem:[#allocation5 + $0x3e]]
        %v658 = vstv %s657
        %v659 = vmul.f32 %v658, %v643
        %v660 = vmul.f32 %v658, %v644
        %v661 = vadd.f32 %v621, %v659
        %v662 = vadd.f32 %v622, %v660
        %s663 = scalar_lea.vmem %s277, 16 [#allocation4]
        %v664 = vld [vmem:[%s663] sm:$0xff]
        %v665 = vld [vmem:[%s663 + $0x8] sm:$0xff]
        %666 = vrot.lane.b32.xlu0 %v664, 17
        %v667 = vpop.permute.xlu0 %666
        %668 = vrot.lane.b32.xlu0 %v665, 17
        %v669 = vpop.permute.xlu0 %668
        %v670 = vsel %vm330, %v667, %v669
        %v671 = vsel %vm330, %v669, %v667
        %v672 = vmul.f32 %v671, %v338
        %v673 = vmul.f32 %v670, %v342
        %s674 = sld [smem:[#allocation5 + $0x9]]
        %v675 = vstv %s674
        %v676 = vmul.f32 %v675, %v672
        %v677 = vmul.f32 %v675, %v673
        %v678 = vadd.f32 %v649, %v676
        %v679 = vadd.f32 %v650, %v677
        %s680 = sld [smem:[#allocation5 + $0x24]]
        %v681 = vstv %s680
        %v682 = vmul.f32 %v681, %v672
        %v683 = vmul.f32 %v681, %v673
        %v684 = vadd.f32 %v655, %v682
        %v685 = vadd.f32 %v656, %v683
        %s686 = sld [smem:[#allocation5 + $0x3f]]
        %v687 = vstv %s686
        %v688 = vmul.f32 %v687, %v672
        %v689 = vmul.f32 %v687, %v673
        %v690 = vadd.f32 %v661, %v688
        %v691 = vadd.f32 %v662, %v689
        %692 = vrot.lane.b32.xlu0 %v664, 16
        %v693 = vpop.permute.xlu0 %692
        %694 = vrot.lane.b32.xlu0 %v665, 16
        %v695 = vpop.permute.xlu0 %694
        %v696 = vsel %vm369, %v693, %v695
        %v697 = vsel %vm369, %v695, %v693
        %v698 = vmul.f32 %v697, %v378
        %v699 = vmul.f32 %v696, %v382
        %s700 = sld [smem:[#allocation5 + $0xa]]
        %v701 = vstv %s700
        %v702 = vmul.f32 %v701, %v698
        %v703 = vmul.f32 %v701, %v699
        %v704 = vadd.f32 %v678, %v702
        %v705 = vadd.f32 %v679, %v703
        %s706 = sld [smem:[#allocation5 + $0x25]]
        %v707 = vstv %s706
        %v708 = vmul.f32 %v707, %v698
        %v709 = vmul.f32 %v707, %v699
        %v710 = vadd.f32 %v684, %v708
        %v711 = vadd.f32 %v685, %v709
        %s712 = sld [smem:[#allocation5 + $0x40]]
        %v713 = vstv %s712
        %v714 = vmul.f32 %v713, %v698
        %v715 = vmul.f32 %v713, %v699
        %v716 = vadd.f32 %v690, %v714
        %v717 = vadd.f32 %v691, %v715
        %718 = vrot.lane.b32.xlu0 %v664, 15
        %v719 = vpop.permute.xlu0 %718
        %720 = vrot.lane.b32.xlu0 %v665, 15
        %v721 = vpop.permute.xlu0 %720
        %v722 = vsel %vm409, %v719, %v721
        %v723 = vsel %vm409, %v721, %v719
        %v724 = vmul.f32 %v723, %v418
        %v725 = vmul.f32 %v722, %v422
        %s726 = sld [smem:[#allocation5 + $0xb]]
        %v727 = vstv %s726
        %v728 = vmul.f32 %v727, %v724
        %v729 = vmul.f32 %v727, %v725
        %v730 = vadd.f32 %v704, %v728
        %v731 = vadd.f32 %v705, %v729
        %s732 = sld [smem:[#allocation5 + $0x26]]
        %v733 = vstv %s732
        %v734 = vmul.f32 %v733, %v724
        %v735 = vmul.f32 %v733, %v725
        %v736 = vadd.f32 %v710, %v734
        %v737 = vadd.f32 %v711, %v735
        %s738 = sld [smem:[#allocation5 + $0x41]]
        %v739 = vstv %s738
        %v740 = vmul.f32 %v739, %v724
        %v741 = vmul.f32 %v739, %v725
        %v742 = vadd.f32 %v716, %v740
        %v743 = vadd.f32 %v717, %v741
        %744 = vrot.lane.b32.xlu0 %v664, 1
        %v745 = vpop.permute.xlu0 %744
        %746 = vrot.lane.b32.xlu0 %v665, 1
        %v747 = vpop.permute.xlu0 %746
        %v748 = vsel %vm449, %v745, %v747
        %v749 = vsel %vm449, %v747, %v745
        %v750 = vmul.f32 %v749, %v458
        %v751 = vmul.f32 %v748, %v462
        %s752 = sld [smem:[#allocation5 + $0xc]]
        %v753 = vstv %s752
        %v754 = vmul.f32 %v753, %v750
        %v755 = vmul.f32 %v753, %v751
        %v756 = vadd.f32 %v730, %v754
        %v757 = vadd.f32 %v731, %v755
        %s758 = sld [smem:[#allocation5 + $0x27]]
        %v759 = vstv %s758
        %v760 = vmul.f32 %v759, %v750
        %v761 = vmul.f32 %v759, %v751
        %v762 = vadd.f32 %v736, %v760
        %v763 = vadd.f32 %v737, %v761
        %s764 = sld [smem:[#allocation5 + $0x42]]
        %v765 = vstv %s764
        %v766 = vmul.f32 %v765, %v750
        %v767 = vmul.f32 %v765, %v751
        %v768 = vadd.f32 %v742, %v766
        %v769 = vadd.f32 %v743, %v767
        %s770 = sld [smem:[#allocation5 + $0xd]]
        %v771 = vstv %s770
        %v772 = vmul.f32 %v771, %v664
        %v773 = vmul.f32 %v771, %v665
        %v774 = vadd.f32 %v756, %v772
        %v775 = vadd.f32 %v757, %v773
        %s776 = sld [smem:[#allocation5 + $0x28]]
        %v777 = vstv %s776
        %v778 = vmul.f32 %v777, %v664
        %v779 = vmul.f32 %v777, %v665
        %v780 = vadd.f32 %v762, %v778
        %v781 = vadd.f32 %v763, %v779
        %s782 = sld [smem:[#allocation5 + $0x43]]
        %v783 = vstv %s782
        %v784 = vmul.f32 %v783, %v664
        %v785 = vmul.f32 %v783, %v665
        %v786 = vadd.f32 %v768, %v784
        %v787 = vadd.f32 %v769, %v785
        %788 = vrot.lane.b32.xlu0 %v664, 127
        %v789 = vpop.permute.xlu0 %788
        %790 = vrot.lane.b32.xlu0 %v665, 127
        %v791 = vpop.permute.xlu0 %790
        %v792 = vsel %vm507, %v789, %v791
        %v793 = vsel %vm507, %v791, %v789
        %v794 = vmul.f32 %v792, %v516
        %v795 = vmul.f32 %v793, %v520
        %s796 = sld [smem:[#allocation5 + $0xe]]
        %v797 = vstv %s796
        %v798 = vmul.f32 %v797, %v794
        %v799 = vmul.f32 %v797, %v795
        %v800 = vadd.f32 %v774, %v798
        %v801 = vadd.f32 %v775, %v799
        %s802 = sld [smem:[#allocation5 + $0x29]]
        %v803 = vstv %s802
        %v804 = vmul.f32 %v803, %v794
        %v805 = vmul.f32 %v803, %v795
        %v806 = vadd.f32 %v780, %v804
        %v807 = vadd.f32 %v781, %v805
        %s808 = sld [smem:[#allocation5 + $0x44]]
        %v809 = vstv %s808
        %v810 = vmul.f32 %v809, %v794
        %v811 = vmul.f32 %v809, %v795
        %v812 = vadd.f32 %v786, %v810
        %v813 = vadd.f32 %v787, %v811
        %814 = vrot.lane.b32.xlu0 %v664, 113
        %v815 = vpop.permute.xlu0 %814
        %816 = vrot.lane.b32.xlu0 %v665, 113
        %v817 = vpop.permute.xlu0 %816
        %v818 = vsel %vm547, %v815, %v817
        %v819 = vsel %vm547, %v817, %v815
        %v820 = vmul.f32 %v818, %v556
        %v821 = vmul.f32 %v819, %v560
        %s822 = sld [smem:[#allocation5 + $0xf]]
        %v823 = vstv %s822
        %v824 = vmul.f32 %v823, %v820
        %v825 = vmul.f32 %v823, %v821
        %v826 = vadd.f32 %v800, %v824
        %v827 = vadd.f32 %v801, %v825
        %s828 = sld [smem:[#allocation5 + $0x2a]]
        %v829 = vstv %s828
        %v830 = vmul.f32 %v829, %v820
        %v831 = vmul.f32 %v829, %v821
        %v832 = vadd.f32 %v806, %v830
        %v833 = vadd.f32 %v807, %v831
        %s834 = sld [smem:[#allocation5 + $0x45]]
        %v835 = vstv %s834
        %v836 = vmul.f32 %v835, %v820
        %v837 = vmul.f32 %v835, %v821
        %v838 = vadd.f32 %v812, %v836
        %v839 = vadd.f32 %v813, %v837
        %840 = vrot.lane.b32.xlu0 %v664, 112
        %v841 = vpop.permute.xlu0 %840
        %842 = vrot.lane.b32.xlu0 %v665, 112
        %v843 = vpop.permute.xlu0 %842
        %v844 = vsel %vm587, %v841, %v843
        %v845 = vsel %vm587, %v843, %v841
        %v846 = vmul.f32 %v844, %v596
        %v847 = vmul.f32 %v845, %v600
        %s848 = sld [smem:[#allocation5 + $0x10]]
        %v849 = vstv %s848
        %v850 = vmul.f32 %v849, %v846
        %v851 = vmul.f32 %v849, %v847
        %v852 = vadd.f32 %v826, %v850
        %v853 = vadd.f32 %v827, %v851
        %s854 = sld [smem:[#allocation5 + $0x2b]]
        %v855 = vstv %s854
        %v856 = vmul.f32 %v855, %v846
        %v857 = vmul.f32 %v855, %v847
        %v858 = vadd.f32 %v832, %v856
        %v859 = vadd.f32 %v833, %v857
        %s860 = sld [smem:[#allocation5 + $0x46]]
        %v861 = vstv %s860
        %v862 = vmul.f32 %v861, %v846
        %v863 = vmul.f32 %v861, %v847
        %v864 = vadd.f32 %v838, %v862
        %v865 = vadd.f32 %v839, %v863
        %866 = vrot.lane.b32.xlu0 %v664, 111
        %v867 = vpop.permute.xlu0 %866
        %868 = vrot.lane.b32.xlu0 %v665, 111
        %v869 = vpop.permute.xlu0 %868
        %v870 = vsel %vm627, %v867, %v869
        %v871 = vsel %vm627, %v869, %v867
        %v872 = vmul.f32 %v870, %v636
        %v873 = vmul.f32 %v871, %v640
        %s874 = sld [smem:[#allocation5 + $0x11]]
        %v875 = vstv %s874
        %v876 = vmul.f32 %v875, %v872
        %v877 = vmul.f32 %v875, %v873
        %v878 = vadd.f32 %v852, %v876
        %v879 = vadd.f32 %v853, %v877
        %s880 = sld [smem:[#allocation5 + $0x2c]]
        %v881 = vstv %s880
        %v882 = vmul.f32 %v881, %v872
        %v883 = vmul.f32 %v881, %v873
        %v884 = vadd.f32 %v858, %v882
        %v885 = vadd.f32 %v859, %v883
        %s886 = sld [smem:[#allocation5 + $0x47]]
        %v887 = vstv %s886
        %v888 = vmul.f32 %v887, %v872
        %v889 = vmul.f32 %v887, %v873
        %v890 = vadd.f32 %v864, %v888
        %v891 = vadd.f32 %v865, %v889
        %s892 = scalar_lea.vmem %s277, 32 [#allocation4]
        %v893 = vld [vmem:[%s892] sm:$0xff]
        %v894 = vld [vmem:[%s892 + $0x8] sm:$0xff]
        %895 = vrot.lane.b32.xlu0 %v893, 17
        %v896 = vpop.permute.xlu0 %895
        %897 = vrot.lane.b32.xlu0 %v894, 17
        %v898 = vpop.permute.xlu0 %897
        %v899 = vsel %vm330, %v896, %v898
        %v900 = vsel %vm330, %v898, %v896
        %v901 = vmul.f32 %v900, %v338
        %v902 = vmul.f32 %v899, %v342
        %s903 = sld [smem:[#allocation5 + $0x12]]
        %v904 = vstv %s903
        %v905 = vmul.f32 %v904, %v901
        %v906 = vmul.f32 %v904, %v902
        %v907 = vadd.f32 %v878, %v905
        %v908 = vadd.f32 %v879, %v906
        %s909 = sld [smem:[#allocation5 + $0x2d]]
        %v910 = vstv %s909
        %v911 = vmul.f32 %v910, %v901
        %v912 = vmul.f32 %v910, %v902
        %v913 = vadd.f32 %v884, %v911
        %v914 = vadd.f32 %v885, %v912
        %s915 = sld [smem:[#allocation5 + $0x48]]
        %v916 = vstv %s915
        %v917 = vmul.f32 %v916, %v901
        %v918 = vmul.f32 %v916, %v902
        %v919 = vadd.f32 %v890, %v917
        %v920 = vadd.f32 %v891, %v918
        %921 = vrot.lane.b32.xlu0 %v893, 16
        %v922 = vpop.permute.xlu0 %921
        %923 = vrot.lane.b32.xlu0 %v894, 16
        %v924 = vpop.permute.xlu0 %923
        %v925 = vsel %vm369, %v922, %v924
        %v926 = vsel %vm369, %v924, %v922
        %v927 = vmul.f32 %v926, %v378
        %v928 = vmul.f32 %v925, %v382
        %s929 = sld [smem:[#allocation5 + $0x13]]
        %v930 = vstv %s929
        %v931 = vmul.f32 %v930, %v927
        %v932 = vmul.f32 %v930, %v928
        %v933 = vadd.f32 %v907, %v931
        %v934 = vadd.f32 %v908, %v932
        %s935 = sld [smem:[#allocation5 + $0x2e]]
        %v936 = vstv %s935
        %v937 = vmul.f32 %v936, %v927
        %v938 = vmul.f32 %v936, %v928
        %v939 = vadd.f32 %v913, %v937
        %v940 = vadd.f32 %v914, %v938
        %s941 = sld [smem:[#allocation5 + $0x49]]
        %v942 = vstv %s941
        %v943 = vmul.f32 %v942, %v927
        %v944 = vmul.f32 %v942, %v928
        %v945 = vadd.f32 %v919, %v943
        %v946 = vadd.f32 %v920, %v944
        %947 = vrot.lane.b32.xlu0 %v893, 15
        %v948 = vpop.permute.xlu0 %947
        %949 = vrot.lane.b32.xlu0 %v894, 15
        %v950 = vpop.permute.xlu0 %949
        %v951 = vsel %vm409, %v948, %v950
        %v952 = vsel %vm409, %v950, %v948
        %v953 = vmul.f32 %v952, %v418
        %v954 = vmul.f32 %v951, %v422
        %s955 = sld [smem:[#allocation5 + $0x14]]
        %v956 = vstv %s955
        %v957 = vmul.f32 %v956, %v953
        %v958 = vmul.f32 %v956, %v954
        %v959 = vadd.f32 %v933, %v957
        %v960 = vadd.f32 %v934, %v958
        %s961 = sld [smem:[#allocation5 + $0x2f]]
        %v962 = vstv %s961
        %v963 = vmul.f32 %v962, %v953
        %v964 = vmul.f32 %v962, %v954
        %v965 = vadd.f32 %v939, %v963
        %v966 = vadd.f32 %v940, %v964
        %s967 = sld [smem:[#allocation5 + $0x4a]]
        %v968 = vstv %s967
        %v969 = vmul.f32 %v968, %v953
        %v970 = vmul.f32 %v968, %v954
        %v971 = vadd.f32 %v945, %v969
        %v972 = vadd.f32 %v946, %v970
        %973 = vrot.lane.b32.xlu0 %v893, 1
        %v974 = vpop.permute.xlu0 %973
        %975 = vrot.lane.b32.xlu0 %v894, 1
        %v976 = vpop.permute.xlu0 %975
        %v977 = vsel %vm449, %v974, %v976
        %v978 = vsel %vm449, %v976, %v974
        %v979 = vmul.f32 %v978, %v458
        %v980 = vmul.f32 %v977, %v462
        %s981 = sld [smem:[#allocation5 + $0x15]]
        %v982 = vstv %s981
        %v983 = vmul.f32 %v982, %v979
        %v984 = vmul.f32 %v982, %v980
        %v985 = vadd.f32 %v959, %v983
        %v986 = vadd.f32 %v960, %v984
        %s987 = sld [smem:[#allocation5 + $0x30]]
        %v988 = vstv %s987
        %v989 = vmul.f32 %v988, %v979
        %v990 = vmul.f32 %v988, %v980
        %v991 = vadd.f32 %v965, %v989
        %v992 = vadd.f32 %v966, %v990
        %s993 = sld [smem:[#allocation5 + $0x4b]]
        %v994 = vstv %s993
        %v995 = vmul.f32 %v994, %v979
        %v996 = vmul.f32 %v994, %v980
        %v997 = vadd.f32 %v971, %v995
        %v998 = vadd.f32 %v972, %v996
        %s999 = sld [smem:[#allocation5 + $0x16]]
        %v1000 = vstv %s999
        %v1001 = vmul.f32 %v1000, %v893
        %v1002 = vmul.f32 %v1000, %v894
        %v1003 = vadd.f32 %v985, %v1001
        %v1004 = vadd.f32 %v986, %v1002
        %s1005 = sld [smem:[#allocation5 + $0x31]]
        %v1006 = vstv %s1005
        %v1007 = vmul.f32 %v1006, %v893
        %v1008 = vmul.f32 %v1006, %v894
        %v1009 = vadd.f32 %v991, %v1007
        %v1010 = vadd.f32 %v992, %v1008
        %s1011 = sld [smem:[#allocation5 + $0x4c]]
        %v1012 = vstv %s1011
        %v1013 = vmul.f32 %v1012, %v893
        %v1014 = vmul.f32 %v1012, %v894
        %v1015 = vadd.f32 %v997, %v1013
        %v1016 = vadd.f32 %v998, %v1014
        %1017 = vrot.lane.b32.xlu0 %v893, 127
        %v1018 = vpop.permute.xlu0 %1017
        %1019 = vrot.lane.b32.xlu0 %v894, 127
        %v1020 = vpop.permute.xlu0 %1019
        %v1021 = vsel %vm507, %v1018, %v1020
        %v1022 = vsel %vm507, %v1020, %v1018
        %v1023 = vmul.f32 %v1021, %v516
        %v1024 = vmul.f32 %v1022, %v520
        %s1025 = sld [smem:[#allocation5 + $0x17]]
        %v1026 = vstv %s1025
        %v1027 = vmul.f32 %v1026, %v1023
        %v1028 = vmul.f32 %v1026, %v1024
        %v1029 = vadd.f32 %v1003, %v1027
        %v1030 = vadd.f32 %v1004, %v1028
        %s1031 = sld [smem:[#allocation5 + $0x32]]
        %v1032 = vstv %s1031
        %v1033 = vmul.f32 %v1032, %v1023
        %v1034 = vmul.f32 %v1032, %v1024
        %v1035 = vadd.f32 %v1009, %v1033
        %v1036 = vadd.f32 %v1010, %v1034
        %s1037 = sld [smem:[#allocation5 + $0x4d]]
        %v1038 = vstv %s1037
        %v1039 = vmul.f32 %v1038, %v1023
        %v1040 = vmul.f32 %v1038, %v1024
        %v1041 = vadd.f32 %v1015, %v1039
        %v1042 = vadd.f32 %v1016, %v1040
        %1043 = vrot.lane.b32.xlu0 %v893, 113
        %v1044 = vpop.permute.xlu0 %1043
        %1045 = vrot.lane.b32.xlu0 %v894, 113
        %v1046 = vpop.permute.xlu0 %1045
        %v1047 = vsel %vm547, %v1044, %v1046
        %v1048 = vsel %vm547, %v1046, %v1044
        %v1049 = vmul.f32 %v1047, %v556
        %v1050 = vmul.f32 %v1048, %v560
        %s1051 = sld [smem:[#allocation5 + $0x18]]
        %v1052 = vstv %s1051
        %v1053 = vmul.f32 %v1052, %v1049
        %v1054 = vmul.f32 %v1052, %v1050
        %v1055 = vadd.f32 %v1029, %v1053
        %v1056 = vadd.f32 %v1030, %v1054
        %s1057 = sld [smem:[#allocation5 + $0x33]]
        %v1058 = vstv %s1057
        %v1059 = vmul.f32 %v1058, %v1049
        %v1060 = vmul.f32 %v1058, %v1050
        %v1061 = vadd.f32 %v1035, %v1059
        %v1062 = vadd.f32 %v1036, %v1060
        %s1063 = sld [smem:[#allocation5 + $0x4e]]
        %v1064 = vstv %s1063
        %v1065 = vmul.f32 %v1064, %v1049
        %v1066 = vmul.f32 %v1064, %v1050
        %v1067 = vadd.f32 %v1041, %v1065
        %v1068 = vadd.f32 %v1042, %v1066
        %1069 = vrot.lane.b32.xlu0 %v893, 112
        %v1070 = vpop.permute.xlu0 %1069
        %1071 = vrot.lane.b32.xlu0 %v894, 112
        %v1072 = vpop.permute.xlu0 %1071
        %v1073 = vsel %vm587, %v1070, %v1072
        %v1074 = vsel %vm587, %v1072, %v1070
        %v1075 = vmul.f32 %v1073, %v596
        %v1076 = vmul.f32 %v1074, %v600
        %s1077 = sld [smem:[#allocation5 + $0x19]]
        %v1078 = vstv %s1077
        %v1079 = vmul.f32 %v1078, %v1075
        %v1080 = vmul.f32 %v1078, %v1076
        %v1081 = vadd.f32 %v1055, %v1079
        %v1082 = vadd.f32 %v1056, %v1080
        %s1083 = sld [smem:[#allocation5 + $0x34]]
        %v1084 = vstv %s1083
        %v1085 = vmul.f32 %v1084, %v1075
        %v1086 = vmul.f32 %v1084, %v1076
        %v1087 = vadd.f32 %v1061, %v1085
        %v1088 = vadd.f32 %v1062, %v1086
        %s1089 = sld [smem:[#allocation5 + $0x4f]]
        %v1090 = vstv %s1089
        %v1091 = vmul.f32 %v1090, %v1075
        %v1092 = vmul.f32 %v1090, %v1076
        %v1093 = vadd.f32 %v1067, %v1091
        %v1094 = vadd.f32 %v1068, %v1092
        %1095 = vrot.lane.b32.xlu0 %v893, 111
        %v1096 = vpop.permute.xlu0 %1095
        %1097 = vrot.lane.b32.xlu0 %v894, 111
        %v1098 = vpop.permute.xlu0 %1097
        %v1099 = vsel %vm627, %v1096, %v1098
        %v1100 = vsel %vm627, %v1098, %v1096
        %v1101 = vmul.f32 %v1099, %v636
        %v1102 = vmul.f32 %v1100, %v640
        %s1103 = sld [smem:[#allocation5 + $0x1a]]
        %v1104 = vstv %s1103
        %v1105 = vmul.f32 %v1104, %v1101
        %v1106 = vmul.f32 %v1104, %v1102
        %v1107 = vadd.f32 %v1081, %v1105
        %v1108 = vadd.f32 %v1082, %v1106
        %s1109 = sld [smem:[#allocation5 + $0x35]]
        %v1110 = vstv %s1109
        %v1111 = vmul.f32 %v1110, %v1101
        %v1112 = vmul.f32 %v1110, %v1102
        %v1113 = vadd.f32 %v1087, %v1111
        %v1114 = vadd.f32 %v1088, %v1112
        %s1115 = sld [smem:[#allocation5 + $0x50]]
        %v1116 = vstv %s1115
        %v1117 = vmul.f32 %v1116, %v1101
        %v1118 = vmul.f32 %v1116, %v1102
        %v1119 = vadd.f32 %v1093, %v1117
        %v1120 = vadd.f32 %v1094, %v1118
        %s1121 = sld [smem:[#allocation7]]
        %v1122 = vstv %s1121
        %v1123 = vadd.f32 %v1107, %v1122
        %v1124 = vadd.f32 %v1108, %v1122
        %v1125 = vmax.f32 %v1123, 0.0
        %v1126 = vmax.f32 %v1124, 0.0
        %1127 = vst [vmem:[#allocation2] sm:$0xff] %v1125
        %1128 = vst [vmem:[#allocation2 + $0x8] sm:$0xff] %v1126
        %s1129 = sld [smem:[#allocation7 + $0x1]]
        %v1130 = vstv %s1129
        %v1131 = vadd.f32 %v1113, %v1130
        %v1132 = vadd.f32 %v1114, %v1130
        %v1133 = vmax.f32 %v1131, 0.0
        %v1134 = vmax.f32 %v1132, 0.0
        %s1135 = scalar_lea.vmem [#allocation2], 16
        %1136 = vst [vmem:[%s1135] sm:$0xff] %v1133
        %1137 = vst [vmem:[%s1135 + $0x8] sm:$0xff] %v1134
        %s1138 = sld [smem:[#allocation7 + $0x2]]
        %v1139 = vstv %s1138
        %v1140 = vadd.f32 %v1119, %v1139
        %v1141 = vadd.f32 %v1120, %v1139
        %v1142 = vmax.f32 %v1140, 0.0
        %v1143 = vmax.f32 %v1141, 0.0
        %s1144 = scalar_lea.vmem [#allocation2], 32
        %1145 = vst [vmem:[%s1144] sm:$0xff] %v1142
        %1146 = vst [vmem:[%s1144 + $0x8] sm:$0xff] %v1143
        %v1147 = vld [vmem:[#allocation2] sm:$0xff]
        %v1148 = vld [vmem:[#allocation2 + $0x8] sm:$0xff]
        %1149 = vrot.lane.b32.xlu0 %v1147, 17
        %v1150 = vpop.permute.xlu0 %1149
        %1151 = vrot.lane.b32.xlu0 %v1148, 17
        %v1152 = vpop.permute.xlu0 %1151
        %v1153 = vsel %vm330, %v1150, %v1152
        %v1154 = vsel %vm330, %v1152, %v1150
        %v1155 = vld [vmem:[%s1] ss:$8 sm:$0x3]
        %v1157 = vlaneseq
        %v1158 = vshrl.u32 %v1157, 7
        %v1159 = vsub.s32 0, %v1158
        %v1160 = vrot.slane %v1155, %v1159
        %v1161 = vlaneseq
        %v1162 = vshrl.u32 %v1161, 7
        %v1163 = vsub.s32 1, %v1162
        %v1164 = vrot.slane %v1155, %v1163
        %v1167 = vmul.f32 %v1154, %v1160
        %v1168 = vmul.f32 %v1153, %v1164
        %s1169 = sld [smem:[#allocation9]]
        %v1170 = vstv %s1169
        %v1171 = vmul.f32 %v1170, %v1167
        %v1172 = vmul.f32 %v1170, %v1168
        %v1173 = vadd.f32 %v1171, 0.0
        %v1174 = vadd.f32 %v1172, 0.0
        %1175 = vrot.lane.b32.xlu0 %v1147, 16
        %v1176 = vpop.permute.xlu0 %1175
        %1177 = vrot.lane.b32.xlu0 %v1148, 16
        %v1178 = vpop.permute.xlu0 %1177
        %v1179 = vsel %vm369, %v1176, %v1178
        %v1180 = vsel %vm369, %v1178, %v1176
        %v1181 = vld [vmem:[%s372] ss:$8 sm:$0x3]
        %v1183 = vlaneseq
        %v1184 = vshrl.u32 %v1183, 7
        %v1185 = vsub.s32 0, %v1184
        %v1186 = vrot.slane %v1181, %v1185
        %v1187 = vlaneseq
        %v1188 = vshrl.u32 %v1187, 7
        %v1189 = vsub.s32 1, %v1188
        %v1190 = vrot.slane %v1181, %v1189
        %v1193 = vmul.f32 %v1180, %v1186
        %v1194 = vmul.f32 %v1179, %v1190
        %s1195 = sld [smem:[#allocation9 + $0x1]]
        %v1196 = vstv %s1195
        %v1197 = vmul.f32 %v1196, %v1193
        %v1198 = vmul.f32 %v1196, %v1194
        %v1199 = vadd.f32 %v1173, %v1197
        %v1200 = vadd.f32 %v1174, %v1198
        %1201 = vrot.lane.b32.xlu0 %v1147, 15
        %v1202 = vpop.permute.xlu0 %1201
        %1203 = vrot.lane.b32.xlu0 %v1148, 15
        %v1204 = vpop.permute.xlu0 %1203
        %v1205 = vsel %vm409, %v1202, %v1204
        %v1206 = vsel %vm409, %v1204, %v1202
        %v1207 = vld [vmem:[%s412] ss:$8 sm:$0x3]
        %v1209 = vlaneseq
        %v1210 = vshrl.u32 %v1209, 7
        %v1211 = vsub.s32 0, %v1210
        %v1212 = vrot.slane %v1207, %v1211
        %v1213 = vlaneseq
        %v1214 = vshrl.u32 %v1213, 7
        %v1215 = vsub.s32 1, %v1214
        %v1216 = vrot.slane %v1207, %v1215
        %v1219 = vmul.f32 %v1206, %v1212
        %v1220 = vmul.f32 %v1205, %v1216
        %s1221 = sld [smem:[#allocation9 + $0x2]]
        %v1222 = vstv %s1221
        %v1223 = vmul.f32 %v1222, %v1219
        %v1224 = vmul.f32 %v1222, %v1220
        %v1225 = vadd.f32 %v1199, %v1223
        %v1226 = vadd.f32 %v1200, %v1224
        %1227 = vrot.lane.b32.xlu0 %v1147, 1
        %v1228 = vpop.permute.xlu0 %1227
        %1229 = vrot.lane.b32.xlu0 %v1148, 1
        %v1230 = vpop.permute.xlu0 %1229
        %v1231 = vsel %vm449, %v1228, %v1230
        %v1232 = vsel %vm449, %v1230, %v1228
        %v1233 = vld [vmem:[%s452] ss:$8 sm:$0x3]
        %v1235 = vlaneseq
        %v1236 = vshrl.u32 %v1235, 7
        %v1237 = vsub.s32 0, %v1236
        %v1238 = vrot.slane %v1233, %v1237
        %v1239 = vlaneseq
        %v1240 = vshrl.u32 %v1239, 7
        %v1241 = vsub.s32 1, %v1240
        %v1242 = vrot.slane %v1233, %v1241
        %v1245 = vmul.f32 %v1232, %v1238
        %v1246 = vmul.f32 %v1231, %v1242
        %s1247 = sld [smem:[#allocation9 + $0x3]]
        %v1248 = vstv %s1247
        %v1249 = vmul.f32 %v1248, %v1245
        %v1250 = vmul.f32 %v1248, %v1246
        %v1251 = vadd.f32 %v1225, %v1249
        %v1252 = vadd.f32 %v1226, %v1250
        %s1253 = sld [smem:[#allocation9 + $0x4]]
        %v1254 = vstv %s1253
        %v1255 = vmul.f32 %v1254, %v1147
        %v1256 = vmul.f32 %v1254, %v1148
        %v1257 = vadd.f32 %v1251, %v1255
        %v1258 = vadd.f32 %v1252, %v1256
        %1259 = vrot.lane.b32.xlu0 %v1147, 127
        %v1260 = vpop.permute.xlu0 %1259
        %1261 = vrot.lane.b32.xlu0 %v1148, 127
        %v1262 = vpop.permute.xlu0 %1261
        %v1263 = vsel %vm507, %v1260, %v1262
        %v1264 = vsel %vm507, %v1262, %v1260
        %v1265 = vld [vmem:[%s510] ss:$8 sm:$0x3]
        %v1267 = vlaneseq
        %v1268 = vshrl.u32 %v1267, 7
        %v1269 = vsub.s32 0, %v1268
        %v1270 = vrot.slane %v1265, %v1269
        %v1271 = vlaneseq
        %v1272 = vshrl.u32 %v1271, 7
        %v1273 = vsub.s32 1, %v1272
        %v1274 = vrot.slane %v1265, %v1273
        %v1277 = vmul.f32 %v1263, %v1270
        %v1278 = vmul.f32 %v1264, %v1274
        %s1279 = sld [smem:[#allocation9 + $0x5]]
        %v1280 = vstv %s1279
        %v1281 = vmul.f32 %v1280, %v1277
        %v1282 = vmul.f32 %v1280, %v1278
        %v1283 = vadd.f32 %v1257, %v1281
        %v1284 = vadd.f32 %v1258, %v1282
        %1285 = vrot.lane.b32.xlu0 %v1147, 113
        %v1286 = vpop.permute.xlu0 %1285
        %1287 = vrot.lane.b32.xlu0 %v1148, 113
        %v1288 = vpop.permute.xlu0 %1287
        %v1289 = vsel %vm547, %v1286, %v1288
        %v1290 = vsel %vm547, %v1288, %v1286
        %v1291 = vld [vmem:[%s550] ss:$8 sm:$0x3]
        %v1293 = vlaneseq
        %v1294 = vshrl.u32 %v1293, 7
        %v1295 = vsub.s32 0, %v1294
        %v1296 = vrot.slane %v1291, %v1295
        %v1297 = vlaneseq
        %v1298 = vshrl.u32 %v1297, 7
        %v1299 = vsub.s32 1, %v1298
        %v1300 = vrot.slane %v1291, %v1299
        %v1303 = vmul.f32 %v1289, %v1296
        %v1304 = vmul.f32 %v1290, %v1300
        %s1305 = sld [smem:[#allocation9 + $0x6]]
        %v1306 = vstv %s1305
        %v1307 = vmul.f32 %v1306, %v1303
        %v1308 = vmul.f32 %v1306, %v1304
        %v1309 = vadd.f32 %v1283, %v1307
        %v1310 = vadd.f32 %v1284, %v1308
        %1311 = vrot.lane.b32.xlu0 %v1147, 112
        %v1312 = vpop.permute.xlu0 %1311
        %1313 = vrot.lane.b32.xlu0 %v1148, 112
        %v1314 = vpop.permute.xlu0 %1313
        %v1315 = vsel %vm587, %v1312, %v1314
        %v1316 = vsel %vm587, %v1314, %v1312
        %v1317 = vld [vmem:[%s590] ss:$8 sm:$0x3]
        %v1319 = vlaneseq
        %v1320 = vshrl.u32 %v1319, 7
        %v1321 = vsub.s32 0, %v1320
        %v1322 = vrot.slane %v1317, %v1321
        %v1323 = vlaneseq
        %v1324 = vshrl.u32 %v1323, 7
        %v1325 = vsub.s32 1, %v1324
        %v1326 = vrot.slane %v1317, %v1325
        %v1329 = vmul.f32 %v1315, %v1322
        %v1330 = vmul.f32 %v1316, %v1326
        %s1331 = sld [smem:[#allocation9 + $0x7]]
        %v1332 = vstv %s1331
        %v1333 = vmul.f32 %v1332, %v1329
        %v1334 = vmul.f32 %v1332, %v1330
        %v1335 = vadd.f32 %v1309, %v1333
        %v1336 = vadd.f32 %v1310, %v1334
        %1337 = vrot.lane.b32.xlu0 %v1147, 111
        %v1338 = vpop.permute.xlu0 %1337
        %1339 = vrot.lane.b32.xlu0 %v1148, 111
        %v1340 = vpop.permute.xlu0 %1339
        %v1341 = vsel %vm627, %v1338, %v1340
        %v1342 = vsel %vm627, %v1340, %v1338
        %v1343 = vld [vmem:[%s630] ss:$8 sm:$0x3]
        %v1345 = vlaneseq
        %v1346 = vshrl.u32 %v1345, 7
        %v1347 = vsub.s32 0, %v1346
        %v1348 = vrot.slane %v1343, %v1347
        %v1349 = vlaneseq
        %v1350 = vshrl.u32 %v1349, 7
        %v1351 = vsub.s32 1, %v1350
        %v1352 = vrot.slane %v1343, %v1351
        %v1355 = vmul.f32 %v1341, %v1348
        %v1356 = vmul.f32 %v1342, %v1352
        %s1357 = sld [smem:[#allocation9 + $0x8]]
        %v1358 = vstv %s1357
        %v1359 = vmul.f32 %v1358, %v1355
        %v1360 = vmul.f32 %v1358, %v1356
        %v1361 = vadd.f32 %v1335, %v1359
        %v1362 = vadd.f32 %v1336, %v1360
        %v1363 = vld [vmem:[%s1135] sm:$0xff]
        %v1364 = vld [vmem:[%s1135 + $0x8] sm:$0xff]
        %1365 = vrot.lane.b32.xlu0 %v1363, 17
        %v1366 = vpop.permute.xlu0 %1365
        %1367 = vrot.lane.b32.xlu0 %v1364, 17
        %v1368 = vpop.permute.xlu0 %1367
        %v1369 = vsel %vm330, %v1366, %v1368
        %v1370 = vsel %vm330, %v1368, %v1366
        %v1371 = vmul.f32 %v1370, %v1160
        %v1372 = vmul.f32 %v1369, %v1164
        %s1373 = sld [smem:[#allocation9 + $0x9]]
        %v1374 = vstv %s1373
        %v1375 = vmul.f32 %v1374, %v1371
        %v1376 = vmul.f32 %v1374, %v1372
        %v1377 = vadd.f32 %v1361, %v1375
        %v1378 = vadd.f32 %v1362, %v1376
        %1379 = vrot.lane.b32.xlu0 %v1363, 16
        %v1380 = vpop.permute.xlu0 %1379
        %1381 = vrot.lane.b32.xlu0 %v1364, 16
        %v1382 = vpop.permute.xlu0 %1381
        %v1383 = vsel %vm369, %v1380, %v1382
        %v1384 = vsel %vm369, %v1382, %v1380
        %v1385 = vmul.f32 %v1384, %v1186
        %v1386 = vmul.f32 %v1383, %v1190
        %s1387 = sld [smem:[#allocation9 + $0xa]]
        %v1388 = vstv %s1387
        %v1389 = vmul.f32 %v1388, %v1385
        %v1390 = vmul.f32 %v1388, %v1386
        %v1391 = vadd.f32 %v1377, %v1389
        %v1392 = vadd.f32 %v1378, %v1390
        %1393 = vrot.lane.b32.xlu0 %v1363, 15
        %v1394 = vpop.permute.xlu0 %1393
        %1395 = vrot.lane.b32.xlu0 %v1364, 15
        %v1396 = vpop.permute.xlu0 %1395
        %v1397 = vsel %vm409, %v1394, %v1396
        %v1398 = vsel %vm409, %v1396, %v1394
        %v1399 = vmul.f32 %v1398, %v1212
        %v1400 = vmul.f32 %v1397, %v1216
        %s1401 = sld [smem:[#allocation9 + $0xb]]
        %v1402 = vstv %s1401
        %v1403 = vmul.f32 %v1402, %v1399
        %v1404 = vmul.f32 %v1402, %v1400
        %v1405 = vadd.f32 %v1391, %v1403
        %v1406 = vadd.f32 %v1392, %v1404
        %1407 = vrot.lane.b32.xlu0 %v1363, 1
        %v1408 = vpop.permute.xlu0 %1407
        %1409 = vrot.lane.b32.xlu0 %v1364, 1
        %v1410 = vpop.permute.xlu0 %1409
        %v1411 = vsel %vm449, %v1408, %v1410
        %v1412 = vsel %vm449, %v1410, %v1408
        %v1413 = vmul.f32 %v1412, %v1238
        %v1414 = vmul.f32 %v1411, %v1242
        %s1415 = sld [smem:[#allocation9 + $0xc]]
        %v1416 = vstv %s1415
        %v1417 = vmul.f32 %v1416, %v1413
        %v1418 = vmul.f32 %v1416, %v1414
        %v1419 = vadd.f32 %v1405, %v1417
        %v1420 = vadd.f32 %v1406, %v1418
        %s1421 = sld [smem:[#allocation9 + $0xd]]
        %v1422 = vstv %s1421
        %v1423 = vmul.f32 %v1422, %v1363
        %v1424 = vmul.f32 %v1422, %v1364
        %v1425 = vadd.f32 %v1419, %v1423
        %v1426 = vadd.f32 %v1420, %v1424
        %1427 = vrot.lane.b32.xlu0 %v1363, 127
        %v1428 = vpop.permute.xlu0 %1427
        %1429 = vrot.lane.b32.xlu0 %v1364, 127
        %v1430 = vpop.permute.xlu0 %1429
        %v1431 = vsel %vm507, %v1428, %v1430
        %v1432 = vsel %vm507, %v1430, %v1428
        %v1433 = vmul.f32 %v1431, %v1270
        %v1434 = vmul.f32 %v1432, %v1274
        %s1435 = sld [smem:[#allocation9 + $0xe]]
        %v1436 = vstv %s1435
        %v1437 = vmul.f32 %v1436, %v1433
        %v1438 = vmul.f32 %v1436, %v1434
        %v1439 = vadd.f32 %v1425, %v1437
        %v1440 = vadd.f32 %v1426, %v1438
        %1441 = vrot.lane.b32.xlu0 %v1363, 113
        %v1442 = vpop.permute.xlu0 %1441
        %1443 = vrot.lane.b32.xlu0 %v1364, 113
        %v1444 = vpop.permute.xlu0 %1443
        %v1445 = vsel %vm547, %v1442, %v1444
        %v1446 = vsel %vm547, %v1444, %v1442
        %v1447 = vmul.f32 %v1445, %v1296
        %v1448 = vmul.f32 %v1446, %v1300
        %s1449 = sld [smem:[#allocation9 + $0xf]]
        %v1450 = vstv %s1449
        %v1451 = vmul.f32 %v1450, %v1447
        %v1452 = vmul.f32 %v1450, %v1448
        %v1453 = vadd.f32 %v1439, %v1451
        %v1454 = vadd.f32 %v1440, %v1452
        %1455 = vrot.lane.b32.xlu0 %v1363, 112
        %v1456 = vpop.permute.xlu0 %1455
        %1457 = vrot.lane.b32.xlu0 %v1364, 112
        %v1458 = vpop.permute.xlu0 %1457
        %v1459 = vsel %vm587, %v1456, %v1458
        %v1460 = vsel %vm587, %v1458, %v1456
        %v1461 = vmul.f32 %v1459, %v1322
        %v1462 = vmul.f32 %v1460, %v1326
        %s1463 = sld [smem:[#allocation9 + $0x10]]
        %v1464 = vstv %s1463
        %v1465 = vmul.f32 %v1464, %v1461
        %v1466 = vmul.f32 %v1464, %v1462
        %v1467 = vadd.f32 %v1453, %v1465
        %v1468 = vadd.f32 %v1454, %v1466
        %1469 = vrot.lane.b32.xlu0 %v1363, 111
        %v1470 = vpop.permute.xlu0 %1469
        %1471 = vrot.lane.b32.xlu0 %v1364, 111
        %v1472 = vpop.permute.xlu0 %1471
        %v1473 = vsel %vm627, %v1470, %v1472
        %v1474 = vsel %vm627, %v1472, %v1470
        %v1475 = vmul.f32 %v1473, %v1348
        %v1476 = vmul.f32 %v1474, %v1352
        %s1477 = sld [smem:[#allocation9 + $0x11]]
        %v1478 = vstv %s1477
        %v1479 = vmul.f32 %v1478, %v1475
        %v1480 = vmul.f32 %v1478, %v1476
        %v1481 = vadd.f32 %v1467, %v1479
        %v1482 = vadd.f32 %v1468, %v1480
        %v1483 = vld [vmem:[%s1144] sm:$0xff]
        %v1484 = vld [vmem:[%s1144 + $0x8] sm:$0xff]
        %1485 = vrot.lane.b32.xlu0 %v1483, 17
        %v1486 = vpop.permute.xlu0 %1485
        %1487 = vrot.lane.b32.xlu0 %v1484, 17
        %v1488 = vpop.permute.xlu0 %1487
        %v1489 = vsel %vm330, %v1486, %v1488
        %v1490 = vsel %vm330, %v1488, %v1486
        %v1491 = vmul.f32 %v1490, %v1160
        %v1492 = vmul.f32 %v1489, %v1164
        %s1493 = sld [smem:[#allocation9 + $0x12]]
        %v1494 = vstv %s1493
        %v1495 = vmul.f32 %v1494, %v1491
        %v1496 = vmul.f32 %v1494, %v1492
        %v1497 = vadd.f32 %v1481, %v1495
        %v1498 = vadd.f32 %v1482, %v1496
        %1499 = vrot.lane.b32.xlu0 %v1483, 16
        %v1500 = vpop.permute.xlu0 %1499
        %1501 = vrot.lane.b32.xlu0 %v1484, 16
        %v1502 = vpop.permute.xlu0 %1501
        %v1503 = vsel %vm369, %v1500, %v1502
        %v1504 = vsel %vm369, %v1502, %v1500
        %v1505 = vmul.f32 %v1504, %v1186
        %v1506 = vmul.f32 %v1503, %v1190
        %s1507 = sld [smem:[#allocation9 + $0x13]]
        %v1508 = vstv %s1507
        %v1509 = vmul.f32 %v1508, %v1505
        %v1510 = vmul.f32 %v1508, %v1506
        %v1511 = vadd.f32 %v1497, %v1509
        %v1512 = vadd.f32 %v1498, %v1510
        %1513 = vrot.lane.b32.xlu0 %v1483, 15
        %v1514 = vpop.permute.xlu0 %1513
        %1515 = vrot.lane.b32.xlu0 %v1484, 15
        %v1516 = vpop.permute.xlu0 %1515
        %v1517 = vsel %vm409, %v1514, %v1516
        %v1518 = vsel %vm409, %v1516, %v1514
        %v1519 = vmul.f32 %v1518, %v1212
        %v1520 = vmul.f32 %v1517, %v1216
        %s1521 = sld [smem:[#allocation9 + $0x14]]
        %v1522 = vstv %s1521
        %v1523 = vmul.f32 %v1522, %v1519
        %v1524 = vmul.f32 %v1522, %v1520
        %v1525 = vadd.f32 %v1511, %v1523
        %v1526 = vadd.f32 %v1512, %v1524
        %1527 = vrot.lane.b32.xlu0 %v1483, 1
        %v1528 = vpop.permute.xlu0 %1527
        %1529 = vrot.lane.b32.xlu0 %v1484, 1
        %v1530 = vpop.permute.xlu0 %1529
        %v1531 = vsel %vm449, %v1528, %v1530
        %v1532 = vsel %vm449, %v1530, %v1528
        %v1533 = vmul.f32 %v1532, %v1238
        %v1534 = vmul.f32 %v1531, %v1242
        %s1535 = sld [smem:[#allocation9 + $0x15]]
        %v1536 = vstv %s1535
        %v1537 = vmul.f32 %v1536, %v1533
        %v1538 = vmul.f32 %v1536, %v1534
        %v1539 = vadd.f32 %v1525, %v1537
        %v1540 = vadd.f32 %v1526, %v1538
        %s1541 = sld [smem:[#allocation9 + $0x16]]
        %v1542 = vstv %s1541
        %v1543 = vmul.f32 %v1542, %v1483
        %v1544 = vmul.f32 %v1542, %v1484
        %v1545 = vadd.f32 %v1539, %v1543
        %v1546 = vadd.f32 %v1540, %v1544
        %1547 = vrot.lane.b32.xlu0 %v1483, 127
        %v1548 = vpop.permute.xlu0 %1547
        %1549 = vrot.lane.b32.xlu0 %v1484, 127
        %v1550 = vpop.permute.xlu0 %1549
        %v1551 = vsel %vm507, %v1548, %v1550
        %v1552 = vsel %vm507, %v1550, %v1548
        %v1553 = vmul.f32 %v1551, %v1270
        %v1554 = vmul.f32 %v1552, %v1274
        %s1555 = sld [smem:[#allocation9 + $0x17]]
        %v1556 = vstv %s1555
        %v1557 = vmul.f32 %v1556, %v1553
        %v1558 = vmul.f32 %v1556, %v1554
        %v1559 = vadd.f32 %v1545, %v1557
        %v1560 = vadd.f32 %v1546, %v1558
        %1561 = vrot.lane.b32.xlu0 %v1483, 113
        %v1562 = vpop.permute.xlu0 %1561
        %1563 = vrot.lane.b32.xlu0 %v1484, 113
        %v1564 = vpop.permute.xlu0 %1563
        %v1565 = vsel %vm547, %v1562, %v1564
        %v1566 = vsel %vm547, %v1564, %v1562
        %v1567 = vmul.f32 %v1565, %v1296
        %v1568 = vmul.f32 %v1566, %v1300
        %s1569 = sld [smem:[#allocation9 + $0x18]]
        %v1570 = vstv %s1569
        %v1571 = vmul.f32 %v1570, %v1567
        %v1572 = vmul.f32 %v1570, %v1568
        %v1573 = vadd.f32 %v1559, %v1571
        %v1574 = vadd.f32 %v1560, %v1572
        %1575 = vrot.lane.b32.xlu0 %v1483, 112
        %v1576 = vpop.permute.xlu0 %1575
        %1577 = vrot.lane.b32.xlu0 %v1484, 112
        %v1578 = vpop.permute.xlu0 %1577
        %v1579 = vsel %vm587, %v1576, %v1578
        %v1580 = vsel %vm587, %v1578, %v1576
        %v1581 = vmul.f32 %v1579, %v1322
        %v1582 = vmul.f32 %v1580, %v1326
        %s1583 = sld [smem:[#allocation9 + $0x19]]
        %v1584 = vstv %s1583
        %v1585 = vmul.f32 %v1584, %v1581
        %v1586 = vmul.f32 %v1584, %v1582
        %v1587 = vadd.f32 %v1573, %v1585
        %v1588 = vadd.f32 %v1574, %v1586
        %1589 = vrot.lane.b32.xlu0 %v1483, 111
        %v1590 = vpop.permute.xlu0 %1589
        %1591 = vrot.lane.b32.xlu0 %v1484, 111
        %v1592 = vpop.permute.xlu0 %1591
        %v1593 = vsel %vm627, %v1590, %v1592
        %v1594 = vsel %vm627, %v1592, %v1590
        %v1595 = vmul.f32 %v1593, %v1348
        %v1596 = vmul.f32 %v1594, %v1352
        %s1597 = sld [smem:[#allocation9 + $0x1a]]
        %v1598 = vstv %s1597
        %v1599 = vmul.f32 %v1598, %v1595
        %v1600 = vmul.f32 %v1598, %v1596
        %v1601 = vadd.f32 %v1587, %v1599
        %v1602 = vadd.f32 %v1588, %v1600
        %s1603 = sld [smem:[#allocation3]]
        %v1604 = vstv %s1603
        %v1605 = vadd.f32 %v1601, %v1604
        %v1606 = vadd.f32 %v1602, %v1604
        %1607 = vst [vmem:[%s321] sm:$0xff] %v1605
        %1608 = vst [vmem:[%s321 + $0x8] sm:$0xff] %v1606
        %p1609 = scmp.lt.s32.totalorder %s20, 1
        %s1610 = scalar_select %p1609, %s20, 1
        %s1611 = smul.addr %s1610, 2
        %s1612 = smul.addr %s1611, 8
        %s1613 = scalar_lea.vmem %s6, %s1612
        // Predicated region
        $region80: #{_lambda_.3} parent=62 // pred_check
          %p1614 = pneg %p169
        $region81: #{_lambda_.3} parent=62 // pred_check_branch
          %1616 = sbr.rel (%p1614) target = $region83
        $region82: #{_lambda_.3} parent=62 // pred_region
          _
        $region83: #{_lambda_.3} parent=62 // pred_fallthru
          _
      $region63: #{_lambda_.3} parent=5 // pred_fallthru
        _
      %p1617 = scmp.le.s32.totalorder 2, %s15
      // Predicated region
      $region84: #{_lambda_.3} parent=5 // pred_check
        %p1618 = pneg %p1617
      $region85: #{_lambda_.3} parent=5 // pred_check_branch
        %1620 = sbr.rel (%p1618) target = $region87
      $region86: #{_lambda_.3} parent=5 // pred_region
        %s1621 = ssub.s32 %s15, 2
        // Predicated region
        $region88: #{_lambda_.3} parent=86 // pred_check
          %p1622 = pneg %p175
        $region89: #{_lambda_.3} parent=86 // pred_check_branch
          %1624 = sbr.rel (%p1622) target = $region91
        $region90: #{_lambda_.3} parent=86 // pred_region
          %p1625 = scmp.lt.s32.totalorder %s21, 1
          %s1626 = scalar_select %p1625, %s21, 1
          %s1627 = smul.addr %s1626, 2
          %s1628 = smul.addr %s1627, 8
          %s1629 = scalar_lea.vmem %s6, %s1628
        $region91: #{_lambda_.3} parent=86 // pred_fallthru
          _
      $region87: #{_lambda_.3} parent=5 // pred_fallthru
        _
    $region6: #{_lambda_.3} parent=1 // loop_footer
      %s19 = sadd.s32 1, %s15
    $region7: #{_lambda_.3} parent=1 // loop_footer_branch
      %14 = sbr.rel target = $region3
    $region8: #{_lambda_.3} parent=1 // loop_exit
      _
    %1630 = vsyncpa [#allocation6], 1
    %s1631 = scalar_lea.sflag [#allocation6], 1
    %1632 = vsyncpa %s1631, 1
    %1633 = vsyncpa [#allocation8], 1

// kernel: _lambda_.5
$region0: #{_lambda_.5}
  #allocation0 [shape = 'u32[]', space=smem, size = 0x4, offset = 0x4, fixed_abs, tag = 'smem constant byte address 0x4 - core index']
  #allocation1 [shape = 'u32[144,128]{1,0:T(1,128)}', space=vmem, size = 0x12000, scoped, tag = 'internal scratch']
  #allocation2 [shape = 'f32[27,2048]{1,0:T(8,128)}', space=vmem, size = 0x40000, scoped, tag = 'scratch operand']
  %s0 = inlined_call_operand.vmem [shape: f32[3,2048], index: 0, kind: input, shape index: {}]
  %s1 = inlined_call_operand.vmem [shape: f32[9,2048], index: 1, kind: input, shape index: {}]
  %s2 = inlined_call_operand.vmem [shape: f32[64,27], index: 2, kind: input, shape index: {}]
  %s3 = inlined_call_operand.vmem [shape: f32[64,1], index: 3, kind: input, shape index: {}]
  %s4 = inlined_call_operand.vmem [shape: f32[64,10], index: 4, kind: input, shape index: {}]
  %s5 = inlined_call_operand.vmem [shape: f32[1,10], index: 5, kind: input, shape index: {}]
  %s6 = inlined_call_operand.vmem [shape: f32[8,10], index: 6, kind: output, shape index: {}]
  %s7 = sld [smem:[#allocation0]]
  $region34: #{_lambda_.5} parent=0
    _
  %s9 = ssub.s32 1, %s7
  %s10 = scalar_select 0, %s9, %s7
  // Predicated region
  $region2: #{_lambda_.5} parent=0 // pred_check
    _
  $region3: #{_lambda_.5} parent=0 // pred_check_branch
    %12 = sbr.rel (0) target = $region5
  $region4: #{_lambda_.5} parent=0 // pred_region
    _
  $region5: #{_lambda_.5} parent=0 // pred_fallthru
    _
  // Predicated region
  $region6: #{_lambda_.5} parent=0 // pred_check
    _
  $region7: #{_lambda_.5} parent=0 // pred_check_branch
    %14 = sbr.rel (0) target = $region9
  $region8: #{_lambda_.5} parent=0 // pred_region
    _
  $region9: #{_lambda_.5} parent=0 // pred_fallthru
    _
  // Predicated region
  $region10: #{_lambda_.5} parent=0 // pred_check
    _
  $region11: #{_lambda_.5} parent=0 // pred_check_branch
    %16 = sbr.rel (0) target = $region13
  $region12: #{_lambda_.5} parent=0 // pred_region
    _
  $region13: #{_lambda_.5} parent=0 // pred_fallthru
    _
  // Predicated region
  $region14: #{_lambda_.5} parent=0 // pred_check
    _
  $region15: #{_lambda_.5} parent=0 // pred_check_branch
    %18 = sbr.rel (0) target = $region17
  $region16: #{_lambda_.5} parent=0 // pred_region
    _
  $region17: #{_lambda_.5} parent=0 // pred_fallthru
    _
  // Predicated region
  $region18: #{_lambda_.5} parent=0 // pred_check
    _
  $region19: #{_lambda_.5} parent=0 // pred_check_branch
    %20 = sbr.rel (0) target = $region21
  $region20: #{_lambda_.5} parent=0 // pred_region
    _
  $region21: #{_lambda_.5} parent=0 // pred_fallthru
    _
  // Predicated region
  $region22: #{_lambda_.5} parent=0 // pred_check
    _
  $region23: #{_lambda_.5} parent=0 // pred_check_branch
    %22 = sbr.rel (0) target = $region25
  $region24: #{_lambda_.5} parent=0 // pred_region
    _
  $region25: #{_lambda_.5} parent=0 // pred_fallthru
    _
  %v23 = vld [vmem:[%s0] sm:$0x77]
  %v24 = vld [vmem:[%s0 + $0x8] sm:$0x77]
  %v25 = vld [vmem:[%s0 + $0x10] sm:$0x77]
  %v26 = vld [vmem:[%s0 + $0x18] sm:$0x77]
  %v27 = vld [vmem:[%s0 + $0x20] sm:$0x77]
  %v28 = vld [vmem:[%s0 + $0x28] sm:$0x77]
  %v29 = vld [vmem:[%s0 + $0x30] sm:$0x77]
  %v30 = vld [vmem:[%s0 + $0x38] sm:$0x77]
  %v39 = vcombine.high %v23, %v23
  %v40 = vcombine.high %v24, %v24
  %v41 = vcombine.high %v25, %v25
  %v42 = vcombine.high %v26, %v26
  %v43 = vcombine.high %v27, %v27
  %v44 = vcombine.high %v28, %v28
  %v45 = vcombine.high %v29, %v29
  %v46 = vcombine.high %v30, %v30
  %55 = vrot.lane.b32.xlu0 %v23, 17
  %v56 = vpop.permute.xlu0 %55
  %57 = vrot.lane.b32.xlu0 %v39, 17
  %v58 = vpop.permute.xlu0 %57
  %59 = vrot.lane.b32.xlu0 %v24, 17
  %v60 = vpop.permute.xlu0 %59
  %61 = vrot.lane.b32.xlu0 %v40, 17
  %v62 = vpop.permute.xlu0 %61
  %63 = vrot.lane.b32.xlu0 %v25, 17
  %v64 = vpop.permute.xlu0 %63
  %65 = vrot.lane.b32.xlu0 %v41, 17
  %v66 = vpop.permute.xlu0 %65
  %67 = vrot.lane.b32.xlu0 %v26, 17
  %v68 = vpop.permute.xlu0 %67
  %69 = vrot.lane.b32.xlu0 %v42, 17
  %v70 = vpop.permute.xlu0 %69
  %71 = vrot.lane.b32.xlu0 %v27, 17
  %v72 = vpop.permute.xlu0 %71
  %73 = vrot.lane.b32.xlu0 %v43, 17
  %v74 = vpop.permute.xlu0 %73
  %75 = vrot.lane.b32.xlu0 %v28, 17
  %v76 = vpop.permute.xlu0 %75
  %77 = vrot.lane.b32.xlu0 %v44, 17
  %v78 = vpop.permute.xlu0 %77
  %79 = vrot.lane.b32.xlu0 %v29, 17
  %v80 = vpop.permute.xlu0 %79
  %81 = vrot.lane.b32.xlu0 %v45, 17
  %v82 = vpop.permute.xlu0 %81
  %83 = vrot.lane.b32.xlu0 %v30, 17
  %v84 = vpop.permute.xlu0 %83
  %85 = vrot.lane.b32.xlu0 %v46, 17
  %v86 = vpop.permute.xlu0 %85
  %v87 = vlaneseq
  %v88 = vand.u32 %v87, 127
  %vm89 = vcmp.lt.s32.totalorder %v88, 17
  %v90 = vsel %vm89, %v84, %v86
  %v91 = vsel %vm89, %v82, %v84
  %v92 = vsel %vm89, %v80, %v82
  %v93 = vsel %vm89, %v78, %v80
  %v94 = vsel %vm89, %v76, %v78
  %v95 = vsel %vm89, %v74, %v76
  %v96 = vsel %vm89, %v72, %v74
  %v97 = vsel %vm89, %v70, %v72
  %v98 = vsel %vm89, %v68, %v70
  %v99 = vsel %vm89, %v66, %v68
  %v100 = vsel %vm89, %v64, %v66
  %v101 = vsel %vm89, %v62, %v64
  %v102 = vsel %vm89, %v60, %v62
  %v103 = vsel %vm89, %v58, %v60
  %v104 = vsel %vm89, %v56, %v58
  %v105 = vsel %vm89, %v86, %v56
  %v106 = vld [vmem:[%s1] ss:$8 sm:$0xf]
  %v107 = vld [vmem:[%s1] ss:$8 sm:$0xf0]
  %v108 = vor.u32 %v106, %v107
  %s109 = scalar_lea.vmem %s1, 64
  %v110 = vld [vmem:[%s109] ss:$8 sm:$0xf]
  %v111 = vld [vmem:[%s109] ss:$8 sm:$0xf0]
  %v112 = vor.u32 %v110, %v111
  %v115 = vlaneseq
  %v116 = vshrl.u32 %v115, 7
  %v117 = vsub.s32 0, %v116
  %v118 = vrot.slane %v108, %v117
  %v119 = vlaneseq
  %v120 = vshrl.u32 %v119, 7
  %v121 = vsub.s32 1, %v120
  %v122 = vrot.slane %v108, %v121
  %v123 = vlaneseq
  %v124 = vshrl.u32 %v123, 7
  %v125 = vsub.s32 2, %v124
  %v126 = vrot.slane %v108, %v125
  %v127 = vlaneseq
  %v128 = vshrl.u32 %v127, 7
  %v129 = vsub.s32 3, %v128
  %v130 = vrot.slane %v108, %v129
  %v131 = vlaneseq
  %v132 = vshrl.u32 %v131, 7
  %v133 = vsub.s32 4, %v132
  %v134 = vrot.slane %v108, %v133
  %v135 = vlaneseq
  %v136 = vshrl.u32 %v135, 7
  %v137 = vsub.s32 5, %v136
  %v138 = vrot.slane %v108, %v137
  %v139 = vlaneseq
  %v140 = vshrl.u32 %v139, 7
  %v141 = vsub.s32 6, %v140
  %v142 = vrot.slane %v108, %v141
  %v143 = vlaneseq
  %v144 = vshrl.u32 %v143, 7
  %v145 = vsub.s32 7, %v144
  %v146 = vrot.slane %v108, %v145
  %v147 = vlaneseq
  %v148 = vshrl.u32 %v147, 7
  %v149 = vsub.s32 0, %v148
  %v150 = vrot.slane %v112, %v149
  %v151 = vlaneseq
  %v152 = vshrl.u32 %v151, 7
  %v153 = vsub.s32 1, %v152
  %v154 = vrot.slane %v112, %v153
  %v155 = vlaneseq
  %v156 = vshrl.u32 %v155, 7
  %v157 = vsub.s32 2, %v156
  %v158 = vrot.slane %v112, %v157
  %v159 = vlaneseq
  %v160 = vshrl.u32 %v159, 7
  %v161 = vsub.s32 3, %v160
  %v162 = vrot.slane %v112, %v161
  %v163 = vlaneseq
  %v164 = vshrl.u32 %v163, 7
  %v165 = vsub.s32 4, %v164
  %v166 = vrot.slane %v112, %v165
  %v167 = vlaneseq
  %v168 = vshrl.u32 %v167, 7
  %v169 = vsub.s32 5, %v168
  %v170 = vrot.slane %v112, %v169
  %v171 = vlaneseq
  %v172 = vshrl.u32 %v171, 7
  %v173 = vsub.s32 6, %v172
  %v174 = vrot.slane %v112, %v173
  %v175 = vlaneseq
  %v176 = vshrl.u32 %v175, 7
  %v177 = vsub.s32 7, %v176
  %v178 = vrot.slane %v112, %v177
  %v195 = vmul.f32 %v105, %v118
  %v196 = vmul.f32 %v104, %v122
  %v197 = vmul.f32 %v103, %v126
  %v198 = vmul.f32 %v102, %v130
  %v199 = vmul.f32 %v101, %v134
  %v200 = vmul.f32 %v100, %v138
  %v201 = vmul.f32 %v99, %v142
  %v202 = vmul.f32 %v98, %v146
  %v203 = vmul.f32 %v97, %v150
  %v204 = vmul.f32 %v96, %v154
  %v205 = vmul.f32 %v95, %v158
  %v206 = vmul.f32 %v94, %v162
  %v207 = vmul.f32 %v93, %v166
  %v208 = vmul.f32 %v92, %v170
  %v209 = vmul.f32 %v91, %v174
  %v210 = vmul.f32 %v90, %v178
  %211 = vst [vmem:[#allocation2] sm:$0x7] %v195
  %212 = vst [vmem:[#allocation2 + $0x8] sm:$0x7] %v196
  %213 = vst [vmem:[#allocation2 + $0x10] sm:$0x7] %v197
  %214 = vst [vmem:[#allocation2 + $0x18] sm:$0x7] %v198
  %215 = vst [vmem:[#allocation2 + $0x20] sm:$0x7] %v199
  %216 = vst [vmem:[#allocation2 + $0x28] sm:$0x7] %v200
  %217 = vst [vmem:[#allocation2 + $0x30] sm:$0x7] %v201
  %218 = vst [vmem:[#allocation2 + $0x38] sm:$0x7] %v202
  %219 = vst [vmem:[#allocation2 + $0x40] sm:$0x7] %v203
  %220 = vst [vmem:[#allocation2 + $0x48] sm:$0x7] %v204
  %221 = vst [vmem:[#allocation2 + $0x50] sm:$0x7] %v205
  %222 = vst [vmem:[#allocation2 + $0x58] sm:$0x7] %v206
  %223 = vst [vmem:[#allocation2 + $0x60] sm:$0x7] %v207
  %224 = vst [vmem:[#allocation2 + $0x68] sm:$0x7] %v208
  %225 = vst [vmem:[#allocation2 + $0x70] sm:$0x7] %v209
  %226 = vst [vmem:[#allocation2 + $0x78] sm:$0x7] %v210
  %227 = vrot.lane.b32.xlu0 %v23, 16
  %v228 = vpop.permute.xlu0 %227
  %229 = vrot.lane.b32.xlu0 %v39, 16
  %v230 = vpop.permute.xlu0 %229
  %231 = vrot.lane.b32.xlu0 %v24, 16
  %v232 = vpop.permute.xlu0 %231
  %233 = vrot.lane.b32.xlu0 %v40, 16
  %v234 = vpop.permute.xlu0 %233
  %235 = vrot.lane.b32.xlu0 %v25, 16
  %v236 = vpop.permute.xlu0 %235
  %237 = vrot.lane.b32.xlu0 %v41, 16
  %v238 = vpop.permute.xlu0 %237
  %239 = vrot.lane.b32.xlu0 %v26, 16
  %v240 = vpop.permute.xlu0 %239
  %241 = vrot.lane.b32.xlu0 %v42, 16
  %v242 = vpop.permute.xlu0 %241
  %243 = vrot.lane.b32.xlu0 %v27, 16
  %v244 = vpop.permute.xlu0 %243
  %245 = vrot.lane.b32.xlu0 %v43, 16
  %v246 = vpop.permute.xlu0 %245
  %247 = vrot.lane.b32.xlu0 %v28, 16
  %v248 = vpop.permute.xlu0 %247
  %249 = vrot.lane.b32.xlu0 %v44, 16
  %v250 = vpop.permute.xlu0 %249
  %251 = vrot.lane.b32.xlu0 %v29, 16
  %v252 = vpop.permute.xlu0 %251
  %253 = vrot.lane.b32.xlu0 %v45, 16
  %v254 = vpop.permute.xlu0 %253
  %255 = vrot.lane.b32.xlu0 %v30, 16
  %v256 = vpop.permute.xlu0 %255
  %257 = vrot.lane.b32.xlu0 %v46, 16
  %v258 = vpop.permute.xlu0 %257
  %vm259 = vcmp.lt.s32.totalorder %v88, 16
  %v260 = vsel %vm259, %v256, %v258
  %v261 = vsel %vm259, %v254, %v256
  %v262 = vsel %vm259, %v252, %v254
  %v263 = vsel %vm259, %v250, %v252
  %v264 = vsel %vm259, %v248, %v250
  %v265 = vsel %vm259, %v246, %v248
  %v266 = vsel %vm259, %v244, %v246
  %v267 = vsel %vm259, %v242, %v244
  %v268 = vsel %vm259, %v240, %v242
  %v269 = vsel %vm259, %v238, %v240
  %v270 = vsel %vm259, %v236, %v238
  %v271 = vsel %vm259, %v234, %v236
  %v272 = vsel %vm259, %v232, %v234
  %v273 = vsel %vm259, %v230, %v232
  %v274 = vsel %vm259, %v228, %v230
  %v275 = vsel %vm259, %v258, %v228
  %s276 = scalar_lea.vmem %s1, 1
  %v277 = vld [vmem:[%s276] ss:$8 sm:$0xf]
  %v278 = vld [vmem:[%s276] ss:$8 sm:$0xf0]
  %v279 = vor.u32 %v277, %v278
  %s280 = scalar_lea.vmem %s1, 65
  %v281 = vld [vmem:[%s280] ss:$8 sm:$0xf]
  %v282 = vld [vmem:[%s280] ss:$8 sm:$0xf0]
  %v283 = vor.u32 %v281, %v282
  %v286 = vlaneseq
  %v287 = vshrl.u32 %v286, 7
  %v288 = vsub.s32 0, %v287
  %v289 = vrot.slane %v279, %v288
  %v290 = vlaneseq
  %v291 = vshrl.u32 %v290, 7
  %v292 = vsub.s32 1, %v291
  %v293 = vrot.slane %v279, %v292
  %v294 = vlaneseq
  %v295 = vshrl.u32 %v294, 7
  %v296 = vsub.s32 2, %v295
  %v297 = vrot.slane %v279, %v296
  %v298 = vlaneseq
  %v299 = vshrl.u32 %v298, 7
  %v300 = vsub.s32 3, %v299
  %v301 = vrot.slane %v279, %v300
  %v302 = vlaneseq
  %v303 = vshrl.u32 %v302, 7
  %v304 = vsub.s32 4, %v303
  %v305 = vrot.slane %v279, %v304
  %v306 = vlaneseq
  %v307 = vshrl.u32 %v306, 7
  %v308 = vsub.s32 5, %v307
  %v309 = vrot.slane %v279, %v308
  %v310 = vlaneseq
  %v311 = vshrl.u32 %v310, 7
  %v312 = vsub.s32 6, %v311
  %v313 = vrot.slane %v279, %v312
  %v314 = vlaneseq
  %v315 = vshrl.u32 %v314, 7
  %v316 = vsub.s32 7, %v315
  %v317 = vrot.slane %v279, %v316
  %v318 = vlaneseq
  %v319 = vshrl.u32 %v318, 7
  %v320 = vsub.s32 0, %v319
  %v321 = vrot.slane %v283, %v320
  %v322 = vlaneseq
  %v323 = vshrl.u32 %v322, 7
  %v324 = vsub.s32 1, %v323
  %v325 = vrot.slane %v283, %v324
  %v326 = vlaneseq
  %v327 = vshrl.u32 %v326, 7
  %v328 = vsub.s32 2, %v327
  %v329 = vrot.slane %v283, %v328
  %v330 = vlaneseq
  %v331 = vshrl.u32 %v330, 7
  %v332 = vsub.s32 3, %v331
  %v333 = vrot.slane %v283, %v332
  %v334 = vlaneseq
  %v335 = vshrl.u32 %v334, 7
  %v336 = vsub.s32 4, %v335
  %v337 = vrot.slane %v283, %v336
  %v338 = vlaneseq
  %v339 = vshrl.u32 %v338, 7
  %v340 = vsub.s32 5, %v339
  %v341 = vrot.slane %v283, %v340
  %v342 = vlaneseq
  %v343 = vshrl.u32 %v342, 7
  %v344 = vsub.s32 6, %v343
  %v345 = vrot.slane %v283, %v344
  %v346 = vlaneseq
  %v347 = vshrl.u32 %v346, 7
  %v348 = vsub.s32 7, %v347
  %v349 = vrot.slane %v283, %v348
  %v366 = vmul.f32 %v275, %v289
  %v367 = vmul.f32 %v274, %v293
  %v368 = vmul.f32 %v273, %v297
  %v369 = vmul.f32 %v272, %v301
  %v370 = vmul.f32 %v271, %v305
  %v371 = vmul.f32 %v270, %v309
  %v372 = vmul.f32 %v269, %v313
  %v373 = vmul.f32 %v268, %v317
  %v374 = vmul.f32 %v267, %v321
  %v375 = vmul.f32 %v266, %v325
  %v376 = vmul.f32 %v265, %v329
  %v377 = vmul.f32 %v264, %v333
  %v378 = vmul.f32 %v263, %v337
  %v379 = vmul.f32 %v262, %v341
  %v380 = vmul.f32 %v261, %v345
  %v381 = vmul.f32 %v260, %v349
  %v398 = vrot.slane %v366, 5
  %v399 = vrot.slane %v367, 5
  %v400 = vrot.slane %v368, 5
  %v401 = vrot.slane %v369, 5
  %v402 = vrot.slane %v370, 5
  %v403 = vrot.slane %v371, 5
  %v404 = vrot.slane %v372, 5
  %v405 = vrot.slane %v373, 5
  %v406 = vrot.slane %v374, 5
  %v407 = vrot.slane %v375, 5
  %v408 = vrot.slane %v376, 5
  %v409 = vrot.slane %v377, 5
  %v410 = vrot.slane %v378, 5
  %v411 = vrot.slane %v379, 5
  %v412 = vrot.slane %v380, 5
  %v413 = vrot.slane %v381, 5
  %430 = vst [vmem:[#allocation2] sm:$0x38] %v398
  %431 = vst [vmem:[#allocation2 + $0x8] sm:$0x38] %v399
  %432 = vst [vmem:[#allocation2 + $0x10] sm:$0x38] %v400
  %433 = vst [vmem:[#allocation2 + $0x18] sm:$0x38] %v401
  %434 = vst [vmem:[#allocation2 + $0x20] sm:$0x38] %v402
  %435 = vst [vmem:[#allocation2 + $0x28] sm:$0x38] %v403
  %436 = vst [vmem:[#allocation2 + $0x30] sm:$0x38] %v404
  %437 = vst [vmem:[#allocation2 + $0x38] sm:$0x38] %v405
  %438 = vst [vmem:[#allocation2 + $0x40] sm:$0x38] %v406
  %439 = vst [vmem:[#allocation2 + $0x48] sm:$0x38] %v407
  %440 = vst [vmem:[#allocation2 + $0x50] sm:$0x38] %v408
  %441 = vst [vmem:[#allocation2 + $0x58] sm:$0x38] %v409
  %442 = vst [vmem:[#allocation2 + $0x60] sm:$0x38] %v410
  %443 = vst [vmem:[#allocation2 + $0x68] sm:$0x38] %v411
  %444 = vst [vmem:[#allocation2 + $0x70] sm:$0x38] %v412
  %445 = vst [vmem:[#allocation2 + $0x78] sm:$0x38] %v413
  %446 = vrot.lane.b32.xlu0 %v23, 15
  %v447 = vpop.permute.xlu0 %446
  %448 = vrot.lane.b32.xlu0 %v39, 15
  %v449 = vpop.permute.xlu0 %448
  %450 = vrot.lane.b32.xlu0 %v24, 15
  %v451 = vpop.permute.xlu0 %450
  %452 = vrot.lane.b32.xlu0 %v40, 15
  %v453 = vpop.permute.xlu0 %452
  %454 = vrot.lane.b32.xlu0 %v25, 15
  %v455 = vpop.permute.xlu0 %454
  %456 = vrot.lane.b32.xlu0 %v41, 15
  %v457 = vpop.permute.xlu0 %456
  %458 = vrot.lane.b32.xlu0 %v26, 15
  %v459 = vpop.permute.xlu0 %458
  %460 = vrot.lane.b32.xlu0 %v42, 15
  %v461 = vpop.permute.xlu0 %460
  %462 = vrot.lane.b32.xlu0 %v27, 15
  %v463 = vpop.permute.xlu0 %462
  %464 = vrot.lane.b32.xlu0 %v43, 15
  %v465 = vpop.permute.xlu0 %464
  %466 = vrot.lane.b32.xlu0 %v28, 15
  %v467 = vpop.permute.xlu0 %466
  %468 = vrot.lane.b32.xlu0 %v44, 15
  %v469 = vpop.permute.xlu0 %468
  %470 = vrot.lane.b32.xlu0 %v29, 15
  %v471 = vpop.permute.xlu0 %470
  %472 = vrot.lane.b32.xlu0 %v45, 15
  %v473 = vpop.permute.xlu0 %472
  %474 = vrot.lane.b32.xlu0 %v30, 15
  %v475 = vpop.permute.xlu0 %474
  %476 = vrot.lane.b32.xlu0 %v46, 15
  %v477 = vpop.permute.xlu0 %476
  %vm478 = vcmp.lt.s32.totalorder %v88, 15
  %v479 = vsel %vm478, %v475, %v477
  %v480 = vsel %vm478, %v473, %v475
  %v481 = vsel %vm478, %v471, %v473
  %v482 = vsel %vm478, %v469, %v471
  %v483 = vsel %vm478, %v467, %v469
  %v484 = vsel %vm478, %v465, %v467
  %v485 = vsel %vm478, %v463, %v465
  %v486 = vsel %vm478, %v461, %v463
  %v487 = vsel %vm478, %v459, %v461
  %v488 = vsel %vm478, %v457, %v459
  %v489 = vsel %vm478, %v455, %v457
  %v490 = vsel %vm478, %v453, %v455
  %v491 = vsel %vm478, %v451, %v453
  %v492 = vsel %vm478, %v449, %v451
  %v493 = vsel %vm478, %v447, %v449
  %v494 = vsel %vm478, %v477, %v447
  %s495 = scalar_lea.vmem %s1, 2
  %v496 = vld [vmem:[%s495] ss:$8 sm:$0xf]
  %v497 = vld [vmem:[%s495] ss:$8 sm:$0xf0]
  %v498 = vor.u32 %v496, %v497
  %s499 = scalar_lea.vmem %s1, 66
  %v500 = vld [vmem:[%s499] ss:$8 sm:$0xf]
  %v501 = vld [vmem:[%s499] ss:$8 sm:$0xf0]
  %v502 = vor.u32 %v500, %v501
  %v505 = vlaneseq
  %v506 = vshrl.u32 %v505, 7
  %v507 = vsub.s32 0, %v506
  %v508 = vrot.slane %v498, %v507
  %v509 = vlaneseq
  %v510 = vshrl.u32 %v509, 7
  %v511 = vsub.s32 1, %v510
  %v512 = vrot.slane %v498, %v511
  %v513 = vlaneseq
  %v514 = vshrl.u32 %v513, 7
  %v515 = vsub.s32 2, %v514
  %v516 = vrot.slane %v498, %v515
  %v517 = vlaneseq
  %v518 = vshrl.u32 %v517, 7
  %v519 = vsub.s32 3, %v518
  %v520 = vrot.slane %v498, %v519
  %v521 = vlaneseq
  %v522 = vshrl.u32 %v521, 7
  %v523 = vsub.s32 4, %v522
  %v524 = vrot.slane %v498, %v523
  %v525 = vlaneseq
  %v526 = vshrl.u32 %v525, 7
  %v527 = vsub.s32 5, %v526
  %v528 = vrot.slane %v498, %v527
  %v529 = vlaneseq
  %v530 = vshrl.u32 %v529, 7
  %v531 = vsub.s32 6, %v530
  %v532 = vrot.slane %v498, %v531
  %v533 = vlaneseq
  %v534 = vshrl.u32 %v533, 7
  %v535 = vsub.s32 7, %v534
  %v536 = vrot.slane %v498, %v535
  %v537 = vlaneseq
  %v538 = vshrl.u32 %v537, 7
  %v539 = vsub.s32 0, %v538
  %v540 = vrot.slane %v502, %v539
  %v541 = vlaneseq
  %v542 = vshrl.u32 %v541, 7
  %v543 = vsub.s32 1, %v542
  %v544 = vrot.slane %v502, %v543
  %v545 = vlaneseq
  %v546 = vshrl.u32 %v545, 7
  %v547 = vsub.s32 2, %v546
  %v548 = vrot.slane %v502, %v547
  %v549 = vlaneseq
  %v550 = vshrl.u32 %v549, 7
  %v551 = vsub.s32 3, %v550
  %v552 = vrot.slane %v502, %v551
  %v553 = vlaneseq
  %v554 = vshrl.u32 %v553, 7
  %v555 = vsub.s32 4, %v554
  %v556 = vrot.slane %v502, %v555
  %v557 = vlaneseq
  %v558 = vshrl.u32 %v557, 7
  %v559 = vsub.s32 5, %v558
  %v560 = vrot.slane %v502, %v559
  %v561 = vlaneseq
  %v562 = vshrl.u32 %v561, 7
  %v563 = vsub.s32 6, %v562
  %v564 = vrot.slane %v502, %v563
  %v565 = vlaneseq
  %v566 = vshrl.u32 %v565, 7
  %v567 = vsub.s32 7, %v566
  %v568 = vrot.slane %v502, %v567
  %v585 = vmul.f32 %v494, %v508
  %v586 = vmul.f32 %v493, %v512
  %v587 = vmul.f32 %v492, %v516
  %v588 = vmul.f32 %v491, %v520
  %v589 = vmul.f32 %v490, %v524
  %v590 = vmul.f32 %v489, %v528
  %v591 = vmul.f32 %v488, %v532
  %v592 = vmul.f32 %v487, %v536
  %v593 = vmul.f32 %v486, %v540
  %v594 = vmul.f32 %v485, %v544
  %v595 = vmul.f32 %v484, %v548
  %v596 = vmul.f32 %v483, %v552
  %v597 = vmul.f32 %v482, %v556
  %v598 = vmul.f32 %v481, %v560
  %v599 = vmul.f32 %v480, %v564
  %v600 = vmul.f32 %v479, %v568
  %v617 = vrot.slane %v585, 2
  %v618 = vrot.slane %v586, 2
  %v619 = vrot.slane %v587, 2
  %v620 = vrot.slane %v588, 2
  %v621 = vrot.slane %v589, 2
  %v622 = vrot.slane %v590, 2
  %v623 = vrot.slane %v591, 2
  %v624 = vrot.slane %v592, 2
  %v625 = vrot.slane %v593, 2
  %v626 = vrot.slane %v594, 2
  %v627 = vrot.slane %v595, 2
  %v628 = vrot.slane %v596, 2
  %v629 = vrot.slane %v597, 2
  %v630 = vrot.slane %v598, 2
  %v631 = vrot.slane %v599, 2
  %v632 = vrot.slane %v600, 2
  %649 = vst [vmem:[#allocation2] sm:$0xc0] %v617
  %650 = vst [vmem:[#allocation2 + $0x8] sm:$0xc0] %v618
  %651 = vst [vmem:[#allocation2 + $0x10] sm:$0xc0] %v619
  %652 = vst [vmem:[#allocation2 + $0x18] sm:$0xc0] %v620
  %653 = vst [vmem:[#allocation2 + $0x20] sm:$0xc0] %v621
  %654 = vst [vmem:[#allocation2 + $0x28] sm:$0xc0] %v622
  %655 = vst [vmem:[#allocation2 + $0x30] sm:$0xc0] %v623
  %656 = vst [vmem:[#allocation2 + $0x38] sm:$0xc0] %v624
  %657 = vst [vmem:[#allocation2 + $0x40] sm:$0xc0] %v625
  %658 = vst [vmem:[#allocation2 + $0x48] sm:$0xc0] %v626
  %659 = vst [vmem:[#allocation2 + $0x50] sm:$0xc0] %v627
  %660 = vst [vmem:[#allocation2 + $0x58] sm:$0xc0] %v628
  %661 = vst [vmem:[#allocation2 + $0x60] sm:$0xc0] %v629
  %662 = vst [vmem:[#allocation2 + $0x68] sm:$0xc0] %v630
  %663 = vst [vmem:[#allocation2 + $0x70] sm:$0xc0] %v631
  %664 = vst [vmem:[#allocation2 + $0x78] sm:$0xc0] %v632
  %665 = vst [vmem:[#allocation2 + $0x80] sm:$0x1] %v617
  %666 = vst [vmem:[#allocation2 + $0x88] sm:$0x1] %v618
  %667 = vst [vmem:[#allocation2 + $0x90] sm:$0x1] %v619
  %668 = vst [vmem:[#allocation2 + $0x98] sm:$0x1] %v620
  %669 = vst [vmem:[#allocation2 + $0xa0] sm:$0x1] %v621
  %670 = vst [vmem:[#allocation2 + $0xa8] sm:$0x1] %v622
  %671 = vst [vmem:[#allocation2 + $0xb0] sm:$0x1] %v623
  %672 = vst [vmem:[#allocation2 + $0xb8] sm:$0x1] %v624
  %673 = vst [vmem:[#allocation2 + $0xc0] sm:$0x1] %v625
  %674 = vst [vmem:[#allocation2 + $0xc8] sm:$0x1] %v626
  %675 = vst [vmem:[#allocation2 + $0xd0] sm:$0x1] %v627
  %676 = vst [vmem:[#allocation2 + $0xd8] sm:$0x1] %v628
  %677 = vst [vmem:[#allocation2 + $0xe0] sm:$0x1] %v629
  %678 = vst [vmem:[#allocation2 + $0xe8] sm:$0x1] %v630
  %679 = vst [vmem:[#allocation2 + $0xf0] sm:$0x1] %v631
  %680 = vst [vmem:[#allocation2 + $0xf8] sm:$0x1] %v632
  %681 = vrot.lane.b32.xlu0 %v23, 1
  %v682 = vpop.permute.xlu0 %681
  %683 = vrot.lane.b32.xlu0 %v39, 1
  %v684 = vpop.permute.xlu0 %683
  %685 = vrot.lane.b32.xlu0 %v24, 1
  %v686 = vpop.permute.xlu0 %685
  %687 = vrot.lane.b32.xlu0 %v40, 1
  %v688 = vpop.permute.xlu0 %687
  %689 = vrot.lane.b32.xlu0 %v25, 1
  %v690 = vpop.permute.xlu0 %689
  %691 = vrot.lane.b32.xlu0 %v41, 1
  %v692 = vpop.permute.xlu0 %691
  %693 = vrot.lane.b32.xlu0 %v26, 1
  %v694 = vpop.permute.xlu0 %693
  %695 = vrot.lane.b32.xlu0 %v42, 1
  %v696 = vpop.permute.xlu0 %695
  %697 = vrot.lane.b32.xlu0 %v27, 1
  %v698 = vpop.permute.xlu0 %697
  %699 = vrot.lane.b32.xlu0 %v43, 1
  %v700 = vpop.permute.xlu0 %699
  %701 = vrot.lane.b32.xlu0 %v28, 1
  %v702 = vpop.permute.xlu0 %701
  %703 = vrot.lane.b32.xlu0 %v44, 1
  %v704 = vpop.permute.xlu0 %703
  %705 = vrot.lane.b32.xlu0 %v29, 1
  %v706 = vpop.permute.xlu0 %705
  %707 = vrot.lane.b32.xlu0 %v45, 1
  %v708 = vpop.permute.xlu0 %707
  %709 = vrot.lane.b32.xlu0 %v30, 1
  %v710 = vpop.permute.xlu0 %709
  %711 = vrot.lane.b32.xlu0 %v46, 1
  %v712 = vpop.permute.xlu0 %711
  %vm713 = vcmp.lt.s32.totalorder %v88, 1
  %v714 = vsel %vm713, %v710, %v712
  %v715 = vsel %vm713, %v708, %v710
  %v716 = vsel %vm713, %v706, %v708
  %v717 = vsel %vm713, %v704, %v706
  %v718 = vsel %vm713, %v702, %v704
  %v719 = vsel %vm713, %v700, %v702
  %v720 = vsel %vm713, %v698, %v700
  %v721 = vsel %vm713, %v696, %v698
  %v722 = vsel %vm713, %v694, %v696
  %v723 = vsel %vm713, %v692, %v694
  %v724 = vsel %vm713, %v690, %v692
  %v725 = vsel %vm713, %v688, %v690
  %v726 = vsel %vm713, %v686, %v688
  %v727 = vsel %vm713, %v684, %v686
  %v728 = vsel %vm713, %v682, %v684
  %v729 = vsel %vm713, %v712, %v682
  %s730 = scalar_lea.vmem %s1, 3
  %v731 = vld [vmem:[%s730] ss:$8 sm:$0xf]
  %v732 = vld [vmem:[%s730] ss:$8 sm:$0xf0]
  %v733 = vor.u32 %v731, %v732
  %s734 = scalar_lea.vmem %s1, 67
  %v735 = vld [vmem:[%s734] ss:$8 sm:$0xf]
  %v736 = vld [vmem:[%s734] ss:$8 sm:$0xf0]
  %v737 = vor.u32 %v735, %v736
  %v740 = vlaneseq
  %v741 = vshrl.u32 %v740, 7
  %v742 = vsub.s32 0, %v741
  %v743 = vrot.slane %v733, %v742
  %v744 = vlaneseq
  %v745 = vshrl.u32 %v744, 7
  %v746 = vsub.s32 1, %v745
  %v747 = vrot.slane %v733, %v746
  %v748 = vlaneseq
  %v749 = vshrl.u32 %v748, 7
  %v750 = vsub.s32 2, %v749
  %v751 = vrot.slane %v733, %v750
  %v752 = vlaneseq
  %v753 = vshrl.u32 %v752, 7
  %v754 = vsub.s32 3, %v753
  %v755 = vrot.slane %v733, %v754
  %v756 = vlaneseq
  %v757 = vshrl.u32 %v756, 7
  %v758 = vsub.s32 4, %v757
  %v759 = vrot.slane %v733, %v758
  %v760 = vlaneseq
  %v761 = vshrl.u32 %v760, 7
  %v762 = vsub.s32 5, %v761
  %v763 = vrot.slane %v733, %v762
  %v764 = vlaneseq
  %v765 = vshrl.u32 %v764, 7
  %v766 = vsub.s32 6, %v765
  %v767 = vrot.slane %v733, %v766
  %v768 = vlaneseq
  %v769 = vshrl.u32 %v768, 7
  %v770 = vsub.s32 7, %v769
  %v771 = vrot.slane %v733, %v770
  %v772 = vlaneseq
  %v773 = vshrl.u32 %v772, 7
  %v774 = vsub.s32 0, %v773
  %v775 = vrot.slane %v737, %v774
  %v776 = vlaneseq
  %v777 = vshrl.u32 %v776, 7
  %v778 = vsub.s32 1, %v777
  %v779 = vrot.slane %v737, %v778
  %v780 = vlaneseq
  %v781 = vshrl.u32 %v780, 7
  %v782 = vsub.s32 2, %v781
  %v783 = vrot.slane %v737, %v782
  %v784 = vlaneseq
  %v785 = vshrl.u32 %v784, 7
  %v786 = vsub.s32 3, %v785
  %v787 = vrot.slane %v737, %v786
  %v788 = vlaneseq
  %v789 = vshrl.u32 %v788, 7
  %v790 = vsub.s32 4, %v789
  %v791 = vrot.slane %v737, %v790
  %v792 = vlaneseq
  %v793 = vshrl.u32 %v792, 7
  %v794 = vsub.s32 5, %v793
  %v795 = vrot.slane %v737, %v794
  %v796 = vlaneseq
  %v797 = vshrl.u32 %v796, 7
  %v798 = vsub.s32 6, %v797
  %v799 = vrot.slane %v737, %v798
  %v800 = vlaneseq
  %v801 = vshrl.u32 %v800, 7
  %v802 = vsub.s32 7, %v801
  %v803 = vrot.slane %v737, %v802
  %v820 = vmul.f32 %v729, %v743
  %v821 = vmul.f32 %v728, %v747
  %v822 = vmul.f32 %v727, %v751
  %v823 = vmul.f32 %v726, %v755
  %v824 = vmul.f32 %v725, %v759
  %v825 = vmul.f32 %v724, %v763
  %v826 = vmul.f32 %v723, %v767
  %v827 = vmul.f32 %v722, %v771
  %v828 = vmul.f32 %v721, %v775
  %v829 = vmul.f32 %v720, %v779
  %v830 = vmul.f32 %v719, %v783
  %v831 = vmul.f32 %v718, %v787
  %v832 = vmul.f32 %v717, %v791
  %v833 = vmul.f32 %v716, %v795
  %v834 = vmul.f32 %v715, %v799
  %v835 = vmul.f32 %v714, %v803
  %v852 = vrot.slane %v820, 7
  %v853 = vrot.slane %v821, 7
  %v854 = vrot.slane %v822, 7
  %v855 = vrot.slane %v823, 7
  %v856 = vrot.slane %v824, 7
  %v857 = vrot.slane %v825, 7
  %v858 = vrot.slane %v826, 7
  %v859 = vrot.slane %v827, 7
  %v860 = vrot.slane %v828, 7
  %v861 = vrot.slane %v829, 7
  %v862 = vrot.slane %v830, 7
  %v863 = vrot.slane %v831, 7
  %v864 = vrot.slane %v832, 7
  %v865 = vrot.slane %v833, 7
  %v866 = vrot.slane %v834, 7
  %v867 = vrot.slane %v835, 7
  %884 = vst [vmem:[#allocation2 + $0x80] sm:$0xe] %v852
  %885 = vst [vmem:[#allocation2 + $0x88] sm:$0xe] %v853
  %886 = vst [vmem:[#allocation2 + $0x90] sm:$0xe] %v854
  %887 = vst [vmem:[#allocation2 + $0x98] sm:$0xe] %v855
  %888 = vst [vmem:[#allocation2 + $0xa0] sm:$0xe] %v856
  %889 = vst [vmem:[#allocation2 + $0xa8] sm:$0xe] %v857
  %890 = vst [vmem:[#allocation2 + $0xb0] sm:$0xe] %v858
  %891 = vst [vmem:[#allocation2 + $0xb8] sm:$0xe] %v859
  %892 = vst [vmem:[#allocation2 + $0xc0] sm:$0xe] %v860
  %893 = vst [vmem:[#allocation2 + $0xc8] sm:$0xe] %v861
  %894 = vst [vmem:[#allocation2 + $0xd0] sm:$0xe] %v862
  %895 = vst [vmem:[#allocation2 + $0xd8] sm:$0xe] %v863
  %896 = vst [vmem:[#allocation2 + $0xe0] sm:$0xe] %v864
  %897 = vst [vmem:[#allocation2 + $0xe8] sm:$0xe] %v865
  %898 = vst [vmem:[#allocation2 + $0xf0] sm:$0xe] %v866
  %899 = vst [vmem:[#allocation2 + $0xf8] sm:$0xe] %v867
  %v900 = vcombine.low %v23, %v23
  %v901 = vcombine.low %v24, %v24
  %v902 = vcombine.low %v25, %v25
  %v903 = vcombine.low %v26, %v26
  %v904 = vcombine.low %v27, %v27
  %v905 = vcombine.low %v28, %v28
  %v906 = vcombine.low %v29, %v29
  %v907 = vcombine.low %v30, %v30
  %916 = vst [vmem:[#allocation2 + $0x80] sm:$0x70] %v900
  %917 = vst [vmem:[#allocation2 + $0x88] sm:$0x70] %v23
  %918 = vst [vmem:[#allocation2 + $0x90] sm:$0x70] %v901
  %919 = vst [vmem:[#allocation2 + $0x98] sm:$0x70] %v24
  %920 = vst [vmem:[#allocation2 + $0xa0] sm:$0x70] %v902
  %921 = vst [vmem:[#allocation2 + $0xa8] sm:$0x70] %v25
  %922 = vst [vmem:[#allocation2 + $0xb0] sm:$0x70] %v903
  %923 = vst [vmem:[#allocation2 + $0xb8] sm:$0x70] %v26
  %924 = vst [vmem:[#allocation2 + $0xc0] sm:$0x70] %v904
  %925 = vst [vmem:[#allocation2 + $0xc8] sm:$0x70] %v27
  %926 = vst [vmem:[#allocation2 + $0xd0] sm:$0x70] %v905
  %927 = vst [vmem:[#allocation2 + $0xd8] sm:$0x70] %v28
  %928 = vst [vmem:[#allocation2 + $0xe0] sm:$0x70] %v906
  %929 = vst [vmem:[#allocation2 + $0xe8] sm:$0x70] %v29
  %930 = vst [vmem:[#allocation2 + $0xf0] sm:$0x70] %v907
  %931 = vst [vmem:[#allocation2 + $0xf8] sm:$0x70] %v30
  %932 = vrot.lane.b32.xlu0 %v23, 127
  %v933 = vpop.permute.xlu0 %932
  %934 = vrot.lane.b32.xlu0 %v39, 127
  %v935 = vpop.permute.xlu0 %934
  %936 = vrot.lane.b32.xlu0 %v24, 127
  %v937 = vpop.permute.xlu0 %936
  %938 = vrot.lane.b32.xlu0 %v40, 127
  %v939 = vpop.permute.xlu0 %938
  %940 = vrot.lane.b32.xlu0 %v25, 127
  %v941 = vpop.permute.xlu0 %940
  %942 = vrot.lane.b32.xlu0 %v41, 127
  %v943 = vpop.permute.xlu0 %942
  %944 = vrot.lane.b32.xlu0 %v26, 127
  %v945 = vpop.permute.xlu0 %944
  %946 = vrot.lane.b32.xlu0 %v42, 127
  %v947 = vpop.permute.xlu0 %946
  %948 = vrot.lane.b32.xlu0 %v27, 127
  %v949 = vpop.permute.xlu0 %948
  %950 = vrot.lane.b32.xlu0 %v43, 127
  %v951 = vpop.permute.xlu0 %950
  %952 = vrot.lane.b32.xlu0 %v28, 127
  %v953 = vpop.permute.xlu0 %952
  %954 = vrot.lane.b32.xlu0 %v44, 127
  %v955 = vpop.permute.xlu0 %954
  %956 = vrot.lane.b32.xlu0 %v29, 127
  %v957 = vpop.permute.xlu0 %956
  %958 = vrot.lane.b32.xlu0 %v45, 127
  %v959 = vpop.permute.xlu0 %958
  %960 = vrot.lane.b32.xlu0 %v30, 127
  %v961 = vpop.permute.xlu0 %960
  %962 = vrot.lane.b32.xlu0 %v46, 127
  %v963 = vpop.permute.xlu0 %962
  %vm964 = vcmp.lt.s32.totalorder %v88, 127
  %v965 = vsel %vm964, %v961, %v963
  %v966 = vsel %vm964, %v959, %v961
  %v967 = vsel %vm964, %v957, %v959
  %v968 = vsel %vm964, %v955, %v957
  %v969 = vsel %vm964, %v953, %v955
  %v970 = vsel %vm964, %v951, %v953
  %v971 = vsel %vm964, %v949, %v951
  %v972 = vsel %vm964, %v947, %v949
  %v973 = vsel %vm964, %v945, %v947
  %v974 = vsel %vm964, %v943, %v945
  %v975 = vsel %vm964, %v941, %v943
  %v976 = vsel %vm964, %v939, %v941
  %v977 = vsel %vm964, %v937, %v939
  %v978 = vsel %vm964, %v935, %v937
  %v979 = vsel %vm964, %v933, %v935
  %v980 = vsel %vm964, %v963, %v933
  %s981 = scalar_lea.vmem %s1, 5
  %v982 = vld [vmem:[%s981] ss:$8 sm:$0xf]
  %v983 = vld [vmem:[%s981] ss:$8 sm:$0xf0]
  %v984 = vor.u32 %v982, %v983
  %s985 = scalar_lea.vmem %s1, 69
  %v986 = vld [vmem:[%s985] ss:$8 sm:$0xf]
  %v987 = vld [vmem:[%s985] ss:$8 sm:$0xf0]
  %v988 = vor.u32 %v986, %v987
  %v991 = vlaneseq
  %v992 = vshrl.u32 %v991, 7
  %v993 = vsub.s32 0, %v992
  %v994 = vrot.slane %v984, %v993
  %v995 = vlaneseq
  %v996 = vshrl.u32 %v995, 7
  %v997 = vsub.s32 1, %v996
  %v998 = vrot.slane %v984, %v997
  %v999 = vlaneseq
  %v1000 = vshrl.u32 %v999, 7
  %v1001 = vsub.s32 2, %v1000
  %v1002 = vrot.slane %v984, %v1001
  %v1003 = vlaneseq
  %v1004 = vshrl.u32 %v1003, 7
  %v1005 = vsub.s32 3, %v1004
  %v1006 = vrot.slane %v984, %v1005
  %v1007 = vlaneseq
  %v1008 = vshrl.u32 %v1007, 7
  %v1009 = vsub.s32 4, %v1008
  %v1010 = vrot.slane %v984, %v1009
  %v1011 = vlaneseq
  %v1012 = vshrl.u32 %v1011, 7
  %v1013 = vsub.s32 5, %v1012
  %v1014 = vrot.slane %v984, %v1013
  %v1015 = vlaneseq
  %v1016 = vshrl.u32 %v1015, 7
  %v1017 = vsub.s32 6, %v1016
  %v1018 = vrot.slane %v984, %v1017
  %v1019 = vlaneseq
  %v1020 = vshrl.u32 %v1019, 7
  %v1021 = vsub.s32 7, %v1020
  %v1022 = vrot.slane %v984, %v1021
  %v1023 = vlaneseq
  %v1024 = vshrl.u32 %v1023, 7
  %v1025 = vsub.s32 0, %v1024
  %v1026 = vrot.slane %v988, %v1025
  %v1027 = vlaneseq
  %v1028 = vshrl.u32 %v1027, 7
  %v1029 = vsub.s32 1, %v1028
  %v1030 = vrot.slane %v988, %v1029
  %v1031 = vlaneseq
  %v1032 = vshrl.u32 %v1031, 7
  %v1033 = vsub.s32 2, %v1032
  %v1034 = vrot.slane %v988, %v1033
  %v1035 = vlaneseq
  %v1036 = vshrl.u32 %v1035, 7
  %v1037 = vsub.s32 3, %v1036
  %v1038 = vrot.slane %v988, %v1037
  %v1039 = vlaneseq
  %v1040 = vshrl.u32 %v1039, 7
  %v1041 = vsub.s32 4, %v1040
  %v1042 = vrot.slane %v988, %v1041
  %v1043 = vlaneseq
  %v1044 = vshrl.u32 %v1043, 7
  %v1045 = vsub.s32 5, %v1044
  %v1046 = vrot.slane %v988, %v1045
  %v1047 = vlaneseq
  %v1048 = vshrl.u32 %v1047, 7
  %v1049 = vsub.s32 6, %v1048
  %v1050 = vrot.slane %v988, %v1049
  %v1051 = vlaneseq
  %v1052 = vshrl.u32 %v1051, 7
  %v1053 = vsub.s32 7, %v1052
  %v1054 = vrot.slane %v988, %v1053
  %v1071 = vmul.f32 %v979, %v994
  %v1072 = vmul.f32 %v978, %v998
  %v1073 = vmul.f32 %v977, %v1002
  %v1074 = vmul.f32 %v976, %v1006
  %v1075 = vmul.f32 %v975, %v1010
  %v1076 = vmul.f32 %v974, %v1014
  %v1077 = vmul.f32 %v973, %v1018
  %v1078 = vmul.f32 %v972, %v1022
  %v1079 = vmul.f32 %v971, %v1026
  %v1080 = vmul.f32 %v970, %v1030
  %v1081 = vmul.f32 %v969, %v1034
  %v1082 = vmul.f32 %v968, %v1038
  %v1083 = vmul.f32 %v967, %v1042
  %v1084 = vmul.f32 %v966, %v1046
  %v1085 = vmul.f32 %v965, %v1050
  %v1086 = vmul.f32 %v980, %v1054
  %v1103 = vrot.slane %v1071, 1
  %v1104 = vrot.slane %v1072, 1
  %v1105 = vrot.slane %v1073, 1
  %v1106 = vrot.slane %v1074, 1
  %v1107 = vrot.slane %v1075, 1
  %v1108 = vrot.slane %v1076, 1
  %v1109 = vrot.slane %v1077, 1
  %v1110 = vrot.slane %v1078, 1
  %v1111 = vrot.slane %v1079, 1
  %v1112 = vrot.slane %v1080, 1
  %v1113 = vrot.slane %v1081, 1
  %v1114 = vrot.slane %v1082, 1
  %v1115 = vrot.slane %v1083, 1
  %v1116 = vrot.slane %v1084, 1
  %v1117 = vrot.slane %v1085, 1
  %v1118 = vrot.slane %v1086, 1
  %1135 = vst [vmem:[#allocation2 + $0x80] sm:$0x80] %v1103
  %1136 = vst [vmem:[#allocation2 + $0x88] sm:$0x80] %v1104
  %1137 = vst [vmem:[#allocation2 + $0x90] sm:$0x80] %v1105
  %1138 = vst [vmem:[#allocation2 + $0x98] sm:$0x80] %v1106
  %1139 = vst [vmem:[#allocation2 + $0xa0] sm:$0x80] %v1107
  %1140 = vst [vmem:[#allocation2 + $0xa8] sm:$0x80] %v1108
  %1141 = vst [vmem:[#allocation2 + $0xb0] sm:$0x80] %v1109
  %1142 = vst [vmem:[#allocation2 + $0xb8] sm:$0x80] %v1110
  %1143 = vst [vmem:[#allocation2 + $0xc0] sm:$0x80] %v1111
  %1144 = vst [vmem:[#allocation2 + $0xc8] sm:$0x80] %v1112
  %1145 = vst [vmem:[#allocation2 + $0xd0] sm:$0x80] %v1113
  %1146 = vst [vmem:[#allocation2 + $0xd8] sm:$0x80] %v1114
  %1147 = vst [vmem:[#allocation2 + $0xe0] sm:$0x80] %v1115
  %1148 = vst [vmem:[#allocation2 + $0xe8] sm:$0x80] %v1116
  %1149 = vst [vmem:[#allocation2 + $0xf0] sm:$0x80] %v1117
  %1150 = vst [vmem:[#allocation2 + $0xf8] sm:$0x80] %v1118
  %1151 = vst [vmem:[#allocation2 + $0x100] sm:$0x3] %v1103
  %1152 = vst [vmem:[#allocation2 + $0x108] sm:$0x3] %v1104
  %1153 = vst [vmem:[#allocation2 + $0x110] sm:$0x3] %v1105
  %1154 = vst [vmem:[#allocation2 + $0x118] sm:$0x3] %v1106
  %1155 = vst [vmem:[#allocation2 + $0x120] sm:$0x3] %v1107
  %1156 = vst [vmem:[#allocation2 + $0x128] sm:$0x3] %v1108
  %1157 = vst [vmem:[#allocation2 + $0x130] sm:$0x3] %v1109
  %1158 = vst [vmem:[#allocation2 + $0x138] sm:$0x3] %v1110
  %1159 = vst [vmem:[#allocation2 + $0x140] sm:$0x3] %v1111
  %1160 = vst [vmem:[#allocation2 + $0x148] sm:$0x3] %v1112
  %1161 = vst [vmem:[#allocation2 + $0x150] sm:$0x3] %v1113
  %1162 = vst [vmem:[#allocation2 + $0x158] sm:$0x3] %v1114
  %1163 = vst [vmem:[#allocation2 + $0x160] sm:$0x3] %v1115
  %1164 = vst [vmem:[#allocation2 + $0x168] sm:$0x3] %v1116
  %1165 = vst [vmem:[#allocation2 + $0x170] sm:$0x3] %v1117
  %1166 = vst [vmem:[#allocation2 + $0x178] sm:$0x3] %v1118
  %1167 = vrot.lane.b32.xlu0 %v23, 113
  %v1168 = vpop.permute.xlu0 %1167
  %1169 = vrot.lane.b32.xlu0 %v39, 113
  %v1170 = vpop.permute.xlu0 %1169
  %1171 = vrot.lane.b32.xlu0 %v24, 113
  %v1172 = vpop.permute.xlu0 %1171
  %1173 = vrot.lane.b32.xlu0 %v40, 113
  %v1174 = vpop.permute.xlu0 %1173
  %1175 = vrot.lane.b32.xlu0 %v25, 113
  %v1176 = vpop.permute.xlu0 %1175
  %1177 = vrot.lane.b32.xlu0 %v41, 113
  %v1178 = vpop.permute.xlu0 %1177
  %1179 = vrot.lane.b32.xlu0 %v26, 113
  %v1180 = vpop.permute.xlu0 %1179
  %1181 = vrot.lane.b32.xlu0 %v42, 113
  %v1182 = vpop.permute.xlu0 %1181
  %1183 = vrot.lane.b32.xlu0 %v27, 113
  %v1184 = vpop.permute.xlu0 %1183
  %1185 = vrot.lane.b32.xlu0 %v43, 113
  %v1186 = vpop.permute.xlu0 %1185
  %1187 = vrot.lane.b32.xlu0 %v28, 113
  %v1188 = vpop.permute.xlu0 %1187
  %1189 = vrot.lane.b32.xlu0 %v44, 113
  %v1190 = vpop.permute.xlu0 %1189
  %1191 = vrot.lane.b32.xlu0 %v29, 113
  %v1192 = vpop.permute.xlu0 %1191
  %1193 = vrot.lane.b32.xlu0 %v45, 113
  %v1194 = vpop.permute.xlu0 %1193
  %1195 = vrot.lane.b32.xlu0 %v30, 113
  %v1196 = vpop.permute.xlu0 %1195
  %1197 = vrot.lane.b32.xlu0 %v46, 113
  %v1198 = vpop.permute.xlu0 %1197
  %vm1199 = vcmp.lt.s32.totalorder %v88, 113
  %v1200 = vsel %vm1199, %v1196, %v1198
  %v1201 = vsel %vm1199, %v1194, %v1196
  %v1202 = vsel %vm1199, %v1192, %v1194
  %v1203 = vsel %vm1199, %v1190, %v1192
  %v1204 = vsel %vm1199, %v1188, %v1190
  %v1205 = vsel %vm1199, %v1186, %v1188
  %v1206 = vsel %vm1199, %v1184, %v1186
  %v1207 = vsel %vm1199, %v1182, %v1184
  %v1208 = vsel %vm1199, %v1180, %v1182
  %v1209 = vsel %vm1199, %v1178, %v1180
  %v1210 = vsel %vm1199, %v1176, %v1178
  %v1211 = vsel %vm1199, %v1174, %v1176
  %v1212 = vsel %vm1199, %v1172, %v1174
  %v1213 = vsel %vm1199, %v1170, %v1172
  %v1214 = vsel %vm1199, %v1168, %v1170
  %v1215 = vsel %vm1199, %v1198, %v1168
  %s1216 = scalar_lea.vmem %s1, 6
  %v1217 = vld [vmem:[%s1216] ss:$8 sm:$0xf]
  %v1218 = vld [vmem:[%s1216] ss:$8 sm:$0xf0]
  %v1219 = vor.u32 %v1217, %v1218
  %s1220 = scalar_lea.vmem %s1, 70
  %v1221 = vld [vmem:[%s1220] ss:$8 sm:$0xf]
  %v1222 = vld [vmem:[%s1220] ss:$8 sm:$0xf0]
  %v1223 = vor.u32 %v1221, %v1222
  %v1226 = vlaneseq
  %v1227 = vshrl.u32 %v1226, 7
  %v1228 = vsub.s32 0, %v1227
  %v1229 = vrot.slane %v1219, %v1228
  %v1230 = vlaneseq
  %v1231 = vshrl.u32 %v1230, 7
  %v1232 = vsub.s32 1, %v1231
  %v1233 = vrot.slane %v1219, %v1232
  %v1234 = vlaneseq
  %v1235 = vshrl.u32 %v1234, 7
  %v1236 = vsub.s32 2, %v1235
  %v1237 = vrot.slane %v1219, %v1236
  %v1238 = vlaneseq
  %v1239 = vshrl.u32 %v1238, 7
  %v1240 = vsub.s32 3, %v1239
  %v1241 = vrot.slane %v1219, %v1240
  %v1242 = vlaneseq
  %v1243 = vshrl.u32 %v1242, 7
  %v1244 = vsub.s32 4, %v1243
  %v1245 = vrot.slane %v1219, %v1244
  %v1246 = vlaneseq
  %v1247 = vshrl.u32 %v1246, 7
  %v1248 = vsub.s32 5, %v1247
  %v1249 = vrot.slane %v1219, %v1248
  %v1250 = vlaneseq
  %v1251 = vshrl.u32 %v1250, 7
  %v1252 = vsub.s32 6, %v1251
  %v1253 = vrot.slane %v1219, %v1252
  %v1254 = vlaneseq
  %v1255 = vshrl.u32 %v1254, 7
  %v1256 = vsub.s32 7, %v1255
  %v1257 = vrot.slane %v1219, %v1256
  %v1258 = vlaneseq
  %v1259 = vshrl.u32 %v1258, 7
  %v1260 = vsub.s32 0, %v1259
  %v1261 = vrot.slane %v1223, %v1260
  %v1262 = vlaneseq
  %v1263 = vshrl.u32 %v1262, 7
  %v1264 = vsub.s32 1, %v1263
  %v1265 = vrot.slane %v1223, %v1264
  %v1266 = vlaneseq
  %v1267 = vshrl.u32 %v1266, 7
  %v1268 = vsub.s32 2, %v1267
  %v1269 = vrot.slane %v1223, %v1268
  %v1270 = vlaneseq
  %v1271 = vshrl.u32 %v1270, 7
  %v1272 = vsub.s32 3, %v1271
  %v1273 = vrot.slane %v1223, %v1272
  %v1274 = vlaneseq
  %v1275 = vshrl.u32 %v1274, 7
  %v1276 = vsub.s32 4, %v1275
  %v1277 = vrot.slane %v1223, %v1276
  %v1278 = vlaneseq
  %v1279 = vshrl.u32 %v1278, 7
  %v1280 = vsub.s32 5, %v1279
  %v1281 = vrot.slane %v1223, %v1280
  %v1282 = vlaneseq
  %v1283 = vshrl.u32 %v1282, 7
  %v1284 = vsub.s32 6, %v1283
  %v1285 = vrot.slane %v1223, %v1284
  %v1286 = vlaneseq
  %v1287 = vshrl.u32 %v1286, 7
  %v1288 = vsub.s32 7, %v1287
  %v1289 = vrot.slane %v1223, %v1288
  %v1306 = vmul.f32 %v1214, %v1229
  %v1307 = vmul.f32 %v1213, %v1233
  %v1308 = vmul.f32 %v1212, %v1237
  %v1309 = vmul.f32 %v1211, %v1241
  %v1310 = vmul.f32 %v1210, %v1245
  %v1311 = vmul.f32 %v1209, %v1249
  %v1312 = vmul.f32 %v1208, %v1253
  %v1313 = vmul.f32 %v1207, %v1257
  %v1314 = vmul.f32 %v1206, %v1261
  %v1315 = vmul.f32 %v1205, %v1265
  %v1316 = vmul.f32 %v1204, %v1269
  %v1317 = vmul.f32 %v1203, %v1273
  %v1318 = vmul.f32 %v1202, %v1277
  %v1319 = vmul.f32 %v1201, %v1281
  %v1320 = vmul.f32 %v1200, %v1285
  %v1321 = vmul.f32 %v1215, %v1289
  %v1338 = vrot.slane %v1306, 6
  %v1339 = vrot.slane %v1307, 6
  %v1340 = vrot.slane %v1308, 6
  %v1341 = vrot.slane %v1309, 6
  %v1342 = vrot.slane %v1310, 6
  %v1343 = vrot.slane %v1311, 6
  %v1344 = vrot.slane %v1312, 6
  %v1345 = vrot.slane %v1313, 6
  %v1346 = vrot.slane %v1314, 6
  %v1347 = vrot.slane %v1315, 6
  %v1348 = vrot.slane %v1316, 6
  %v1349 = vrot.slane %v1317, 6
  %v1350 = vrot.slane %v1318, 6
  %v1351 = vrot.slane %v1319, 6
  %v1352 = vrot.slane %v1320, 6
  %v1353 = vrot.slane %v1321, 6
  %1370 = vst [vmem:[#allocation2 + $0x100] sm:$0x1c] %v1338
  %1371 = vst [vmem:[#allocation2 + $0x108] sm:$0x1c] %v1339
  %1372 = vst [vmem:[#allocation2 + $0x110] sm:$0x1c] %v1340
  %1373 = vst [vmem:[#allocation2 + $0x118] sm:$0x1c] %v1341
  %1374 = vst [vmem:[#allocation2 + $0x120] sm:$0x1c] %v1342
  %1375 = vst [vmem:[#allocation2 + $0x128] sm:$0x1c] %v1343
  %1376 = vst [vmem:[#allocation2 + $0x130] sm:$0x1c] %v1344
  %1377 = vst [vmem:[#allocation2 + $0x138] sm:$0x1c] %v1345
  %1378 = vst [vmem:[#allocation2 + $0x140] sm:$0x1c] %v1346
  %1379 = vst [vmem:[#allocation2 + $0x148] sm:$0x1c] %v1347
  %1380 = vst [vmem:[#allocation2 + $0x150] sm:$0x1c] %v1348
  %1381 = vst [vmem:[#allocation2 + $0x158] sm:$0x1c] %v1349
  %1382 = vst [vmem:[#allocation2 + $0x160] sm:$0x1c] %v1350
  %1383 = vst [vmem:[#allocation2 + $0x168] sm:$0x1c] %v1351
  %1384 = vst [vmem:[#allocation2 + $0x170] sm:$0x1c] %v1352
  %1385 = vst [vmem:[#allocation2 + $0x178] sm:$0x1c] %v1353
  %1386 = vrot.lane.b32.xlu0 %v23, 112
  %v1387 = vpop.permute.xlu0 %1386
  %1388 = vrot.lane.b32.xlu0 %v39, 112
  %v1389 = vpop.permute.xlu0 %1388
  %1390 = vrot.lane.b32.xlu0 %v24, 112
  %v1391 = vpop.permute.xlu0 %1390
  %1392 = vrot.lane.b32.xlu0 %v40, 112
  %v1393 = vpop.permute.xlu0 %1392
  %1394 = vrot.lane.b32.xlu0 %v25, 112
  %v1395 = vpop.permute.xlu0 %1394
  %1396 = vrot.lane.b32.xlu0 %v41, 112
  %v1397 = vpop.permute.xlu0 %1396
  %1398 = vrot.lane.b32.xlu0 %v26, 112
  %v1399 = vpop.permute.xlu0 %1398
  %1400 = vrot.lane.b32.xlu0 %v42, 112
  %v1401 = vpop.permute.xlu0 %1400
  %1402 = vrot.lane.b32.xlu0 %v27, 112
  %v1403 = vpop.permute.xlu0 %1402
  %1404 = vrot.lane.b32.xlu0 %v43, 112
  %v1405 = vpop.permute.xlu0 %1404
  %1406 = vrot.lane.b32.xlu0 %v28, 112
  %v1407 = vpop.permute.xlu0 %1406
  %1408 = vrot.lane.b32.xlu0 %v44, 112
  %v1409 = vpop.permute.xlu0 %1408
  %1410 = vrot.lane.b32.xlu0 %v29, 112
  %v1411 = vpop.permute.xlu0 %1410
  %1412 = vrot.lane.b32.xlu0 %v45, 112
  %v1413 = vpop.permute.xlu0 %1412
  %1414 = vrot.lane.b32.xlu0 %v30, 112
  %v1415 = vpop.permute.xlu0 %1414
  %1416 = vrot.lane.b32.xlu0 %v46, 112
  %v1417 = vpop.permute.xlu0 %1416
  %vm1418 = vcmp.lt.s32.totalorder %v88, 112
  %v1419 = vsel %vm1418, %v1415, %v1417
  %v1420 = vsel %vm1418, %v1413, %v1415
  %v1421 = vsel %vm1418, %v1411, %v1413
  %v1422 = vsel %vm1418, %v1409, %v1411
  %v1423 = vsel %vm1418, %v1407, %v1409
  %v1424 = vsel %vm1418, %v1405, %v1407
  %v1425 = vsel %vm1418, %v1403, %v1405
  %v1426 = vsel %vm1418, %v1401, %v1403
  %v1427 = vsel %vm1418, %v1399, %v1401
  %v1428 = vsel %vm1418, %v1397, %v1399
  %v1429 = vsel %vm1418, %v1395, %v1397
  %v1430 = vsel %vm1418, %v1393, %v1395
  %v1431 = vsel %vm1418, %v1391, %v1393
  %v1432 = vsel %vm1418, %v1389, %v1391
  %v1433 = vsel %vm1418, %v1387, %v1389
  %v1434 = vsel %vm1418, %v1417, %v1387
  %s1435 = scalar_lea.vmem %s1, 7
  %v1436 = vld [vmem:[%s1435] ss:$8 sm:$0xf]
  %v1437 = vld [vmem:[%s1435] ss:$8 sm:$0xf0]
  %v1438 = vor.u32 %v1436, %v1437
  %s1439 = scalar_lea.vmem %s1, 71
  %v1440 = vld [vmem:[%s1439] ss:$8 sm:$0xf]
  %v1441 = vld [vmem:[%s1439] ss:$8 sm:$0xf0]
  %v1442 = vor.u32 %v1440, %v1441
  %v1445 = vlaneseq
  %v1446 = vshrl.u32 %v1445, 7
  %v1447 = vsub.s32 0, %v1446
  %v1448 = vrot.slane %v1438, %v1447
  %v1449 = vlaneseq
  %v1450 = vshrl.u32 %v1449, 7
  %v1451 = vsub.s32 1, %v1450
  %v1452 = vrot.slane %v1438, %v1451
  %v1453 = vlaneseq
  %v1454 = vshrl.u32 %v1453, 7
  %v1455 = vsub.s32 2, %v1454
  %v1456 = vrot.slane %v1438, %v1455
  %v1457 = vlaneseq
  %v1458 = vshrl.u32 %v1457, 7
  %v1459 = vsub.s32 3, %v1458
  %v1460 = vrot.slane %v1438, %v1459
  %v1461 = vlaneseq
  %v1462 = vshrl.u32 %v1461, 7
  %v1463 = vsub.s32 4, %v1462
  %v1464 = vrot.slane %v1438, %v1463
  %v1465 = vlaneseq
  %v1466 = vshrl.u32 %v1465, 7
  %v1467 = vsub.s32 5, %v1466
  %v1468 = vrot.slane %v1438, %v1467
  %v1469 = vlaneseq
  %v1470 = vshrl.u32 %v1469, 7
  %v1471 = vsub.s32 6, %v1470
  %v1472 = vrot.slane %v1438, %v1471
  %v1473 = vlaneseq
  %v1474 = vshrl.u32 %v1473, 7
  %v1475 = vsub.s32 7, %v1474
  %v1476 = vrot.slane %v1438, %v1475
  %v1477 = vlaneseq
  %v1478 = vshrl.u32 %v1477, 7
  %v1479 = vsub.s32 0, %v1478
  %v1480 = vrot.slane %v1442, %v1479
  %v1481 = vlaneseq
  %v1482 = vshrl.u32 %v1481, 7
  %v1483 = vsub.s32 1, %v1482
  %v1484 = vrot.slane %v1442, %v1483
  %v1485 = vlaneseq
  %v1486 = vshrl.u32 %v1485, 7
  %v1487 = vsub.s32 2, %v1486
  %v1488 = vrot.slane %v1442, %v1487
  %v1489 = vlaneseq
  %v1490 = vshrl.u32 %v1489, 7
  %v1491 = vsub.s32 3, %v1490
  %v1492 = vrot.slane %v1442, %v1491
  %v1493 = vlaneseq
  %v1494 = vshrl.u32 %v1493, 7
  %v1495 = vsub.s32 4, %v1494
  %v1496 = vrot.slane %v1442, %v1495
  %v1497 = vlaneseq
  %v1498 = vshrl.u32 %v1497, 7
  %v1499 = vsub.s32 5, %v1498
  %v1500 = vrot.slane %v1442, %v1499
  %v1501 = vlaneseq
  %v1502 = vshrl.u32 %v1501, 7
  %v1503 = vsub.s32 6, %v1502
  %v1504 = vrot.slane %v1442, %v1503
  %v1505 = vlaneseq
  %v1506 = vshrl.u32 %v1505, 7
  %v1507 = vsub.s32 7, %v1506
  %v1508 = vrot.slane %v1442, %v1507
  %v1525 = vmul.f32 %v1433, %v1448
  %v1526 = vmul.f32 %v1432, %v1452
  %v1527 = vmul.f32 %v1431, %v1456
  %v1528 = vmul.f32 %v1430, %v1460
  %v1529 = vmul.f32 %v1429, %v1464
  %v1530 = vmul.f32 %v1428, %v1468
  %v1531 = vmul.f32 %v1427, %v1472
  %v1532 = vmul.f32 %v1426, %v1476
  %v1533 = vmul.f32 %v1425, %v1480
  %v1534 = vmul.f32 %v1424, %v1484
  %v1535 = vmul.f32 %v1423, %v1488
  %v1536 = vmul.f32 %v1422, %v1492
  %v1537 = vmul.f32 %v1421, %v1496
  %v1538 = vmul.f32 %v1420, %v1500
  %v1539 = vmul.f32 %v1419, %v1504
  %v1540 = vmul.f32 %v1434, %v1508
  %v1557 = vrot.slane %v1525, 3
  %v1558 = vrot.slane %v1526, 3
  %v1559 = vrot.slane %v1527, 3
  %v1560 = vrot.slane %v1528, 3
  %v1561 = vrot.slane %v1529, 3
  %v1562 = vrot.slane %v1530, 3
  %v1563 = vrot.slane %v1531, 3
  %v1564 = vrot.slane %v1532, 3
  %v1565 = vrot.slane %v1533, 3
  %v1566 = vrot.slane %v1534, 3
  %v1567 = vrot.slane %v1535, 3
  %v1568 = vrot.slane %v1536, 3
  %v1569 = vrot.slane %v1537, 3
  %v1570 = vrot.slane %v1538, 3
  %v1571 = vrot.slane %v1539, 3
  %v1572 = vrot.slane %v1540, 3
  %1589 = vst [vmem:[#allocation2 + $0x100] sm:$0xe0] %v1557
  %1590 = vst [vmem:[#allocation2 + $0x108] sm:$0xe0] %v1558
  %1591 = vst [vmem:[#allocation2 + $0x110] sm:$0xe0] %v1559
  %1592 = vst [vmem:[#allocation2 + $0x118] sm:$0xe0] %v1560
  %1593 = vst [vmem:[#allocation2 + $0x120] sm:$0xe0] %v1561
  %1594 = vst [vmem:[#allocation2 + $0x128] sm:$0xe0] %v1562
  %1595 = vst [vmem:[#allocation2 + $0x130] sm:$0xe0] %v1563
  %1596 = vst [vmem:[#allocation2 + $0x138] sm:$0xe0] %v1564
  %1597 = vst [vmem:[#allocation2 + $0x140] sm:$0xe0] %v1565
  %1598 = vst [vmem:[#allocation2 + $0x148] sm:$0xe0] %v1566
  %1599 = vst [vmem:[#allocation2 + $0x150] sm:$0xe0] %v1567
  %1600 = vst [vmem:[#allocation2 + $0x158] sm:$0xe0] %v1568
  %1601 = vst [vmem:[#allocation2 + $0x160] sm:$0xe0] %v1569
  %1602 = vst [vmem:[#allocation2 + $0x168] sm:$0xe0] %v1570
  %1603 = vst [vmem:[#allocation2 + $0x170] sm:$0xe0] %v1571
  %1604 = vst [vmem:[#allocation2 + $0x178] sm:$0xe0] %v1572
  %1605 = vrot.lane.b32.xlu0 %v23, 111
  %v1606 = vpop.permute.xlu0 %1605
  %1607 = vrot.lane.b32.xlu0 %v39, 111
  %v1608 = vpop.permute.xlu0 %1607
  %1609 = vrot.lane.b32.xlu0 %v24, 111
  %v1610 = vpop.permute.xlu0 %1609
  %1611 = vrot.lane.b32.xlu0 %v40, 111
  %v1612 = vpop.permute.xlu0 %1611
  %1613 = vrot.lane.b32.xlu0 %v25, 111
  %v1614 = vpop.permute.xlu0 %1613
  %1615 = vrot.lane.b32.xlu0 %v41, 111
  %v1616 = vpop.permute.xlu0 %1615
  %1617 = vrot.lane.b32.xlu0 %v26, 111
  %v1618 = vpop.permute.xlu0 %1617
  %1619 = vrot.lane.b32.xlu0 %v42, 111
  %v1620 = vpop.permute.xlu0 %1619
  %1621 = vrot.lane.b32.xlu0 %v27, 111
  %v1622 = vpop.permute.xlu0 %1621
  %1623 = vrot.lane.b32.xlu0 %v43, 111
  %v1624 = vpop.permute.xlu0 %1623
  %1625 = vrot.lane.b32.xlu0 %v28, 111
  %v1626 = vpop.permute.xlu0 %1625
  %1627 = vrot.lane.b32.xlu0 %v44, 111
  %v1628 = vpop.permute.xlu0 %1627
  %1629 = vrot.lane.b32.xlu0 %v29, 111
  %v1630 = vpop.permute.xlu0 %1629
  %1631 = vrot.lane.b32.xlu0 %v45, 111
  %v1632 = vpop.permute.xlu0 %1631
  %1633 = vrot.lane.b32.xlu0 %v30, 111
  %v1634 = vpop.permute.xlu0 %1633
  %1635 = vrot.lane.b32.xlu0 %v46, 111
  %v1636 = vpop.permute.xlu0 %1635
  %vm1637 = vcmp.lt.s32.totalorder %v88, 111
  %v1638 = vsel %vm1637, %v1634, %v1636
  %v1639 = vsel %vm1637, %v1632, %v1634
  %v1640 = vsel %vm1637, %v1630, %v1632
  %v1641 = vsel %vm1637, %v1628, %v1630
  %v1642 = vsel %vm1637, %v1626, %v1628
  %v1643 = vsel %vm1637, %v1624, %v1626
  %v1644 = vsel %vm1637, %v1622, %v1624
  %v1645 = vsel %vm1637, %v1620, %v1622
  %v1646 = vsel %vm1637, %v1618, %v1620
  %v1647 = vsel %vm1637, %v1616, %v1618
  %v1648 = vsel %vm1637, %v1614, %v1616
  %v1649 = vsel %vm1637, %v1612, %v1614
  %v1650 = vsel %vm1637, %v1610, %v1612
  %v1651 = vsel %vm1637, %v1608, %v1610
  %v1652 = vsel %vm1637, %v1606, %v1608
  %v1653 = vsel %vm1637, %v1636, %v1606
  %s1654 = scalar_lea.vmem %s1, 128
  %v1655 = vld [vmem:[%s1654] ss:$8 sm:$0xf]
  %v1656 = vld [vmem:[%s1654] ss:$8 sm:$0xf0]
  %v1657 = vor.u32 %v1655, %v1656
  %s1658 = scalar_lea.vmem %s1, 192
  %v1659 = vld [vmem:[%s1658] ss:$8 sm:$0xf]
  %v1660 = vld [vmem:[%s1658] ss:$8 sm:$0xf0]
  %v1661 = vor.u32 %v1659, %v1660
  %v1664 = vlaneseq
  %v1665 = vshrl.u32 %v1664, 7
  %v1666 = vsub.s32 0, %v1665
  %v1667 = vrot.slane %v1657, %v1666
  %v1668 = vlaneseq
  %v1669 = vshrl.u32 %v1668, 7
  %v1670 = vsub.s32 1, %v1669
  %v1671 = vrot.slane %v1657, %v1670
  %v1672 = vlaneseq
  %v1673 = vshrl.u32 %v1672, 7
  %v1674 = vsub.s32 2, %v1673
  %v1675 = vrot.slane %v1657, %v1674
  %v1676 = vlaneseq
  %v1677 = vshrl.u32 %v1676, 7
  %v1678 = vsub.s32 3, %v1677
  %v1679 = vrot.slane %v1657, %v1678
  %v1680 = vlaneseq
  %v1681 = vshrl.u32 %v1680, 7
  %v1682 = vsub.s32 4, %v1681
  %v1683 = vrot.slane %v1657, %v1682
  %v1684 = vlaneseq
  %v1685 = vshrl.u32 %v1684, 7
  %v1686 = vsub.s32 5, %v1685
  %v1687 = vrot.slane %v1657, %v1686
  %v1688 = vlaneseq
  %v1689 = vshrl.u32 %v1688, 7
  %v1690 = vsub.s32 6, %v1689
  %v1691 = vrot.slane %v1657, %v1690
  %v1692 = vlaneseq
  %v1693 = vshrl.u32 %v1692, 7
  %v1694 = vsub.s32 7, %v1693
  %v1695 = vrot.slane %v1657, %v1694
  %v1696 = vlaneseq
  %v1697 = vshrl.u32 %v1696, 7
  %v1698 = vsub.s32 0, %v1697
  %v1699 = vrot.slane %v1661, %v1698
  %v1700 = vlaneseq
  %v1701 = vshrl.u32 %v1700, 7
  %v1702 = vsub.s32 1, %v1701
  %v1703 = vrot.slane %v1661, %v1702
  %v1704 = vlaneseq
  %v1705 = vshrl.u32 %v1704, 7
  %v1706 = vsub.s32 2, %v1705
  %v1707 = vrot.slane %v1661, %v1706
  %v1708 = vlaneseq
  %v1709 = vshrl.u32 %v1708, 7
  %v1710 = vsub.s32 3, %v1709
  %v1711 = vrot.slane %v1661, %v1710
  %v1712 = vlaneseq
  %v1713 = vshrl.u32 %v1712, 7
  %v1714 = vsub.s32 4, %v1713
  %v1715 = vrot.slane %v1661, %v1714
  %v1716 = vlaneseq
  %v1717 = vshrl.u32 %v1716, 7
  %v1718 = vsub.s32 5, %v1717
  %v1719 = vrot.slane %v1661, %v1718
  %v1720 = vlaneseq
  %v1721 = vshrl.u32 %v1720, 7
  %v1722 = vsub.s32 6, %v1721
  %v1723 = vrot.slane %v1661, %v1722
  %v1724 = vlaneseq
  %v1725 = vshrl.u32 %v1724, 7
  %v1726 = vsub.s32 7, %v1725
  %v1727 = vrot.slane %v1661, %v1726
  %v1744 = vmul.f32 %v1652, %v1667
  %v1745 = vmul.f32 %v1651, %v1671
  %v1746 = vmul.f32 %v1650, %v1675
  %v1747 = vmul.f32 %v1649, %v1679
  %v1748 = vmul.f32 %v1648, %v1683
  %v1749 = vmul.f32 %v1647, %v1687
  %v1750 = vmul.f32 %v1646, %v1691
  %v1751 = vmul.f32 %v1645, %v1695
  %v1752 = vmul.f32 %v1644, %v1699
  %v1753 = vmul.f32 %v1643, %v1703
  %v1754 = vmul.f32 %v1642, %v1707
  %v1755 = vmul.f32 %v1641, %v1711
  %v1756 = vmul.f32 %v1640, %v1715
  %v1757 = vmul.f32 %v1639, %v1719
  %v1758 = vmul.f32 %v1638, %v1723
  %v1759 = vmul.f32 %v1653, %v1727
  %1760 = vst [vmem:[#allocation2 + $0x180] sm:$0x7] %v1744
  %1761 = vst [vmem:[#allocation2 + $0x188] sm:$0x7] %v1745
  %1762 = vst [vmem:[#allocation2 + $0x190] sm:$0x7] %v1746
  %1763 = vst [vmem:[#allocation2 + $0x198] sm:$0x7] %v1747
  %1764 = vst [vmem:[#allocation2 + $0x1a0] sm:$0x7] %v1748
  %1765 = vst [vmem:[#allocation2 + $0x1a8] sm:$0x7] %v1749
  %1766 = vst [vmem:[#allocation2 + $0x1b0] sm:$0x7] %v1750
  %1767 = vst [vmem:[#allocation2 + $0x1b8] sm:$0x7] %v1751
  %1768 = vst [vmem:[#allocation2 + $0x1c0] sm:$0x7] %v1752
  %1769 = vst [vmem:[#allocation2 + $0x1c8] sm:$0x7] %v1753
  %1770 = vst [vmem:[#allocation2 + $0x1d0] sm:$0x7] %v1754
  %1771 = vst [vmem:[#allocation2 + $0x1d8] sm:$0x7] %v1755
  %1772 = vst [vmem:[#allocation2 + $0x1e0] sm:$0x7] %v1756
  %1773 = vst [vmem:[#allocation2 + $0x1e8] sm:$0x7] %v1757
  %1774 = vst [vmem:[#allocation2 + $0x1f0] sm:$0x7] %v1758
  %1775 = vst [vmem:[#allocation2 + $0x1f8] sm:$0x7] %v1759
  %v1776 = vld [vmem:[%s2] sm:$0xff]
  %v1777 = vld [vmem:[%s2 + $0x8] sm:$0xff]
  %v1778 = vld [vmem:[%s2 + $0x10] sm:$0xff]
  %v1779 = vld [vmem:[%s2 + $0x18] sm:$0xff]
  %v1780 = vld [vmem:[%s2 + $0x20] sm:$0xff]
  %v1781 = vld [vmem:[%s2 + $0x28] sm:$0xff]
  %v1782 = vld [vmem:[%s2 + $0x30] sm:$0xff]
  %v1783 = vld [vmem:[%s2 + $0x38] sm:$0xff]
  %v1784 = vld [vmem:[#allocation2] sm:$0xff]
  %v1785 = vld [vmem:[#allocation2 + $0x8] sm:$0xff]
  %v1786 = vld [vmem:[#allocation2 + $0x10] sm:$0xff]
  %v1787 = vld [vmem:[#allocation2 + $0x18] sm:$0xff]
  %v1788 = vld [vmem:[#allocation2 + $0x20] sm:$0xff]
  %v1789 = vld [vmem:[#allocation2 + $0x28] sm:$0xff]
  %v1790 = vld [vmem:[#allocation2 + $0x30] sm:$0xff]
  %v1791 = vld [vmem:[#allocation2 + $0x38] sm:$0xff]
  %v1792 = vld [vmem:[#allocation2 + $0x40] sm:$0xff]
  %v1793 = vld [vmem:[#allocation2 + $0x48] sm:$0xff]
  %v1794 = vld [vmem:[#allocation2 + $0x50] sm:$0xff]
  %v1795 = vld [vmem:[#allocation2 + $0x58] sm:$0xff]
  %v1796 = vld [vmem:[#allocation2 + $0x60] sm:$0xff]
  %v1797 = vld [vmem:[#allocation2 + $0x68] sm:$0xff]
  %v1798 = vld [vmem:[#allocation2 + $0x70] sm:$0xff]
  %v1799 = vld [vmem:[#allocation2 + $0x78] sm:$0xff]
  %v1800 = vld [vmem:[#allocation2 + $0x80] sm:$0xff]
  %v1801 = vld [vmem:[#allocation2 + $0x88] sm:$0xff]
  %v1802 = vld [vmem:[#allocation2 + $0x90] sm:$0xff]
  %v1803 = vld [vmem:[#allocation2 + $0x98] sm:$0xff]
  %v1804 = vld [vmem:[#allocation2 + $0xa0] sm:$0xff]
  %v1805 = vld [vmem:[#allocation2 + $0xa8] sm:$0xff]
  %v1806 = vld [vmem:[#allocation2 + $0xb0] sm:$0xff]
  %v1807 = vld [vmem:[#allocation2 + $0xb8] sm:$0xff]
  %v1808 = vld [vmem:[#allocation2 + $0xc0] sm:$0xff]
  %v1809 = vld [vmem:[#allocation2 + $0xc8] sm:$0xff]
  %v1810 = vld [vmem:[#allocation2 + $0xd0] sm:$0xff]
  %v1811 = vld [vmem:[#allocation2 + $0xd8] sm:$0xff]
  %v1812 = vld [vmem:[#allocation2 + $0xe0] sm:$0xff]
  %v1813 = vld [vmem:[#allocation2 + $0xe8] sm:$0xff]
  %v1814 = vld [vmem:[#allocation2 + $0xf0] sm:$0xff]
  %v1815 = vld [vmem:[#allocation2 + $0xf8] sm:$0xff]
  %v1816 = vld [vmem:[#allocation2 + $0x100] sm:$0xff]
  %v1817 = vld [vmem:[#allocation2 + $0x108] sm:$0xff]
  %v1818 = vld [vmem:[#allocation2 + $0x110] sm:$0xff]
  %v1819 = vld [vmem:[#allocation2 + $0x118] sm:$0xff]
  %v1820 = vld [vmem:[#allocation2 + $0x120] sm:$0xff]
  %v1821 = vld [vmem:[#allocation2 + $0x128] sm:$0xff]
  %v1822 = vld [vmem:[#allocation2 + $0x130] sm:$0xff]
  %v1823 = vld [vmem:[#allocation2 + $0x138] sm:$0xff]
  %v1824 = vld [vmem:[#allocation2 + $0x140] sm:$0xff]
  %v1825 = vld [vmem:[#allocation2 + $0x148] sm:$0xff]
  %v1826 = vld [vmem:[#allocation2 + $0x150] sm:$0xff]
  %v1827 = vld [vmem:[#allocation2 + $0x158] sm:$0xff]
  %v1828 = vld [vmem:[#allocation2 + $0x160] sm:$0xff]
  %v1829 = vld [vmem:[#allocation2 + $0x168] sm:$0xff]
  %v1830 = vld [vmem:[#allocation2 + $0x170] sm:$0xff]
  %v1831 = vld [vmem:[#allocation2 + $0x178] sm:$0xff]
  %v1832 = vld [vmem:[#allocation2 + $0x180] sm:$0x7]
  %v1833 = vld [vmem:[#allocation2 + $0x188] sm:$0x7]
  %v1834 = vld [vmem:[#allocation2 + $0x190] sm:$0x7]
  %v1835 = vld [vmem:[#allocation2 + $0x198] sm:$0x7]
  %v1836 = vld [vmem:[#allocation2 + $0x1a0] sm:$0x7]
  %v1837 = vld [vmem:[#allocation2 + $0x1a8] sm:$0x7]
  %v1838 = vld [vmem:[#allocation2 + $0x1b0] sm:$0x7]
  %v1839 = vld [vmem:[#allocation2 + $0x1b8] sm:$0x7]
  %v1840 = vld [vmem:[#allocation2 + $0x1c0] sm:$0x7]
  %v1841 = vld [vmem:[#allocation2 + $0x1c8] sm:$0x7]
  %v1842 = vld [vmem:[#allocation2 + $0x1d0] sm:$0x7]
  %v1843 = vld [vmem:[#allocation2 + $0x1d8] sm:$0x7]
  %v1844 = vld [vmem:[#allocation2 + $0x1e0] sm:$0x7]
  %v1845 = vld [vmem:[#allocation2 + $0x1e8] sm:$0x7]
  %v1846 = vld [vmem:[#allocation2 + $0x1f0] sm:$0x7]
  %v1847 = vld [vmem:[#allocation2 + $0x1f8] sm:$0x7]
  %v1848 = vld [vmem:[%s3] sm:$0xff]
  %v1849 = vld [vmem:[%s3 + $0x8] sm:$0xff]
  %v1850 = vld [vmem:[%s3 + $0x10] sm:$0xff]
  %v1851 = vld [vmem:[%s3 + $0x18] sm:$0xff]
  %v1852 = vld [vmem:[%s3 + $0x20] sm:$0xff]
  %v1853 = vld [vmem:[%s3 + $0x28] sm:$0xff]
  %v1854 = vld [vmem:[%s3 + $0x30] sm:$0xff]
  %v1855 = vld [vmem:[%s3 + $0x38] sm:$0xff]
  %1857 = vset.pattern.permute.xlu0 0
  %1858 = vperm.xlu0 %1857, %v1848
  %v1859 = vpop.permute.xlu0 %1858
  %1862 = vset.pattern.permute.xlu0 0
  %1863 = vperm.xlu0 %1862, %v1849
  %v1864 = vpop.permute.xlu0 %1863
  %1867 = vset.pattern.permute.xlu0 0
  %1868 = vperm.xlu0 %1867, %v1850
  %v1869 = vpop.permute.xlu0 %1868
  %1872 = vset.pattern.permute.xlu0 0
  %1873 = vperm.xlu0 %1872, %v1851
  %v1874 = vpop.permute.xlu0 %1873
  %1877 = vset.pattern.permute.xlu0 0
  %1878 = vperm.xlu0 %1877, %v1852
  %v1879 = vpop.permute.xlu0 %1878
  %1882 = vset.pattern.permute.xlu0 0
  %1883 = vperm.xlu0 %1882, %v1853
  %v1884 = vpop.permute.xlu0 %1883
  %1887 = vset.pattern.permute.xlu0 0
  %1888 = vperm.xlu0 %1887, %v1854
  %v1889 = vpop.permute.xlu0 %1888
  %1892 = vset.pattern.permute.xlu0 0
  %1893 = vperm.xlu0 %1892, %v1855
  %v1894 = vpop.permute.xlu0 %1893
  %vm1896 = vcmask 220160
  %v1898 = vsel %vm1896, %v1776, 0
  %v1901 = vsel %vm1896, %v1777, 0
  %v1904 = vsel %vm1896, %v1778, 0
  %v1907 = vsel %vm1896, %v1779, 0
  %v1910 = vsel %vm1896, %v1780, 0
  %v1913 = vsel %vm1896, %v1781, 0
  %v1916 = vsel %vm1896, %v1782, 0
  %v1919 = vsel %vm1896, %v1783, 0
  %vm1921 = vcmask 1042432
  %v1923 = vsel %vm1921, %v1832, 0
  %v1926 = vsel %vm1921, %v1833, 0
  %v1929 = vsel %vm1921, %v1834, 0
  %v1932 = vsel %vm1921, %v1835, 0
  %v1935 = vsel %vm1921, %v1836, 0
  %v1938 = vsel %vm1921, %v1837, 0
  %v1941 = vsel %vm1921, %v1838, 0
  %v1944 = vsel %vm1921, %v1839, 0
  %v1947 = vsel %vm1921, %v1840, 0
  %v1950 = vsel %vm1921, %v1841, 0
  %v1953 = vsel %vm1921, %v1842, 0
  %v1956 = vsel %vm1921, %v1843, 0
  %v1959 = vsel %vm1921, %v1844, 0
  %v1962 = vsel %vm1921, %v1845, 0
  %v1965 = vsel %vm1921, %v1846, 0
  %v1968 = vsel %vm1921, %v1847, 0
  %1970 = vmatprep.subr.mxu0 0.0
  %1971 = vmatpush1.msra.mxu0 0.0
  %1972 = vmatprep.subr.mxu0 0.0
  %1973 = vmatpush1.msra.mxu0 0.0
  %1974 = vmatprep.subr.mxu0 0.0
  %1975 = vmatpush1.msra.mxu0 0.0
  %1976 = vmatprep.subr.mxu0 0.0
  %1977 = vmatpush1.msra.mxu0 0.0
  %1978 = vmatprep.subr.mxu0 0.0
  %1979 = vmatpush1.msra.mxu0 0.0
  %1980 = vmatprep.subr.mxu0 0.0
  %1981 = vmatpush1.msra.mxu0 0.0
  %1982 = vmatprep.subr.mxu0 0.0
  %1983 = vmatpush1.msra.mxu0 0.0
  %1984 = vmatprep.subr.mxu0 0.0
  %1985 = vmatpush1.msra.mxu0 0.0
  %1986 = vmatprep.subr.mxu0 0.0
  %1987 = vmatpush1.msra.mxu0 0.0
  %1988 = vmatprep.subr.mxu0 0.0
  %1989 = vmatpush1.msra.mxu0 0.0
  %1990 = vmatprep.subr.mxu0 0.0
  %1991 = vmatpush1.msra.mxu0 0.0
  %1992 = vmatprep.subr.mxu0 0.0
  %1993 = vmatpush1.msra.mxu0 0.0
  %1994 = vmatprep.subr.mxu0 %v1926
  %1995 = vmatpush1.msra.mxu0 %v1923
  %1996 = vmatprep.subr.mxu0 %v1817
  %1997 = vmatpush1.msra.mxu0 %v1816
  %1998 = vmatprep.subr.mxu0 %v1801
  %1999 = vmatpush1.msra.mxu0 %v1800
  %2000 = vmatprep.subr.mxu0 %v1785
  %2001 = vmatpush1.msra.mxu0 %v1784
  %2002 = vmatprep.subr.mxu0 0.0
  %2003 = vmatpush2.msra.mxu0 0.0
  %2004 = vmatprep.subr.mxu0 0.0
  %2005 = vmatpush2.msra.mxu0 0.0
  %2006 = vmatprep.subr.mxu0 0.0
  %2007 = vmatpush2.msra.mxu0 0.0
  %2008 = vmatprep.subr.mxu0 0.0
  %2009 = vmatpush2.msra.mxu0 0.0
  %2010 = vmatprep.subr.mxu0 0.0
  %2011 = vmatpush2.msra.mxu0 0.0
  %2012 = vmatprep.subr.mxu0 0.0
  %2013 = vmatpush2.msra.mxu0 0.0
  %2014 = vmatprep.subr.mxu0 0.0
  %2015 = vmatpush2.msra.mxu0 0.0
  %2016 = vmatprep.subr.mxu0 0.0
  %2017 = vmatpush2.msra.mxu0 0.0
  %2018 = vmatprep.subr.mxu0 0.0
  %2019 = vmatpush2.msra.mxu0 0.0
  %2020 = vmatprep.subr.mxu0 0.0
  %2021 = vmatpush2.msra.mxu0 0.0
  %2022 = vmatprep.subr.mxu0 0.0
  %2023 = vmatpush2.msra.mxu0 0.0
  %2024 = vmatprep.subr.mxu0 0.0
  %2025 = vmatpush2.msra.mxu0 0.0
  %2026 = vmatprep.subr.mxu0 0.0
  %2027 = vmatpush2.msra.mxu0 0.0
  %2028 = vmatprep.subr.mxu0 0.0
  %2029 = vmatpush2.msra.mxu0 0.0
  %2030 = vmatprep.subr.mxu0 0.0
  %2031 = vmatpush2.msra.mxu0 0.0
  %2032 = vmatprep.subr.mxu0 0.0
  %2033 = vmatpush2.msra.mxu0 0.0
  %2034 = vmatprep.mubr.f32.mxu0 0.0
  %2035 = vmatmul.mubr.f32.gmra.mxu0 %v1898
  %v2036 = vpop.f32.mrf.mxu0
  %v2037 = vadd.f32 %v1859, %v2036
  %v2038 = vpop.f32.mrf.mxu0
  %v2039 = vadd.f32 %v1859, %v2038
  %2040 = vmatprep.mubr.f32.mxu0 0.0
  %2041 = vmatmul.mubr.f32.gmra.mxu0 %v1901
  %v2042 = vpop.f32.mrf.mxu0
  %v2043 = vadd.f32 %v1864, %v2042
  %v2044 = vpop.f32.mrf.mxu0
  %v2045 = vadd.f32 %v1864, %v2044
  %2046 = vmatprep.mubr.f32.mxu0 0.0
  %2047 = vmatmul.mubr.f32.gmra.mxu0 %v1904
  %v2048 = vpop.f32.mrf.mxu0
  %v2049 = vadd.f32 %v1869, %v2048
  %v2050 = vpop.f32.mrf.mxu0
  %v2051 = vadd.f32 %v1869, %v2050
  %2052 = vmatprep.mubr.f32.mxu0 0.0
  %2053 = vmatmul.mubr.f32.gmra.mxu0 %v1907
  %v2054 = vpop.f32.mrf.mxu0
  %v2055 = vadd.f32 %v1874, %v2054
  %v2056 = vpop.f32.mrf.mxu0
  %v2057 = vadd.f32 %v1874, %v2056
  %2058 = vmatprep.mubr.f32.mxu0 0.0
  %2059 = vmatmul.mubr.f32.gmra.mxu0 %v1910
  %v2060 = vpop.f32.mrf.mxu0
  %v2061 = vadd.f32 %v1879, %v2060
  %v2062 = vpop.f32.mrf.mxu0
  %v2063 = vadd.f32 %v1879, %v2062
  %2064 = vmatprep.mubr.f32.mxu0 0.0
  %2065 = vmatmul.mubr.f32.gmra.mxu0 %v1913
  %v2066 = vpop.f32.mrf.mxu0
  %v2067 = vadd.f32 %v1884, %v2066
  %v2068 = vpop.f32.mrf.mxu0
  %v2069 = vadd.f32 %v1884, %v2068
  %2070 = vmatprep.mubr.f32.mxu0 0.0
  %2071 = vmatmul.mubr.f32.gmra.mxu0 %v1916
  %v2072 = vpop.f32.mrf.mxu0
  %v2073 = vadd.f32 %v1889, %v2072
  %v2074 = vpop.f32.mrf.mxu0
  %v2075 = vadd.f32 %v1889, %v2074
  %2076 = vmatprep.mubr.f32.mxu0 0.0
  %2077 = vmatmul.mubr.f32.gmra.mxu0 %v1919
  %v2078 = vpop.f32.mrf.mxu0
  %v2079 = vadd.f32 %v1894, %v2078
  %v2080 = vpop.f32.mrf.mxu0
  %v2081 = vadd.f32 %v1894, %v2080
  %2082 = vdwg.mxu0
  %2083 = vmatprep.subr.mxu0 0.0
  %2084 = vmatpush1.msra.mxu0 0.0
  %2085 = vmatprep.subr.mxu0 0.0
  %2086 = vmatpush1.msra.mxu0 0.0
  %2087 = vmatprep.subr.mxu0 0.0
  %2088 = vmatpush1.msra.mxu0 0.0
  %2089 = vmatprep.subr.mxu0 0.0
  %2090 = vmatpush1.msra.mxu0 0.0
  %2091 = vmatprep.subr.mxu0 0.0
  %2092 = vmatpush1.msra.mxu0 0.0
  %2093 = vmatprep.subr.mxu0 0.0
  %2094 = vmatpush1.msra.mxu0 0.0
  %2095 = vmatprep.subr.mxu0 0.0
  %2096 = vmatpush1.msra.mxu0 0.0
  %2097 = vmatprep.subr.mxu0 0.0
  %2098 = vmatpush1.msra.mxu0 0.0
  %2099 = vmatprep.subr.mxu0 0.0
  %2100 = vmatpush1.msra.mxu0 0.0
  %2101 = vmatprep.subr.mxu0 0.0
  %2102 = vmatpush1.msra.mxu0 0.0
  %2103 = vmatprep.subr.mxu0 0.0
  %2104 = vmatpush1.msra.mxu0 0.0
  %2105 = vmatprep.subr.mxu0 0.0
  %2106 = vmatpush1.msra.mxu0 0.0
  %2107 = vmatprep.subr.mxu0 %v1932
  %2108 = vmatpush1.msra.mxu0 %v1929
  %2109 = vmatprep.subr.mxu0 %v1819
  %2110 = vmatpush1.msra.mxu0 %v1818
  %2111 = vmatprep.subr.mxu0 %v1803
  %2112 = vmatpush1.msra.mxu0 %v1802
  %2113 = vmatprep.subr.mxu0 %v1787
  %2114 = vmatpush1.msra.mxu0 %v1786
  %2115 = vmatprep.subr.mxu0 0.0
  %2116 = vmatpush2.msra.mxu0 0.0
  %2117 = vmatprep.subr.mxu0 0.0
  %2118 = vmatpush2.msra.mxu0 0.0
  %2119 = vmatprep.subr.mxu0 0.0
  %2120 = vmatpush2.msra.mxu0 0.0
  %2121 = vmatprep.subr.mxu0 0.0
  %2122 = vmatpush2.msra.mxu0 0.0
  %2123 = vmatprep.subr.mxu0 0.0
  %2124 = vmatpush2.msra.mxu0 0.0
  %2125 = vmatprep.subr.mxu0 0.0
  %2126 = vmatpush2.msra.mxu0 0.0
  %2127 = vmatprep.subr.mxu0 0.0
  %2128 = vmatpush2.msra.mxu0 0.0
  %2129 = vmatprep.subr.mxu0 0.0
  %2130 = vmatpush2.msra.mxu0 0.0
  %2131 = vmatprep.subr.mxu0 0.0
  %2132 = vmatpush2.msra.mxu0 0.0
  %2133 = vmatprep.subr.mxu0 0.0
  %2134 = vmatpush2.msra.mxu0 0.0
  %2135 = vmatprep.subr.mxu0 0.0
  %2136 = vmatpush2.msra.mxu0 0.0
  %2137 = vmatprep.subr.mxu0 0.0
  %2138 = vmatpush2.msra.mxu0 0.0
  %2139 = vmatprep.subr.mxu0 0.0
  %2140 = vmatpush2.msra.mxu0 0.0
  %2141 = vmatprep.subr.mxu0 0.0
  %2142 = vmatpush2.msra.mxu0 0.0
  %2143 = vmatprep.subr.mxu0 0.0
  %2144 = vmatpush2.msra.mxu0 0.0
  %2145 = vmatprep.subr.mxu0 0.0
  %2146 = vmatpush2.msra.mxu0 0.0
  %2147 = vmatprep.mubr.f32.mxu0 0.0
  %2148 = vmatmul.mubr.f32.gmra.mxu0 %v1898
  %v2149 = vpop.f32.mrf.mxu0
  %v2150 = vadd.f32 %v1859, %v2149
  %v2151 = vpop.f32.mrf.mxu0
  %v2152 = vadd.f32 %v1859, %v2151
  %2153 = vmatprep.mubr.f32.mxu0 0.0
  %2154 = vmatmul.mubr.f32.gmra.mxu0 %v1901
  %v2155 = vpop.f32.mrf.mxu0
  %v2156 = vadd.f32 %v1864, %v2155
  %v2157 = vpop.f32.mrf.mxu0
  %v2158 = vadd.f32 %v1864, %v2157
  %2159 = vmatprep.mubr.f32.mxu0 0.0
  %2160 = vmatmul.mubr.f32.gmra.mxu0 %v1904
  %v2161 = vpop.f32.mrf.mxu0
  %v2162 = vadd.f32 %v1869, %v2161
  %v2163 = vpop.f32.mrf.mxu0
  %v2164 = vadd.f32 %v1869, %v2163
  %2165 = vmatprep.mubr.f32.mxu0 0.0
  %2166 = vmatmul.mubr.f32.gmra.mxu0 %v1907
  %v2167 = vpop.f32.mrf.mxu0
  %v2168 = vadd.f32 %v1874, %v2167
  %v2169 = vpop.f32.mrf.mxu0
  %v2170 = vadd.f32 %v1874, %v2169
  %2171 = vmatprep.mubr.f32.mxu0 0.0
  %2172 = vmatmul.mubr.f32.gmra.mxu0 %v1910
  %v2173 = vpop.f32.mrf.mxu0
  %v2174 = vadd.f32 %v1879, %v2173
  %v2175 = vpop.f32.mrf.mxu0
  %v2176 = vadd.f32 %v1879, %v2175
  %2177 = vmatprep.mubr.f32.mxu0 0.0
  %2178 = vmatmul.mubr.f32.gmra.mxu0 %v1913
  %v2179 = vpop.f32.mrf.mxu0
  %v2180 = vadd.f32 %v1884, %v2179
  %v2181 = vpop.f32.mrf.mxu0
  %v2182 = vadd.f32 %v1884, %v2181
  %2183 = vmatprep.mubr.f32.mxu0 0.0
  %2184 = vmatmul.mubr.f32.gmra.mxu0 %v1916
  %v2185 = vpop.f32.mrf.mxu0
  %v2186 = vadd.f32 %v1889, %v2185
  %v2187 = vpop.f32.mrf.mxu0
  %v2188 = vadd.f32 %v1889, %v2187
  %2189 = vmatprep.mubr.f32.mxu0 0.0
  %2190 = vmatmul.mubr.f32.gmra.mxu0 %v1919
  %v2191 = vpop.f32.mrf.mxu0
  %v2192 = vadd.f32 %v1894, %v2191
  %v2193 = vpop.f32.mrf.mxu0
  %v2194 = vadd.f32 %v1894, %v2193
  %2195 = vdwg.mxu0
  %2196 = vmatprep.subr.mxu0 0.0
  %2197 = vmatpush1.msra.mxu0 0.0
  %2198 = vmatprep.subr.mxu0 0.0
  %2199 = vmatpush1.msra.mxu0 0.0
  %2200 = vmatprep.subr.mxu0 0.0
  %2201 = vmatpush1.msra.mxu0 0.0
  %2202 = vmatprep.subr.mxu0 0.0
  %2203 = vmatpush1.msra.mxu0 0.0
  %2204 = vmatprep.subr.mxu0 0.0
  %2205 = vmatpush1.msra.mxu0 0.0
  %2206 = vmatprep.subr.mxu0 0.0
  %2207 = vmatpush1.msra.mxu0 0.0
  %2208 = vmatprep.subr.mxu0 0.0
  %2209 = vmatpush1.msra.mxu0 0.0
  %2210 = vmatprep.subr.mxu0 0.0
  %2211 = vmatpush1.msra.mxu0 0.0
  %2212 = vmatprep.subr.mxu0 0.0
  %2213 = vmatpush1.msra.mxu0 0.0
  %2214 = vmatprep.subr.mxu0 0.0
  %2215 = vmatpush1.msra.mxu0 0.0
  %2216 = vmatprep.subr.mxu0 0.0
  %2217 = vmatpush1.msra.mxu0 0.0
  %2218 = vmatprep.subr.mxu0 0.0
  %2219 = vmatpush1.msra.mxu0 0.0
  %2220 = vmatprep.subr.mxu0 %v1938
  %2221 = vmatpush1.msra.mxu0 %v1935
  %2222 = vmatprep.subr.mxu0 %v1821
  %2223 = vmatpush1.msra.mxu0 %v1820
  %2224 = vmatprep.subr.mxu0 %v1805
  %2225 = vmatpush1.msra.mxu0 %v1804
  %2226 = vmatprep.subr.mxu0 %v1789
  %2227 = vmatpush1.msra.mxu0 %v1788
  %2228 = vmatprep.subr.mxu0 0.0
  %2229 = vmatpush2.msra.mxu0 0.0
  %2230 = vmatprep.subr.mxu0 0.0
  %2231 = vmatpush2.msra.mxu0 0.0
  %2232 = vmatprep.subr.mxu0 0.0
  %2233 = vmatpush2.msra.mxu0 0.0
  %2234 = vmatprep.subr.mxu0 0.0
  %2235 = vmatpush2.msra.mxu0 0.0
  %2236 = vmatprep.subr.mxu0 0.0
  %2237 = vmatpush2.msra.mxu0 0.0
  %2238 = vmatprep.subr.mxu0 0.0
  %2239 = vmatpush2.msra.mxu0 0.0
  %2240 = vmatprep.subr.mxu0 0.0
  %2241 = vmatpush2.msra.mxu0 0.0
  %2242 = vmatprep.subr.mxu0 0.0
  %2243 = vmatpush2.msra.mxu0 0.0
  %2244 = vmatprep.subr.mxu0 0.0
  %2245 = vmatpush2.msra.mxu0 0.0
  %2246 = vmatprep.subr.mxu0 0.0
  %2247 = vmatpush2.msra.mxu0 0.0
  %2248 = vmatprep.subr.mxu0 0.0
  %2249 = vmatpush2.msra.mxu0 0.0
  %2250 = vmatprep.subr.mxu0 0.0
  %2251 = vmatpush2.msra.mxu0 0.0
  %2252 = vmatprep.subr.mxu0 0.0
  %2253 = vmatpush2.msra.mxu0 0.0
  %2254 = vmatprep.subr.mxu0 0.0
  %2255 = vmatpush2.msra.mxu0 0.0
  %2256 = vmatprep.subr.mxu0 0.0
  %2257 = vmatpush2.msra.mxu0 0.0
  %2258 = vmatprep.subr.mxu0 0.0
  %2259 = vmatpush2.msra.mxu0 0.0
  %2260 = vmatprep.mubr.f32.mxu0 0.0
  %2261 = vmatmul.mubr.f32.gmra.mxu0 %v1898
  %v2262 = vpop.f32.mrf.mxu0
  %v2263 = vadd.f32 %v1859, %v2262
  %v2264 = vpop.f32.mrf.mxu0
  %v2265 = vadd.f32 %v1859, %v2264
  %2266 = vmatprep.mubr.f32.mxu0 0.0
  %2267 = vmatmul.mubr.f32.gmra.mxu0 %v1901
  %v2268 = vpop.f32.mrf.mxu0
  %v2269 = vadd.f32 %v1864, %v2268
  %v2270 = vpop.f32.mrf.mxu0
  %v2271 = vadd.f32 %v1864, %v2270
  %2272 = vmatprep.mubr.f32.mxu0 0.0
  %2273 = vmatmul.mubr.f32.gmra.mxu0 %v1904
  %v2274 = vpop.f32.mrf.mxu0
  %v2275 = vadd.f32 %v1869, %v2274
  %v2276 = vpop.f32.mrf.mxu0
  %v2277 = vadd.f32 %v1869, %v2276
  %2278 = vmatprep.mubr.f32.mxu0 0.0
  %2279 = vmatmul.mubr.f32.gmra.mxu0 %v1907
  %v2280 = vpop.f32.mrf.mxu0
  %v2281 = vadd.f32 %v1874, %v2280
  %v2282 = vpop.f32.mrf.mxu0
  %v2283 = vadd.f32 %v1874, %v2282
  %2284 = vmatprep.mubr.f32.mxu0 0.0
  %2285 = vmatmul.mubr.f32.gmra.mxu0 %v1910
  %v2286 = vpop.f32.mrf.mxu0
  %v2287 = vadd.f32 %v1879, %v2286
  %v2288 = vpop.f32.mrf.mxu0
  %v2289 = vadd.f32 %v1879, %v2288
  %2290 = vmatprep.mubr.f32.mxu0 0.0
  %2291 = vmatmul.mubr.f32.gmra.mxu0 %v1913
  %v2292 = vpop.f32.mrf.mxu0
  %v2293 = vadd.f32 %v1884, %v2292
  %v2294 = vpop.f32.mrf.mxu0
  %v2295 = vadd.f32 %v1884, %v2294
  %2296 = vmatprep.mubr.f32.mxu0 0.0
  %2297 = vmatmul.mubr.f32.gmra.mxu0 %v1916
  %v2298 = vpop.f32.mrf.mxu0
  %v2299 = vadd.f32 %v1889, %v2298
  %v2300 = vpop.f32.mrf.mxu0
  %v2301 = vadd.f32 %v1889, %v2300
  %2302 = vmatprep.mubr.f32.mxu0 0.0
  %2303 = vmatmul.mubr.f32.gmra.mxu0 %v1919
  %v2304 = vpop.f32.mrf.mxu0
  %v2305 = vadd.f32 %v1894, %v2304
  %v2306 = vpop.f32.mrf.mxu0
  %v2307 = vadd.f32 %v1894, %v2306
  %2308 = vdwg.mxu0
  %2309 = vmatprep.subr.mxu0 0.0
  %2310 = vmatpush1.msra.mxu0 0.0
  %2311 = vmatprep.subr.mxu0 0.0
  %2312 = vmatpush1.msra.mxu0 0.0
  %2313 = vmatprep.subr.mxu0 0.0
  %2314 = vmatpush1.msra.mxu0 0.0
  %2315 = vmatprep.subr.mxu0 0.0
  %2316 = vmatpush1.msra.mxu0 0.0
  %2317 = vmatprep.subr.mxu0 0.0
  %2318 = vmatpush1.msra.mxu0 0.0
  %2319 = vmatprep.subr.mxu0 0.0
  %2320 = vmatpush1.msra.mxu0 0.0
  %2321 = vmatprep.subr.mxu0 0.0
  %2322 = vmatpush1.msra.mxu0 0.0
  %2323 = vmatprep.subr.mxu0 0.0
  %2324 = vmatpush1.msra.mxu0 0.0
  %2325 = vmatprep.subr.mxu0 0.0
  %2326 = vmatpush1.msra.mxu0 0.0
  %2327 = vmatprep.subr.mxu0 0.0
  %2328 = vmatpush1.msra.mxu0 0.0
  %2329 = vmatprep.subr.mxu0 0.0
  %2330 = vmatpush1.msra.mxu0 0.0
  %2331 = vmatprep.subr.mxu0 0.0
  %2332 = vmatpush1.msra.mxu0 0.0
  %2333 = vmatprep.subr.mxu0 %v1944
  %2334 = vmatpush1.msra.mxu0 %v1941
  %2335 = vmatprep.subr.mxu0 %v1823
  %2336 = vmatpush1.msra.mxu0 %v1822
  %2337 = vmatprep.subr.mxu0 %v1807
  %2338 = vmatpush1.msra.mxu0 %v1806
  %2339 = vmatprep.subr.mxu0 %v1791
  %2340 = vmatpush1.msra.mxu0 %v1790
  %2341 = vmatprep.subr.mxu0 0.0
  %2342 = vmatpush2.msra.mxu0 0.0
  %2343 = vmatprep.subr.mxu0 0.0
  %2344 = vmatpush2.msra.mxu0 0.0
  %2345 = vmatprep.subr.mxu0 0.0
  %2346 = vmatpush2.msra.mxu0 0.0
  %2347 = vmatprep.subr.mxu0 0.0
  %2348 = vmatpush2.msra.mxu0 0.0
  %2349 = vmatprep.subr.mxu0 0.0
  %2350 = vmatpush2.msra.mxu0 0.0
  %2351 = vmatprep.subr.mxu0 0.0
  %2352 = vmatpush2.msra.mxu0 0.0
  %2353 = vmatprep.subr.mxu0 0.0
  %2354 = vmatpush2.msra.mxu0 0.0
  %2355 = vmatprep.subr.mxu0 0.0
  %2356 = vmatpush2.msra.mxu0 0.0
  %2357 = vmatprep.subr.mxu0 0.0
  %2358 = vmatpush2.msra.mxu0 0.0
  %2359 = vmatprep.subr.mxu0 0.0
  %2360 = vmatpush2.msra.mxu0 0.0
  %2361 = vmatprep.subr.mxu0 0.0
  %2362 = vmatpush2.msra.mxu0 0.0
  %2363 = vmatprep.subr.mxu0 0.0
  %2364 = vmatpush2.msra.mxu0 0.0
  %2365 = vmatprep.subr.mxu0 0.0
  %2366 = vmatpush2.msra.mxu0 0.0
  %2367 = vmatprep.subr.mxu0 0.0
  %2368 = vmatpush2.msra.mxu0 0.0
  %2369 = vmatprep.subr.mxu0 0.0
  %2370 = vmatpush2.msra.mxu0 0.0
  %2371 = vmatprep.subr.mxu0 0.0
  %2372 = vmatpush2.msra.mxu0 0.0
  %2373 = vmatprep.mubr.f32.mxu0 0.0
  %2374 = vmatmul.mubr.f32.gmra.mxu0 %v1898
  %v2375 = vpop.f32.mrf.mxu0
  %v2376 = vadd.f32 %v1859, %v2375
  %v2377 = vpop.f32.mrf.mxu0
  %v2378 = vadd.f32 %v1859, %v2377
  %2379 = vmatprep.mubr.f32.mxu0 0.0
  %2380 = vmatmul.mubr.f32.gmra.mxu0 %v1901
  %v2381 = vpop.f32.mrf.mxu0
  %v2382 = vadd.f32 %v1864, %v2381
  %v2383 = vpop.f32.mrf.mxu0
  %v2384 = vadd.f32 %v1864, %v2383
  %2385 = vmatprep.mubr.f32.mxu0 0.0
  %2386 = vmatmul.mubr.f32.gmra.mxu0 %v1904
  %v2387 = vpop.f32.mrf.mxu0
  %v2388 = vadd.f32 %v1869, %v2387
  %v2389 = vpop.f32.mrf.mxu0
  %v2390 = vadd.f32 %v1869, %v2389
  %2391 = vmatprep.mubr.f32.mxu0 0.0
  %2392 = vmatmul.mubr.f32.gmra.mxu0 %v1907
  %v2393 = vpop.f32.mrf.mxu0
  %v2394 = vadd.f32 %v1874, %v2393
  %v2395 = vpop.f32.mrf.mxu0
  %v2396 = vadd.f32 %v1874, %v2395
  %2397 = vmatprep.mubr.f32.mxu0 0.0
  %2398 = vmatmul.mubr.f32.gmra.mxu0 %v1910
  %v2399 = vpop.f32.mrf.mxu0
  %v2400 = vadd.f32 %v1879, %v2399
  %v2401 = vpop.f32.mrf.mxu0
  %v2402 = vadd.f32 %v1879, %v2401
  %2403 = vmatprep.mubr.f32.mxu0 0.0
  %2404 = vmatmul.mubr.f32.gmra.mxu0 %v1913
  %v2405 = vpop.f32.mrf.mxu0
  %v2406 = vadd.f32 %v1884, %v2405
  %v2407 = vpop.f32.mrf.mxu0
  %v2408 = vadd.f32 %v1884, %v2407
  %2409 = vmatprep.mubr.f32.mxu0 0.0
  %2410 = vmatmul.mubr.f32.gmra.mxu0 %v1916
  %v2411 = vpop.f32.mrf.mxu0
  %v2412 = vadd.f32 %v1889, %v2411
  %v2413 = vpop.f32.mrf.mxu0
  %v2414 = vadd.f32 %v1889, %v2413
  %2415 = vmatprep.mubr.f32.mxu0 0.0
  %2416 = vmatmul.mubr.f32.gmra.mxu0 %v1919
  %v2417 = vpop.f32.mrf.mxu0
  %v2418 = vadd.f32 %v1894, %v2417
  %v2419 = vpop.f32.mrf.mxu0
  %v2420 = vadd.f32 %v1894, %v2419
  %2421 = vdwg.mxu0
  %2422 = vmatprep.subr.mxu0 0.0
  %2423 = vmatpush1.msra.mxu0 0.0
  %2424 = vmatprep.subr.mxu0 0.0
  %2425 = vmatpush1.msra.mxu0 0.0
  %2426 = vmatprep.subr.mxu0 0.0
  %2427 = vmatpush1.msra.mxu0 0.0
  %2428 = vmatprep.subr.mxu0 0.0
  %2429 = vmatpush1.msra.mxu0 0.0
  %2430 = vmatprep.subr.mxu0 0.0
  %2431 = vmatpush1.msra.mxu0 0.0
  %2432 = vmatprep.subr.mxu0 0.0
  %2433 = vmatpush1.msra.mxu0 0.0
  %2434 = vmatprep.subr.mxu0 0.0
  %2435 = vmatpush1.msra.mxu0 0.0
  %2436 = vmatprep.subr.mxu0 0.0
  %2437 = vmatpush1.msra.mxu0 0.0
  %2438 = vmatprep.subr.mxu0 0.0
  %2439 = vmatpush1.msra.mxu0 0.0
  %2440 = vmatprep.subr.mxu0 0.0
  %2441 = vmatpush1.msra.mxu0 0.0
  %2442 = vmatprep.subr.mxu0 0.0
  %2443 = vmatpush1.msra.mxu0 0.0
  %2444 = vmatprep.subr.mxu0 0.0
  %2445 = vmatpush1.msra.mxu0 0.0
  %2446 = vmatprep.subr.mxu0 %v1950
  %2447 = vmatpush1.msra.mxu0 %v1947
  %2448 = vmatprep.subr.mxu0 %v1825
  %2449 = vmatpush1.msra.mxu0 %v1824
  %2450 = vmatprep.subr.mxu0 %v1809
  %2451 = vmatpush1.msra.mxu0 %v1808
  %2452 = vmatprep.subr.mxu0 %v1793
  %2453 = vmatpush1.msra.mxu0 %v1792
  %2454 = vmatprep.subr.mxu0 0.0
  %2455 = vmatpush2.msra.mxu0 0.0
  %2456 = vmatprep.subr.mxu0 0.0
  %2457 = vmatpush2.msra.mxu0 0.0
  %2458 = vmatprep.subr.mxu0 0.0
  %2459 = vmatpush2.msra.mxu0 0.0
  %2460 = vmatprep.subr.mxu0 0.0
  %2461 = vmatpush2.msra.mxu0 0.0
  %2462 = vmatprep.subr.mxu0 0.0
  %2463 = vmatpush2.msra.mxu0 0.0
  %2464 = vmatprep.subr.mxu0 0.0
  %2465 = vmatpush2.msra.mxu0 0.0
  %2466 = vmatprep.subr.mxu0 0.0
  %2467 = vmatpush2.msra.mxu0 0.0
  %2468 = vmatprep.subr.mxu0 0.0
  %2469 = vmatpush2.msra.mxu0 0.0
  %2470 = vmatprep.subr.mxu0 0.0
  %2471 = vmatpush2.msra.mxu0 0.0
  %2472 = vmatprep.subr.mxu0 0.0
  %2473 = vmatpush2.msra.mxu0 0.0
  %2474 = vmatprep.subr.mxu0 0.0
  %2475 = vmatpush2.msra.mxu0 0.0
  %2476 = vmatprep.subr.mxu0 0.0
  %2477 = vmatpush2.msra.mxu0 0.0
  %2478 = vmatprep.subr.mxu0 0.0
  %2479 = vmatpush2.msra.mxu0 0.0
  %2480 = vmatprep.subr.mxu0 0.0
  %2481 = vmatpush2.msra.mxu0 0.0
  %2482 = vmatprep.subr.mxu0 0.0
  %2483 = vmatpush2.msra.mxu0 0.0
  %2484 = vmatprep.subr.mxu0 0.0
  %2485 = vmatpush2.msra.mxu0 0.0
  %2486 = vmatprep.mubr.f32.mxu0 0.0
  %2487 = vmatmul.mubr.f32.gmra.mxu0 %v1898
  %v2488 = vpop.f32.mrf.mxu0
  %v2489 = vadd.f32 %v1859, %v2488
  %v2490 = vpop.f32.mrf.mxu0
  %v2491 = vadd.f32 %v1859, %v2490
  %2492 = vmatprep.mubr.f32.mxu0 0.0
  %2493 = vmatmul.mubr.f32.gmra.mxu0 %v1901
  %v2494 = vpop.f32.mrf.mxu0
  %v2495 = vadd.f32 %v1864, %v2494
  %v2496 = vpop.f32.mrf.mxu0
  %v2497 = vadd.f32 %v1864, %v2496
  %2498 = vmatprep.mubr.f32.mxu0 0.0
  %2499 = vmatmul.mubr.f32.gmra.mxu0 %v1904
  %v2500 = vpop.f32.mrf.mxu0
  %v2501 = vadd.f32 %v1869, %v2500
  %v2502 = vpop.f32.mrf.mxu0
  %v2503 = vadd.f32 %v1869, %v2502
  %2504 = vmatprep.mubr.f32.mxu0 0.0
  %2505 = vmatmul.mubr.f32.gmra.mxu0 %v1907
  %v2506 = vpop.f32.mrf.mxu0
  %v2507 = vadd.f32 %v1874, %v2506
  %v2508 = vpop.f32.mrf.mxu0
  %v2509 = vadd.f32 %v1874, %v2508
  %2510 = vmatprep.mubr.f32.mxu0 0.0
  %2511 = vmatmul.mubr.f32.gmra.mxu0 %v1910
  %v2512 = vpop.f32.mrf.mxu0
  %v2513 = vadd.f32 %v1879, %v2512
  %v2514 = vpop.f32.mrf.mxu0
  %v2515 = vadd.f32 %v1879, %v2514
  %2516 = vmatprep.mubr.f32.mxu0 0.0
  %2517 = vmatmul.mubr.f32.gmra.mxu0 %v1913
  %v2518 = vpop.f32.mrf.mxu0
  %v2519 = vadd.f32 %v1884, %v2518
  %v2520 = vpop.f32.mrf.mxu0
  %v2521 = vadd.f32 %v1884, %v2520
  %2522 = vmatprep.mubr.f32.mxu0 0.0
  %2523 = vmatmul.mubr.f32.gmra.mxu0 %v1916
  %v2524 = vpop.f32.mrf.mxu0
  %v2525 = vadd.f32 %v1889, %v2524
  %v2526 = vpop.f32.mrf.mxu0
  %v2527 = vadd.f32 %v1889, %v2526
  %2528 = vmatprep.mubr.f32.mxu0 0.0
  %2529 = vmatmul.mubr.f32.gmra.mxu0 %v1919
  %v2530 = vpop.f32.mrf.mxu0
  %v2531 = vadd.f32 %v1894, %v2530
  %v2532 = vpop.f32.mrf.mxu0
  %v2533 = vadd.f32 %v1894, %v2532
  %2534 = vdwg.mxu0
  %2535 = vmatprep.subr.mxu0 0.0
  %2536 = vmatpush1.msra.mxu0 0.0
  %2537 = vmatprep.subr.mxu0 0.0
  %2538 = vmatpush1.msra.mxu0 0.0
  %2539 = vmatprep.subr.mxu0 0.0
  %2540 = vmatpush1.msra.mxu0 0.0
  %2541 = vmatprep.subr.mxu0 0.0
  %2542 = vmatpush1.msra.mxu0 0.0
  %2543 = vmatprep.subr.mxu0 0.0
  %2544 = vmatpush1.msra.mxu0 0.0
  %2545 = vmatprep.subr.mxu0 0.0
  %2546 = vmatpush1.msra.mxu0 0.0
  %2547 = vmatprep.subr.mxu0 0.0
  %2548 = vmatpush1.msra.mxu0 0.0
  %2549 = vmatprep.subr.mxu0 0.0
  %2550 = vmatpush1.msra.mxu0 0.0
  %2551 = vmatprep.subr.mxu0 0.0
  %2552 = vmatpush1.msra.mxu0 0.0
  %2553 = vmatprep.subr.mxu0 0.0
  %2554 = vmatpush1.msra.mxu0 0.0
  %2555 = vmatprep.subr.mxu0 0.0
  %2556 = vmatpush1.msra.mxu0 0.0
  %2557 = vmatprep.subr.mxu0 0.0
  %2558 = vmatpush1.msra.mxu0 0.0
  %2559 = vmatprep.subr.mxu0 %v1956
  %2560 = vmatpush1.msra.mxu0 %v1953
  %2561 = vmatprep.subr.mxu0 %v1827
  %2562 = vmatpush1.msra.mxu0 %v1826
  %2563 = vmatprep.subr.mxu0 %v1811
  %2564 = vmatpush1.msra.mxu0 %v1810
  %2565 = vmatprep.subr.mxu0 %v1795
  %2566 = vmatpush1.msra.mxu0 %v1794
  %2567 = vmatprep.subr.mxu0 0.0
  %2568 = vmatpush2.msra.mxu0 0.0
  %2569 = vmatprep.subr.mxu0 0.0
  %2570 = vmatpush2.msra.mxu0 0.0
  %2571 = vmatprep.subr.mxu0 0.0
  %2572 = vmatpush2.msra.mxu0 0.0
  %2573 = vmatprep.subr.mxu0 0.0
  %2574 = vmatpush2.msra.mxu0 0.0
  %2575 = vmatprep.subr.mxu0 0.0
  %2576 = vmatpush2.msra.mxu0 0.0
  %2577 = vmatprep.subr.mxu0 0.0
  %2578 = vmatpush2.msra.mxu0 0.0
  %2579 = vmatprep.subr.mxu0 0.0
  %2580 = vmatpush2.msra.mxu0 0.0
  %2581 = vmatprep.subr.mxu0 0.0
  %2582 = vmatpush2.msra.mxu0 0.0
  %2583 = vmatprep.subr.mxu0 0.0
  %2584 = vmatpush2.msra.mxu0 0.0
  %2585 = vmatprep.subr.mxu0 0.0
  %2586 = vmatpush2.msra.mxu0 0.0
  %2587 = vmatprep.subr.mxu0 0.0
  %2588 = vmatpush2.msra.mxu0 0.0
  %2589 = vmatprep.subr.mxu0 0.0
  %2590 = vmatpush2.msra.mxu0 0.0
  %2591 = vmatprep.subr.mxu0 0.0
  %2592 = vmatpush2.msra.mxu0 0.0
  %2593 = vmatprep.subr.mxu0 0.0
  %2594 = vmatpush2.msra.mxu0 0.0
  %2595 = vmatprep.subr.mxu0 0.0
  %2596 = vmatpush2.msra.mxu0 0.0
  %2597 = vmatprep.subr.mxu0 0.0
  %2598 = vmatpush2.msra.mxu0 0.0
  %2599 = vmatprep.mubr.f32.mxu0 0.0
  %2600 = vmatmul.mubr.f32.gmra.mxu0 %v1898
  %v2601 = vpop.f32.mrf.mxu0
  %v2602 = vadd.f32 %v1859, %v2601
  %v2603 = vpop.f32.mrf.mxu0
  %v2604 = vadd.f32 %v1859, %v2603
  %2605 = vmatprep.mubr.f32.mxu0 0.0
  %2606 = vmatmul.mubr.f32.gmra.mxu0 %v1901
  %v2607 = vpop.f32.mrf.mxu0
  %v2608 = vadd.f32 %v1864, %v2607
  %v2609 = vpop.f32.mrf.mxu0
  %v2610 = vadd.f32 %v1864, %v2609
  %2611 = vmatprep.mubr.f32.mxu0 0.0
  %2612 = vmatmul.mubr.f32.gmra.mxu0 %v1904
  %v2613 = vpop.f32.mrf.mxu0
  %v2614 = vadd.f32 %v1869, %v2613
  %v2615 = vpop.f32.mrf.mxu0
  %v2616 = vadd.f32 %v1869, %v2615
  %2617 = vmatprep.mubr.f32.mxu0 0.0
  %2618 = vmatmul.mubr.f32.gmra.mxu0 %v1907
  %v2619 = vpop.f32.mrf.mxu0
  %v2620 = vadd.f32 %v1874, %v2619
  %v2621 = vpop.f32.mrf.mxu0
  %v2622 = vadd.f32 %v1874, %v2621
  %2623 = vmatprep.mubr.f32.mxu0 0.0
  %2624 = vmatmul.mubr.f32.gmra.mxu0 %v1910
  %v2625 = vpop.f32.mrf.mxu0
  %v2626 = vadd.f32 %v1879, %v2625
  %v2627 = vpop.f32.mrf.mxu0
  %v2628 = vadd.f32 %v1879, %v2627
  %2629 = vmatprep.mubr.f32.mxu0 0.0
  %2630 = vmatmul.mubr.f32.gmra.mxu0 %v1913
  %v2631 = vpop.f32.mrf.mxu0
  %v2632 = vadd.f32 %v1884, %v2631
  %v2633 = vpop.f32.mrf.mxu0
  %v2634 = vadd.f32 %v1884, %v2633
  %2635 = vmatprep.mubr.f32.mxu0 0.0
  %2636 = vmatmul.mubr.f32.gmra.mxu0 %v1916
  %v2637 = vpop.f32.mrf.mxu0
  %v2638 = vadd.f32 %v1889, %v2637
  %v2639 = vpop.f32.mrf.mxu0
  %v2640 = vadd.f32 %v1889, %v2639
  %2641 = vmatprep.mubr.f32.mxu0 0.0
  %2642 = vmatmul.mubr.f32.gmra.mxu0 %v1919
  %v2643 = vpop.f32.mrf.mxu0
  %v2644 = vadd.f32 %v1894, %v2643
  %v2645 = vpop.f32.mrf.mxu0
  %v2646 = vadd.f32 %v1894, %v2645
  %2647 = vdwg.mxu0
  %2648 = vmatprep.subr.mxu0 0.0
  %2649 = vmatpush1.msra.mxu0 0.0
  %2650 = vmatprep.subr.mxu0 0.0
  %2651 = vmatpush1.msra.mxu0 0.0
  %2652 = vmatprep.subr.mxu0 0.0
  %2653 = vmatpush1.msra.mxu0 0.0
  %2654 = vmatprep.subr.mxu0 0.0
  %2655 = vmatpush1.msra.mxu0 0.0
  %2656 = vmatprep.subr.mxu0 0.0
  %2657 = vmatpush1.msra.mxu0 0.0
  %2658 = vmatprep.subr.mxu0 0.0
  %2659 = vmatpush1.msra.mxu0 0.0
  %2660 = vmatprep.subr.mxu0 0.0
  %2661 = vmatpush1.msra.mxu0 0.0
  %2662 = vmatprep.subr.mxu0 0.0
  %2663 = vmatpush1.msra.mxu0 0.0
  %2664 = vmatprep.subr.mxu0 0.0
  %2665 = vmatpush1.msra.mxu0 0.0
  %2666 = vmatprep.subr.mxu0 0.0
  %2667 = vmatpush1.msra.mxu0 0.0
  %2668 = vmatprep.subr.mxu0 0.0
  %2669 = vmatpush1.msra.mxu0 0.0
  %2670 = vmatprep.subr.mxu0 0.0
  %2671 = vmatpush1.msra.mxu0 0.0
  %2672 = vmatprep.subr.mxu0 %v1962
  %2673 = vmatpush1.msra.mxu0 %v1959
  %2674 = vmatprep.subr.mxu0 %v1829
  %2675 = vmatpush1.msra.mxu0 %v1828
  %2676 = vmatprep.subr.mxu0 %v1813
  %2677 = vmatpush1.msra.mxu0 %v1812
  %2678 = vmatprep.subr.mxu0 %v1797
  %2679 = vmatpush1.msra.mxu0 %v1796
  %2680 = vmatprep.subr.mxu0 0.0
  %2681 = vmatpush2.msra.mxu0 0.0
  %2682 = vmatprep.subr.mxu0 0.0
  %2683 = vmatpush2.msra.mxu0 0.0
  %2684 = vmatprep.subr.mxu0 0.0
  %2685 = vmatpush2.msra.mxu0 0.0
  %2686 = vmatprep.subr.mxu0 0.0
  %2687 = vmatpush2.msra.mxu0 0.0
  %2688 = vmatprep.subr.mxu0 0.0
  %2689 = vmatpush2.msra.mxu0 0.0
  %2690 = vmatprep.subr.mxu0 0.0
  %2691 = vmatpush2.msra.mxu0 0.0
  %2692 = vmatprep.subr.mxu0 0.0
  %2693 = vmatpush2.msra.mxu0 0.0
  %2694 = vmatprep.subr.mxu0 0.0
  %2695 = vmatpush2.msra.mxu0 0.0
  %2696 = vmatprep.subr.mxu0 0.0
  %2697 = vmatpush2.msra.mxu0 0.0
  %2698 = vmatprep.subr.mxu0 0.0
  %2699 = vmatpush2.msra.mxu0 0.0
  %2700 = vmatprep.subr.mxu0 0.0
  %2701 = vmatpush2.msra.mxu0 0.0
  %2702 = vmatprep.subr.mxu0 0.0
  %2703 = vmatpush2.msra.mxu0 0.0
  %2704 = vmatprep.subr.mxu0 0.0
  %2705 = vmatpush2.msra.mxu0 0.0
  %2706 = vmatprep.subr.mxu0 0.0
  %2707 = vmatpush2.msra.mxu0 0.0
  %2708 = vmatprep.subr.mxu0 0.0
  %2709 = vmatpush2.msra.mxu0 0.0
  %2710 = vmatprep.subr.mxu0 0.0
  %2711 = vmatpush2.msra.mxu0 0.0
  %2712 = vmatprep.mubr.f32.mxu0 0.0
  %2713 = vmatmul.mubr.f32.gmra.mxu0 %v1898
  %v2714 = vpop.f32.mrf.mxu0
  %v2715 = vadd.f32 %v1859, %v2714
  %v2716 = vpop.f32.mrf.mxu0
  %v2717 = vadd.f32 %v1859, %v2716
  %2718 = vmatprep.mubr.f32.mxu0 0.0
  %2719 = vmatmul.mubr.f32.gmra.mxu0 %v1901
  %v2720 = vpop.f32.mrf.mxu0
  %v2721 = vadd.f32 %v1864, %v2720
  %v2722 = vpop.f32.mrf.mxu0
  %v2723 = vadd.f32 %v1864, %v2722
  %2724 = vmatprep.mubr.f32.mxu0 0.0
  %2725 = vmatmul.mubr.f32.gmra.mxu0 %v1904
  %v2726 = vpop.f32.mrf.mxu0
  %v2727 = vadd.f32 %v1869, %v2726
  %v2728 = vpop.f32.mrf.mxu0
  %v2729 = vadd.f32 %v1869, %v2728
  %2730 = vmatprep.mubr.f32.mxu0 0.0
  %2731 = vmatmul.mubr.f32.gmra.mxu0 %v1907
  %v2732 = vpop.f32.mrf.mxu0
  %v2733 = vadd.f32 %v1874, %v2732
  %v2734 = vpop.f32.mrf.mxu0
  %v2735 = vadd.f32 %v1874, %v2734
  %2736 = vmatprep.mubr.f32.mxu0 0.0
  %2737 = vmatmul.mubr.f32.gmra.mxu0 %v1910
  %v2738 = vpop.f32.mrf.mxu0
  %v2739 = vadd.f32 %v1879, %v2738
  %v2740 = vpop.f32.mrf.mxu0
  %v2741 = vadd.f32 %v1879, %v2740
  %2742 = vmatprep.mubr.f32.mxu0 0.0
  %2743 = vmatmul.mubr.f32.gmra.mxu0 %v1913
  %v2744 = vpop.f32.mrf.mxu0
  %v2745 = vadd.f32 %v1884, %v2744
  %v2746 = vpop.f32.mrf.mxu0
  %v2747 = vadd.f32 %v1884, %v2746
  %2748 = vmatprep.mubr.f32.mxu0 0.0
  %2749 = vmatmul.mubr.f32.gmra.mxu0 %v1916
  %v2750 = vpop.f32.mrf.mxu0
  %v2751 = vadd.f32 %v1889, %v2750
  %v2752 = vpop.f32.mrf.mxu0
  %v2753 = vadd.f32 %v1889, %v2752
  %2754 = vmatprep.mubr.f32.mxu0 0.0
  %2755 = vmatmul.mubr.f32.gmra.mxu0 %v1919
  %v2756 = vpop.f32.mrf.mxu0
  %v2757 = vadd.f32 %v1894, %v2756
  %v2758 = vpop.f32.mrf.mxu0
  %v2759 = vadd.f32 %v1894, %v2758
  %2760 = vdwg.mxu0
  %2761 = vmatprep.subr.mxu0 0.0
  %2762 = vmatpush1.msra.mxu0 0.0
  %2763 = vmatprep.subr.mxu0 0.0
  %2764 = vmatpush1.msra.mxu0 0.0
  %2765 = vmatprep.subr.mxu0 0.0
  %2766 = vmatpush1.msra.mxu0 0.0
  %2767 = vmatprep.subr.mxu0 0.0
  %2768 = vmatpush1.msra.mxu0 0.0
  %2769 = vmatprep.subr.mxu0 0.0
  %2770 = vmatpush1.msra.mxu0 0.0
  %2771 = vmatprep.subr.mxu0 0.0
  %2772 = vmatpush1.msra.mxu0 0.0
  %2773 = vmatprep.subr.mxu0 0.0
  %2774 = vmatpush1.msra.mxu0 0.0
  %2775 = vmatprep.subr.mxu0 0.0
  %2776 = vmatpush1.msra.mxu0 0.0
  %2777 = vmatprep.subr.mxu0 0.0
  %2778 = vmatpush1.msra.mxu0 0.0
  %2779 = vmatprep.subr.mxu0 0.0
  %2780 = vmatpush1.msra.mxu0 0.0
  %2781 = vmatprep.subr.mxu0 0.0
  %2782 = vmatpush1.msra.mxu0 0.0
  %2783 = vmatprep.subr.mxu0 0.0
  %2784 = vmatpush1.msra.mxu0 0.0
  %2785 = vmatprep.subr.mxu0 %v1968
  %2786 = vmatpush1.msra.mxu0 %v1965
  %2787 = vmatprep.subr.mxu0 %v1831
  %2788 = vmatpush1.msra.mxu0 %v1830
  %2789 = vmatprep.subr.mxu0 %v1815
  %2790 = vmatpush1.msra.mxu0 %v1814
  %2791 = vmatprep.subr.mxu0 %v1799
  %2792 = vmatpush1.msra.mxu0 %v1798
  %2793 = vmatprep.subr.mxu0 0.0
  %2794 = vmatpush2.msra.mxu0 0.0
  %2795 = vmatprep.subr.mxu0 0.0
  %2796 = vmatpush2.msra.mxu0 0.0
  %2797 = vmatprep.subr.mxu0 0.0
  %2798 = vmatpush2.msra.mxu0 0.0
  %2799 = vmatprep.subr.mxu0 0.0
  %2800 = vmatpush2.msra.mxu0 0.0
  %2801 = vmatprep.subr.mxu0 0.0
  %2802 = vmatpush2.msra.mxu0 0.0
  %2803 = vmatprep.subr.mxu0 0.0
  %2804 = vmatpush2.msra.mxu0 0.0
  %2805 = vmatprep.subr.mxu0 0.0
  %2806 = vmatpush2.msra.mxu0 0.0
  %2807 = vmatprep.subr.mxu0 0.0
  %2808 = vmatpush2.msra.mxu0 0.0
  %2809 = vmatprep.subr.mxu0 0.0
  %2810 = vmatpush2.msra.mxu0 0.0
  %2811 = vmatprep.subr.mxu0 0.0
  %2812 = vmatpush2.msra.mxu0 0.0
  %2813 = vmatprep.subr.mxu0 0.0
  %2814 = vmatpush2.msra.mxu0 0.0
  %2815 = vmatprep.subr.mxu0 0.0
  %2816 = vmatpush2.msra.mxu0 0.0
  %2817 = vmatprep.subr.mxu0 0.0
  %2818 = vmatpush2.msra.mxu0 0.0
  %2819 = vmatprep.subr.mxu0 0.0
  %2820 = vmatpush2.msra.mxu0 0.0
  %2821 = vmatprep.subr.mxu0 0.0
  %2822 = vmatpush2.msra.mxu0 0.0
  %2823 = vmatprep.subr.mxu0 0.0
  %2824 = vmatpush2.msra.mxu0 0.0
  %2825 = vmatprep.mubr.f32.mxu0 0.0
  %2826 = vmatmul.mubr.f32.gmra.mxu0 %v1898
  %v2827 = vpop.f32.mrf.mxu0
  %v2828 = vadd.f32 %v1859, %v2827
  %v2829 = vpop.f32.mrf.mxu0
  %v2830 = vadd.f32 %v1859, %v2829
  %2831 = vmatprep.mubr.f32.mxu0 0.0
  %2832 = vmatmul.mubr.f32.gmra.mxu0 %v1901
  %v2833 = vpop.f32.mrf.mxu0
  %v2834 = vadd.f32 %v1864, %v2833
  %v2835 = vpop.f32.mrf.mxu0
  %v2836 = vadd.f32 %v1864, %v2835
  %2837 = vmatprep.mubr.f32.mxu0 0.0
  %2838 = vmatmul.mubr.f32.gmra.mxu0 %v1904
  %v2839 = vpop.f32.mrf.mxu0
  %v2840 = vadd.f32 %v1869, %v2839
  %v2841 = vpop.f32.mrf.mxu0
  %v2842 = vadd.f32 %v1869, %v2841
  %2843 = vmatprep.mubr.f32.mxu0 0.0
  %2844 = vmatmul.mubr.f32.gmra.mxu0 %v1907
  %v2845 = vpop.f32.mrf.mxu0
  %v2846 = vadd.f32 %v1874, %v2845
  %v2847 = vpop.f32.mrf.mxu0
  %v2848 = vadd.f32 %v1874, %v2847
  %2849 = vmatprep.mubr.f32.mxu0 0.0
  %2850 = vmatmul.mubr.f32.gmra.mxu0 %v1910
  %v2851 = vpop.f32.mrf.mxu0
  %v2852 = vadd.f32 %v1879, %v2851
  %v2853 = vpop.f32.mrf.mxu0
  %v2854 = vadd.f32 %v1879, %v2853
  %2855 = vmatprep.mubr.f32.mxu0 0.0
  %2856 = vmatmul.mubr.f32.gmra.mxu0 %v1913
  %v2857 = vpop.f32.mrf.mxu0
  %v2858 = vadd.f32 %v1884, %v2857
  %v2859 = vpop.f32.mrf.mxu0
  %v2860 = vadd.f32 %v1884, %v2859
  %2861 = vmatprep.mubr.f32.mxu0 0.0
  %2862 = vmatmul.mubr.f32.gmra.mxu0 %v1916
  %v2863 = vpop.f32.mrf.mxu0
  %v2864 = vadd.f32 %v1889, %v2863
  %v2865 = vpop.f32.mrf.mxu0
  %v2866 = vadd.f32 %v1889, %v2865
  %2867 = vmatprep.mubr.f32.mxu0 0.0
  %2868 = vmatmul.mubr.f32.gmra.mxu0 %v1919
  %v2869 = vpop.f32.mrf.mxu0
  %v2870 = vadd.f32 %v1894, %v2869
  %v2871 = vpop.f32.mrf.mxu0
  %v2872 = vadd.f32 %v1894, %v2871
  %2873 = vdwg.mxu0
  %v2874 = vmax.f32 %v2037, 0.0
  %v2875 = vmax.f32 %v2039, 0.0
  %v2876 = vmax.f32 %v2150, 0.0
  %v2877 = vmax.f32 %v2152, 0.0
  %v2878 = vmax.f32 %v2263, 0.0
  %v2879 = vmax.f32 %v2265, 0.0
  %v2880 = vmax.f32 %v2376, 0.0
  %v2881 = vmax.f32 %v2378, 0.0
  %v2882 = vmax.f32 %v2489, 0.0
  %v2883 = vmax.f32 %v2491, 0.0
  %v2884 = vmax.f32 %v2602, 0.0
  %v2885 = vmax.f32 %v2604, 0.0
  %v2886 = vmax.f32 %v2715, 0.0
  %v2887 = vmax.f32 %v2717, 0.0
  %v2888 = vmax.f32 %v2828, 0.0
  %v2889 = vmax.f32 %v2830, 0.0
  %v2890 = vmax.f32 %v2043, 0.0
  %v2891 = vmax.f32 %v2045, 0.0
  %v2892 = vmax.f32 %v2156, 0.0
  %v2893 = vmax.f32 %v2158, 0.0
  %v2894 = vmax.f32 %v2269, 0.0
  %v2895 = vmax.f32 %v2271, 0.0
  %v2896 = vmax.f32 %v2382, 0.0
  %v2897 = vmax.f32 %v2384, 0.0
  %v2898 = vmax.f32 %v2495, 0.0
  %v2899 = vmax.f32 %v2497, 0.0
  %v2900 = vmax.f32 %v2608, 0.0
  %v2901 = vmax.f32 %v2610, 0.0
  %v2902 = vmax.f32 %v2721, 0.0
  %v2903 = vmax.f32 %v2723, 0.0
  %v2904 = vmax.f32 %v2834, 0.0
  %v2905 = vmax.f32 %v2836, 0.0
  %v2906 = vmax.f32 %v2049, 0.0
  %v2907 = vmax.f32 %v2051, 0.0
  %v2908 = vmax.f32 %v2162, 0.0
  %v2909 = vmax.f32 %v2164, 0.0
  %v2910 = vmax.f32 %v2275, 0.0
  %v2911 = vmax.f32 %v2277, 0.0
  %v2912 = vmax.f32 %v2388, 0.0
  %v2913 = vmax.f32 %v2390, 0.0
  %v2914 = vmax.f32 %v2501, 0.0
  %v2915 = vmax.f32 %v2503, 0.0
  %v2916 = vmax.f32 %v2614, 0.0
  %v2917 = vmax.f32 %v2616, 0.0
  %v2918 = vmax.f32 %v2727, 0.0
  %v2919 = vmax.f32 %v2729, 0.0
  %v2920 = vmax.f32 %v2840, 0.0
  %v2921 = vmax.f32 %v2842, 0.0
  %v2922 = vmax.f32 %v2055, 0.0
  %v2923 = vmax.f32 %v2057, 0.0
  %v2924 = vmax.f32 %v2168, 0.0
  %v2925 = vmax.f32 %v2170, 0.0
  %v2926 = vmax.f32 %v2281, 0.0
  %v2927 = vmax.f32 %v2283, 0.0
  %v2928 = vmax.f32 %v2394, 0.0
  %v2929 = vmax.f32 %v2396, 0.0
  %v2930 = vmax.f32 %v2507, 0.0
  %v2931 = vmax.f32 %v2509, 0.0
  %v2932 = vmax.f32 %v2620, 0.0
  %v2933 = vmax.f32 %v2622, 0.0
  %v2934 = vmax.f32 %v2733, 0.0
  %v2935 = vmax.f32 %v2735, 0.0
  %v2936 = vmax.f32 %v2846, 0.0
  %v2937 = vmax.f32 %v2848, 0.0
  %v2938 = vmax.f32 %v2061, 0.0
  %v2939 = vmax.f32 %v2063, 0.0
  %v2940 = vmax.f32 %v2174, 0.0
  %v2941 = vmax.f32 %v2176, 0.0
  %v2942 = vmax.f32 %v2287, 0.0
  %v2943 = vmax.f32 %v2289, 0.0
  %v2944 = vmax.f32 %v2400, 0.0
  %v2945 = vmax.f32 %v2402, 0.0
  %v2946 = vmax.f32 %v2513, 0.0
  %v2947 = vmax.f32 %v2515, 0.0
  %v2948 = vmax.f32 %v2626, 0.0
  %v2949 = vmax.f32 %v2628, 0.0
  %v2950 = vmax.f32 %v2739, 0.0
  %v2951 = vmax.f32 %v2741, 0.0
  %v2952 = vmax.f32 %v2852, 0.0
  %v2953 = vmax.f32 %v2854, 0.0
  %v2954 = vmax.f32 %v2067, 0.0
  %v2955 = vmax.f32 %v2069, 0.0
  %v2956 = vmax.f32 %v2180, 0.0
  %v2957 = vmax.f32 %v2182, 0.0
  %v2958 = vmax.f32 %v2293, 0.0
  %v2959 = vmax.f32 %v2295, 0.0
  %v2960 = vmax.f32 %v2406, 0.0
  %v2961 = vmax.f32 %v2408, 0.0
  %v2962 = vmax.f32 %v2519, 0.0
  %v2963 = vmax.f32 %v2521, 0.0
  %v2964 = vmax.f32 %v2632, 0.0
  %v2965 = vmax.f32 %v2634, 0.0
  %v2966 = vmax.f32 %v2745, 0.0
  %v2967 = vmax.f32 %v2747, 0.0
  %v2968 = vmax.f32 %v2858, 0.0
  %v2969 = vmax.f32 %v2860, 0.0
  %v2970 = vmax.f32 %v2073, 0.0
  %v2971 = vmax.f32 %v2075, 0.0
  %v2972 = vmax.f32 %v2186, 0.0
  %v2973 = vmax.f32 %v2188, 0.0
  %v2974 = vmax.f32 %v2299, 0.0
  %v2975 = vmax.f32 %v2301, 0.0
  %v2976 = vmax.f32 %v2412, 0.0
  %v2977 = vmax.f32 %v2414, 0.0
  %v2978 = vmax.f32 %v2525, 0.0
  %v2979 = vmax.f32 %v2527, 0.0
  %v2980 = vmax.f32 %v2638, 0.0
  %v2981 = vmax.f32 %v2640, 0.0
  %v2982 = vmax.f32 %v2751, 0.0
  %v2983 = vmax.f32 %v2753, 0.0
  %v2984 = vmax.f32 %v2864, 0.0
  %v2985 = vmax.f32 %v2866, 0.0
  %v2986 = vmax.f32 %v2079, 0.0
  %v2987 = vmax.f32 %v2081, 0.0
  %v2988 = vmax.f32 %v2192, 0.0
  %v2989 = vmax.f32 %v2194, 0.0
  %v2990 = vmax.f32 %v2305, 0.0
  %v2991 = vmax.f32 %v2307, 0.0
  %v2992 = vmax.f32 %v2418, 0.0
  %v2993 = vmax.f32 %v2420, 0.0
  %v2994 = vmax.f32 %v2531, 0.0
  %v2995 = vmax.f32 %v2533, 0.0
  %v2996 = vmax.f32 %v2644, 0.0
  %v2997 = vmax.f32 %v2646, 0.0
  %v2998 = vmax.f32 %v2757, 0.0
  %v2999 = vmax.f32 %v2759, 0.0
  %v3000 = vmax.f32 %v2870, 0.0
  %v3001 = vmax.f32 %v2872, 0.0
  %v3002 = vcombine.low %v2874, %v2878
  %v3003 = vcombine.high %v2874, %v2878
  %v3005 = vunpack.c.l.s4 1983009808
  %v3006 = vunpack.c.0.s8 %v3005
  %v3007 = vlaneseq
  %v3008 = vshrl.u32 %v3007, 7
  %v3009 = vsub.s32 %v3006, %v3008
  %v3010 = vrot.slane %v3002, %v3009
  %v3012 = vunpack.c.l.s4 1983009808
  %v3013 = vunpack.c.0.s8 %v3012
  %v3014 = vlaneseq
  %v3015 = vshrl.u32 %v3014, 7
  %v3016 = vsub.s32 %v3013, %v3015
  %v3017 = vrot.slane %v3003, %v3016
  %v3018 = vcombine.low %v2876, %v2880
  %v3019 = vcombine.high %v2876, %v2880
  %v3021 = vunpack.c.l.s4 1983009808
  %v3022 = vunpack.c.0.s8 %v3021
  %v3023 = vlaneseq
  %v3024 = vshrl.u32 %v3023, 7
  %v3025 = vsub.s32 %v3022, %v3024
  %v3026 = vrot.slane %v3018, %v3025
  %v3028 = vunpack.c.l.s4 1983009808
  %v3029 = vunpack.c.0.s8 %v3028
  %v3030 = vlaneseq
  %v3031 = vshrl.u32 %v3030, 7
  %v3032 = vsub.s32 %v3029, %v3031
  %v3033 = vrot.slane %v3019, %v3032
  %v3034 = vcombine.low %v2882, %v2886
  %v3035 = vcombine.high %v2882, %v2886
  %v3037 = vunpack.c.l.s4 1983009808
  %v3038 = vunpack.c.0.s8 %v3037
  %v3039 = vlaneseq
  %v3040 = vshrl.u32 %v3039, 7
  %v3041 = vsub.s32 %v3038, %v3040
  %v3042 = vrot.slane %v3034, %v3041
  %v3044 = vunpack.c.l.s4 1983009808
  %v3045 = vunpack.c.0.s8 %v3044
  %v3046 = vlaneseq
  %v3047 = vshrl.u32 %v3046, 7
  %v3048 = vsub.s32 %v3045, %v3047
  %v3049 = vrot.slane %v3035, %v3048
  %v3050 = vcombine.low %v2884, %v2888
  %v3051 = vcombine.high %v2884, %v2888
  %v3053 = vunpack.c.l.s4 1983009808
  %v3054 = vunpack.c.0.s8 %v3053
  %v3055 = vlaneseq
  %v3056 = vshrl.u32 %v3055, 7
  %v3057 = vsub.s32 %v3054, %v3056
  %v3058 = vrot.slane %v3050, %v3057
  %v3060 = vunpack.c.l.s4 1983009808
  %v3061 = vunpack.c.0.s8 %v3060
  %v3062 = vlaneseq
  %v3063 = vshrl.u32 %v3062, 7
  %v3064 = vsub.s32 %v3061, %v3063
  %v3065 = vrot.slane %v3051, %v3064
  %v3066 = vcombine.low %v3010, %v3026
  %v3067 = vcombine.high %v3010, %v3026
  %v3069 = vunpack.c.l.s4 1934713408
  %v3070 = vunpack.c.0.s8 %v3069
  %v3071 = vlaneseq
  %v3072 = vshrl.u32 %v3071, 7
  %v3073 = vsub.s32 %v3070, %v3072
  %v3074 = vrot.slane %v3066, %v3073
  %v3076 = vunpack.c.l.s4 1934713408
  %v3077 = vunpack.c.0.s8 %v3076
  %v3078 = vlaneseq
  %v3079 = vshrl.u32 %v3078, 7
  %v3080 = vsub.s32 %v3077, %v3079
  %v3081 = vrot.slane %v3067, %v3080
  %v3082 = vcombine.low %v3017, %v3033
  %v3083 = vcombine.high %v3017, %v3033
  %v3085 = vunpack.c.l.s4 1934713408
  %v3086 = vunpack.c.0.s8 %v3085
  %v3087 = vlaneseq
  %v3088 = vshrl.u32 %v3087, 7
  %v3089 = vsub.s32 %v3086, %v3088
  %v3090 = vrot.slane %v3082, %v3089
  %v3092 = vunpack.c.l.s4 1934713408
  %v3093 = vunpack.c.0.s8 %v3092
  %v3094 = vlaneseq
  %v3095 = vshrl.u32 %v3094, 7
  %v3096 = vsub.s32 %v3093, %v3095
  %v3097 = vrot.slane %v3083, %v3096
  %v3098 = vcombine.low %v3042, %v3058
  %v3099 = vcombine.high %v3042, %v3058
  %v3101 = vunpack.c.l.s4 1934713408
  %v3102 = vunpack.c.0.s8 %v3101
  %v3103 = vlaneseq
  %v3104 = vshrl.u32 %v3103, 7
  %v3105 = vsub.s32 %v3102, %v3104
  %v3106 = vrot.slane %v3098, %v3105
  %v3108 = vunpack.c.l.s4 1934713408
  %v3109 = vunpack.c.0.s8 %v3108
  %v3110 = vlaneseq
  %v3111 = vshrl.u32 %v3110, 7
  %v3112 = vsub.s32 %v3109, %v3111
  %v3113 = vrot.slane %v3099, %v3112
  %v3114 = vcombine.low %v3049, %v3065
  %v3115 = vcombine.high %v3049, %v3065
  %v3117 = vunpack.c.l.s4 1934713408
  %v3118 = vunpack.c.0.s8 %v3117
  %v3119 = vlaneseq
  %v3120 = vshrl.u32 %v3119, 7
  %v3121 = vsub.s32 %v3118, %v3120
  %v3122 = vrot.slane %v3114, %v3121
  %v3124 = vunpack.c.l.s4 1934713408
  %v3125 = vunpack.c.0.s8 %v3124
  %v3126 = vlaneseq
  %v3127 = vshrl.u32 %v3126, 7
  %v3128 = vsub.s32 %v3125, %v3127
  %v3129 = vrot.slane %v3115, %v3128
  %v3130 = vcombine.low %v3074, %v3106
  %v3131 = vcombine.high %v3074, %v3106
  %v3132 = vcombine.low %v3081, %v3113
  %v3133 = vcombine.high %v3081, %v3113
  %v3134 = vcombine.low %v3090, %v3122
  %v3135 = vcombine.high %v3090, %v3122
  %v3136 = vcombine.low %v3097, %v3129
  %v3137 = vcombine.high %v3097, %v3129
  %v3138 = vcombine.low %v2890, %v2894
  %v3139 = vcombine.high %v2890, %v2894
  %v3141 = vunpack.c.l.s4 1983009808
  %v3142 = vunpack.c.0.s8 %v3141
  %v3143 = vlaneseq
  %v3144 = vshrl.u32 %v3143, 7
  %v3145 = vsub.s32 %v3142, %v3144
  %v3146 = vrot.slane %v3138, %v3145
  %v3148 = vunpack.c.l.s4 1983009808
  %v3149 = vunpack.c.0.s8 %v3148
  %v3150 = vlaneseq
  %v3151 = vshrl.u32 %v3150, 7
  %v3152 = vsub.s32 %v3149, %v3151
  %v3153 = vrot.slane %v3139, %v3152
  %v3154 = vcombine.low %v2892, %v2896
  %v3155 = vcombine.high %v2892, %v2896
  %v3157 = vunpack.c.l.s4 1983009808
  %v3158 = vunpack.c.0.s8 %v3157
  %v3159 = vlaneseq
  %v3160 = vshrl.u32 %v3159, 7
  %v3161 = vsub.s32 %v3158, %v3160
  %v3162 = vrot.slane %v3154, %v3161
  %v3164 = vunpack.c.l.s4 1983009808
  %v3165 = vunpack.c.0.s8 %v3164
  %v3166 = vlaneseq
  %v3167 = vshrl.u32 %v3166, 7
  %v3168 = vsub.s32 %v3165, %v3167
  %v3169 = vrot.slane %v3155, %v3168
  %v3170 = vcombine.low %v2898, %v2902
  %v3171 = vcombine.high %v2898, %v2902
  %v3173 = vunpack.c.l.s4 1983009808
  %v3174 = vunpack.c.0.s8 %v3173
  %v3175 = vlaneseq
  %v3176 = vshrl.u32 %v3175, 7
  %v3177 = vsub.s32 %v3174, %v3176
  %v3178 = vrot.slane %v3170, %v3177
  %v3180 = vunpack.c.l.s4 1983009808
  %v3181 = vunpack.c.0.s8 %v3180
  %v3182 = vlaneseq
  %v3183 = vshrl.u32 %v3182, 7
  %v3184 = vsub.s32 %v3181, %v3183
  %v3185 = vrot.slane %v3171, %v3184
  %v3186 = vcombine.low %v2900, %v2904
  %v3187 = vcombine.high %v2900, %v2904
  %v3189 = vunpack.c.l.s4 1983009808
  %v3190 = vunpack.c.0.s8 %v3189
  %v3191 = vlaneseq
  %v3192 = vshrl.u32 %v3191, 7
  %v3193 = vsub.s32 %v3190, %v3192
  %v3194 = vrot.slane %v3186, %v3193
  %v3196 = vunpack.c.l.s4 1983009808
  %v3197 = vunpack.c.0.s8 %v3196
  %v3198 = vlaneseq
  %v3199 = vshrl.u32 %v3198, 7
  %v3200 = vsub.s32 %v3197, %v3199
  %v3201 = vrot.slane %v3187, %v3200
  %v3202 = vcombine.low %v3146, %v3162
  %v3203 = vcombine.high %v3146, %v3162
  %v3205 = vunpack.c.l.s4 1934713408
  %v3206 = vunpack.c.0.s8 %v3205
  %v3207 = vlaneseq
  %v3208 = vshrl.u32 %v3207, 7
  %v3209 = vsub.s32 %v3206, %v3208
  %v3210 = vrot.slane %v3202, %v3209
  %v3212 = vunpack.c.l.s4 1934713408
  %v3213 = vunpack.c.0.s8 %v3212
  %v3214 = vlaneseq
  %v3215 = vshrl.u32 %v3214, 7
  %v3216 = vsub.s32 %v3213, %v3215
  %v3217 = vrot.slane %v3203, %v3216
  %v3218 = vcombine.low %v3153, %v3169
  %v3219 = vcombine.high %v3153, %v3169
  %v3221 = vunpack.c.l.s4 1934713408
  %v3222 = vunpack.c.0.s8 %v3221
  %v3223 = vlaneseq
  %v3224 = vshrl.u32 %v3223, 7
  %v3225 = vsub.s32 %v3222, %v3224
  %v3226 = vrot.slane %v3218, %v3225
  %v3228 = vunpack.c.l.s4 1934713408
  %v3229 = vunpack.c.0.s8 %v3228
  %v3230 = vlaneseq
  %v3231 = vshrl.u32 %v3230, 7
  %v3232 = vsub.s32 %v3229, %v3231
  %v3233 = vrot.slane %v3219, %v3232
  %v3234 = vcombine.low %v3178, %v3194
  %v3235 = vcombine.high %v3178, %v3194
  %v3237 = vunpack.c.l.s4 1934713408
  %v3238 = vunpack.c.0.s8 %v3237
  %v3239 = vlaneseq
  %v3240 = vshrl.u32 %v3239, 7
  %v3241 = vsub.s32 %v3238, %v3240
  %v3242 = vrot.slane %v3234, %v3241
  %v3244 = vunpack.c.l.s4 1934713408
  %v3245 = vunpack.c.0.s8 %v3244
  %v3246 = vlaneseq
  %v3247 = vshrl.u32 %v3246, 7
  %v3248 = vsub.s32 %v3245, %v3247
  %v3249 = vrot.slane %v3235, %v3248
  %v3250 = vcombine.low %v3185, %v3201
  %v3251 = vcombine.high %v3185, %v3201
  %v3253 = vunpack.c.l.s4 1934713408
  %v3254 = vunpack.c.0.s8 %v3253
  %v3255 = vlaneseq
  %v3256 = vshrl.u32 %v3255, 7
  %v3257 = vsub.s32 %v3254, %v3256
  %v3258 = vrot.slane %v3250, %v3257
  %v3260 = vunpack.c.l.s4 1934713408
  %v3261 = vunpack.c.0.s8 %v3260
  %v3262 = vlaneseq
  %v3263 = vshrl.u32 %v3262, 7
  %v3264 = vsub.s32 %v3261, %v3263
  %v3265 = vrot.slane %v3251, %v3264
  %v3266 = vcombine.low %v3210, %v3242
  %v3267 = vcombine.high %v3210, %v3242
  %v3268 = vcombine.low %v3217, %v3249
  %v3269 = vcombine.high %v3217, %v3249
  %v3270 = vcombine.low %v3226, %v3258
  %v3271 = vcombine.high %v3226, %v3258
  %v3272 = vcombine.low %v3233, %v3265
  %v3273 = vcombine.high %v3233, %v3265
  %v3274 = vcombine.low %v2906, %v2910
  %v3275 = vcombine.high %v2906, %v2910
  %v3277 = vunpack.c.l.s4 1983009808
  %v3278 = vunpack.c.0.s8 %v3277
  %v3279 = vlaneseq
  %v3280 = vshrl.u32 %v3279, 7
  %v3281 = vsub.s32 %v3278, %v3280
  %v3282 = vrot.slane %v3274, %v3281
  %v3284 = vunpack.c.l.s4 1983009808
  %v3285 = vunpack.c.0.s8 %v3284
  %v3286 = vlaneseq
  %v3287 = vshrl.u32 %v3286, 7
  %v3288 = vsub.s32 %v3285, %v3287
  %v3289 = vrot.slane %v3275, %v3288
  %v3290 = vcombine.low %v2908, %v2912
  %v3291 = vcombine.high %v2908, %v2912
  %v3293 = vunpack.c.l.s4 1983009808
  %v3294 = vunpack.c.0.s8 %v3293
  %v3295 = vlaneseq
  %v3296 = vshrl.u32 %v3295, 7
  %v3297 = vsub.s32 %v3294, %v3296
  %v3298 = vrot.slane %v3290, %v3297
  %v3300 = vunpack.c.l.s4 1983009808
  %v3301 = vunpack.c.0.s8 %v3300
  %v3302 = vlaneseq
  %v3303 = vshrl.u32 %v3302, 7
  %v3304 = vsub.s32 %v3301, %v3303
  %v3305 = vrot.slane %v3291, %v3304
  %v3306 = vcombine.low %v2914, %v2918
  %v3307 = vcombine.high %v2914, %v2918
  %v3309 = vunpack.c.l.s4 1983009808
  %v3310 = vunpack.c.0.s8 %v3309
  %v3311 = vlaneseq
  %v3312 = vshrl.u32 %v3311, 7
  %v3313 = vsub.s32 %v3310, %v3312
  %v3314 = vrot.slane %v3306, %v3313
  %v3316 = vunpack.c.l.s4 1983009808
  %v3317 = vunpack.c.0.s8 %v3316
  %v3318 = vlaneseq
  %v3319 = vshrl.u32 %v3318, 7
  %v3320 = vsub.s32 %v3317, %v3319
  %v3321 = vrot.slane %v3307, %v3320
  %v3322 = vcombine.low %v2916, %v2920
  %v3323 = vcombine.high %v2916, %v2920
  %v3325 = vunpack.c.l.s4 1983009808
  %v3326 = vunpack.c.0.s8 %v3325
  %v3327 = vlaneseq
  %v3328 = vshrl.u32 %v3327, 7
  %v3329 = vsub.s32 %v3326, %v3328
  %v3330 = vrot.slane %v3322, %v3329
  %v3332 = vunpack.c.l.s4 1983009808
  %v3333 = vunpack.c.0.s8 %v3332
  %v3334 = vlaneseq
  %v3335 = vshrl.u32 %v3334, 7
  %v3336 = vsub.s32 %v3333, %v3335
  %v3337 = vrot.slane %v3323, %v3336
  %v3338 = vcombine.low %v3282, %v3298
  %v3339 = vcombine.high %v3282, %v3298
  %v3341 = vunpack.c.l.s4 1934713408
  %v3342 = vunpack.c.0.s8 %v3341
  %v3343 = vlaneseq
  %v3344 = vshrl.u32 %v3343, 7
  %v3345 = vsub.s32 %v3342, %v3344
  %v3346 = vrot.slane %v3338, %v3345
  %v3348 = vunpack.c.l.s4 1934713408
  %v3349 = vunpack.c.0.s8 %v3348
  %v3350 = vlaneseq
  %v3351 = vshrl.u32 %v3350, 7
  %v3352 = vsub.s32 %v3349, %v3351
  %v3353 = vrot.slane %v3339, %v3352
  %v3354 = vcombine.low %v3289, %v3305
  %v3355 = vcombine.high %v3289, %v3305
  %v3357 = vunpack.c.l.s4 1934713408
  %v3358 = vunpack.c.0.s8 %v3357
  %v3359 = vlaneseq
  %v3360 = vshrl.u32 %v3359, 7
  %v3361 = vsub.s32 %v3358, %v3360
  %v3362 = vrot.slane %v3354, %v3361
  %v3364 = vunpack.c.l.s4 1934713408
  %v3365 = vunpack.c.0.s8 %v3364
  %v3366 = vlaneseq
  %v3367 = vshrl.u32 %v3366, 7
  %v3368 = vsub.s32 %v3365, %v3367
  %v3369 = vrot.slane %v3355, %v3368
  %v3370 = vcombine.low %v3314, %v3330
  %v3371 = vcombine.high %v3314, %v3330
  %v3373 = vunpack.c.l.s4 1934713408
  %v3374 = vunpack.c.0.s8 %v3373
  %v3375 = vlaneseq
  %v3376 = vshrl.u32 %v3375, 7
  %v3377 = vsub.s32 %v3374, %v3376
  %v3378 = vrot.slane %v3370, %v3377
  %v3380 = vunpack.c.l.s4 1934713408
  %v3381 = vunpack.c.0.s8 %v3380
  %v3382 = vlaneseq
  %v3383 = vshrl.u32 %v3382, 7
  %v3384 = vsub.s32 %v3381, %v3383
  %v3385 = vrot.slane %v3371, %v3384
  %v3386 = vcombine.low %v3321, %v3337
  %v3387 = vcombine.high %v3321, %v3337
  %v3389 = vunpack.c.l.s4 1934713408
  %v3390 = vunpack.c.0.s8 %v3389
  %v3391 = vlaneseq
  %v3392 = vshrl.u32 %v3391, 7
  %v3393 = vsub.s32 %v3390, %v3392
  %v3394 = vrot.slane %v3386, %v3393
  %v3396 = vunpack.c.l.s4 1934713408
  %v3397 = vunpack.c.0.s8 %v3396
  %v3398 = vlaneseq
  %v3399 = vshrl.u32 %v3398, 7
  %v3400 = vsub.s32 %v3397, %v3399
  %v3401 = vrot.slane %v3387, %v3400
  %v3402 = vcombine.low %v3346, %v3378
  %v3403 = vcombine.high %v3346, %v3378
  %v3404 = vcombine.low %v3353, %v3385
  %v3405 = vcombine.high %v3353, %v3385
  %v3406 = vcombine.low %v3362, %v3394
  %v3407 = vcombine.high %v3362, %v3394
  %v3408 = vcombine.low %v3369, %v3401
  %v3409 = vcombine.high %v3369, %v3401
  %v3410 = vcombine.low %v2922, %v2926
  %v3411 = vcombine.high %v2922, %v2926
  %v3413 = vunpack.c.l.s4 1983009808
  %v3414 = vunpack.c.0.s8 %v3413
  %v3415 = vlaneseq
  %v3416 = vshrl.u32 %v3415, 7
  %v3417 = vsub.s32 %v3414, %v3416
  %v3418 = vrot.slane %v3410, %v3417
  %v3420 = vunpack.c.l.s4 1983009808
  %v3421 = vunpack.c.0.s8 %v3420
  %v3422 = vlaneseq
  %v3423 = vshrl.u32 %v3422, 7
  %v3424 = vsub.s32 %v3421, %v3423
  %v3425 = vrot.slane %v3411, %v3424
  %v3426 = vcombine.low %v2924, %v2928
  %v3427 = vcombine.high %v2924, %v2928
  %v3429 = vunpack.c.l.s4 1983009808
  %v3430 = vunpack.c.0.s8 %v3429
  %v3431 = vlaneseq
  %v3432 = vshrl.u32 %v3431, 7
  %v3433 = vsub.s32 %v3430, %v3432
  %v3434 = vrot.slane %v3426, %v3433
  %v3436 = vunpack.c.l.s4 1983009808
  %v3437 = vunpack.c.0.s8 %v3436
  %v3438 = vlaneseq
  %v3439 = vshrl.u32 %v3438, 7
  %v3440 = vsub.s32 %v3437, %v3439
  %v3441 = vrot.slane %v3427, %v3440
  %v3442 = vcombine.low %v2930, %v2934
  %v3443 = vcombine.high %v2930, %v2934
  %v3445 = vunpack.c.l.s4 1983009808
  %v3446 = vunpack.c.0.s8 %v3445
  %v3447 = vlaneseq
  %v3448 = vshrl.u32 %v3447, 7
  %v3449 = vsub.s32 %v3446, %v3448
  %v3450 = vrot.slane %v3442, %v3449
  %v3452 = vunpack.c.l.s4 1983009808
  %v3453 = vunpack.c.0.s8 %v3452
  %v3454 = vlaneseq
  %v3455 = vshrl.u32 %v3454, 7
  %v3456 = vsub.s32 %v3453, %v3455
  %v3457 = vrot.slane %v3443, %v3456
  %v3458 = vcombine.low %v2932, %v2936
  %v3459 = vcombine.high %v2932, %v2936
  %v3461 = vunpack.c.l.s4 1983009808
  %v3462 = vunpack.c.0.s8 %v3461
  %v3463 = vlaneseq
  %v3464 = vshrl.u32 %v3463, 7
  %v3465 = vsub.s32 %v3462, %v3464
  %v3466 = vrot.slane %v3458, %v3465
  %v3468 = vunpack.c.l.s4 1983009808
  %v3469 = vunpack.c.0.s8 %v3468
  %v3470 = vlaneseq
  %v3471 = vshrl.u32 %v3470, 7
  %v3472 = vsub.s32 %v3469, %v3471
  %v3473 = vrot.slane %v3459, %v3472
  %v3474 = vcombine.low %v3418, %v3434
  %v3475 = vcombine.high %v3418, %v3434
  %v3477 = vunpack.c.l.s4 1934713408
  %v3478 = vunpack.c.0.s8 %v3477
  %v3479 = vlaneseq
  %v3480 = vshrl.u32 %v3479, 7
  %v3481 = vsub.s32 %v3478, %v3480
  %v3482 = vrot.slane %v3474, %v3481
  %v3484 = vunpack.c.l.s4 1934713408
  %v3485 = vunpack.c.0.s8 %v3484
  %v3486 = vlaneseq
  %v3487 = vshrl.u32 %v3486, 7
  %v3488 = vsub.s32 %v3485, %v3487
  %v3489 = vrot.slane %v3475, %v3488
  %v3490 = vcombine.low %v3425, %v3441
  %v3491 = vcombine.high %v3425, %v3441
  %v3493 = vunpack.c.l.s4 1934713408
  %v3494 = vunpack.c.0.s8 %v3493
  %v3495 = vlaneseq
  %v3496 = vshrl.u32 %v3495, 7
  %v3497 = vsub.s32 %v3494, %v3496
  %v3498 = vrot.slane %v3490, %v3497
  %v3500 = vunpack.c.l.s4 1934713408
  %v3501 = vunpack.c.0.s8 %v3500
  %v3502 = vlaneseq
  %v3503 = vshrl.u32 %v3502, 7
  %v3504 = vsub.s32 %v3501, %v3503
  %v3505 = vrot.slane %v3491, %v3504
  %v3506 = vcombine.low %v3450, %v3466
  %v3507 = vcombine.high %v3450, %v3466
  %v3509 = vunpack.c.l.s4 1934713408
  %v3510 = vunpack.c.0.s8 %v3509
  %v3511 = vlaneseq
  %v3512 = vshrl.u32 %v3511, 7
  %v3513 = vsub.s32 %v3510, %v3512
  %v3514 = vrot.slane %v3506, %v3513
  %v3516 = vunpack.c.l.s4 1934713408
  %v3517 = vunpack.c.0.s8 %v3516
  %v3518 = vlaneseq
  %v3519 = vshrl.u32 %v3518, 7
  %v3520 = vsub.s32 %v3517, %v3519
  %v3521 = vrot.slane %v3507, %v3520
  %v3522 = vcombine.low %v3457, %v3473
  %v3523 = vcombine.high %v3457, %v3473
  %v3525 = vunpack.c.l.s4 1934713408
  %v3526 = vunpack.c.0.s8 %v3525
  %v3527 = vlaneseq
  %v3528 = vshrl.u32 %v3527, 7
  %v3529 = vsub.s32 %v3526, %v3528
  %v3530 = vrot.slane %v3522, %v3529
  %v3532 = vunpack.c.l.s4 1934713408
  %v3533 = vunpack.c.0.s8 %v3532
  %v3534 = vlaneseq
  %v3535 = vshrl.u32 %v3534, 7
  %v3536 = vsub.s32 %v3533, %v3535
  %v3537 = vrot.slane %v3523, %v3536
  %v3538 = vcombine.low %v3482, %v3514
  %v3539 = vcombine.high %v3482, %v3514
  %v3540 = vcombine.low %v3489, %v3521
  %v3541 = vcombine.high %v3489, %v3521
  %v3542 = vcombine.low %v3498, %v3530
  %v3543 = vcombine.high %v3498, %v3530
  %v3544 = vcombine.low %v3505, %v3537
  %v3545 = vcombine.high %v3505, %v3537
  %v3546 = vcombine.low %v2938, %v2942
  %v3547 = vcombine.high %v2938, %v2942
  %v3549 = vunpack.c.l.s4 1983009808
  %v3550 = vunpack.c.0.s8 %v3549
  %v3551 = vlaneseq
  %v3552 = vshrl.u32 %v3551, 7
  %v3553 = vsub.s32 %v3550, %v3552
  %v3554 = vrot.slane %v3546, %v3553
  %v3556 = vunpack.c.l.s4 1983009808
  %v3557 = vunpack.c.0.s8 %v3556
  %v3558 = vlaneseq
  %v3559 = vshrl.u32 %v3558, 7
  %v3560 = vsub.s32 %v3557, %v3559
  %v3561 = vrot.slane %v3547, %v3560
  %v3562 = vcombine.low %v2940, %v2944
  %v3563 = vcombine.high %v2940, %v2944
  %v3565 = vunpack.c.l.s4 1983009808
  %v3566 = vunpack.c.0.s8 %v3565
  %v3567 = vlaneseq
  %v3568 = vshrl.u32 %v3567, 7
  %v3569 = vsub.s32 %v3566, %v3568
  %v3570 = vrot.slane %v3562, %v3569
  %v3572 = vunpack.c.l.s4 1983009808
  %v3573 = vunpack.c.0.s8 %v3572
  %v3574 = vlaneseq
  %v3575 = vshrl.u32 %v3574, 7
  %v3576 = vsub.s32 %v3573, %v3575
  %v3577 = vrot.slane %v3563, %v3576
  %v3578 = vcombine.low %v2946, %v2950
  %v3579 = vcombine.high %v2946, %v2950
  %v3581 = vunpack.c.l.s4 1983009808
  %v3582 = vunpack.c.0.s8 %v3581
  %v3583 = vlaneseq
  %v3584 = vshrl.u32 %v3583, 7
  %v3585 = vsub.s32 %v3582, %v3584
  %v3586 = vrot.slane %v3578, %v3585
  %v3588 = vunpack.c.l.s4 1983009808
  %v3589 = vunpack.c.0.s8 %v3588
  %v3590 = vlaneseq
  %v3591 = vshrl.u32 %v3590, 7
  %v3592 = vsub.s32 %v3589, %v3591
  %v3593 = vrot.slane %v3579, %v3592
  %v3594 = vcombine.low %v2948, %v2952
  %v3595 = vcombine.high %v2948, %v2952
  %v3597 = vunpack.c.l.s4 1983009808
  %v3598 = vunpack.c.0.s8 %v3597
  %v3599 = vlaneseq
  %v3600 = vshrl.u32 %v3599, 7
  %v3601 = vsub.s32 %v3598, %v3600
  %v3602 = vrot.slane %v3594, %v3601
  %v3604 = vunpack.c.l.s4 1983009808
  %v3605 = vunpack.c.0.s8 %v3604
  %v3606 = vlaneseq
  %v3607 = vshrl.u32 %v3606, 7
  %v3608 = vsub.s32 %v3605, %v3607
  %v3609 = vrot.slane %v3595, %v3608
  %v3610 = vcombine.low %v3554, %v3570
  %v3611 = vcombine.high %v3554, %v3570
  %v3613 = vunpack.c.l.s4 1934713408
  %v3614 = vunpack.c.0.s8 %v3613
  %v3615 = vlaneseq
  %v3616 = vshrl.u32 %v3615, 7
  %v3617 = vsub.s32 %v3614, %v3616
  %v3618 = vrot.slane %v3610, %v3617
  %v3620 = vunpack.c.l.s4 1934713408
  %v3621 = vunpack.c.0.s8 %v3620
  %v3622 = vlaneseq
  %v3623 = vshrl.u32 %v3622, 7
  %v3624 = vsub.s32 %v3621, %v3623
  %v3625 = vrot.slane %v3611, %v3624
  %v3626 = vcombine.low %v3561, %v3577
  %v3627 = vcombine.high %v3561, %v3577
  %v3629 = vunpack.c.l.s4 1934713408
  %v3630 = vunpack.c.0.s8 %v3629
  %v3631 = vlaneseq
  %v3632 = vshrl.u32 %v3631, 7
  %v3633 = vsub.s32 %v3630, %v3632
  %v3634 = vrot.slane %v3626, %v3633
  %v3636 = vunpack.c.l.s4 1934713408
  %v3637 = vunpack.c.0.s8 %v3636
  %v3638 = vlaneseq
  %v3639 = vshrl.u32 %v3638, 7
  %v3640 = vsub.s32 %v3637, %v3639
  %v3641 = vrot.slane %v3627, %v3640
  %v3642 = vcombine.low %v3586, %v3602
  %v3643 = vcombine.high %v3586, %v3602
  %v3645 = vunpack.c.l.s4 1934713408
  %v3646 = vunpack.c.0.s8 %v3645
  %v3647 = vlaneseq
  %v3648 = vshrl.u32 %v3647, 7
  %v3649 = vsub.s32 %v3646, %v3648
  %v3650 = vrot.slane %v3642, %v3649
  %v3652 = vunpack.c.l.s4 1934713408
  %v3653 = vunpack.c.0.s8 %v3652
  %v3654 = vlaneseq
  %v3655 = vshrl.u32 %v3654, 7
  %v3656 = vsub.s32 %v3653, %v3655
  %v3657 = vrot.slane %v3643, %v3656
  %v3658 = vcombine.low %v3593, %v3609
  %v3659 = vcombine.high %v3593, %v3609
  %v3661 = vunpack.c.l.s4 1934713408
  %v3662 = vunpack.c.0.s8 %v3661
  %v3663 = vlaneseq
  %v3664 = vshrl.u32 %v3663, 7
  %v3665 = vsub.s32 %v3662, %v3664
  %v3666 = vrot.slane %v3658, %v3665
  %v3668 = vunpack.c.l.s4 1934713408
  %v3669 = vunpack.c.0.s8 %v3668
  %v3670 = vlaneseq
  %v3671 = vshrl.u32 %v3670, 7
  %v3672 = vsub.s32 %v3669, %v3671
  %v3673 = vrot.slane %v3659, %v3672
  %v3674 = vcombine.low %v3618, %v3650
  %v3675 = vcombine.high %v3618, %v3650
  %v3676 = vcombine.low %v3625, %v3657
  %v3677 = vcombine.high %v3625, %v3657
  %v3678 = vcombine.low %v3634, %v3666
  %v3679 = vcombine.high %v3634, %v3666
  %v3680 = vcombine.low %v3641, %v3673
  %v3681 = vcombine.high %v3641, %v3673
  %v3682 = vcombine.low %v2954, %v2958
  %v3683 = vcombine.high %v2954, %v2958
  %v3685 = vunpack.c.l.s4 1983009808
  %v3686 = vunpack.c.0.s8 %v3685
  %v3687 = vlaneseq
  %v3688 = vshrl.u32 %v3687, 7
  %v3689 = vsub.s32 %v3686, %v3688
  %v3690 = vrot.slane %v3682, %v3689
  %v3692 = vunpack.c.l.s4 1983009808
  %v3693 = vunpack.c.0.s8 %v3692
  %v3694 = vlaneseq
  %v3695 = vshrl.u32 %v3694, 7
  %v3696 = vsub.s32 %v3693, %v3695
  %v3697 = vrot.slane %v3683, %v3696
  %v3698 = vcombine.low %v2956, %v2960
  %v3699 = vcombine.high %v2956, %v2960
  %v3701 = vunpack.c.l.s4 1983009808
  %v3702 = vunpack.c.0.s8 %v3701
  %v3703 = vlaneseq
  %v3704 = vshrl.u32 %v3703, 7
  %v3705 = vsub.s32 %v3702, %v3704
  %v3706 = vrot.slane %v3698, %v3705
  %v3708 = vunpack.c.l.s4 1983009808
  %v3709 = vunpack.c.0.s8 %v3708
  %v3710 = vlaneseq
  %v3711 = vshrl.u32 %v3710, 7
  %v3712 = vsub.s32 %v3709, %v3711
  %v3713 = vrot.slane %v3699, %v3712
  %v3714 = vcombine.low %v2962, %v2966
  %v3715 = vcombine.high %v2962, %v2966
  %v3717 = vunpack.c.l.s4 1983009808
  %v3718 = vunpack.c.0.s8 %v3717
  %v3719 = vlaneseq
  %v3720 = vshrl.u32 %v3719, 7
  %v3721 = vsub.s32 %v3718, %v3720
  %v3722 = vrot.slane %v3714, %v3721
  %v3724 = vunpack.c.l.s4 1983009808
  %v3725 = vunpack.c.0.s8 %v3724
  %v3726 = vlaneseq
  %v3727 = vshrl.u32 %v3726, 7
  %v3728 = vsub.s32 %v3725, %v3727
  %v3729 = vrot.slane %v3715, %v3728
  %v3730 = vcombine.low %v2964, %v2968
  %v3731 = vcombine.high %v2964, %v2968
  %v3733 = vunpack.c.l.s4 1983009808
  %v3734 = vunpack.c.0.s8 %v3733
  %v3735 = vlaneseq
  %v3736 = vshrl.u32 %v3735, 7
  %v3737 = vsub.s32 %v3734, %v3736
  %v3738 = vrot.slane %v3730, %v3737
  %v3740 = vunpack.c.l.s4 1983009808
  %v3741 = vunpack.c.0.s8 %v3740
  %v3742 = vlaneseq
  %v3743 = vshrl.u32 %v3742, 7
  %v3744 = vsub.s32 %v3741, %v3743
  %v3745 = vrot.slane %v3731, %v3744
  %v3746 = vcombine.low %v3690, %v3706
  %v3747 = vcombine.high %v3690, %v3706
  %v3749 = vunpack.c.l.s4 1934713408
  %v3750 = vunpack.c.0.s8 %v3749
  %v3751 = vlaneseq
  %v3752 = vshrl.u32 %v3751, 7
  %v3753 = vsub.s32 %v3750, %v3752
  %v3754 = vrot.slane %v3746, %v3753
  %v3756 = vunpack.c.l.s4 1934713408
  %v3757 = vunpack.c.0.s8 %v3756
  %v3758 = vlaneseq
  %v3759 = vshrl.u32 %v3758, 7
  %v3760 = vsub.s32 %v3757, %v3759
  %v3761 = vrot.slane %v3747, %v3760
  %v3762 = vcombine.low %v3697, %v3713
  %v3763 = vcombine.high %v3697, %v3713
  %v3765 = vunpack.c.l.s4 1934713408
  %v3766 = vunpack.c.0.s8 %v3765
  %v3767 = vlaneseq
  %v3768 = vshrl.u32 %v3767, 7
  %v3769 = vsub.s32 %v3766, %v3768
  %v3770 = vrot.slane %v3762, %v3769
  %v3772 = vunpack.c.l.s4 1934713408
  %v3773 = vunpack.c.0.s8 %v3772
  %v3774 = vlaneseq
  %v3775 = vshrl.u32 %v3774, 7
  %v3776 = vsub.s32 %v3773, %v3775
  %v3777 = vrot.slane %v3763, %v3776
  %v3778 = vcombine.low %v3722, %v3738
  %v3779 = vcombine.high %v3722, %v3738
  %v3781 = vunpack.c.l.s4 1934713408
  %v3782 = vunpack.c.0.s8 %v3781
  %v3783 = vlaneseq
  %v3784 = vshrl.u32 %v3783, 7
  %v3785 = vsub.s32 %v3782, %v3784
  %v3786 = vrot.slane %v3778, %v3785
  %v3788 = vunpack.c.l.s4 1934713408
  %v3789 = vunpack.c.0.s8 %v3788
  %v3790 = vlaneseq
  %v3791 = vshrl.u32 %v3790, 7
  %v3792 = vsub.s32 %v3789, %v3791
  %v3793 = vrot.slane %v3779, %v3792
  %v3794 = vcombine.low %v3729, %v3745
  %v3795 = vcombine.high %v3729, %v3745
  %v3797 = vunpack.c.l.s4 1934713408
  %v3798 = vunpack.c.0.s8 %v3797
  %v3799 = vlaneseq
  %v3800 = vshrl.u32 %v3799, 7
  %v3801 = vsub.s32 %v3798, %v3800
  %v3802 = vrot.slane %v3794, %v3801
  %v3804 = vunpack.c.l.s4 1934713408
  %v3805 = vunpack.c.0.s8 %v3804
  %v3806 = vlaneseq
  %v3807 = vshrl.u32 %v3806, 7
  %v3808 = vsub.s32 %v3805, %v3807
  %v3809 = vrot.slane %v3795, %v3808
  %v3810 = vcombine.low %v3754, %v3786
  %v3811 = vcombine.high %v3754, %v3786
  %v3812 = vcombine.low %v3761, %v3793
  %v3813 = vcombine.high %v3761, %v3793
  %v3814 = vcombine.low %v3770, %v3802
  %v3815 = vcombine.high %v3770, %v3802
  %v3816 = vcombine.low %v3777, %v3809
  %v3817 = vcombine.high %v3777, %v3809
  %v3818 = vcombine.low %v2970, %v2974
  %v3819 = vcombine.high %v2970, %v2974
  %v3821 = vunpack.c.l.s4 1983009808
  %v3822 = vunpack.c.0.s8 %v3821
  %v3823 = vlaneseq
  %v3824 = vshrl.u32 %v3823, 7
  %v3825 = vsub.s32 %v3822, %v3824
  %v3826 = vrot.slane %v3818, %v3825
  %v3828 = vunpack.c.l.s4 1983009808
  %v3829 = vunpack.c.0.s8 %v3828
  %v3830 = vlaneseq
  %v3831 = vshrl.u32 %v3830, 7
  %v3832 = vsub.s32 %v3829, %v3831
  %v3833 = vrot.slane %v3819, %v3832
  %v3834 = vcombine.low %v2972, %v2976
  %v3835 = vcombine.high %v2972, %v2976
  %v3837 = vunpack.c.l.s4 1983009808
  %v3838 = vunpack.c.0.s8 %v3837
  %v3839 = vlaneseq
  %v3840 = vshrl.u32 %v3839, 7
  %v3841 = vsub.s32 %v3838, %v3840
  %v3842 = vrot.slane %v3834, %v3841
  %v3844 = vunpack.c.l.s4 1983009808
  %v3845 = vunpack.c.0.s8 %v3844
  %v3846 = vlaneseq
  %v3847 = vshrl.u32 %v3846, 7
  %v3848 = vsub.s32 %v3845, %v3847
  %v3849 = vrot.slane %v3835, %v3848
  %v3850 = vcombine.low %v2978, %v2982
  %v3851 = vcombine.high %v2978, %v2982
  %v3853 = vunpack.c.l.s4 1983009808
  %v3854 = vunpack.c.0.s8 %v3853
  %v3855 = vlaneseq
  %v3856 = vshrl.u32 %v3855, 7
  %v3857 = vsub.s32 %v3854, %v3856
  %v3858 = vrot.slane %v3850, %v3857
  %v3860 = vunpack.c.l.s4 1983009808
  %v3861 = vunpack.c.0.s8 %v3860
  %v3862 = vlaneseq
  %v3863 = vshrl.u32 %v3862, 7
  %v3864 = vsub.s32 %v3861, %v3863
  %v3865 = vrot.slane %v3851, %v3864
  %v3866 = vcombine.low %v2980, %v2984
  %v3867 = vcombine.high %v2980, %v2984
  %v3869 = vunpack.c.l.s4 1983009808
  %v3870 = vunpack.c.0.s8 %v3869
  %v3871 = vlaneseq
  %v3872 = vshrl.u32 %v3871, 7
  %v3873 = vsub.s32 %v3870, %v3872
  %v3874 = vrot.slane %v3866, %v3873
  %v3876 = vunpack.c.l.s4 1983009808
  %v3877 = vunpack.c.0.s8 %v3876
  %v3878 = vlaneseq
  %v3879 = vshrl.u32 %v3878, 7
  %v3880 = vsub.s32 %v3877, %v3879
  %v3881 = vrot.slane %v3867, %v3880
  %v3882 = vcombine.low %v3826, %v3842
  %v3883 = vcombine.high %v3826, %v3842
  %v3885 = vunpack.c.l.s4 1934713408
  %v3886 = vunpack.c.0.s8 %v3885
  %v3887 = vlaneseq
  %v3888 = vshrl.u32 %v3887, 7
  %v3889 = vsub.s32 %v3886, %v3888
  %v3890 = vrot.slane %v3882, %v3889
  %v3892 = vunpack.c.l.s4 1934713408
  %v3893 = vunpack.c.0.s8 %v3892
  %v3894 = vlaneseq
  %v3895 = vshrl.u32 %v3894, 7
  %v3896 = vsub.s32 %v3893, %v3895
  %v3897 = vrot.slane %v3883, %v3896
  %v3898 = vcombine.low %v3833, %v3849
  %v3899 = vcombine.high %v3833, %v3849
  %v3901 = vunpack.c.l.s4 1934713408
  %v3902 = vunpack.c.0.s8 %v3901
  %v3903 = vlaneseq
  %v3904 = vshrl.u32 %v3903, 7
  %v3905 = vsub.s32 %v3902, %v3904
  %v3906 = vrot.slane %v3898, %v3905
  %v3908 = vunpack.c.l.s4 1934713408
  %v3909 = vunpack.c.0.s8 %v3908
  %v3910 = vlaneseq
  %v3911 = vshrl.u32 %v3910, 7
  %v3912 = vsub.s32 %v3909, %v3911
  %v3913 = vrot.slane %v3899, %v3912
  %v3914 = vcombine.low %v3858, %v3874
  %v3915 = vcombine.high %v3858, %v3874
  %v3917 = vunpack.c.l.s4 1934713408
  %v3918 = vunpack.c.0.s8 %v3917
  %v3919 = vlaneseq
  %v3920 = vshrl.u32 %v3919, 7
  %v3921 = vsub.s32 %v3918, %v3920
  %v3922 = vrot.slane %v3914, %v3921
  %v3924 = vunpack.c.l.s4 1934713408
  %v3925 = vunpack.c.0.s8 %v3924
  %v3926 = vlaneseq
  %v3927 = vshrl.u32 %v3926, 7
  %v3928 = vsub.s32 %v3925, %v3927
  %v3929 = vrot.slane %v3915, %v3928
  %v3930 = vcombine.low %v3865, %v3881
  %v3931 = vcombine.high %v3865, %v3881
  %v3933 = vunpack.c.l.s4 1934713408
  %v3934 = vunpack.c.0.s8 %v3933
  %v3935 = vlaneseq
  %v3936 = vshrl.u32 %v3935, 7
  %v3937 = vsub.s32 %v3934, %v3936
  %v3938 = vrot.slane %v3930, %v3937
  %v3940 = vunpack.c.l.s4 1934713408
  %v3941 = vunpack.c.0.s8 %v3940
  %v3942 = vlaneseq
  %v3943 = vshrl.u32 %v3942, 7
  %v3944 = vsub.s32 %v3941, %v3943
  %v3945 = vrot.slane %v3931, %v3944
  %v3946 = vcombine.low %v3890, %v3922
  %v3947 = vcombine.high %v3890, %v3922
  %v3948 = vcombine.low %v3897, %v3929
  %v3949 = vcombine.high %v3897, %v3929
  %v3950 = vcombine.low %v3906, %v3938
  %v3951 = vcombine.high %v3906, %v3938
  %v3952 = vcombine.low %v3913, %v3945
  %v3953 = vcombine.high %v3913, %v3945
  %v3954 = vcombine.low %v2986, %v2990
  %v3955 = vcombine.high %v2986, %v2990
  %v3957 = vunpack.c.l.s4 1983009808
  %v3958 = vunpack.c.0.s8 %v3957
  %v3959 = vlaneseq
  %v3960 = vshrl.u32 %v3959, 7
  %v3961 = vsub.s32 %v3958, %v3960
  %v3962 = vrot.slane %v3954, %v3961
  %v3964 = vunpack.c.l.s4 1983009808
  %v3965 = vunpack.c.0.s8 %v3964
  %v3966 = vlaneseq
  %v3967 = vshrl.u32 %v3966, 7
  %v3968 = vsub.s32 %v3965, %v3967
  %v3969 = vrot.slane %v3955, %v3968
  %v3970 = vcombine.low %v2988, %v2992
  %v3971 = vcombine.high %v2988, %v2992
  %v3973 = vunpack.c.l.s4 1983009808
  %v3974 = vunpack.c.0.s8 %v3973
  %v3975 = vlaneseq
  %v3976 = vshrl.u32 %v3975, 7
  %v3977 = vsub.s32 %v3974, %v3976
  %v3978 = vrot.slane %v3970, %v3977
  %v3980 = vunpack.c.l.s4 1983009808
  %v3981 = vunpack.c.0.s8 %v3980
  %v3982 = vlaneseq
  %v3983 = vshrl.u32 %v3982, 7
  %v3984 = vsub.s32 %v3981, %v3983
  %v3985 = vrot.slane %v3971, %v3984
  %v3986 = vcombine.low %v2994, %v2998
  %v3987 = vcombine.high %v2994, %v2998
  %v3989 = vunpack.c.l.s4 1983009808
  %v3990 = vunpack.c.0.s8 %v3989
  %v3991 = vlaneseq
  %v3992 = vshrl.u32 %v3991, 7
  %v3993 = vsub.s32 %v3990, %v3992
  %v3994 = vrot.slane %v3986, %v3993
  %v3996 = vunpack.c.l.s4 1983009808
  %v3997 = vunpack.c.0.s8 %v3996
  %v3998 = vlaneseq
  %v3999 = vshrl.u32 %v3998, 7
  %v4000 = vsub.s32 %v3997, %v3999
  %v4001 = vrot.slane %v3987, %v4000
  %v4002 = vcombine.low %v2996, %v3000
  %v4003 = vcombine.high %v2996, %v3000
  %v4005 = vunpack.c.l.s4 1983009808
  %v4006 = vunpack.c.0.s8 %v4005
  %v4007 = vlaneseq
  %v4008 = vshrl.u32 %v4007, 7
  %v4009 = vsub.s32 %v4006, %v4008
  %v4010 = vrot.slane %v4002, %v4009
  %v4012 = vunpack.c.l.s4 1983009808
  %v4013 = vunpack.c.0.s8 %v4012
  %v4014 = vlaneseq
  %v4015 = vshrl.u32 %v4014, 7
  %v4016 = vsub.s32 %v4013, %v4015
  %v4017 = vrot.slane %v4003, %v4016
  %v4018 = vcombine.low %v3962, %v3978
  %v4019 = vcombine.high %v3962, %v3978
  %v4021 = vunpack.c.l.s4 1934713408
  %v4022 = vunpack.c.0.s8 %v4021
  %v4023 = vlaneseq
  %v4024 = vshrl.u32 %v4023, 7
  %v4025 = vsub.s32 %v4022, %v4024
  %v4026 = vrot.slane %v4018, %v4025
  %v4028 = vunpack.c.l.s4 1934713408
  %v4029 = vunpack.c.0.s8 %v4028
  %v4030 = vlaneseq
  %v4031 = vshrl.u32 %v4030, 7
  %v4032 = vsub.s32 %v4029, %v4031
  %v4033 = vrot.slane %v4019, %v4032
  %v4034 = vcombine.low %v3969, %v3985
  %v4035 = vcombine.high %v3969, %v3985
  %v4037 = vunpack.c.l.s4 1934713408
  %v4038 = vunpack.c.0.s8 %v4037
  %v4039 = vlaneseq
  %v4040 = vshrl.u32 %v4039, 7
  %v4041 = vsub.s32 %v4038, %v4040
  %v4042 = vrot.slane %v4034, %v4041
  %v4044 = vunpack.c.l.s4 1934713408
  %v4045 = vunpack.c.0.s8 %v4044
  %v4046 = vlaneseq
  %v4047 = vshrl.u32 %v4046, 7
  %v4048 = vsub.s32 %v4045, %v4047
  %v4049 = vrot.slane %v4035, %v4048
  %v4050 = vcombine.low %v3994, %v4010
  %v4051 = vcombine.high %v3994, %v4010
  %v4053 = vunpack.c.l.s4 1934713408
  %v4054 = vunpack.c.0.s8 %v4053
  %v4055 = vlaneseq
  %v4056 = vshrl.u32 %v4055, 7
  %v4057 = vsub.s32 %v4054, %v4056
  %v4058 = vrot.slane %v4050, %v4057
  %v4060 = vunpack.c.l.s4 1934713408
  %v4061 = vunpack.c.0.s8 %v4060
  %v4062 = vlaneseq
  %v4063 = vshrl.u32 %v4062, 7
  %v4064 = vsub.s32 %v4061, %v4063
  %v4065 = vrot.slane %v4051, %v4064
  %v4066 = vcombine.low %v4001, %v4017
  %v4067 = vcombine.high %v4001, %v4017
  %v4069 = vunpack.c.l.s4 1934713408
  %v4070 = vunpack.c.0.s8 %v4069
  %v4071 = vlaneseq
  %v4072 = vshrl.u32 %v4071, 7
  %v4073 = vsub.s32 %v4070, %v4072
  %v4074 = vrot.slane %v4066, %v4073
  %v4076 = vunpack.c.l.s4 1934713408
  %v4077 = vunpack.c.0.s8 %v4076
  %v4078 = vlaneseq
  %v4079 = vshrl.u32 %v4078, 7
  %v4080 = vsub.s32 %v4077, %v4079
  %v4081 = vrot.slane %v4067, %v4080
  %v4082 = vcombine.low %v4026, %v4058
  %v4083 = vcombine.high %v4026, %v4058
  %v4084 = vcombine.low %v4033, %v4065
  %v4085 = vcombine.high %v4033, %v4065
  %v4086 = vcombine.low %v4042, %v4074
  %v4087 = vcombine.high %v4042, %v4074
  %v4088 = vcombine.low %v4049, %v4081
  %v4089 = vcombine.high %v4049, %v4081
  %v4090 = vcombine.low %v2875, %v2879
  %v4091 = vcombine.high %v2875, %v2879
  %v4093 = vunpack.c.l.s4 1983009808
  %v4094 = vunpack.c.0.s8 %v4093
  %v4095 = vlaneseq
  %v4096 = vshrl.u32 %v4095, 7
  %v4097 = vsub.s32 %v4094, %v4096
  %v4098 = vrot.slane %v4090, %v4097
  %v4100 = vunpack.c.l.s4 1983009808
  %v4101 = vunpack.c.0.s8 %v4100
  %v4102 = vlaneseq
  %v4103 = vshrl.u32 %v4102, 7
  %v4104 = vsub.s32 %v4101, %v4103
  %v4105 = vrot.slane %v4091, %v4104
  %v4106 = vcombine.low %v2877, %v2881
  %v4107 = vcombine.high %v2877, %v2881
  %v4109 = vunpack.c.l.s4 1983009808
  %v4110 = vunpack.c.0.s8 %v4109
  %v4111 = vlaneseq
  %v4112 = vshrl.u32 %v4111, 7
  %v4113 = vsub.s32 %v4110, %v4112
  %v4114 = vrot.slane %v4106, %v4113
  %v4116 = vunpack.c.l.s4 1983009808
  %v4117 = vunpack.c.0.s8 %v4116
  %v4118 = vlaneseq
  %v4119 = vshrl.u32 %v4118, 7
  %v4120 = vsub.s32 %v4117, %v4119
  %v4121 = vrot.slane %v4107, %v4120
  %v4122 = vcombine.low %v2883, %v2887
  %v4123 = vcombine.high %v2883, %v2887
  %v4125 = vunpack.c.l.s4 1983009808
  %v4126 = vunpack.c.0.s8 %v4125
  %v4127 = vlaneseq
  %v4128 = vshrl.u32 %v4127, 7
  %v4129 = vsub.s32 %v4126, %v4128
  %v4130 = vrot.slane %v4122, %v4129
  %v4132 = vunpack.c.l.s4 1983009808
  %v4133 = vunpack.c.0.s8 %v4132
  %v4134 = vlaneseq
  %v4135 = vshrl.u32 %v4134, 7
  %v4136 = vsub.s32 %v4133, %v4135
  %v4137 = vrot.slane %v4123, %v4136
  %v4138 = vcombine.low %v2885, %v2889
  %v4139 = vcombine.high %v2885, %v2889
  %v4141 = vunpack.c.l.s4 1983009808
  %v4142 = vunpack.c.0.s8 %v4141
  %v4143 = vlaneseq
  %v4144 = vshrl.u32 %v4143, 7
  %v4145 = vsub.s32 %v4142, %v4144
  %v4146 = vrot.slane %v4138, %v4145
  %v4148 = vunpack.c.l.s4 1983009808
  %v4149 = vunpack.c.0.s8 %v4148
  %v4150 = vlaneseq
  %v4151 = vshrl.u32 %v4150, 7
  %v4152 = vsub.s32 %v4149, %v4151
  %v4153 = vrot.slane %v4139, %v4152
  %v4154 = vcombine.low %v4098, %v4114
  %v4155 = vcombine.high %v4098, %v4114
  %v4157 = vunpack.c.l.s4 1934713408
  %v4158 = vunpack.c.0.s8 %v4157
  %v4159 = vlaneseq
  %v4160 = vshrl.u32 %v4159, 7
  %v4161 = vsub.s32 %v4158, %v4160
  %v4162 = vrot.slane %v4154, %v4161
  %v4164 = vunpack.c.l.s4 1934713408
  %v4165 = vunpack.c.0.s8 %v4164
  %v4166 = vlaneseq
  %v4167 = vshrl.u32 %v4166, 7
  %v4168 = vsub.s32 %v4165, %v4167
  %v4169 = vrot.slane %v4155, %v4168
  %v4170 = vcombine.low %v4105, %v4121
  %v4171 = vcombine.high %v4105, %v4121
  %v4173 = vunpack.c.l.s4 1934713408
  %v4174 = vunpack.c.0.s8 %v4173
  %v4175 = vlaneseq
  %v4176 = vshrl.u32 %v4175, 7
  %v4177 = vsub.s32 %v4174, %v4176
  %v4178 = vrot.slane %v4170, %v4177
  %v4180 = vunpack.c.l.s4 1934713408
  %v4181 = vunpack.c.0.s8 %v4180
  %v4182 = vlaneseq
  %v4183 = vshrl.u32 %v4182, 7
  %v4184 = vsub.s32 %v4181, %v4183
  %v4185 = vrot.slane %v4171, %v4184
  %v4186 = vcombine.low %v4130, %v4146
  %v4187 = vcombine.high %v4130, %v4146
  %v4189 = vunpack.c.l.s4 1934713408
  %v4190 = vunpack.c.0.s8 %v4189
  %v4191 = vlaneseq
  %v4192 = vshrl.u32 %v4191, 7
  %v4193 = vsub.s32 %v4190, %v4192
  %v4194 = vrot.slane %v4186, %v4193
  %v4196 = vunpack.c.l.s4 1934713408
  %v4197 = vunpack.c.0.s8 %v4196
  %v4198 = vlaneseq
  %v4199 = vshrl.u32 %v4198, 7
  %v4200 = vsub.s32 %v4197, %v4199
  %v4201 = vrot.slane %v4187, %v4200
  %v4202 = vcombine.low %v4137, %v4153
  %v4203 = vcombine.high %v4137, %v4153
  %v4205 = vunpack.c.l.s4 1934713408
  %v4206 = vunpack.c.0.s8 %v4205
  %v4207 = vlaneseq
  %v4208 = vshrl.u32 %v4207, 7
  %v4209 = vsub.s32 %v4206, %v4208
  %v4210 = vrot.slane %v4202, %v4209
  %v4212 = vunpack.c.l.s4 1934713408
  %v4213 = vunpack.c.0.s8 %v4212
  %v4214 = vlaneseq
  %v4215 = vshrl.u32 %v4214, 7
  %v4216 = vsub.s32 %v4213, %v4215
  %v4217 = vrot.slane %v4203, %v4216
  %v4218 = vcombine.low %v4162, %v4194
  %v4219 = vcombine.high %v4162, %v4194
  %v4220 = vcombine.low %v4169, %v4201
  %v4221 = vcombine.high %v4169, %v4201
  %v4222 = vcombine.low %v4178, %v4210
  %v4223 = vcombine.high %v4178, %v4210
  %v4224 = vcombine.low %v4185, %v4217
  %v4225 = vcombine.high %v4185, %v4217
  %v4226 = vcombine.low %v2891, %v2895
  %v4227 = vcombine.high %v2891, %v2895
  %v4229 = vunpack.c.l.s4 1983009808
  %v4230 = vunpack.c.0.s8 %v4229
  %v4231 = vlaneseq
  %v4232 = vshrl.u32 %v4231, 7
  %v4233 = vsub.s32 %v4230, %v4232
  %v4234 = vrot.slane %v4226, %v4233
  %v4236 = vunpack.c.l.s4 1983009808
  %v4237 = vunpack.c.0.s8 %v4236
  %v4238 = vlaneseq
  %v4239 = vshrl.u32 %v4238, 7
  %v4240 = vsub.s32 %v4237, %v4239
  %v4241 = vrot.slane %v4227, %v4240
  %v4242 = vcombine.low %v2893, %v2897
  %v4243 = vcombine.high %v2893, %v2897
  %v4245 = vunpack.c.l.s4 1983009808
  %v4246 = vunpack.c.0.s8 %v4245
  %v4247 = vlaneseq
  %v4248 = vshrl.u32 %v4247, 7
  %v4249 = vsub.s32 %v4246, %v4248
  %v4250 = vrot.slane %v4242, %v4249
  %v4252 = vunpack.c.l.s4 1983009808
  %v4253 = vunpack.c.0.s8 %v4252
  %v4254 = vlaneseq
  %v4255 = vshrl.u32 %v4254, 7
  %v4256 = vsub.s32 %v4253, %v4255
  %v4257 = vrot.slane %v4243, %v4256
  %v4258 = vcombine.low %v2899, %v2903
  %v4259 = vcombine.high %v2899, %v2903
  %v4261 = vunpack.c.l.s4 1983009808
  %v4262 = vunpack.c.0.s8 %v4261
  %v4263 = vlaneseq
  %v4264 = vshrl.u32 %v4263, 7
  %v4265 = vsub.s32 %v4262, %v4264
  %v4266 = vrot.slane %v4258, %v4265
  %v4268 = vunpack.c.l.s4 1983009808
  %v4269 = vunpack.c.0.s8 %v4268
  %v4270 = vlaneseq
  %v4271 = vshrl.u32 %v4270, 7
  %v4272 = vsub.s32 %v4269, %v4271
  %v4273 = vrot.slane %v4259, %v4272
  %v4274 = vcombine.low %v2901, %v2905
  %v4275 = vcombine.high %v2901, %v2905
  %v4277 = vunpack.c.l.s4 1983009808
  %v4278 = vunpack.c.0.s8 %v4277
  %v4279 = vlaneseq
  %v4280 = vshrl.u32 %v4279, 7
  %v4281 = vsub.s32 %v4278, %v4280
  %v4282 = vrot.slane %v4274, %v4281
  %v4284 = vunpack.c.l.s4 1983009808
  %v4285 = vunpack.c.0.s8 %v4284
  %v4286 = vlaneseq
  %v4287 = vshrl.u32 %v4286, 7
  %v4288 = vsub.s32 %v4285, %v4287
  %v4289 = vrot.slane %v4275, %v4288
  %v4290 = vcombine.low %v4234, %v4250
  %v4291 = vcombine.high %v4234, %v4250
  %v4293 = vunpack.c.l.s4 1934713408
  %v4294 = vunpack.c.0.s8 %v4293
  %v4295 = vlaneseq
  %v4296 = vshrl.u32 %v4295, 7
  %v4297 = vsub.s32 %v4294, %v4296
  %v4298 = vrot.slane %v4290, %v4297
  %v4300 = vunpack.c.l.s4 1934713408
  %v4301 = vunpack.c.0.s8 %v4300
  %v4302 = vlaneseq
  %v4303 = vshrl.u32 %v4302, 7
  %v4304 = vsub.s32 %v4301, %v4303
  %v4305 = vrot.slane %v4291, %v4304
  %v4306 = vcombine.low %v4241, %v4257
  %v4307 = vcombine.high %v4241, %v4257
  %v4309 = vunpack.c.l.s4 1934713408
  %v4310 = vunpack.c.0.s8 %v4309
  %v4311 = vlaneseq
  %v4312 = vshrl.u32 %v4311, 7
  %v4313 = vsub.s32 %v4310, %v4312
  %v4314 = vrot.slane %v4306, %v4313
  %v4316 = vunpack.c.l.s4 1934713408
  %v4317 = vunpack.c.0.s8 %v4316
  %v4318 = vlaneseq
  %v4319 = vshrl.u32 %v4318, 7
  %v4320 = vsub.s32 %v4317, %v4319
  %v4321 = vrot.slane %v4307, %v4320
  %v4322 = vcombine.low %v4266, %v4282
  %v4323 = vcombine.high %v4266, %v4282
  %v4325 = vunpack.c.l.s4 1934713408
  %v4326 = vunpack.c.0.s8 %v4325
  %v4327 = vlaneseq
  %v4328 = vshrl.u32 %v4327, 7
  %v4329 = vsub.s32 %v4326, %v4328
  %v4330 = vrot.slane %v4322, %v4329
  %v4332 = vunpack.c.l.s4 1934713408
  %v4333 = vunpack.c.0.s8 %v4332
  %v4334 = vlaneseq
  %v4335 = vshrl.u32 %v4334, 7
  %v4336 = vsub.s32 %v4333, %v4335
  %v4337 = vrot.slane %v4323, %v4336
  %v4338 = vcombine.low %v4273, %v4289
  %v4339 = vcombine.high %v4273, %v4289
  %v4341 = vunpack.c.l.s4 1934713408
  %v4342 = vunpack.c.0.s8 %v4341
  %v4343 = vlaneseq
  %v4344 = vshrl.u32 %v4343, 7
  %v4345 = vsub.s32 %v4342, %v4344
  %v4346 = vrot.slane %v4338, %v4345
  %v4348 = vunpack.c.l.s4 1934713408
  %v4349 = vunpack.c.0.s8 %v4348
  %v4350 = vlaneseq
  %v4351 = vshrl.u32 %v4350, 7
  %v4352 = vsub.s32 %v4349, %v4351
  %v4353 = vrot.slane %v4339, %v4352
  %v4354 = vcombine.low %v4298, %v4330
  %v4355 = vcombine.high %v4298, %v4330
  %v4356 = vcombine.low %v4305, %v4337
  %v4357 = vcombine.high %v4305, %v4337
  %v4358 = vcombine.low %v4314, %v4346
  %v4359 = vcombine.high %v4314, %v4346
  %v4360 = vcombine.low %v4321, %v4353
  %v4361 = vcombine.high %v4321, %v4353
  %v4362 = vcombine.low %v2907, %v2911
  %v4363 = vcombine.high %v2907, %v2911
  %v4365 = vunpack.c.l.s4 1983009808
  %v4366 = vunpack.c.0.s8 %v4365
  %v4367 = vlaneseq
  %v4368 = vshrl.u32 %v4367, 7
  %v4369 = vsub.s32 %v4366, %v4368
  %v4370 = vrot.slane %v4362, %v4369
  %v4372 = vunpack.c.l.s4 1983009808
  %v4373 = vunpack.c.0.s8 %v4372
  %v4374 = vlaneseq
  %v4375 = vshrl.u32 %v4374, 7
  %v4376 = vsub.s32 %v4373, %v4375
  %v4377 = vrot.slane %v4363, %v4376
  %v4378 = vcombine.low %v2909, %v2913
  %v4379 = vcombine.high %v2909, %v2913
  %v4381 = vunpack.c.l.s4 1983009808
  %v4382 = vunpack.c.0.s8 %v4381
  %v4383 = vlaneseq
  %v4384 = vshrl.u32 %v4383, 7
  %v4385 = vsub.s32 %v4382, %v4384
  %v4386 = vrot.slane %v4378, %v4385
  %v4388 = vunpack.c.l.s4 1983009808
  %v4389 = vunpack.c.0.s8 %v4388
  %v4390 = vlaneseq
  %v4391 = vshrl.u32 %v4390, 7
  %v4392 = vsub.s32 %v4389, %v4391
  %v4393 = vrot.slane %v4379, %v4392
  %v4394 = vcombine.low %v2915, %v2919
  %v4395 = vcombine.high %v2915, %v2919
  %v4397 = vunpack.c.l.s4 1983009808
  %v4398 = vunpack.c.0.s8 %v4397
  %v4399 = vlaneseq
  %v4400 = vshrl.u32 %v4399, 7
  %v4401 = vsub.s32 %v4398, %v4400
  %v4402 = vrot.slane %v4394, %v4401
  %v4404 = vunpack.c.l.s4 1983009808
  %v4405 = vunpack.c.0.s8 %v4404
  %v4406 = vlaneseq
  %v4407 = vshrl.u32 %v4406, 7
  %v4408 = vsub.s32 %v4405, %v4407
  %v4409 = vrot.slane %v4395, %v4408
  %v4410 = vcombine.low %v2917, %v2921
  %v4411 = vcombine.high %v2917, %v2921
  %v4413 = vunpack.c.l.s4 1983009808
  %v4414 = vunpack.c.0.s8 %v4413
  %v4415 = vlaneseq
  %v4416 = vshrl.u32 %v4415, 7
  %v4417 = vsub.s32 %v4414, %v4416
  %v4418 = vrot.slane %v4410, %v4417
  %v4420 = vunpack.c.l.s4 1983009808
  %v4421 = vunpack.c.0.s8 %v4420
  %v4422 = vlaneseq
  %v4423 = vshrl.u32 %v4422, 7
  %v4424 = vsub.s32 %v4421, %v4423
  %v4425 = vrot.slane %v4411, %v4424
  %v4426 = vcombine.low %v4370, %v4386
  %v4427 = vcombine.high %v4370, %v4386
  %v4429 = vunpack.c.l.s4 1934713408
  %v4430 = vunpack.c.0.s8 %v4429
  %v4431 = vlaneseq
  %v4432 = vshrl.u32 %v4431, 7
  %v4433 = vsub.s32 %v4430, %v4432
  %v4434 = vrot.slane %v4426, %v4433
  %v4436 = vunpack.c.l.s4 1934713408
  %v4437 = vunpack.c.0.s8 %v4436
  %v4438 = vlaneseq
  %v4439 = vshrl.u32 %v4438, 7
  %v4440 = vsub.s32 %v4437, %v4439
  %v4441 = vrot.slane %v4427, %v4440
  %v4442 = vcombine.low %v4377, %v4393
  %v4443 = vcombine.high %v4377, %v4393
  %v4445 = vunpack.c.l.s4 1934713408
  %v4446 = vunpack.c.0.s8 %v4445
  %v4447 = vlaneseq
  %v4448 = vshrl.u32 %v4447, 7
  %v4449 = vsub.s32 %v4446, %v4448
  %v4450 = vrot.slane %v4442, %v4449
  %v4452 = vunpack.c.l.s4 1934713408
  %v4453 = vunpack.c.0.s8 %v4452
  %v4454 = vlaneseq
  %v4455 = vshrl.u32 %v4454, 7
  %v4456 = vsub.s32 %v4453, %v4455
  %v4457 = vrot.slane %v4443, %v4456
  %v4458 = vcombine.low %v4402, %v4418
  %v4459 = vcombine.high %v4402, %v4418
  %v4461 = vunpack.c.l.s4 1934713408
  %v4462 = vunpack.c.0.s8 %v4461
  %v4463 = vlaneseq
  %v4464 = vshrl.u32 %v4463, 7
  %v4465 = vsub.s32 %v4462, %v4464
  %v4466 = vrot.slane %v4458, %v4465
  %v4468 = vunpack.c.l.s4 1934713408
  %v4469 = vunpack.c.0.s8 %v4468
  %v4470 = vlaneseq
  %v4471 = vshrl.u32 %v4470, 7
  %v4472 = vsub.s32 %v4469, %v4471
  %v4473 = vrot.slane %v4459, %v4472
  %v4474 = vcombine.low %v4409, %v4425
  %v4475 = vcombine.high %v4409, %v4425
  %v4477 = vunpack.c.l.s4 1934713408
  %v4478 = vunpack.c.0.s8 %v4477
  %v4479 = vlaneseq
  %v4480 = vshrl.u32 %v4479, 7
  %v4481 = vsub.s32 %v4478, %v4480
  %v4482 = vrot.slane %v4474, %v4481
  %v4484 = vunpack.c.l.s4 1934713408
  %v4485 = vunpack.c.0.s8 %v4484
  %v4486 = vlaneseq
  %v4487 = vshrl.u32 %v4486, 7
  %v4488 = vsub.s32 %v4485, %v4487
  %v4489 = vrot.slane %v4475, %v4488
  %v4490 = vcombine.low %v4434, %v4466
  %v4491 = vcombine.high %v4434, %v4466
  %v4492 = vcombine.low %v4441, %v4473
  %v4493 = vcombine.high %v4441, %v4473
  %v4494 = vcombine.low %v4450, %v4482
  %v4495 = vcombine.high %v4450, %v4482
  %v4496 = vcombine.low %v4457, %v4489
  %v4497 = vcombine.high %v4457, %v4489
  %v4498 = vcombine.low %v2923, %v2927
  %v4499 = vcombine.high %v2923, %v2927
  %v4501 = vunpack.c.l.s4 1983009808
  %v4502 = vunpack.c.0.s8 %v4501
  %v4503 = vlaneseq
  %v4504 = vshrl.u32 %v4503, 7
  %v4505 = vsub.s32 %v4502, %v4504
  %v4506 = vrot.slane %v4498, %v4505
  %v4508 = vunpack.c.l.s4 1983009808
  %v4509 = vunpack.c.0.s8 %v4508
  %v4510 = vlaneseq
  %v4511 = vshrl.u32 %v4510, 7
  %v4512 = vsub.s32 %v4509, %v4511
  %v4513 = vrot.slane %v4499, %v4512
  %v4514 = vcombine.low %v2925, %v2929
  %v4515 = vcombine.high %v2925, %v2929
  %v4517 = vunpack.c.l.s4 1983009808
  %v4518 = vunpack.c.0.s8 %v4517
  %v4519 = vlaneseq
  %v4520 = vshrl.u32 %v4519, 7
  %v4521 = vsub.s32 %v4518, %v4520
  %v4522 = vrot.slane %v4514, %v4521
  %v4524 = vunpack.c.l.s4 1983009808
  %v4525 = vunpack.c.0.s8 %v4524
  %v4526 = vlaneseq
  %v4527 = vshrl.u32 %v4526, 7
  %v4528 = vsub.s32 %v4525, %v4527
  %v4529 = vrot.slane %v4515, %v4528
  %v4530 = vcombine.low %v2931, %v2935
  %v4531 = vcombine.high %v2931, %v2935
  %v4533 = vunpack.c.l.s4 1983009808
  %v4534 = vunpack.c.0.s8 %v4533
  %v4535 = vlaneseq
  %v4536 = vshrl.u32 %v4535, 7
  %v4537 = vsub.s32 %v4534, %v4536
  %v4538 = vrot.slane %v4530, %v4537
  %v4540 = vunpack.c.l.s4 1983009808
  %v4541 = vunpack.c.0.s8 %v4540
  %v4542 = vlaneseq
  %v4543 = vshrl.u32 %v4542, 7
  %v4544 = vsub.s32 %v4541, %v4543
  %v4545 = vrot.slane %v4531, %v4544
  %v4546 = vcombine.low %v2933, %v2937
  %v4547 = vcombine.high %v2933, %v2937
  %v4549 = vunpack.c.l.s4 1983009808
  %v4550 = vunpack.c.0.s8 %v4549
  %v4551 = vlaneseq
  %v4552 = vshrl.u32 %v4551, 7
  %v4553 = vsub.s32 %v4550, %v4552
  %v4554 = vrot.slane %v4546, %v4553
  %v4556 = vunpack.c.l.s4 1983009808
  %v4557 = vunpack.c.0.s8 %v4556
  %v4558 = vlaneseq
  %v4559 = vshrl.u32 %v4558, 7
  %v4560 = vsub.s32 %v4557, %v4559
  %v4561 = vrot.slane %v4547, %v4560
  %v4562 = vcombine.low %v4506, %v4522
  %v4563 = vcombine.high %v4506, %v4522
  %v4565 = vunpack.c.l.s4 1934713408
  %v4566 = vunpack.c.0.s8 %v4565
  %v4567 = vlaneseq
  %v4568 = vshrl.u32 %v4567, 7
  %v4569 = vsub.s32 %v4566, %v4568
  %v4570 = vrot.slane %v4562, %v4569
  %v4572 = vunpack.c.l.s4 1934713408
  %v4573 = vunpack.c.0.s8 %v4572
  %v4574 = vlaneseq
  %v4575 = vshrl.u32 %v4574, 7
  %v4576 = vsub.s32 %v4573, %v4575
  %v4577 = vrot.slane %v4563, %v4576
  %v4578 = vcombine.low %v4513, %v4529
  %v4579 = vcombine.high %v4513, %v4529
  %v4581 = vunpack.c.l.s4 1934713408
  %v4582 = vunpack.c.0.s8 %v4581
  %v4583 = vlaneseq
  %v4584 = vshrl.u32 %v4583, 7
  %v4585 = vsub.s32 %v4582, %v4584
  %v4586 = vrot.slane %v4578, %v4585
  %v4588 = vunpack.c.l.s4 1934713408
  %v4589 = vunpack.c.0.s8 %v4588
  %v4590 = vlaneseq
  %v4591 = vshrl.u32 %v4590, 7
  %v4592 = vsub.s32 %v4589, %v4591
  %v4593 = vrot.slane %v4579, %v4592
  %v4594 = vcombine.low %v4538, %v4554
  %v4595 = vcombine.high %v4538, %v4554
  %v4597 = vunpack.c.l.s4 1934713408
  %v4598 = vunpack.c.0.s8 %v4597
  %v4599 = vlaneseq
  %v4600 = vshrl.u32 %v4599, 7
  %v4601 = vsub.s32 %v4598, %v4600
  %v4602 = vrot.slane %v4594, %v4601
  %v4604 = vunpack.c.l.s4 1934713408
  %v4605 = vunpack.c.0.s8 %v4604
  %v4606 = vlaneseq
  %v4607 = vshrl.u32 %v4606, 7
  %v4608 = vsub.s32 %v4605, %v4607
  %v4609 = vrot.slane %v4595, %v4608
  %v4610 = vcombine.low %v4545, %v4561
  %v4611 = vcombine.high %v4545, %v4561
  %v4613 = vunpack.c.l.s4 1934713408
  %v4614 = vunpack.c.0.s8 %v4613
  %v4615 = vlaneseq
  %v4616 = vshrl.u32 %v4615, 7
  %v4617 = vsub.s32 %v4614, %v4616
  %v4618 = vrot.slane %v4610, %v4617
  %v4620 = vunpack.c.l.s4 1934713408
  %v4621 = vunpack.c.0.s8 %v4620
  %v4622 = vlaneseq
  %v4623 = vshrl.u32 %v4622, 7
  %v4624 = vsub.s32 %v4621, %v4623
  %v4625 = vrot.slane %v4611, %v4624
  %v4626 = vcombine.low %v4570, %v4602
  %v4627 = vcombine.high %v4570, %v4602
  %v4628 = vcombine.low %v4577, %v4609
  %v4629 = vcombine.high %v4577, %v4609
  %v4630 = vcombine.low %v4586, %v4618
  %v4631 = vcombine.high %v4586, %v4618
  %v4632 = vcombine.low %v4593, %v4625
  %v4633 = vcombine.high %v4593, %v4625
  %v4634 = vcombine.low %v2939, %v2943
  %v4635 = vcombine.high %v2939, %v2943
  %v4637 = vunpack.c.l.s4 1983009808
  %v4638 = vunpack.c.0.s8 %v4637
  %v4639 = vlaneseq
  %v4640 = vshrl.u32 %v4639, 7
  %v4641 = vsub.s32 %v4638, %v4640
  %v4642 = vrot.slane %v4634, %v4641
  %v4644 = vunpack.c.l.s4 1983009808
  %v4645 = vunpack.c.0.s8 %v4644
  %v4646 = vlaneseq
  %v4647 = vshrl.u32 %v4646, 7
  %v4648 = vsub.s32 %v4645, %v4647
  %v4649 = vrot.slane %v4635, %v4648
  %v4650 = vcombine.low %v2941, %v2945
  %v4651 = vcombine.high %v2941, %v2945
  %v4653 = vunpack.c.l.s4 1983009808
  %v4654 = vunpack.c.0.s8 %v4653
  %v4655 = vlaneseq
  %v4656 = vshrl.u32 %v4655, 7
  %v4657 = vsub.s32 %v4654, %v4656
  %v4658 = vrot.slane %v4650, %v4657
  %v4660 = vunpack.c.l.s4 1983009808
  %v4661 = vunpack.c.0.s8 %v4660
  %v4662 = vlaneseq
  %v4663 = vshrl.u32 %v4662, 7
  %v4664 = vsub.s32 %v4661, %v4663
  %v4665 = vrot.slane %v4651, %v4664
  %v4666 = vcombine.low %v2947, %v2951
  %v4667 = vcombine.high %v2947, %v2951
  %v4669 = vunpack.c.l.s4 1983009808
  %v4670 = vunpack.c.0.s8 %v4669
  %v4671 = vlaneseq
  %v4672 = vshrl.u32 %v4671, 7
  %v4673 = vsub.s32 %v4670, %v4672
  %v4674 = vrot.slane %v4666, %v4673
  %v4676 = vunpack.c.l.s4 1983009808
  %v4677 = vunpack.c.0.s8 %v4676
  %v4678 = vlaneseq
  %v4679 = vshrl.u32 %v4678, 7
  %v4680 = vsub.s32 %v4677, %v4679
  %v4681 = vrot.slane %v4667, %v4680
  %v4682 = vcombine.low %v2949, %v2953
  %v4683 = vcombine.high %v2949, %v2953
  %v4685 = vunpack.c.l.s4 1983009808
  %v4686 = vunpack.c.0.s8 %v4685
  %v4687 = vlaneseq
  %v4688 = vshrl.u32 %v4687, 7
  %v4689 = vsub.s32 %v4686, %v4688
  %v4690 = vrot.slane %v4682, %v4689
  %v4692 = vunpack.c.l.s4 1983009808
  %v4693 = vunpack.c.0.s8 %v4692
  %v4694 = vlaneseq
  %v4695 = vshrl.u32 %v4694, 7
  %v4696 = vsub.s32 %v4693, %v4695
  %v4697 = vrot.slane %v4683, %v4696
  %v4698 = vcombine.low %v4642, %v4658
  %v4699 = vcombine.high %v4642, %v4658
  %v4701 = vunpack.c.l.s4 1934713408
  %v4702 = vunpack.c.0.s8 %v4701
  %v4703 = vlaneseq
  %v4704 = vshrl.u32 %v4703, 7
  %v4705 = vsub.s32 %v4702, %v4704
  %v4706 = vrot.slane %v4698, %v4705
  %v4708 = vunpack.c.l.s4 1934713408
  %v4709 = vunpack.c.0.s8 %v4708
  %v4710 = vlaneseq
  %v4711 = vshrl.u32 %v4710, 7
  %v4712 = vsub.s32 %v4709, %v4711
  %v4713 = vrot.slane %v4699, %v4712
  %v4714 = vcombine.low %v4649, %v4665
  %v4715 = vcombine.high %v4649, %v4665
  %v4717 = vunpack.c.l.s4 1934713408
  %v4718 = vunpack.c.0.s8 %v4717
  %v4719 = vlaneseq
  %v4720 = vshrl.u32 %v4719, 7
  %v4721 = vsub.s32 %v4718, %v4720
  %v4722 = vrot.slane %v4714, %v4721
  %v4724 = vunpack.c.l.s4 1934713408
  %v4725 = vunpack.c.0.s8 %v4724
  %v4726 = vlaneseq
  %v4727 = vshrl.u32 %v4726, 7
  %v4728 = vsub.s32 %v4725, %v4727
  %v4729 = vrot.slane %v4715, %v4728
  %v4730 = vcombine.low %v4674, %v4690
  %v4731 = vcombine.high %v4674, %v4690
  %v4733 = vunpack.c.l.s4 1934713408
  %v4734 = vunpack.c.0.s8 %v4733
  %v4735 = vlaneseq
  %v4736 = vshrl.u32 %v4735, 7
  %v4737 = vsub.s32 %v4734, %v4736
  %v4738 = vrot.slane %v4730, %v4737
  %v4740 = vunpack.c.l.s4 1934713408
  %v4741 = vunpack.c.0.s8 %v4740
  %v4742 = vlaneseq
  %v4743 = vshrl.u32 %v4742, 7
  %v4744 = vsub.s32 %v4741, %v4743
  %v4745 = vrot.slane %v4731, %v4744
  %v4746 = vcombine.low %v4681, %v4697
  %v4747 = vcombine.high %v4681, %v4697
  %v4749 = vunpack.c.l.s4 1934713408
  %v4750 = vunpack.c.0.s8 %v4749
  %v4751 = vlaneseq
  %v4752 = vshrl.u32 %v4751, 7
  %v4753 = vsub.s32 %v4750, %v4752
  %v4754 = vrot.slane %v4746, %v4753
  %v4756 = vunpack.c.l.s4 1934713408
  %v4757 = vunpack.c.0.s8 %v4756
  %v4758 = vlaneseq
  %v4759 = vshrl.u32 %v4758, 7
  %v4760 = vsub.s32 %v4757, %v4759
  %v4761 = vrot.slane %v4747, %v4760
  %v4762 = vcombine.low %v4706, %v4738
  %v4763 = vcombine.high %v4706, %v4738
  %v4764 = vcombine.low %v4713, %v4745
  %v4765 = vcombine.high %v4713, %v4745
  %v4766 = vcombine.low %v4722, %v4754
  %v4767 = vcombine.high %v4722, %v4754
  %v4768 = vcombine.low %v4729, %v4761
  %v4769 = vcombine.high %v4729, %v4761
  %v4770 = vcombine.low %v2955, %v2959
  %v4771 = vcombine.high %v2955, %v2959
  %v4773 = vunpack.c.l.s4 1983009808
  %v4774 = vunpack.c.0.s8 %v4773
  %v4775 = vlaneseq
  %v4776 = vshrl.u32 %v4775, 7
  %v4777 = vsub.s32 %v4774, %v4776
  %v4778 = vrot.slane %v4770, %v4777
  %v4780 = vunpack.c.l.s4 1983009808
  %v4781 = vunpack.c.0.s8 %v4780
  %v4782 = vlaneseq
  %v4783 = vshrl.u32 %v4782, 7
  %v4784 = vsub.s32 %v4781, %v4783
  %v4785 = vrot.slane %v4771, %v4784
  %v4786 = vcombine.low %v2957, %v2961
  %v4787 = vcombine.high %v2957, %v2961
  %v4789 = vunpack.c.l.s4 1983009808
  %v4790 = vunpack.c.0.s8 %v4789
  %v4791 = vlaneseq
  %v4792 = vshrl.u32 %v4791, 7
  %v4793 = vsub.s32 %v4790, %v4792
  %v4794 = vrot.slane %v4786, %v4793
  %v4796 = vunpack.c.l.s4 1983009808
  %v4797 = vunpack.c.0.s8 %v4796
  %v4798 = vlaneseq
  %v4799 = vshrl.u32 %v4798, 7
  %v4800 = vsub.s32 %v4797, %v4799
  %v4801 = vrot.slane %v4787, %v4800
  %v4802 = vcombine.low %v2963, %v2967
  %v4803 = vcombine.high %v2963, %v2967
  %v4805 = vunpack.c.l.s4 1983009808
  %v4806 = vunpack.c.0.s8 %v4805
  %v4807 = vlaneseq
  %v4808 = vshrl.u32 %v4807, 7
  %v4809 = vsub.s32 %v4806, %v4808
  %v4810 = vrot.slane %v4802, %v4809
  %v4812 = vunpack.c.l.s4 1983009808
  %v4813 = vunpack.c.0.s8 %v4812
  %v4814 = vlaneseq
  %v4815 = vshrl.u32 %v4814, 7
  %v4816 = vsub.s32 %v4813, %v4815
  %v4817 = vrot.slane %v4803, %v4816
  %v4818 = vcombine.low %v2965, %v2969
  %v4819 = vcombine.high %v2965, %v2969
  %v4821 = vunpack.c.l.s4 1983009808
  %v4822 = vunpack.c.0.s8 %v4821
  %v4823 = vlaneseq
  %v4824 = vshrl.u32 %v4823, 7
  %v4825 = vsub.s32 %v4822, %v4824
  %v4826 = vrot.slane %v4818, %v4825
  %v4828 = vunpack.c.l.s4 1983009808
  %v4829 = vunpack.c.0.s8 %v4828
  %v4830 = vlaneseq
  %v4831 = vshrl.u32 %v4830, 7
  %v4832 = vsub.s32 %v4829, %v4831
  %v4833 = vrot.slane %v4819, %v4832
  %v4834 = vcombine.low %v4778, %v4794
  %v4835 = vcombine.high %v4778, %v4794
  %v4837 = vunpack.c.l.s4 1934713408
  %v4838 = vunpack.c.0.s8 %v4837
  %v4839 = vlaneseq
  %v4840 = vshrl.u32 %v4839, 7
  %v4841 = vsub.s32 %v4838, %v4840
  %v4842 = vrot.slane %v4834, %v4841
  %v4844 = vunpack.c.l.s4 1934713408
  %v4845 = vunpack.c.0.s8 %v4844
  %v4846 = vlaneseq
  %v4847 = vshrl.u32 %v4846, 7
  %v4848 = vsub.s32 %v4845, %v4847
  %v4849 = vrot.slane %v4835, %v4848
  %v4850 = vcombine.low %v4785, %v4801
  %v4851 = vcombine.high %v4785, %v4801
  %v4853 = vunpack.c.l.s4 1934713408
  %v4854 = vunpack.c.0.s8 %v4853
  %v4855 = vlaneseq
  %v4856 = vshrl.u32 %v4855, 7
  %v4857 = vsub.s32 %v4854, %v4856
  %v4858 = vrot.slane %v4850, %v4857
  %v4860 = vunpack.c.l.s4 1934713408
  %v4861 = vunpack.c.0.s8 %v4860
  %v4862 = vlaneseq
  %v4863 = vshrl.u32 %v4862, 7
  %v4864 = vsub.s32 %v4861, %v4863
  %v4865 = vrot.slane %v4851, %v4864
  %v4866 = vcombine.low %v4810, %v4826
  %v4867 = vcombine.high %v4810, %v4826
  %v4869 = vunpack.c.l.s4 1934713408
  %v4870 = vunpack.c.0.s8 %v4869
  %v4871 = vlaneseq
  %v4872 = vshrl.u32 %v4871, 7
  %v4873 = vsub.s32 %v4870, %v4872
  %v4874 = vrot.slane %v4866, %v4873
  %v4876 = vunpack.c.l.s4 1934713408
  %v4877 = vunpack.c.0.s8 %v4876
  %v4878 = vlaneseq
  %v4879 = vshrl.u32 %v4878, 7
  %v4880 = vsub.s32 %v4877, %v4879
  %v4881 = vrot.slane %v4867, %v4880
  %v4882 = vcombine.low %v4817, %v4833
  %v4883 = vcombine.high %v4817, %v4833
  %v4885 = vunpack.c.l.s4 1934713408
  %v4886 = vunpack.c.0.s8 %v4885
  %v4887 = vlaneseq
  %v4888 = vshrl.u32 %v4887, 7
  %v4889 = vsub.s32 %v4886, %v4888
  %v4890 = vrot.slane %v4882, %v4889
  %v4892 = vunpack.c.l.s4 1934713408
  %v4893 = vunpack.c.0.s8 %v4892
  %v4894 = vlaneseq
  %v4895 = vshrl.u32 %v4894, 7
  %v4896 = vsub.s32 %v4893, %v4895
  %v4897 = vrot.slane %v4883, %v4896
  %v4898 = vcombine.low %v4842, %v4874
  %v4899 = vcombine.high %v4842, %v4874
  %v4900 = vcombine.low %v4849, %v4881
  %v4901 = vcombine.high %v4849, %v4881
  %v4902 = vcombine.low %v4858, %v4890
  %v4903 = vcombine.high %v4858, %v4890
  %v4904 = vcombine.low %v4865, %v4897
  %v4905 = vcombine.high %v4865, %v4897
  %v4906 = vcombine.low %v2971, %v2975
  %v4907 = vcombine.high %v2971, %v2975
  %v4909 = vunpack.c.l.s4 1983009808
  %v4910 = vunpack.c.0.s8 %v4909
  %v4911 = vlaneseq
  %v4912 = vshrl.u32 %v4911, 7
  %v4913 = vsub.s32 %v4910, %v4912
  %v4914 = vrot.slane %v4906, %v4913
  %v4916 = vunpack.c.l.s4 1983009808
  %v4917 = vunpack.c.0.s8 %v4916
  %v4918 = vlaneseq
  %v4919 = vshrl.u32 %v4918, 7
  %v4920 = vsub.s32 %v4917, %v4919
  %v4921 = vrot.slane %v4907, %v4920
  %v4922 = vcombine.low %v2973, %v2977
  %v4923 = vcombine.high %v2973, %v2977
  %v4925 = vunpack.c.l.s4 1983009808
  %v4926 = vunpack.c.0.s8 %v4925
  %v4927 = vlaneseq
  %v4928 = vshrl.u32 %v4927, 7
  %v4929 = vsub.s32 %v4926, %v4928
  %v4930 = vrot.slane %v4922, %v4929
  %v4932 = vunpack.c.l.s4 1983009808
  %v4933 = vunpack.c.0.s8 %v4932
  %v4934 = vlaneseq
  %v4935 = vshrl.u32 %v4934, 7
  %v4936 = vsub.s32 %v4933, %v4935
  %v4937 = vrot.slane %v4923, %v4936
  %v4938 = vcombine.low %v2979, %v2983
  %v4939 = vcombine.high %v2979, %v2983
  %v4941 = vunpack.c.l.s4 1983009808
  %v4942 = vunpack.c.0.s8 %v4941
  %v4943 = vlaneseq
  %v4944 = vshrl.u32 %v4943, 7
  %v4945 = vsub.s32 %v4942, %v4944
  %v4946 = vrot.slane %v4938, %v4945
  %v4948 = vunpack.c.l.s4 1983009808
  %v4949 = vunpack.c.0.s8 %v4948
  %v4950 = vlaneseq
  %v4951 = vshrl.u32 %v4950, 7
  %v4952 = vsub.s32 %v4949, %v4951
  %v4953 = vrot.slane %v4939, %v4952
  %v4954 = vcombine.low %v2981, %v2985
  %v4955 = vcombine.high %v2981, %v2985
  %v4957 = vunpack.c.l.s4 1983009808
  %v4958 = vunpack.c.0.s8 %v4957
  %v4959 = vlaneseq
  %v4960 = vshrl.u32 %v4959, 7
  %v4961 = vsub.s32 %v4958, %v4960
  %v4962 = vrot.slane %v4954, %v4961
  %v4964 = vunpack.c.l.s4 1983009808
  %v4965 = vunpack.c.0.s8 %v4964
  %v4966 = vlaneseq
  %v4967 = vshrl.u32 %v4966, 7
  %v4968 = vsub.s32 %v4965, %v4967
  %v4969 = vrot.slane %v4955, %v4968
  %v4970 = vcombine.low %v4914, %v4930
  %v4971 = vcombine.high %v4914, %v4930
  %v4973 = vunpack.c.l.s4 1934713408
  %v4974 = vunpack.c.0.s8 %v4973
  %v4975 = vlaneseq
  %v4976 = vshrl.u32 %v4975, 7
  %v4977 = vsub.s32 %v4974, %v4976
  %v4978 = vrot.slane %v4970, %v4977
  %v4980 = vunpack.c.l.s4 1934713408
  %v4981 = vunpack.c.0.s8 %v4980
  %v4982 = vlaneseq
  %v4983 = vshrl.u32 %v4982, 7
  %v4984 = vsub.s32 %v4981, %v4983
  %v4985 = vrot.slane %v4971, %v4984
  %v4986 = vcombine.low %v4921, %v4937
  %v4987 = vcombine.high %v4921, %v4937
  %v4989 = vunpack.c.l.s4 1934713408
  %v4990 = vunpack.c.0.s8 %v4989
  %v4991 = vlaneseq
  %v4992 = vshrl.u32 %v4991, 7
  %v4993 = vsub.s32 %v4990, %v4992
  %v4994 = vrot.slane %v4986, %v4993
  %v4996 = vunpack.c.l.s4 1934713408
  %v4997 = vunpack.c.0.s8 %v4996
  %v4998 = vlaneseq
  %v4999 = vshrl.u32 %v4998, 7
  %v5000 = vsub.s32 %v4997, %v4999
  %v5001 = vrot.slane %v4987, %v5000
  %v5002 = vcombine.low %v4946, %v4962
  %v5003 = vcombine.high %v4946, %v4962
  %v5005 = vunpack.c.l.s4 1934713408
  %v5006 = vunpack.c.0.s8 %v5005
  %v5007 = vlaneseq
  %v5008 = vshrl.u32 %v5007, 7
  %v5009 = vsub.s32 %v5006, %v5008
  %v5010 = vrot.slane %v5002, %v5009
  %v5012 = vunpack.c.l.s4 1934713408
  %v5013 = vunpack.c.0.s8 %v5012
  %v5014 = vlaneseq
  %v5015 = vshrl.u32 %v5014, 7
  %v5016 = vsub.s32 %v5013, %v5015
  %v5017 = vrot.slane %v5003, %v5016
  %v5018 = vcombine.low %v4953, %v4969
  %v5019 = vcombine.high %v4953, %v4969
  %v5021 = vunpack.c.l.s4 1934713408
  %v5022 = vunpack.c.0.s8 %v5021
  %v5023 = vlaneseq
  %v5024 = vshrl.u32 %v5023, 7
  %v5025 = vsub.s32 %v5022, %v5024
  %v5026 = vrot.slane %v5018, %v5025
  %v5028 = vunpack.c.l.s4 1934713408
  %v5029 = vunpack.c.0.s8 %v5028
  %v5030 = vlaneseq
  %v5031 = vshrl.u32 %v5030, 7
  %v5032 = vsub.s32 %v5029, %v5031
  %v5033 = vrot.slane %v5019, %v5032
  %v5034 = vcombine.low %v4978, %v5010
  %v5035 = vcombine.high %v4978, %v5010
  %v5036 = vcombine.low %v4985, %v5017
  %v5037 = vcombine.high %v4985, %v5017
  %v5038 = vcombine.low %v4994, %v5026
  %v5039 = vcombine.high %v4994, %v5026
  %v5040 = vcombine.low %v5001, %v5033
  %v5041 = vcombine.high %v5001, %v5033
  %v5042 = vcombine.low %v2987, %v2991
  %v5043 = vcombine.high %v2987, %v2991
  %v5045 = vunpack.c.l.s4 1983009808
  %v5046 = vunpack.c.0.s8 %v5045
  %v5047 = vlaneseq
  %v5048 = vshrl.u32 %v5047, 7
  %v5049 = vsub.s32 %v5046, %v5048
  %v5050 = vrot.slane %v5042, %v5049
  %v5052 = vunpack.c.l.s4 1983009808
  %v5053 = vunpack.c.0.s8 %v5052
  %v5054 = vlaneseq
  %v5055 = vshrl.u32 %v5054, 7
  %v5056 = vsub.s32 %v5053, %v5055
  %v5057 = vrot.slane %v5043, %v5056
  %v5058 = vcombine.low %v2989, %v2993
  %v5059 = vcombine.high %v2989, %v2993
  %v5061 = vunpack.c.l.s4 1983009808
  %v5062 = vunpack.c.0.s8 %v5061
  %v5063 = vlaneseq
  %v5064 = vshrl.u32 %v5063, 7
  %v5065 = vsub.s32 %v5062, %v5064
  %v5066 = vrot.slane %v5058, %v5065
  %v5068 = vunpack.c.l.s4 1983009808
  %v5069 = vunpack.c.0.s8 %v5068
  %v5070 = vlaneseq
  %v5071 = vshrl.u32 %v5070, 7
  %v5072 = vsub.s32 %v5069, %v5071
  %v5073 = vrot.slane %v5059, %v5072
  %v5074 = vcombine.low %v2995, %v2999
  %v5075 = vcombine.high %v2995, %v2999
  %v5077 = vunpack.c.l.s4 1983009808
  %v5078 = vunpack.c.0.s8 %v5077
  %v5079 = vlaneseq
  %v5080 = vshrl.u32 %v5079, 7
  %v5081 = vsub.s32 %v5078, %v5080
  %v5082 = vrot.slane %v5074, %v5081
  %v5084 = vunpack.c.l.s4 1983009808
  %v5085 = vunpack.c.0.s8 %v5084
  %v5086 = vlaneseq
  %v5087 = vshrl.u32 %v5086, 7
  %v5088 = vsub.s32 %v5085, %v5087
  %v5089 = vrot.slane %v5075, %v5088
  %v5090 = vcombine.low %v2997, %v3001
  %v5091 = vcombine.high %v2997, %v3001
  %v5093 = vunpack.c.l.s4 1983009808
  %v5094 = vunpack.c.0.s8 %v5093
  %v5095 = vlaneseq
  %v5096 = vshrl.u32 %v5095, 7
  %v5097 = vsub.s32 %v5094, %v5096
  %v5098 = vrot.slane %v5090, %v5097
  %v5100 = vunpack.c.l.s4 1983009808
  %v5101 = vunpack.c.0.s8 %v5100
  %v5102 = vlaneseq
  %v5103 = vshrl.u32 %v5102, 7
  %v5104 = vsub.s32 %v5101, %v5103
  %v5105 = vrot.slane %v5091, %v5104
  %v5106 = vcombine.low %v5050, %v5066
  %v5107 = vcombine.high %v5050, %v5066
  %v5109 = vunpack.c.l.s4 1934713408
  %v5110 = vunpack.c.0.s8 %v5109
  %v5111 = vlaneseq
  %v5112 = vshrl.u32 %v5111, 7
  %v5113 = vsub.s32 %v5110, %v5112
  %v5114 = vrot.slane %v5106, %v5113
  %v5116 = vunpack.c.l.s4 1934713408
  %v5117 = vunpack.c.0.s8 %v5116
  %v5118 = vlaneseq
  %v5119 = vshrl.u32 %v5118, 7
  %v5120 = vsub.s32 %v5117, %v5119
  %v5121 = vrot.slane %v5107, %v5120
  %v5122 = vcombine.low %v5057, %v5073
  %v5123 = vcombine.high %v5057, %v5073
  %v5125 = vunpack.c.l.s4 1934713408
  %v5126 = vunpack.c.0.s8 %v5125
  %v5127 = vlaneseq
  %v5128 = vshrl.u32 %v5127, 7
  %v5129 = vsub.s32 %v5126, %v5128
  %v5130 = vrot.slane %v5122, %v5129
  %v5132 = vunpack.c.l.s4 1934713408
  %v5133 = vunpack.c.0.s8 %v5132
  %v5134 = vlaneseq
  %v5135 = vshrl.u32 %v5134, 7
  %v5136 = vsub.s32 %v5133, %v5135
  %v5137 = vrot.slane %v5123, %v5136
  %v5138 = vcombine.low %v5082, %v5098
  %v5139 = vcombine.high %v5082, %v5098
  %v5141 = vunpack.c.l.s4 1934713408
  %v5142 = vunpack.c.0.s8 %v5141
  %v5143 = vlaneseq
  %v5144 = vshrl.u32 %v5143, 7
  %v5145 = vsub.s32 %v5142, %v5144
  %v5146 = vrot.slane %v5138, %v5145
  %v5148 = vunpack.c.l.s4 1934713408
  %v5149 = vunpack.c.0.s8 %v5148
  %v5150 = vlaneseq
  %v5151 = vshrl.u32 %v5150, 7
  %v5152 = vsub.s32 %v5149, %v5151
  %v5153 = vrot.slane %v5139, %v5152
  %v5154 = vcombine.low %v5089, %v5105
  %v5155 = vcombine.high %v5089, %v5105
  %v5157 = vunpack.c.l.s4 1934713408
  %v5158 = vunpack.c.0.s8 %v5157
  %v5159 = vlaneseq
  %v5160 = vshrl.u32 %v5159, 7
  %v5161 = vsub.s32 %v5158, %v5160
  %v5162 = vrot.slane %v5154, %v5161
  %v5164 = vunpack.c.l.s4 1934713408
  %v5165 = vunpack.c.0.s8 %v5164
  %v5166 = vlaneseq
  %v5167 = vshrl.u32 %v5166, 7
  %v5168 = vsub.s32 %v5165, %v5167
  %v5169 = vrot.slane %v5155, %v5168
  %v5170 = vcombine.low %v5114, %v5146
  %v5171 = vcombine.high %v5114, %v5146
  %v5172 = vcombine.low %v5121, %v5153
  %v5173 = vcombine.high %v5121, %v5153
  %v5174 = vcombine.low %v5130, %v5162
  %v5175 = vcombine.high %v5130, %v5162
  %v5176 = vcombine.low %v5137, %v5169
  %v5177 = vcombine.high %v5137, %v5169
  %v5178 = vadd.f32 %v3130, %v4218
  %5179 = vadd.xlane.f32.xlu0 %v5178
  %v5180 = vpop.xlane.xlu0 %5179
  %v5181 = vadd.f32 %v3131, %v4219
  %5182 = vadd.xlane.f32.xlu0 %v5181
  %v5183 = vpop.xlane.xlu0 %5182
  %v5184 = vadd.f32 %v3132, %v4220
  %5185 = vadd.xlane.f32.xlu0 %v5184
  %v5186 = vpop.xlane.xlu0 %5185
  %v5187 = vadd.f32 %v3133, %v4221
  %5188 = vadd.xlane.f32.xlu0 %v5187
  %v5189 = vpop.xlane.xlu0 %5188
  %v5190 = vadd.f32 %v3134, %v4222
  %5191 = vadd.xlane.f32.xlu0 %v5190
  %v5192 = vpop.xlane.xlu0 %5191
  %v5193 = vadd.f32 %v3135, %v4223
  %5194 = vadd.xlane.f32.xlu0 %v5193
  %v5195 = vpop.xlane.xlu0 %5194
  %v5196 = vadd.f32 %v3136, %v4224
  %5197 = vadd.xlane.f32.xlu0 %v5196
  %v5198 = vpop.xlane.xlu0 %5197
  %v5199 = vadd.f32 %v3137, %v4225
  %5200 = vadd.xlane.f32.xlu0 %v5199
  %v5201 = vpop.xlane.xlu0 %5200
  %v5202 = vadd.f32 %v3266, %v4354
  %5203 = vadd.xlane.f32.xlu0 %v5202
  %v5204 = vpop.xlane.xlu0 %5203
  %v5205 = vadd.f32 %v3267, %v4355
  %5206 = vadd.xlane.f32.xlu0 %v5205
  %v5207 = vpop.xlane.xlu0 %5206
  %v5208 = vadd.f32 %v3268, %v4356
  %5209 = vadd.xlane.f32.xlu0 %v5208
  %v5210 = vpop.xlane.xlu0 %5209
  %v5211 = vadd.f32 %v3269, %v4357
  %5212 = vadd.xlane.f32.xlu0 %v5211
  %v5213 = vpop.xlane.xlu0 %5212
  %v5214 = vadd.f32 %v3270, %v4358
  %5215 = vadd.xlane.f32.xlu0 %v5214
  %v5216 = vpop.xlane.xlu0 %5215
  %v5217 = vadd.f32 %v3271, %v4359
  %5218 = vadd.xlane.f32.xlu0 %v5217
  %v5219 = vpop.xlane.xlu0 %5218
  %v5220 = vadd.f32 %v3272, %v4360
  %5221 = vadd.xlane.f32.xlu0 %v5220
  %v5222 = vpop.xlane.xlu0 %5221
  %v5223 = vadd.f32 %v3273, %v4361
  %5224 = vadd.xlane.f32.xlu0 %v5223
  %v5225 = vpop.xlane.xlu0 %5224
  %v5226 = vadd.f32 %v3402, %v4490
  %5227 = vadd.xlane.f32.xlu0 %v5226
  %v5228 = vpop.xlane.xlu0 %5227
  %v5229 = vadd.f32 %v3403, %v4491
  %5230 = vadd.xlane.f32.xlu0 %v5229
  %v5231 = vpop.xlane.xlu0 %5230
  %v5232 = vadd.f32 %v3404, %v4492
  %5233 = vadd.xlane.f32.xlu0 %v5232
  %v5234 = vpop.xlane.xlu0 %5233
  %v5235 = vadd.f32 %v3405, %v4493
  %5236 = vadd.xlane.f32.xlu0 %v5235
  %v5237 = vpop.xlane.xlu0 %5236
  %v5238 = vadd.f32 %v3406, %v4494
  %5239 = vadd.xlane.f32.xlu0 %v5238
  %v5240 = vpop.xlane.xlu0 %5239
  %v5241 = vadd.f32 %v3407, %v4495
  %5242 = vadd.xlane.f32.xlu0 %v5241
  %v5243 = vpop.xlane.xlu0 %5242
  %v5244 = vadd.f32 %v3408, %v4496
  %5245 = vadd.xlane.f32.xlu0 %v5244
  %v5246 = vpop.xlane.xlu0 %5245
  %v5247 = vadd.f32 %v3409, %v4497
  %5248 = vadd.xlane.f32.xlu0 %v5247
  %v5249 = vpop.xlane.xlu0 %5248
  %v5250 = vadd.f32 %v3538, %v4626
  %5251 = vadd.xlane.f32.xlu0 %v5250
  %v5252 = vpop.xlane.xlu0 %5251
  %v5253 = vadd.f32 %v3539, %v4627
  %5254 = vadd.xlane.f32.xlu0 %v5253
  %v5255 = vpop.xlane.xlu0 %5254
  %v5256 = vadd.f32 %v3540, %v4628
  %5257 = vadd.xlane.f32.xlu0 %v5256
  %v5258 = vpop.xlane.xlu0 %5257
  %v5259 = vadd.f32 %v3541, %v4629
  %5260 = vadd.xlane.f32.xlu0 %v5259
  %v5261 = vpop.xlane.xlu0 %5260
  %v5262 = vadd.f32 %v3542, %v4630
  %5263 = vadd.xlane.f32.xlu0 %v5262
  %v5264 = vpop.xlane.xlu0 %5263
  %v5265 = vadd.f32 %v3543, %v4631
  %5266 = vadd.xlane.f32.xlu0 %v5265
  %v5267 = vpop.xlane.xlu0 %5266
  %v5268 = vadd.f32 %v3544, %v4632
  %5269 = vadd.xlane.f32.xlu0 %v5268
  %v5270 = vpop.xlane.xlu0 %5269
  %v5271 = vadd.f32 %v3545, %v4633
  %5272 = vadd.xlane.f32.xlu0 %v5271
  %v5273 = vpop.xlane.xlu0 %5272
  %v5274 = vadd.f32 %v3674, %v4762
  %5275 = vadd.xlane.f32.xlu0 %v5274
  %v5276 = vpop.xlane.xlu0 %5275
  %v5277 = vadd.f32 %v3675, %v4763
  %5278 = vadd.xlane.f32.xlu0 %v5277
  %v5279 = vpop.xlane.xlu0 %5278
  %v5280 = vadd.f32 %v3676, %v4764
  %5281 = vadd.xlane.f32.xlu0 %v5280
  %v5282 = vpop.xlane.xlu0 %5281
  %v5283 = vadd.f32 %v3677, %v4765
  %5284 = vadd.xlane.f32.xlu0 %v5283
  %v5285 = vpop.xlane.xlu0 %5284
  %v5286 = vadd.f32 %v3678, %v4766
  %5287 = vadd.xlane.f32.xlu0 %v5286
  %v5288 = vpop.xlane.xlu0 %5287
  %v5289 = vadd.f32 %v3679, %v4767
  %5290 = vadd.xlane.f32.xlu0 %v5289
  %v5291 = vpop.xlane.xlu0 %5290
  %v5292 = vadd.f32 %v3680, %v4768
  %5293 = vadd.xlane.f32.xlu0 %v5292
  %v5294 = vpop.xlane.xlu0 %5293
  %v5295 = vadd.f32 %v3681, %v4769
  %5296 = vadd.xlane.f32.xlu0 %v5295
  %v5297 = vpop.xlane.xlu0 %5296
  %v5298 = vadd.f32 %v3810, %v4898
  %5299 = vadd.xlane.f32.xlu0 %v5298
  %v5300 = vpop.xlane.xlu0 %5299
  %v5301 = vadd.f32 %v3811, %v4899
  %5302 = vadd.xlane.f32.xlu0 %v5301
  %v5303 = vpop.xlane.xlu0 %5302
  %v5304 = vadd.f32 %v3812, %v4900
  %5305 = vadd.xlane.f32.xlu0 %v5304
  %v5306 = vpop.xlane.xlu0 %5305
  %v5307 = vadd.f32 %v3813, %v4901
  %5308 = vadd.xlane.f32.xlu0 %v5307
  %v5309 = vpop.xlane.xlu0 %5308
  %v5310 = vadd.f32 %v3814, %v4902
  %5311 = vadd.xlane.f32.xlu0 %v5310
  %v5312 = vpop.xlane.xlu0 %5311
  %v5313 = vadd.f32 %v3815, %v4903
  %5314 = vadd.xlane.f32.xlu0 %v5313
  %v5315 = vpop.xlane.xlu0 %5314
  %v5316 = vadd.f32 %v3816, %v4904
  %5317 = vadd.xlane.f32.xlu0 %v5316
  %v5318 = vpop.xlane.xlu0 %5317
  %v5319 = vadd.f32 %v3817, %v4905
  %5320 = vadd.xlane.f32.xlu0 %v5319
  %v5321 = vpop.xlane.xlu0 %5320
  %v5322 = vadd.f32 %v3946, %v5034
  %5323 = vadd.xlane.f32.xlu0 %v5322
  %v5324 = vpop.xlane.xlu0 %5323
  %v5325 = vadd.f32 %v3947, %v5035
  %5326 = vadd.xlane.f32.xlu0 %v5325
  %v5327 = vpop.xlane.xlu0 %5326
  %v5328 = vadd.f32 %v3948, %v5036
  %5329 = vadd.xlane.f32.xlu0 %v5328
  %v5330 = vpop.xlane.xlu0 %5329
  %v5331 = vadd.f32 %v3949, %v5037
  %5332 = vadd.xlane.f32.xlu0 %v5331
  %v5333 = vpop.xlane.xlu0 %5332
  %v5334 = vadd.f32 %v3950, %v5038
  %5335 = vadd.xlane.f32.xlu0 %v5334
  %v5336 = vpop.xlane.xlu0 %5335
  %v5337 = vadd.f32 %v3951, %v5039
  %5338 = vadd.xlane.f32.xlu0 %v5337
  %v5339 = vpop.xlane.xlu0 %5338
  %v5340 = vadd.f32 %v3952, %v5040
  %5341 = vadd.xlane.f32.xlu0 %v5340
  %v5342 = vpop.xlane.xlu0 %5341
  %v5343 = vadd.f32 %v3953, %v5041
  %5344 = vadd.xlane.f32.xlu0 %v5343
  %v5345 = vpop.xlane.xlu0 %5344
  %v5346 = vadd.f32 %v4082, %v5170
  %5347 = vadd.xlane.f32.xlu0 %v5346
  %v5348 = vpop.xlane.xlu0 %5347
  %v5349 = vadd.f32 %v4083, %v5171
  %5350 = vadd.xlane.f32.xlu0 %v5349
  %v5351 = vpop.xlane.xlu0 %5350
  %v5352 = vadd.f32 %v4084, %v5172
  %5353 = vadd.xlane.f32.xlu0 %v5352
  %v5354 = vpop.xlane.xlu0 %5353
  %v5355 = vadd.f32 %v4085, %v5173
  %5356 = vadd.xlane.f32.xlu0 %v5355
  %v5357 = vpop.xlane.xlu0 %5356
  %v5358 = vadd.f32 %v4086, %v5174
  %5359 = vadd.xlane.f32.xlu0 %v5358
  %v5360 = vpop.xlane.xlu0 %5359
  %v5361 = vadd.f32 %v4087, %v5175
  %5362 = vadd.xlane.f32.xlu0 %v5361
  %v5363 = vpop.xlane.xlu0 %5362
  %v5364 = vadd.f32 %v4088, %v5176
  %5365 = vadd.xlane.f32.xlu0 %v5364
  %v5366 = vpop.xlane.xlu0 %5365
  %v5367 = vadd.f32 %v4089, %v5177
  %5368 = vadd.xlane.f32.xlu0 %v5367
  %v5369 = vpop.xlane.xlu0 %5368
  %v5370 = vmul.f32 %v5180, 0.00390625
  %v5371 = vmul.f32 %v5183, 0.00390625
  %v5372 = vmul.f32 %v5186, 0.00390625
  %v5373 = vmul.f32 %v5189, 0.00390625
  %v5374 = vmul.f32 %v5192, 0.00390625
  %v5375 = vmul.f32 %v5195, 0.00390625
  %v5376 = vmul.f32 %v5198, 0.00390625
  %v5377 = vmul.f32 %v5201, 0.00390625
  %v5378 = vmul.f32 %v5204, 0.00390625
  %v5379 = vmul.f32 %v5207, 0.00390625
  %v5380 = vmul.f32 %v5210, 0.00390625
  %v5381 = vmul.f32 %v5213, 0.00390625
  %v5382 = vmul.f32 %v5216, 0.00390625
  %v5383 = vmul.f32 %v5219, 0.00390625
  %v5384 = vmul.f32 %v5222, 0.00390625
  %v5385 = vmul.f32 %v5225, 0.00390625
  %v5386 = vmul.f32 %v5228, 0.00390625
  %v5387 = vmul.f32 %v5231, 0.00390625
  %v5388 = vmul.f32 %v5234, 0.00390625
  %v5389 = vmul.f32 %v5237, 0.00390625
  %v5390 = vmul.f32 %v5240, 0.00390625
  %v5391 = vmul.f32 %v5243, 0.00390625
  %v5392 = vmul.f32 %v5246, 0.00390625
  %v5393 = vmul.f32 %v5249, 0.00390625
  %v5394 = vmul.f32 %v5252, 0.00390625
  %v5395 = vmul.f32 %v5255, 0.00390625
  %v5396 = vmul.f32 %v5258, 0.00390625
  %v5397 = vmul.f32 %v5261, 0.00390625
  %v5398 = vmul.f32 %v5264, 0.00390625
  %v5399 = vmul.f32 %v5267, 0.00390625
  %v5400 = vmul.f32 %v5270, 0.00390625
  %v5401 = vmul.f32 %v5273, 0.00390625
  %v5402 = vmul.f32 %v5276, 0.00390625
  %v5403 = vmul.f32 %v5279, 0.00390625
  %v5404 = vmul.f32 %v5282, 0.00390625
  %v5405 = vmul.f32 %v5285, 0.00390625
  %v5406 = vmul.f32 %v5288, 0.00390625
  %v5407 = vmul.f32 %v5291, 0.00390625
  %v5408 = vmul.f32 %v5294, 0.00390625
  %v5409 = vmul.f32 %v5297, 0.00390625
  %v5410 = vmul.f32 %v5300, 0.00390625
  %v5411 = vmul.f32 %v5303, 0.00390625
  %v5412 = vmul.f32 %v5306, 0.00390625
  %v5413 = vmul.f32 %v5309, 0.00390625
  %v5414 = vmul.f32 %v5312, 0.00390625
  %v5415 = vmul.f32 %v5315, 0.00390625
  %v5416 = vmul.f32 %v5318, 0.00390625
  %v5417 = vmul.f32 %v5321, 0.00390625
  %v5418 = vmul.f32 %v5324, 0.00390625
  %v5419 = vmul.f32 %v5327, 0.00390625
  %v5420 = vmul.f32 %v5330, 0.00390625
  %v5421 = vmul.f32 %v5333, 0.00390625
  %v5422 = vmul.f32 %v5336, 0.00390625
  %v5423 = vmul.f32 %v5339, 0.00390625
  %v5424 = vmul.f32 %v5342, 0.00390625
  %v5425 = vmul.f32 %v5345, 0.00390625
  %v5426 = vmul.f32 %v5348, 0.00390625
  %v5427 = vmul.f32 %v5351, 0.00390625
  %v5428 = vmul.f32 %v5354, 0.00390625
  %v5429 = vmul.f32 %v5357, 0.00390625
  %v5430 = vmul.f32 %v5360, 0.00390625
  %v5431 = vmul.f32 %v5363, 0.00390625
  %v5432 = vmul.f32 %v5366, 0.00390625
  %v5433 = vmul.f32 %v5369, 0.00390625
  %v5434 = vld [vmem:[%s4] sm:$0xff]
  %v5435 = vld [vmem:[%s4 + $0x8] sm:$0xff]
  %v5436 = vld [vmem:[%s4 + $0x10] sm:$0xff]
  %v5437 = vld [vmem:[%s4 + $0x18] sm:$0xff]
  %v5438 = vld [vmem:[%s4 + $0x20] sm:$0xff]
  %v5439 = vld [vmem:[%s4 + $0x28] sm:$0xff]
  %v5440 = vld [vmem:[%s4 + $0x30] sm:$0xff]
  %v5441 = vld [vmem:[%s4 + $0x38] sm:$0xff]
  %v5442 = vld [vmem:[%s5] sm:$0x1]
  %v5444 = vlaneseq
  %v5445 = vshrl.u32 %v5444, 7
  %v5446 = vsub.s32 0, %v5445
  %v5447 = vrot.slane %v5442, %v5446
  %v5513 = vlaneseq
  %v5514 = vshrl.u32 %v5513, 7
  %v5515 = vsub.s32 %v88, %v5514
  %v5516 = vrot.slane %v5370, %v5515
  %v5517 = vlaneseq
  %v5518 = vshrl.u32 %v5517, 7
  %v5519 = vsub.s32 %v88, %v5518
  %v5520 = vrot.slane %v5371, %v5519
  %v5521 = vlaneseq
  %v5522 = vshrl.u32 %v5521, 7
  %v5523 = vsub.s32 %v88, %v5522
  %v5524 = vrot.slane %v5372, %v5523
  %v5525 = vlaneseq
  %v5526 = vshrl.u32 %v5525, 7
  %v5527 = vsub.s32 %v88, %v5526
  %v5528 = vrot.slane %v5373, %v5527
  %v5529 = vlaneseq
  %v5530 = vshrl.u32 %v5529, 7
  %v5531 = vsub.s32 %v88, %v5530
  %v5532 = vrot.slane %v5374, %v5531
  %v5533 = vlaneseq
  %v5534 = vshrl.u32 %v5533, 7
  %v5535 = vsub.s32 %v88, %v5534
  %v5536 = vrot.slane %v5375, %v5535
  %v5537 = vlaneseq
  %v5538 = vshrl.u32 %v5537, 7
  %v5539 = vsub.s32 %v88, %v5538
  %v5540 = vrot.slane %v5376, %v5539
  %v5541 = vlaneseq
  %v5542 = vshrl.u32 %v5541, 7
  %v5543 = vsub.s32 %v88, %v5542
  %v5544 = vrot.slane %v5377, %v5543
  %v5545 = vlaneseq
  %v5546 = vshrl.u32 %v5545, 7
  %v5547 = vsub.s32 %v88, %v5546
  %v5548 = vrot.slane %v5378, %v5547
  %v5549 = vlaneseq
  %v5550 = vshrl.u32 %v5549, 7
  %v5551 = vsub.s32 %v88, %v5550
  %v5552 = vrot.slane %v5379, %v5551
  %v5553 = vlaneseq
  %v5554 = vshrl.u32 %v5553, 7
  %v5555 = vsub.s32 %v88, %v5554
  %v5556 = vrot.slane %v5380, %v5555
  %v5557 = vlaneseq
  %v5558 = vshrl.u32 %v5557, 7
  %v5559 = vsub.s32 %v88, %v5558
  %v5560 = vrot.slane %v5381, %v5559
  %v5561 = vlaneseq
  %v5562 = vshrl.u32 %v5561, 7
  %v5563 = vsub.s32 %v88, %v5562
  %v5564 = vrot.slane %v5382, %v5563
  %v5565 = vlaneseq
  %v5566 = vshrl.u32 %v5565, 7
  %v5567 = vsub.s32 %v88, %v5566
  %v5568 = vrot.slane %v5383, %v5567
  %v5569 = vlaneseq
  %v5570 = vshrl.u32 %v5569, 7
  %v5571 = vsub.s32 %v88, %v5570
  %v5572 = vrot.slane %v5384, %v5571
  %v5573 = vlaneseq
  %v5574 = vshrl.u32 %v5573, 7
  %v5575 = vsub.s32 %v88, %v5574
  %v5576 = vrot.slane %v5385, %v5575
  %v5577 = vlaneseq
  %v5578 = vshrl.u32 %v5577, 7
  %v5579 = vsub.s32 %v88, %v5578
  %v5580 = vrot.slane %v5386, %v5579
  %v5581 = vlaneseq
  %v5582 = vshrl.u32 %v5581, 7
  %v5583 = vsub.s32 %v88, %v5582
  %v5584 = vrot.slane %v5387, %v5583
  %v5585 = vlaneseq
  %v5586 = vshrl.u32 %v5585, 7
  %v5587 = vsub.s32 %v88, %v5586
  %v5588 = vrot.slane %v5388, %v5587
  %v5589 = vlaneseq
  %v5590 = vshrl.u32 %v5589, 7
  %v5591 = vsub.s32 %v88, %v5590
  %v5592 = vrot.slane %v5389, %v5591
  %v5593 = vlaneseq
  %v5594 = vshrl.u32 %v5593, 7
  %v5595 = vsub.s32 %v88, %v5594
  %v5596 = vrot.slane %v5390, %v5595
  %v5597 = vlaneseq
  %v5598 = vshrl.u32 %v5597, 7
  %v5599 = vsub.s32 %v88, %v5598
  %v5600 = vrot.slane %v5391, %v5599
  %v5601 = vlaneseq
  %v5602 = vshrl.u32 %v5601, 7
  %v5603 = vsub.s32 %v88, %v5602
  %v5604 = vrot.slane %v5392, %v5603
  %v5605 = vlaneseq
  %v5606 = vshrl.u32 %v5605, 7
  %v5607 = vsub.s32 %v88, %v5606
  %v5608 = vrot.slane %v5393, %v5607
  %v5609 = vlaneseq
  %v5610 = vshrl.u32 %v5609, 7
  %v5611 = vsub.s32 %v88, %v5610
  %v5612 = vrot.slane %v5394, %v5611
  %v5613 = vlaneseq
  %v5614 = vshrl.u32 %v5613, 7
  %v5615 = vsub.s32 %v88, %v5614
  %v5616 = vrot.slane %v5395, %v5615
  %v5617 = vlaneseq
  %v5618 = vshrl.u32 %v5617, 7
  %v5619 = vsub.s32 %v88, %v5618
  %v5620 = vrot.slane %v5396, %v5619
  %v5621 = vlaneseq
  %v5622 = vshrl.u32 %v5621, 7
  %v5623 = vsub.s32 %v88, %v5622
  %v5624 = vrot.slane %v5397, %v5623
  %v5625 = vlaneseq
  %v5626 = vshrl.u32 %v5625, 7
  %v5627 = vsub.s32 %v88, %v5626
  %v5628 = vrot.slane %v5398, %v5627
  %v5629 = vlaneseq
  %v5630 = vshrl.u32 %v5629, 7
  %v5631 = vsub.s32 %v88, %v5630
  %v5632 = vrot.slane %v5399, %v5631
  %v5633 = vlaneseq
  %v5634 = vshrl.u32 %v5633, 7
  %v5635 = vsub.s32 %v88, %v5634
  %v5636 = vrot.slane %v5400, %v5635
  %v5637 = vlaneseq
  %v5638 = vshrl.u32 %v5637, 7
  %v5639 = vsub.s32 %v88, %v5638
  %v5640 = vrot.slane %v5401, %v5639
  %v5641 = vlaneseq
  %v5642 = vshrl.u32 %v5641, 7
  %v5643 = vsub.s32 %v88, %v5642
  %v5644 = vrot.slane %v5402, %v5643
  %v5645 = vlaneseq
  %v5646 = vshrl.u32 %v5645, 7
  %v5647 = vsub.s32 %v88, %v5646
  %v5648 = vrot.slane %v5403, %v5647
  %v5649 = vlaneseq
  %v5650 = vshrl.u32 %v5649, 7
  %v5651 = vsub.s32 %v88, %v5650
  %v5652 = vrot.slane %v5404, %v5651
  %v5653 = vlaneseq
  %v5654 = vshrl.u32 %v5653, 7
  %v5655 = vsub.s32 %v88, %v5654
  %v5656 = vrot.slane %v5405, %v5655
  %v5657 = vlaneseq
  %v5658 = vshrl.u32 %v5657, 7
  %v5659 = vsub.s32 %v88, %v5658
  %v5660 = vrot.slane %v5406, %v5659
  %v5661 = vlaneseq
  %v5662 = vshrl.u32 %v5661, 7
  %v5663 = vsub.s32 %v88, %v5662
  %v5664 = vrot.slane %v5407, %v5663
  %v5665 = vlaneseq
  %v5666 = vshrl.u32 %v5665, 7
  %v5667 = vsub.s32 %v88, %v5666
  %v5668 = vrot.slane %v5408, %v5667
  %v5669 = vlaneseq
  %v5670 = vshrl.u32 %v5669, 7
  %v5671 = vsub.s32 %v88, %v5670
  %v5672 = vrot.slane %v5409, %v5671
  %v5673 = vlaneseq
  %v5674 = vshrl.u32 %v5673, 7
  %v5675 = vsub.s32 %v88, %v5674
  %v5676 = vrot.slane %v5410, %v5675
  %v5677 = vlaneseq
  %v5678 = vshrl.u32 %v5677, 7
  %v5679 = vsub.s32 %v88, %v5678
  %v5680 = vrot.slane %v5411, %v5679
  %v5681 = vlaneseq
  %v5682 = vshrl.u32 %v5681, 7
  %v5683 = vsub.s32 %v88, %v5682
  %v5684 = vrot.slane %v5412, %v5683
  %v5685 = vlaneseq
  %v5686 = vshrl.u32 %v5685, 7
  %v5687 = vsub.s32 %v88, %v5686
  %v5688 = vrot.slane %v5413, %v5687
  %v5689 = vlaneseq
  %v5690 = vshrl.u32 %v5689, 7
  %v5691 = vsub.s32 %v88, %v5690
  %v5692 = vrot.slane %v5414, %v5691
  %v5693 = vlaneseq
  %v5694 = vshrl.u32 %v5693, 7
  %v5695 = vsub.s32 %v88, %v5694
  %v5696 = vrot.slane %v5415, %v5695
  %v5697 = vlaneseq
  %v5698 = vshrl.u32 %v5697, 7
  %v5699 = vsub.s32 %v88, %v5698
  %v5700 = vrot.slane %v5416, %v5699
  %v5701 = vlaneseq
  %v5702 = vshrl.u32 %v5701, 7
  %v5703 = vsub.s32 %v88, %v5702
  %v5704 = vrot.slane %v5417, %v5703
  %v5705 = vlaneseq
  %v5706 = vshrl.u32 %v5705, 7
  %v5707 = vsub.s32 %v88, %v5706
  %v5708 = vrot.slane %v5418, %v5707
  %v5709 = vlaneseq
  %v5710 = vshrl.u32 %v5709, 7
  %v5711 = vsub.s32 %v88, %v5710
  %v5712 = vrot.slane %v5419, %v5711
  %v5713 = vlaneseq
  %v5714 = vshrl.u32 %v5713, 7
  %v5715 = vsub.s32 %v88, %v5714
  %v5716 = vrot.slane %v5420, %v5715
  %v5717 = vlaneseq
  %v5718 = vshrl.u32 %v5717, 7
  %v5719 = vsub.s32 %v88, %v5718
  %v5720 = vrot.slane %v5421, %v5719
  %v5721 = vlaneseq
  %v5722 = vshrl.u32 %v5721, 7
  %v5723 = vsub.s32 %v88, %v5722
  %v5724 = vrot.slane %v5422, %v5723
  %v5725 = vlaneseq
  %v5726 = vshrl.u32 %v5725, 7
  %v5727 = vsub.s32 %v88, %v5726
  %v5728 = vrot.slane %v5423, %v5727
  %v5729 = vlaneseq
  %v5730 = vshrl.u32 %v5729, 7
  %v5731 = vsub.s32 %v88, %v5730
  %v5732 = vrot.slane %v5424, %v5731
  %v5733 = vlaneseq
  %v5734 = vshrl.u32 %v5733, 7
  %v5735 = vsub.s32 %v88, %v5734
  %v5736 = vrot.slane %v5425, %v5735
  %v5737 = vlaneseq
  %v5738 = vshrl.u32 %v5737, 7
  %v5739 = vsub.s32 %v88, %v5738
  %v5740 = vrot.slane %v5426, %v5739
  %v5741 = vlaneseq
  %v5742 = vshrl.u32 %v5741, 7
  %v5743 = vsub.s32 %v88, %v5742
  %v5744 = vrot.slane %v5427, %v5743
  %v5745 = vlaneseq
  %v5746 = vshrl.u32 %v5745, 7
  %v5747 = vsub.s32 %v88, %v5746
  %v5748 = vrot.slane %v5428, %v5747
  %v5749 = vlaneseq
  %v5750 = vshrl.u32 %v5749, 7
  %v5751 = vsub.s32 %v88, %v5750
  %v5752 = vrot.slane %v5429, %v5751
  %v5753 = vlaneseq
  %v5754 = vshrl.u32 %v5753, 7
  %v5755 = vsub.s32 %v88, %v5754
  %v5756 = vrot.slane %v5430, %v5755
  %v5757 = vlaneseq
  %v5758 = vshrl.u32 %v5757, 7
  %v5759 = vsub.s32 %v88, %v5758
  %v5760 = vrot.slane %v5431, %v5759
  %v5761 = vlaneseq
  %v5762 = vshrl.u32 %v5761, 7
  %v5763 = vsub.s32 %v88, %v5762
  %v5764 = vrot.slane %v5432, %v5763
  %v5765 = vlaneseq
  %v5766 = vshrl.u32 %v5765, 7
  %v5767 = vsub.s32 %v88, %v5766
  %v5768 = vrot.slane %v5433, %v5767
  %vm5769 = vcmask 1041409
  %v5770 = vsel %vm5769, %v5520, %v5516
  %vm5771 = vcmask 1042434
  %v5772 = vsel %vm5771, %v5524, %v5770
  %vm5773 = vcmask 1043459
  %v5774 = vsel %vm5773, %v5528, %v5772
  %vm5775 = vcmask 1044484
  %v5776 = vsel %vm5775, %v5532, %v5774
  %vm5777 = vcmask 1045509
  %v5778 = vsel %vm5777, %v5536, %v5776
  %vm5779 = vcmask 1046534
  %v5780 = vsel %vm5779, %v5540, %v5778
  %vm5781 = vcmask 1047559
  %v5782 = vsel %vm5781, %v5544, %v5780
  %v5783 = vsel %vm5769, %v5552, %v5548
  %v5784 = vsel %vm5771, %v5556, %v5783
  %v5785 = vsel %vm5773, %v5560, %v5784
  %v5786 = vsel %vm5775, %v5564, %v5785
  %v5787 = vsel %vm5777, %v5568, %v5786
  %v5788 = vsel %vm5779, %v5572, %v5787
  %v5789 = vsel %vm5781, %v5576, %v5788
  %v5790 = vsel %vm5769, %v5584, %v5580
  %v5791 = vsel %vm5771, %v5588, %v5790
  %v5792 = vsel %vm5773, %v5592, %v5791
  %v5793 = vsel %vm5775, %v5596, %v5792
  %v5794 = vsel %vm5777, %v5600, %v5793
  %v5795 = vsel %vm5779, %v5604, %v5794
  %v5796 = vsel %vm5781, %v5608, %v5795
  %v5797 = vsel %vm5769, %v5616, %v5612
  %v5798 = vsel %vm5771, %v5620, %v5797
  %v5799 = vsel %vm5773, %v5624, %v5798
  %v5800 = vsel %vm5775, %v5628, %v5799
  %v5801 = vsel %vm5777, %v5632, %v5800
  %v5802 = vsel %vm5779, %v5636, %v5801
  %v5803 = vsel %vm5781, %v5640, %v5802
  %v5804 = vsel %vm5769, %v5648, %v5644
  %v5805 = vsel %vm5771, %v5652, %v5804
  %v5806 = vsel %vm5773, %v5656, %v5805
  %v5807 = vsel %vm5775, %v5660, %v5806
  %v5808 = vsel %vm5777, %v5664, %v5807
  %v5809 = vsel %vm5779, %v5668, %v5808
  %v5810 = vsel %vm5781, %v5672, %v5809
  %v5811 = vsel %vm5769, %v5680, %v5676
  %v5812 = vsel %vm5771, %v5684, %v5811
  %v5813 = vsel %vm5773, %v5688, %v5812
  %v5814 = vsel %vm5775, %v5692, %v5813
  %v5815 = vsel %vm5777, %v5696, %v5814
  %v5816 = vsel %vm5779, %v5700, %v5815
  %v5817 = vsel %vm5781, %v5704, %v5816
  %v5818 = vsel %vm5769, %v5712, %v5708
  %v5819 = vsel %vm5771, %v5716, %v5818
  %v5820 = vsel %vm5773, %v5720, %v5819
  %v5821 = vsel %vm5775, %v5724, %v5820
  %v5822 = vsel %vm5777, %v5728, %v5821
  %v5823 = vsel %vm5779, %v5732, %v5822
  %v5824 = vsel %vm5781, %v5736, %v5823
  %v5825 = vsel %vm5769, %v5744, %v5740
  %v5826 = vsel %vm5771, %v5748, %v5825
  %v5827 = vsel %vm5773, %v5752, %v5826
  %v5828 = vsel %vm5775, %v5756, %v5827
  %v5829 = vsel %vm5777, %v5760, %v5828
  %v5830 = vsel %vm5779, %v5764, %v5829
  %v5831 = vsel %vm5781, %v5768, %v5830
  %5840 = vxpose.xlu0.b32.start [1/16] %v5782, 128
  %5841 = vxpose.xlu0.b32.cont [2/16] %v5789, 128
  %5842 = vxpose.xlu0.b32.cont [3/16] %v5796, 128
  %5843 = vxpose.xlu0.b32.cont [4/16] %v5803, 128
  %5844 = vxpose.xlu0.b32.cont [5/16] %v5810, 128
  %5845 = vxpose.xlu0.b32.cont [6/16] %v5817, 128
  %5846 = vxpose.xlu0.b32.cont [7/16] %v5824, 128
  %5847 = vxpose.xlu0.b32.cont [8/16] %v5831, 128
  %5848 = vxpose.xlu0.b32.cont [9/16] 0.0, 128
  %5849 = vxpose.xlu0.b32.cont [10/16] 0.0, 128
  %5850 = vxpose.xlu0.b32.cont [11/16] 0.0, 128
  %5851 = vxpose.xlu0.b32.cont [12/16] 0.0, 128
  %5852 = vxpose.xlu0.b32.cont [13/16] 0.0, 128
  %5853 = vxpose.xlu0.b32.cont [14/16] 0.0, 128
  %5854 = vxpose.xlu0.b32.cont [15/16] 0.0, 128
  %5855 = vxpose.xlu0.b32.end [16/16] 0.0, 128
  %v5856 = vpop.trf.xlu0
  %v5857 = vpop.trf.xlu0
  %v5858 = vpop.trf.xlu0
  %v5859 = vpop.trf.xlu0
  %v5860 = vpop.trf.xlu0
  %v5861 = vpop.trf.xlu0
  %v5862 = vpop.trf.xlu0
  %v5863 = vpop.trf.xlu0
  %v5864 = vpop.trf.xlu0
  %v5865 = vpop.trf.xlu0
  %v5866 = vpop.trf.xlu0
  %v5867 = vpop.trf.xlu0
  %v5868 = vpop.trf.xlu0
  %v5869 = vpop.trf.xlu0
  %v5870 = vpop.trf.xlu0
  %v5871 = vpop.trf.xlu0
  %vm5872 = vcmask 523264
  %v5874 = vsel %vm5872, %v5856, 0
  %5876 = vmatprep.subr.mxu0 0.0
  %5877 = vmatpush1.msra.mxu0 0.0
  %5878 = vmatprep.subr.mxu0 0.0
  %5879 = vmatpush1.msra.mxu0 0.0
  %5880 = vmatprep.subr.mxu0 0.0
  %5881 = vmatpush1.msra.mxu0 0.0
  %5882 = vmatprep.subr.mxu0 0.0
  %5883 = vmatpush1.msra.mxu0 0.0
  %5884 = vmatprep.subr.mxu0 0.0
  %5885 = vmatpush1.msra.mxu0 0.0
  %5886 = vmatprep.subr.mxu0 0.0
  %5887 = vmatpush1.msra.mxu0 0.0
  %5888 = vmatprep.subr.mxu0 0.0
  %5889 = vmatpush1.msra.mxu0 0.0
  %5890 = vmatprep.subr.mxu0 0.0
  %5891 = vmatpush1.msra.mxu0 0.0
  %5892 = vmatprep.subr.mxu0 0.0
  %5893 = vmatpush1.msra.mxu0 %v5441
  %5894 = vmatprep.subr.mxu0 0.0
  %5895 = vmatpush1.msra.mxu0 %v5440
  %5896 = vmatprep.subr.mxu0 0.0
  %5897 = vmatpush1.msra.mxu0 %v5439
  %5898 = vmatprep.subr.mxu0 0.0
  %5899 = vmatpush1.msra.mxu0 %v5438
  %5900 = vmatprep.subr.mxu0 0.0
  %5901 = vmatpush1.msra.mxu0 %v5437
  %5902 = vmatprep.subr.mxu0 0.0
  %5903 = vmatpush1.msra.mxu0 %v5436
  %5904 = vmatprep.subr.mxu0 0.0
  %5905 = vmatpush1.msra.mxu0 %v5435
  %5906 = vmatprep.subr.mxu0 0.0
  %5907 = vmatpush1.msra.mxu0 %v5434
  %5908 = vmatprep.subr.mxu0 0.0
  %5909 = vmatpush2.msra.mxu0 0.0
  %5910 = vmatprep.subr.mxu0 0.0
  %5911 = vmatpush2.msra.mxu0 0.0
  %5912 = vmatprep.subr.mxu0 0.0
  %5913 = vmatpush2.msra.mxu0 0.0
  %5914 = vmatprep.subr.mxu0 0.0
  %5915 = vmatpush2.msra.mxu0 0.0
  %5916 = vmatprep.subr.mxu0 0.0
  %5917 = vmatpush2.msra.mxu0 0.0
  %5918 = vmatprep.subr.mxu0 0.0
  %5919 = vmatpush2.msra.mxu0 0.0
  %5920 = vmatprep.subr.mxu0 0.0
  %5921 = vmatpush2.msra.mxu0 0.0
  %5922 = vmatprep.subr.mxu0 0.0
  %5923 = vmatpush2.msra.mxu0 0.0
  %5924 = vmatprep.subr.mxu0 0.0
  %5925 = vmatpush2.msra.mxu0 0.0
  %5926 = vmatprep.subr.mxu0 0.0
  %5927 = vmatpush2.msra.mxu0 0.0
  %5928 = vmatprep.subr.mxu0 0.0
  %5929 = vmatpush2.msra.mxu0 0.0
  %5930 = vmatprep.subr.mxu0 0.0
  %5931 = vmatpush2.msra.mxu0 0.0
  %5932 = vmatprep.subr.mxu0 0.0
  %5933 = vmatpush2.msra.mxu0 0.0
  %5934 = vmatprep.subr.mxu0 0.0
  %5935 = vmatpush2.msra.mxu0 0.0
  %5936 = vmatprep.subr.mxu0 0.0
  %5937 = vmatpush2.msra.mxu0 0.0
  %5938 = vmatprep.subr.mxu0 0.0
  %5939 = vmatpush2.msra.mxu0 0.0
  %5940 = vmatprep.mubr.f32.mxu0 0.0
  %5941 = vmatmul.mubr.f32.gmra.mxu0 %v5874
  %v5942 = vpop.f32.mrf.mxu0
  %v5943 = vadd.f32 %v5447, %v5942
  %v5944 = vpop.f32.mrf.mxu0
  %5945 = vdwg.mxu0
  %v5946 = vsub.f32 0.0, %v5943
  %v5947 = vmul.f32 %v5946, 1.442695
  %v5948 = vpow.pop %v5947
  %v5949 = vadd.f32 %v5948, 1.0
  %v5950 = vrcp.pop %v5949
  %v5951 = vmul.f32 1.0, %v5950
  %vm5952 = vcmask 80896
  %5953 = vst.msk [vmem:[%s6] sm:$0xff] %vm5952, %v5951
  // Predicated region
  $region26: #{_lambda_.5} parent=0 // pred_check
    _
  $region27: #{_lambda_.5} parent=0 // pred_check_branch
    %5955 = sbr.rel (0) target = $region29
  $region28: #{_lambda_.5} parent=0 // pred_region
    _
  $region29: #{_lambda_.5} parent=0 // pred_fallthru
    _
  // Predicated region
  $region30: #{_lambda_.5} parent=0 // pred_check
    _
  $region31: #{_lambda_.5} parent=0 // pred_check_branch
    %5957 = sbr.rel (0) target = $region33
  $region32: #{_lambda_.5} parent=0 // pred_region
    _
  $region33: #{_lambda_.5} parent=0 // pred_fallthru
    _

</llo_original>
